<compile_context>
chip_gen: v5e
topology: v5e:2x2
jax: 0.10.0
libtpu: 0.0.40
codegen_flags: <defaults>
</compile_context>

<pallas_src>
import functools
import math

import jax
import jax.numpy as jnp
from jax.experimental import pallas as pl
from jax.experimental.pallas import tpu as pltpu

LN_EPS = 1e-5
F32 = jnp.float32
BF16 = jnp.bfloat16


def _layernorm(y, g, b):
    mu = jnp.mean(y, axis=-1, keepdims=True)
    yc = y - mu
    var = jnp.mean(yc * yc, axis=-1, keepdims=True)
    return yc * jax.lax.rsqrt(var + LN_EPS) * g + b


def selfgat_kernel(
        # per-tile activations / graph data
        x_ref,        # (R, D)       f32  padded node features (flat slab layout)
        ecol_ref,     # (2TE, 2)     i32  rows [src ; tgt], cols [global idx, edge_mask]
        erow_ref,     # (1, 8, 2TE)  i32  row 0 = [global tgt idx | global src idx]
        ea_ref,       # (TE, ED)     f32  edge attributes
        nm_ref,       # (R, 1)       i32  node (query) mask
        # weights
        w_ref,        # (D, D)   bf16  GAT W
        ast_ref,      # (D, 2)   bf16  [a_src | a_tgt]
        aedge_ref,    # (ED, 1)  bf16  a_edge
        wqkv_ref,     # (D, 3D)  bf16  [Wq | Wk | Wv]
        wo_ref,       # (D, D)   bf16
        ln_ref,       # (8, D)   f32   rows: g1,b1,g2,b2,g3,b3,0,0
        w1_ref,       # (D, F)   bf16
        bf1_ref,      # (1, F)   f32
        w2_ref,       # (F, D)   bf16
        bf2_ref,      # (1, D)   f32
        # output
        out_ref,      # (R, D)   f32
        *, heads, n_real, n_edges_real, T, NP, EP):
    R, D = x_ref.shape
    TE = T * EP
    dk = D // heads

    # ------------------------------ GAT layer --------------------------------
    # h' = x @ W : one flat matmul (no per-slab broadcast weights).
    hp = jnp.dot(x_ref[...].astype(BF16), w_ref[...],
                 preferred_element_type=F32)                        # (R, D)
    hp_bf = hp.astype(BF16)

    # Gather src/tgt endpoint features for every edge with ONE one-hot matmul.
    ecol = ecol_ref[...]                                            # (2TE, 2)
    gidx = ecol[:, 0:1]                                             # (2TE, 1)
    iota_r = jax.lax.broadcasted_iota(jnp.int32, (2 * TE, R), 1)
    oh_gat = (iota_r == gidx).astype(F32).astype(BF16)              # (2TE, R)
    x_both = jnp.dot(oh_gat, hp_bf, preferred_element_type=F32)     # (2TE, D) [x_src ; x_tgt]

    # e = LeakyReLU(a_src.x_src + a_tgt.x_tgt + a_edge.edge_attr)
    e_st = jnp.dot(x_both.astype(BF16), ast_ref[...],
                   preferred_element_type=F32)                      # (2TE, 2)
    e_edge = jnp.dot(ea_ref[...].astype(BF16), aedge_ref[...],
                     preferred_element_type=F32)                    # (TE, 1)
    e = e_st[0:TE, 0:1] + e_st[TE:2 * TE, 1:2] + e_edge             # (TE, 1)
    e = jnp.where(e > 0, e, 0.2 * e)                                # LeakyReLU(0.2)

    # Masked softmax over the EP edges of each slab (free reshape: EP % 8 == 0).
    # Rows with no valid edge -> uniform over the *real* edges, matching
    # torch's `e[~isfinite(e).any(-1)] = 0`.
    em3 = ecol[0:TE, 1:2].reshape(T, EP, 1)                         # (T, EP, 1) i32
    e3 = jnp.where(em3 > 0, e.reshape(T, EP, 1), -1e30)
    row_valid = jnp.sum(em3, axis=1, keepdims=True) > 0             # (T, 1, 1)
    real_edge = jax.lax.broadcasted_iota(jnp.int32, (T, EP, 1), 1) < n_edges_real
    e3 = jnp.where(row_valid, e3, jnp.where(real_edge, 0.0, -1e30))
    m = jnp.max(e3, axis=1, keepdims=True)
    p = jnp.exp(e3 - m)
    alpha3 = p * pl.reciprocal(jnp.sum(p, axis=1, keepdims=True), approx=True)
    alpha = alpha3.reshape(TE, 1)                                   # (TE, 1)

    # Scatter-add x_src*alpha -> tgt nodes and x_tgt*alpha -> src nodes with
    # ONE (R, 2TE) one-hot matmul (column order matches x_both rows).
    alpha2 = jnp.concatenate([alpha, alpha], axis=0)                # (2TE, 1)
    xw = (x_both * alpha2).astype(BF16)                             # (2TE, D)
    sidx = erow_ref[0][0:1, :]                                      # (1, 2TE) [tgt | src]
    iota_n = jax.lax.broadcasted_iota(jnp.int32, (R, 2 * TE), 0)
    oh_sc = (iota_n == sidx).astype(F32).astype(BF16)               # (R, 2TE)
    agg = jnp.dot(oh_sc, xw, preferred_element_type=F32)            # (R, D)
    gat = jnp.where(agg > 0, agg, jnp.exp(jnp.minimum(agg, 0.0)) - 1.0)   # ELU

    # ---------- norm1 / block-diagonal self-attention / norm2 / FFN ----------
    ln = ln_ref[...]
    g1, b1 = ln[0:1, :], ln[1:2, :]
    g2, b2 = ln[2:3, :], ln[3:4, :]
    g3, b3 = ln[4:5, :], ln[5:6, :]

    # torch literally computes norm(x + dropout(x)) with x the sub-layer
    # OUTPUT, so with dropout = identity the "residual" is 2*x.
    x1 = _layernorm(gat + gat, g1, b1)                              # (R, D)

    qkv = jnp.dot(x1.astype(BF16), wqkv_ref[...],
                  preferred_element_type=F32)                       # (R, 3D)
    qkv3 = qkv.reshape(T, NP, 3 * D)                                # free split
    # torch: mask.unsqueeze(2).unsqueeze(3).transpose(3,4) puts node_mask on
    # the QUERY axis -> whole query rows are filled with -1e9.
    qmask = nm_ref[...].reshape(T, NP, 1) != 0                      # (T, NP, 1)
    key_real = jax.lax.broadcasted_iota(jnp.int32, (1, 1, NP), 2) < n_real

    scale = 1.0 / math.sqrt(dk)
    heads_out = []
    for hd in range(heads):
        q_h = qkv3[:, :, hd * dk:(hd + 1) * dk].astype(BF16)
        k_h = qkv3[:, :, D + hd * dk:D + (hd + 1) * dk].astype(BF16)
        v_h = qkv3[:, :, 2 * D + hd * dk:2 * D + (hd + 1) * dk].astype(BF16)
        s = jnp.einsum('tqd,tkd->tqk', q_h, k_h,
                       preferred_element_type=F32) * scale          # (T, NP, NP)
        s = jnp.where(qmask, -1e9, s)       # masked_fill(mask == True, -1e9)
        s = jnp.where(key_real, s, -1e30)   # exclude padded key rows
        mx = jnp.max(s, axis=2, keepdims=True)
        ps = jnp.exp(s - mx)
        attn = ps * pl.reciprocal(jnp.sum(ps, axis=2, keepdims=True), approx=True)
        heads_out.append(jnp.einsum('tqk,tkd->tqd', attn.astype(BF16), v_h,
                                    preferred_element_type=F32))    # (T, NP, dk)
    o_cat = jnp.concatenate(heads_out, axis=-1).reshape(R, D)       # (R, D)
    attn_out = jnp.dot(o_cat.astype(BF16), wo_ref[...],
                       preferred_element_type=F32)                  # one fused Wo

    x2 = _layernorm(attn_out + attn_out, g2, b2)

    ff = jnp.dot(x2.astype(BF16), w1_ref[...],
                 preferred_element_type=F32) + bf1_ref[...]
    ff = jnp.maximum(ff, 0.0)
    ff = jnp.dot(ff.astype(BF16), w2_ref[...],
                 preferred_element_type=F32) + bf2_ref[...]

    out_ref[...] = _layernorm(ff + ff, g3, b3)


# -----------------------------------------------------------------------------
# Wrapper
# -----------------------------------------------------------------------------
def self_gat_block(x, edge_index, edge_attr, node_mask, edge_mask, params,
                   *, heads, tile_bs=8):
    B, S, N, D = x.shape
    E = edge_index.shape[2]
    ED = edge_attr.shape[-1]
    F = params["w1"].shape[1]
    BS = B * S
    assert D % heads == 0

    NP = ((N + 7) // 8) * 8              # pad nodes to a multiple of 8
    EP = ((E + 7) // 8) * 8              # pad edges to a multiple of 8
    T = max(1, math.gcd(BS, tile_bs))    # slabs per grid step (keeps grid >= 2 here)
    NT = BS // T                         # grid steps
    R = T * NP
    TE = T * EP

    # ---- activations / graph data in kernel layout ----
    xf = jnp.pad(x.reshape(BS, N, D).astype(jnp.float32),
                 ((0, 0), (0, NP - N), (0, 0))).reshape(BS * NP, D)

    src = jnp.pad(edge_index[..., 0].reshape(BS, E).astype(jnp.int32),
                  ((0, 0), (0, EP - E)))
    tgt = jnp.pad(edge_index[..., 1].reshape(BS, E).astype(jnp.int32),
                  ((0, 0), (0, EP - E)))
    em = jnp.pad(edge_mask.reshape(BS, E).astype(jnp.int32),
                 ((0, 0), (0, EP - E)))
    ea = jnp.pad(edge_attr.reshape(BS, E, ED).astype(jnp.float32),
                 ((0, 0), (0, EP - E), (0, 0))).reshape(BS * EP, ED)

    # global (within-tile) node indices: slab-in-tile offset + cleaned index
    offs = (jnp.arange(BS, dtype=jnp.int32) % T)[:, None] * NP
    src_g = jnp.where(em > 0, src, 0) + offs                        # (BS, EP)
    tgt_g = jnp.where(em > 0, tgt, 0) + offs

    srcg_t = src_g.reshape(NT, TE)
    tgtg_t = tgt_g.reshape(NT, TE)
    em_t = em.reshape(NT, TE)
    # column layout: per tile rows [src block ; tgt block] x cols [idx, mask]
    ecol = jnp.stack(
        [jnp.stack([srcg_t, tgtg_t], axis=1).reshape(NT * 2 * TE),
         jnp.stack([em_t, em_t], axis=1).reshape(NT * 2 * TE)], axis=-1)
    # row layout: per tile, row 0 = [tgt | src] (scatter targets of [x_src ; x_tgt])
    erow = jnp.zeros((NT, 8, 2 * TE), jnp.int32).at[:, 0, :].set(
        jnp.concatenate([tgtg_t, srcg_t], axis=1))

    nm = jnp.pad(node_mask.reshape(BS, N).astype(jnp.int32),
                 ((0, 0), (0, NP - N)), constant_values=1).reshape(BS * NP, 1)

    # ---- weights in kernel layout (fused projections, bf16 MXU operands) ----
    ast2 = jnp.concatenate([params["a_src"], params["a_tgt"]], axis=1)         # (D,2)
    wqkv = jnp.concatenate([params["wq"], params["wk"], params["wv"]], axis=1)  # (D,3D)
    ln_pack = jnp.concatenate(
        [params["ln1_g"], params["ln1_b"], params["ln2_g"], params["ln2_b"],
         params["ln3_g"], params["ln3_b"], jnp.zeros((2, D), jnp.float32)], axis=0)

    tile2 = lambda i: (i, 0)
    tile3 = lambda i: (i, 0, 0)
    fix2 = lambda i: (0, 0)

    kernel = functools.partial(selfgat_kernel, heads=heads, n_real=N,
                               n_edges_real=E, T=T, NP=NP, EP=EP)

    out = pl.pallas_call(
        kernel,
        out_shape=jax.ShapeDtypeStruct((BS * NP, D), jnp.float32),
        grid=(NT,),
        in_specs=[
            pl.BlockSpec((R, D), tile2),           # x (padded, flat)
            pl.BlockSpec((2 * TE, 2), tile2),      # edge idx/mask (column layout)
            pl.BlockSpec((1, 8, 2 * TE), tile3),   # edge idx (row layout)
            pl.BlockSpec((TE, ED), tile2),         # edge attributes
            pl.BlockSpec((R, 1), tile2),           # node (query) mask
            pl.BlockSpec((D, D), fix2),            # W_gat
            pl.BlockSpec((D, 2), fix2),            # [a_src | a_tgt]
            pl.BlockSpec((ED, 1), fix2),           # a_edge
            pl.BlockSpec((D, 3 * D), fix2),        # [Wq | Wk | Wv]
            pl.BlockSpec((D, D), fix2),            # Wo
            pl.BlockSpec((8, D), fix2),            # packed LayerNorm params
            pl.BlockSpec((D, F), fix2),            # ff W1
            pl.BlockSpec((1, F), fix2),            # ff b1
            pl.BlockSpec((F, D), fix2),            # ff W2
            pl.BlockSpec((1, D), fix2),            # ff b2
        ],
        out_specs=pl.BlockSpec((R, D), tile2),
        compiler_params=pltpu.CompilerParams(dimension_semantics=("parallel",)),
    )(xf, ecol, erow, ea, nm,
      params["W_gat"].astype(BF16), ast2.astype(BF16), params["a_edge"].astype(BF16),
      wqkv.astype(BF16), params["wo"].astype(BF16),
      ln_pack,
      params["w1"].astype(BF16), params["b1"],
      params["w2"].astype(BF16), params["b2"])

    return out.reshape(BS, NP, D)[:, :N, :].reshape(B, S, N, D)


# -----------------------------------------------------------------------------
# Parameter construction
# -----------------------------------------------------------------------------
def make_params(key, D, ED, F):
    ks = jax.random.split(key, 10)
    sc = 1.0 / math.sqrt(D)
    a_full = jax.random.normal(ks[1], (2 * D + ED, 1), jnp.float32) * 0.1
    return dict(
        W_gat=jax.random.normal(ks[0], (D, D), jnp.float32) * sc,
        a_src=a_full[:D],
        a_tgt=a_full[D:2 * D],
        a_edge=a_full[2 * D:],
        wq=jax.random.normal(ks[2], (D, D), jnp.float32) * sc,
        wk=jax.random.normal(ks[3], (D, D), jnp.float32) * sc,
        wv=jax.random.normal(ks[4], (D, D), jnp.float32) * sc,
        wo=jax.random.normal(ks[5], (D, D), jnp.float32) * sc,
        ln1_g=jnp.ones((1, D), jnp.float32), ln1_b=jnp.zeros((1, D), jnp.float32),
        ln2_g=jnp.ones((1, D), jnp.float32), ln2_b=jnp.zeros((1, D), jnp.float32),
        ln3_g=jnp.ones((1, D), jnp.float32), ln3_b=jnp.zeros((1, D), jnp.float32),
        w1=jax.random.normal(ks[6], (D, F), jnp.float32) * sc,
        b1=jax.random.normal(ks[7], (1, F), jnp.float32) * 0.01,
        w2=jax.random.normal(ks[8], (F, D), jnp.float32) * (1.0 / math.sqrt(F)),
        b2=jax.random.normal(ks[9], (1, D), jnp.float32) * 0.01,
    )


if __name__ == "__main__":
    B, S, D, ED, heads, F = 2, 8, 32, 8, 4, 64
    N = S + 1          # num_nodes (seq_len + 1, as produced by GATLayer.expand_data)
    E = S              # num_edges

    key = jax.random.PRNGKey(0)
    k_x, k_e, k_p = jax.random.split(key, 3)

    x = jax.random.normal(k_x, (B, S, N, D), jnp.float32)
    edge_attr = jax.random.normal(k_e, (B, S, E, ED), jnp.float32)

    e_ids = jnp.arange(E)
    s_ids = jnp.arange(S)
    edge_mask = jnp.broadcast_to((e_ids[None, :] <= s_ids[:, None])[None], (B, S, E))
    src_base = jnp.broadcast_to((e_ids % N)[None, None, :], (B, S, E))
    tgt_base = jnp.broadcast_to(((e_ids + 1) % N)[None, None, :], (B, S, E))
    src_idx = jnp.where(edge_mask, src_base, -1)
    tgt_idx = jnp.where(edge_mask, tgt_base, -1)
    edge_index = jnp.stack([src_idx, tgt_idx], axis=-1).astype(jnp.int32)
    edge_attr = jnp.where(edge_mask[..., None], edge_attr, 0.0)

    node_mask = jnp.broadcast_to(
        (jnp.arange(N)[None, None, :] > (jnp.arange(S)[None, :, None] + 1)), (B, S, N))

    params = make_params(k_p, D, ED, F)

    out = self_gat_block(x, edge_index, edge_attr, node_mask, edge_mask,
                         params, heads=heads)
    out = jax.block_until_ready(out)
    assert out.shape == (B, S, N, D)
    assert bool(jnp.all(jnp.isfinite(out)))
    print("KERNEL_OK")
</pallas_src>

<mosaic_0001>
module attributes {stable_mosaic.version = 11 : i64} {
  func.func @selfgat_kernel(%arg0: i32, %arg1: memref<128x32xf32, #tpu.memory_space<vmem>>, %arg2: memref<128x2xi32, #tpu.memory_space<vmem>>, %arg3: memref<1x8x128xi32, #tpu.memory_space<vmem>>, %arg4: memref<64x8xf32, #tpu.memory_space<vmem>>, %arg5: memref<128x1xi32, #tpu.memory_space<vmem>>, %arg6: memref<32x32xbf16, #tpu.memory_space<vmem>>, %arg7: memref<32x2xbf16, #tpu.memory_space<vmem>>, %arg8: memref<8x1xbf16, #tpu.memory_space<vmem>>, %arg9: memref<32x96xbf16, #tpu.memory_space<vmem>>, %arg10: memref<32x32xbf16, #tpu.memory_space<vmem>>, %arg11: memref<8x32xf32, #tpu.memory_space<vmem>>, %arg12: memref<32x64xbf16, #tpu.memory_space<vmem>>, %arg13: memref<1x64xf32, #tpu.memory_space<vmem>>, %arg14: memref<64x32xbf16, #tpu.memory_space<vmem>>, %arg15: memref<1x32xf32, #tpu.memory_space<vmem>>, %arg16: memref<128x32xf32, #tpu.memory_space<vmem>>) attributes {dimension_semantics = [#tpu.dimension_semantics<parallel>], iteration_bounds = array<i64: 2>, scalar_prefetch = 0 : i64, scratch_operands = 0 : i64, tpu.core_type = #tpu.core_type<tc>, window_params = [{transform_indices = @transform_0, window_bounds = array<i64: 128, 32>}, {transform_indices = @transform_1, window_bounds = array<i64: 128, 2>}, {transform_indices = @transform_2, window_bounds = array<i64: 1, 8, 128>}, {transform_indices = @transform_3, window_bounds = array<i64: 64, 8>}, {transform_indices = @transform_4, window_bounds = array<i64: 128, 1>}, {pipeline_mode = #tpu.pipeline_mode<synchronous>, transform_indices = @transform_5, window_bounds = array<i64: 32, 32>}, {pipeline_mode = #tpu.pipeline_mode<synchronous>, transform_indices = @transform_6, window_bounds = array<i64: 32, 2>}, {pipeline_mode = #tpu.pipeline_mode<synchronous>, transform_indices = @transform_7, window_bounds = array<i64: 8, 1>}, {pipeline_mode = #tpu.pipeline_mode<synchronous>, transform_indices = @transform_8, window_bounds = array<i64: 32, 96>}, {pipeline_mode = #tpu.pipeline_mode<synchronous>, transform_indices = @transform_9, window_bounds = array<i64: 32, 32>}, {pipeline_mode = #tpu.pipeline_mode<synchronous>, transform_indices = @transform_10, window_bounds = array<i64: 8, 32>}, {pipeline_mode = #tpu.pipeline_mode<synchronous>, transform_indices = @transform_11, window_bounds = array<i64: 32, 64>}, {pipeline_mode = #tpu.pipeline_mode<synchronous>, transform_indices = @transform_12, window_bounds = array<i64: 1, 64>}, {pipeline_mode = #tpu.pipeline_mode<synchronous>, transform_indices = @transform_13, window_bounds = array<i64: 64, 32>}, {pipeline_mode = #tpu.pipeline_mode<synchronous>, transform_indices = @transform_14, window_bounds = array<i64: 1, 32>}, {transform_indices = @transform_15, window_bounds = array<i64: 128, 32>}]} {
    %c0 = arith.constant 0 : index
    %c0_0 = arith.constant 0 : index
    %0 = vector.load %arg1[%c0, %c0_0] : memref<128x32xf32, #tpu.memory_space<vmem>>, vector<128x32xf32>
    %1 = arith.truncf %0 : vector<128x32xf32> to vector<128x32xbf16>
    %c0_1 = arith.constant 0 : index
    %c0_2 = arith.constant 0 : index
    %2 = vector.load %arg6[%c0_1, %c0_2] : memref<32x32xbf16, #tpu.memory_space<vmem>>, vector<32x32xbf16>
    %cst = arith.constant dense<0.000000e+00> : vector<128x32xf32>
    %3 = tpu.matmul %1, %2, %cst {dimension_numbers = #tpu.dot_dimension_numbers<[1], [0], [0], [1], [0, 0, 1, 1], [], []>} : vector<128x32xbf16>, vector<32x32xbf16>, vector<128x32xf32> -> vector<128x32xf32>
    %4 = arith.truncf %3 : vector<128x32xf32> to vector<128x32xbf16>
    %c0_3 = arith.constant 0 : index
    %c0_4 = arith.constant 0 : index
    %5 = vector.load %arg2[%c0_3, %c0_4] : memref<128x2xi32, #tpu.memory_space<vmem>>, vector<128x2xi32>
    %6 = vector.extract_strided_slice %5 {offsets = [0, 0], sizes = [128, 1], strides = [1, 1]} : vector<128x2xi32> to vector<128x1xi32>
    %7 = tpu.iota {dimensions = array<i32: 1>} : vector<128x128xi32>
    %8 = vector.broadcast %6 : vector<128x1xi32> to vector<128x128xi32>
    %9 = arith.cmpi eq, %7, %8 : vector<128x128xi32>
    %10 = arith.extui %9 : vector<128x128xi1> to vector<128x128xi32>
    %11 = arith.sitofp %10 : vector<128x128xi32> to vector<128x128xf32>
    %12 = arith.truncf %11 : vector<128x128xf32> to vector<128x128xbf16>
    %cst_5 = arith.constant dense<0.000000e+00> : vector<128x32xf32>
    %13 = tpu.matmul %12, %4, %cst_5 {dimension_numbers = #tpu.dot_dimension_numbers<[1], [0], [0], [1], [0, 0, 1, 1], [], []>} : vector<128x128xbf16>, vector<128x32xbf16>, vector<128x32xf32> -> vector<128x32xf32>
    %14 = arith.truncf %13 : vector<128x32xf32> to vector<128x32xbf16>
    %c0_6 = arith.constant 0 : index
    %c0_7 = arith.constant 0 : index
    %15 = vector.load %arg7[%c0_6, %c0_7] : memref<32x2xbf16, #tpu.memory_space<vmem>>, vector<32x2xbf16>
    %cst_8 = arith.constant dense<0.000000e+00> : vector<128x2xf32>
    %16 = tpu.matmul %14, %15, %cst_8 {dimension_numbers = #tpu.dot_dimension_numbers<[1], [0], [0], [1], [0, 0, 1, 1], [], []>} : vector<128x32xbf16>, vector<32x2xbf16>, vector<128x2xf32> -> vector<128x2xf32>
    %c0_9 = arith.constant 0 : index
    %c0_10 = arith.constant 0 : index
    %17 = vector.load %arg4[%c0_9, %c0_10] : memref<64x8xf32, #tpu.memory_space<vmem>>, vector<64x8xf32>
    %18 = arith.truncf %17 : vector<64x8xf32> to vector<64x8xbf16>
    %c0_11 = arith.constant 0 : index
    %c0_12 = arith.constant 0 : index
    %19 = vector.load %arg8[%c0_11, %c0_12] : memref<8x1xbf16, #tpu.memory_space<vmem>>, vector<8x1xbf16>
    %cst_13 = arith.constant dense<0.000000e+00> : vector<64x1xf32>
    %20 = tpu.matmul %18, %19, %cst_13 {dimension_numbers = #tpu.dot_dimension_numbers<[1], [0], [0], [1], [0, 0, 1, 1], [], []>} : vector<64x8xbf16>, vector<8x1xbf16>, vector<64x1xf32> -> vector<64x1xf32>
    %21 = vector.extract_strided_slice %16 {offsets = [0, 0], sizes = [64, 1], strides = [1, 1]} : vector<128x2xf32> to vector<64x1xf32>
    %22 = vector.extract_strided_slice %16 {offsets = [64, 1], sizes = [64, 1], strides = [1, 1]} : vector<128x2xf32> to vector<64x1xf32>
    %23 = arith.addf %21, %22 : vector<64x1xf32>
    %24 = arith.addf %23, %20 : vector<64x1xf32>
    %cst_14 = arith.constant 0.000000e+00 : f32
    %25 = vector.broadcast %cst_14 : f32 to vector<64x1xf32>
    %26 = arith.cmpf ogt, %24, %25 : vector<64x1xf32>
    %cst_15 = arith.constant 2.000000e-01 : f32
    %27 = vector.broadcast %cst_15 : f32 to vector<64x1xf32>
    %28 = arith.mulf %27, %24 : vector<64x1xf32>
    %29 = arith.select %26, %24, %28 : vector<64x1xi1>, vector<64x1xf32>
    %30 = vector.extract_strided_slice %5 {offsets = [0, 1], sizes = [64, 1], strides = [1, 1]} : vector<128x2xi32> to vector<64x1xi32>
    %31 = vector.shape_cast %30 : vector<64x1xi32> to vector<8x8x1xi32>
    %c0_i32 = arith.constant 0 : i32
    %32 = vector.broadcast %c0_i32 : i32 to vector<8x8x1xi32>
    %33 = arith.cmpi sgt, %31, %32 : vector<8x8x1xi32>
    %34 = vector.shape_cast %29 : vector<64x1xf32> to vector<8x8x1xf32>
    %cst_16 = arith.constant -1.000000e+30 : f32
    %35 = vector.broadcast %cst_16 : f32 to vector<8x8x1xf32>
    %36 = arith.select %33, %34, %35 : vector<8x8x1xi1>, vector<8x8x1xf32>
    %cst_17 = arith.constant dense<0> : vector<8x1xi32>
    %37 = vector.multi_reduction <add>, %31, %cst_17 [1] : vector<8x8x1xi32> to vector<8x1xi32>
    %38 = vector.shape_cast %37 : vector<8x1xi32> to vector<8x1x1xi32>
    %c0_i32_18 = arith.constant 0 : i32
    %39 = vector.broadcast %c0_i32_18 : i32 to vector<8x1x1xi32>
    %40 = arith.cmpi sgt, %38, %39 : vector<8x1x1xi32>
    %41 = tpu.iota {dimensions = array<i32: 1>} : vector<8x8x1xi32>
    %c8_i32 = arith.constant 8 : i32
    %42 = vector.broadcast %c8_i32 : i32 to vector<8x8x1xi32>
    %43 = arith.cmpi slt, %41, %42 : vector<8x8x1xi32>
    %cst_19 = arith.constant 0.000000e+00 : f32
    %cst_20 = arith.constant -1.000000e+30 : f32
    %44 = vector.broadcast %cst_19 : f32 to vector<8x8x1xf32>
    %45 = vector.broadcast %cst_20 : f32 to vector<8x8x1xf32>
    %46 = arith.select %43, %44, %45 : vector<8x8x1xi1>, vector<8x8x1xf32>
    %47 = vector.shape_cast %40 : vector<8x1x1xi1> to vector<8x1x1xi1>
    %48 = vector.broadcast %47 : vector<8x1x1xi1> to vector<8x8x1xi1>
    %49 = arith.select %48, %36, %46 : vector<8x8x1xi1>, vector<8x8x1xf32>
    %cst_21 = arith.constant dense<0xFF800000> : vector<8x1xf32>
    %50 = vector.multi_reduction <maximumf>, %49, %cst_21 [1] : vector<8x8x1xf32> to vector<8x1xf32>
    %51 = vector.shape_cast %50 : vector<8x1xf32> to vector<8x1x1xf32>
    %52 = vector.broadcast %51 : vector<8x1x1xf32> to vector<8x8x1xf32>
    %53 = arith.subf %49, %52 : vector<8x8x1xf32>
    %54 = math.exp %53 : vector<8x8x1xf32>
    %cst_22 = arith.constant dense<0.000000e+00> : vector<8x1xf32>
    %55 = vector.multi_reduction <add>, %54, %cst_22 [1] : vector<8x8x1xf32> to vector<8x1xf32>
    %56 = vector.shape_cast %55 : vector<8x1xf32> to vector<8x1x1xf32>
    %57 = tpu.reciprocal %56 {approx = true} : vector<8x1x1xf32> -> vector<8x1x1xf32>
    %58 = vector.broadcast %57 : vector<8x1x1xf32> to vector<8x8x1xf32>
    %59 = arith.mulf %54, %58 : vector<8x8x1xf32>
    %60 = vector.shape_cast %59 : vector<8x8x1xf32> to vector<64x1xf32>
    %61 = tpu.concatenate %60, %60 in 0 : vector<64x1xf32>, vector<64x1xf32> -> vector<128x1xf32>
    %62 = vector.broadcast %61 : vector<128x1xf32> to vector<128x32xf32>
    %63 = arith.mulf %13, %62 : vector<128x32xf32>
    %64 = arith.truncf %63 : vector<128x32xf32> to vector<128x32xbf16>
    %c0_23 = arith.constant 0 : index
    %c0_24 = arith.constant 0 : index
    %c0_25 = arith.constant 0 : index
    %65 = vector.load %arg3[%c0_23, %c0_24, %c0_25] : memref<1x8x128xi32, #tpu.memory_space<vmem>>, vector<1x8x128xi32>
    %66 = vector.shape_cast %65 : vector<1x8x128xi32> to vector<8x128xi32>
    %67 = vector.extract_strided_slice %66 {offsets = [0, 0], sizes = [1, 128], strides = [1, 1]} : vector<8x128xi32> to vector<1x128xi32>
    %68 = tpu.iota {dimensions = array<i32: 0>} : vector<128x128xi32>
    %69 = vector.broadcast %67 : vector<1x128xi32> to vector<128x128xi32>
    %70 = arith.cmpi eq, %68, %69 : vector<128x128xi32>
    %71 = arith.extui %70 : vector<128x128xi1> to vector<128x128xi32>
    %72 = arith.sitofp %71 : vector<128x128xi32> to vector<128x128xf32>
    %73 = arith.truncf %72 : vector<128x128xf32> to vector<128x128xbf16>
    %cst_26 = arith.constant dense<0.000000e+00> : vector<128x32xf32>
    %74 = tpu.matmul %73, %64, %cst_26 {dimension_numbers = #tpu.dot_dimension_numbers<[1], [0], [0], [1], [0, 0, 1, 1], [], []>} : vector<128x128xbf16>, vector<128x32xbf16>, vector<128x32xf32> -> vector<128x32xf32>
    %cst_27 = arith.constant 0.000000e+00 : f32
    %75 = vector.broadcast %cst_27 : f32 to vector<128x32xf32>
    %76 = arith.cmpf ogt, %74, %75 : vector<128x32xf32>
    %cst_28 = arith.constant 0.000000e+00 : f32
    %77 = vector.broadcast %cst_28 : f32 to vector<128x32xf32>
    %78 = arith.minimumf %74, %77 : vector<128x32xf32>
    %79 = math.exp %78 : vector<128x32xf32>
    %cst_29 = arith.constant 1.000000e+00 : f32
    %80 = vector.broadcast %cst_29 : f32 to vector<128x32xf32>
    %81 = arith.subf %79, %80 : vector<128x32xf32>
    %82 = arith.select %76, %74, %81 : vector<128x32xi1>, vector<128x32xf32>
    %c0_30 = arith.constant 0 : index
    %c0_31 = arith.constant 0 : index
    %83 = vector.load %arg11[%c0_30, %c0_31] : memref<8x32xf32, #tpu.memory_space<vmem>>, vector<8x32xf32>
    %84 = vector.extract_strided_slice %83 {offsets = [0, 0], sizes = [1, 32], strides = [1, 1]} : vector<8x32xf32> to vector<1x32xf32>
    %85 = vector.extract_strided_slice %83 {offsets = [1, 0], sizes = [1, 32], strides = [1, 1]} : vector<8x32xf32> to vector<1x32xf32>
    %86 = vector.extract_strided_slice %83 {offsets = [2, 0], sizes = [1, 32], strides = [1, 1]} : vector<8x32xf32> to vector<1x32xf32>
    %87 = vector.extract_strided_slice %83 {offsets = [3, 0], sizes = [1, 32], strides = [1, 1]} : vector<8x32xf32> to vector<1x32xf32>
    %88 = vector.extract_strided_slice %83 {offsets = [4, 0], sizes = [1, 32], strides = [1, 1]} : vector<8x32xf32> to vector<1x32xf32>
    %89 = vector.extract_strided_slice %83 {offsets = [5, 0], sizes = [1, 32], strides = [1, 1]} : vector<8x32xf32> to vector<1x32xf32>
    %90 = arith.addf %82, %82 : vector<128x32xf32>
    %cst_32 = arith.constant dense<0.000000e+00> : vector<128xf32>
    %91 = vector.multi_reduction <add>, %90, %cst_32 [1] : vector<128x32xf32> to vector<128xf32>
    %92 = vector.shape_cast %91 : vector<128xf32> to vector<128x1xf32>
    %cst_33 = arith.constant 3.200000e+01 : f32
    %93 = vector.broadcast %cst_33 : f32 to vector<128x1xf32>
    %94 = arith.divf %92, %93 : vector<128x1xf32>
    %95 = vector.broadcast %94 : vector<128x1xf32> to vector<128x32xf32>
    %96 = arith.subf %90, %95 : vector<128x32xf32>
    %97 = arith.mulf %96, %96 : vector<128x32xf32>
    %cst_34 = arith.constant dense<0.000000e+00> : vector<128xf32>
    %98 = vector.multi_reduction <add>, %97, %cst_34 [1] : vector<128x32xf32> to vector<128xf32>
    %99 = vector.shape_cast %98 : vector<128xf32> to vector<128x1xf32>
    %cst_35 = arith.constant 3.200000e+01 : f32
    %100 = vector.broadcast %cst_35 : f32 to vector<128x1xf32>
    %101 = arith.divf %99, %100 : vector<128x1xf32>
    %cst_36 = arith.constant 9.99999974E-6 : f32
    %102 = vector.broadcast %cst_36 : f32 to vector<128x1xf32>
    %103 = arith.addf %101, %102 : vector<128x1xf32>
    %104 = math.rsqrt %103 : vector<128x1xf32>
    %105 = vector.broadcast %104 : vector<128x1xf32> to vector<128x32xf32>
    %106 = arith.mulf %96, %105 : vector<128x32xf32>
    %107 = vector.broadcast %84 : vector<1x32xf32> to vector<128x32xf32>
    %108 = arith.mulf %106, %107 : vector<128x32xf32>
    %109 = vector.broadcast %85 : vector<1x32xf32> to vector<128x32xf32>
    %110 = arith.addf %108, %109 : vector<128x32xf32>
    %111 = arith.truncf %110 : vector<128x32xf32> to vector<128x32xbf16>
    %c0_37 = arith.constant 0 : index
    %c0_38 = arith.constant 0 : index
    %112 = vector.load %arg9[%c0_37, %c0_38] : memref<32x96xbf16, #tpu.memory_space<vmem>>, vector<32x96xbf16>
    %cst_39 = arith.constant dense<0.000000e+00> : vector<128x96xf32>
    %113 = tpu.matmul %111, %112, %cst_39 {dimension_numbers = #tpu.dot_dimension_numbers<[1], [0], [0], [1], [0, 0, 1, 1], [], []>} : vector<128x32xbf16>, vector<32x96xbf16>, vector<128x96xf32> -> vector<128x96xf32>
    %114 = vector.shape_cast %113 : vector<128x96xf32> to vector<8x16x96xf32>
    %c0_40 = arith.constant 0 : index
    %c0_41 = arith.constant 0 : index
    %115 = vector.load %arg5[%c0_40, %c0_41] : memref<128x1xi32, #tpu.memory_space<vmem>>, vector<128x1xi32>
    %116 = vector.shape_cast %115 : vector<128x1xi32> to vector<8x16x1xi32>
    %c0_i32_42 = arith.constant 0 : i32
    %117 = vector.broadcast %c0_i32_42 : i32 to vector<8x16x1xi32>
    %118 = arith.cmpi ne, %116, %117 : vector<8x16x1xi32>
    %119 = tpu.iota {dimensions = array<i32: 2>} : vector<1x1x16xi32>
    %c9_i32 = arith.constant 9 : i32
    %120 = vector.broadcast %c9_i32 : i32 to vector<1x1x16xi32>
    %121 = arith.cmpi slt, %119, %120 : vector<1x1x16xi32>
    %122 = vector.extract_strided_slice %114 {offsets = [0, 0, 0], sizes = [8, 16, 8], strides = [1, 1, 1]} : vector<8x16x96xf32> to vector<8x16x8xf32>
    %123 = arith.truncf %122 : vector<8x16x8xf32> to vector<8x16x8xbf16>
    %124 = vector.extract_strided_slice %114 {offsets = [0, 0, 32], sizes = [8, 16, 8], strides = [1, 1, 1]} : vector<8x16x96xf32> to vector<8x16x8xf32>
    %125 = arith.truncf %124 : vector<8x16x8xf32> to vector<8x16x8xbf16>
    %126 = vector.extract_strided_slice %114 {offsets = [0, 0, 64], sizes = [8, 16, 8], strides = [1, 1, 1]} : vector<8x16x96xf32> to vector<8x16x8xf32>
    %127 = arith.truncf %126 : vector<8x16x8xf32> to vector<8x16x8xbf16>
    "tpu.trace_start"() <{level = 10 : i32, message = "tqd,tkd->tqk"}> : () -> ()
    %cst_43 = arith.constant dense<0.000000e+00> : vector<8x16x16xf32>
    %128 = tpu.matmul %123, %125, %cst_43 {dimension_numbers = #tpu.dot_dimension_numbers<[2], [2], [1], [1], [0, 0, 0, 1, 1, 1], [0], [0]>} : vector<8x16x8xbf16>, vector<8x16x8xbf16>, vector<8x16x16xf32> -> vector<8x16x16xf32>
    "tpu.trace_stop"() : () -> ()
    %cst_44 = arith.constant 0.353553385 : f32
    %129 = vector.broadcast %cst_44 : f32 to vector<8x16x16xf32>
    %130 = arith.mulf %128, %129 : vector<8x16x16xf32>
    %cst_45 = arith.constant -1.000000e+09 : f32
    %131 = vector.shape_cast %118 : vector<8x16x1xi1> to vector<8x16x1xi1>
    %132 = vector.broadcast %131 : vector<8x16x1xi1> to vector<8x16x16xi1>
    %133 = vector.broadcast %cst_45 : f32 to vector<8x16x16xf32>
    %134 = arith.select %132, %133, %130 : vector<8x16x16xi1>, vector<8x16x16xf32>
    %cst_46 = arith.constant -1.000000e+30 : f32
    %135 = vector.shape_cast %121 : vector<1x1x16xi1> to vector<1x1x16xi1>
    %136 = vector.broadcast %135 : vector<1x1x16xi1> to vector<8x16x16xi1>
    %137 = vector.broadcast %cst_46 : f32 to vector<8x16x16xf32>
    %138 = arith.select %136, %134, %137 : vector<8x16x16xi1>, vector<8x16x16xf32>
    %cst_47 = arith.constant dense<0xFF800000> : vector<8x16xf32>
    %139 = vector.multi_reduction <maximumf>, %138, %cst_47 [2] : vector<8x16x16xf32> to vector<8x16xf32>
    %140 = vector.shape_cast %139 : vector<8x16xf32> to vector<8x16x1xf32>
    %141 = vector.broadcast %140 : vector<8x16x1xf32> to vector<8x16x16xf32>
    %142 = arith.subf %138, %141 : vector<8x16x16xf32>
    %143 = math.exp %142 : vector<8x16x16xf32>
    %cst_48 = arith.constant dense<0.000000e+00> : vector<8x16xf32>
    %144 = vector.multi_reduction <add>, %143, %cst_48 [2] : vector<8x16x16xf32> to vector<8x16xf32>
    %145 = vector.shape_cast %144 : vector<8x16xf32> to vector<8x16x1xf32>
    %146 = tpu.reciprocal %145 {approx = true} : vector<8x16x1xf32> -> vector<8x16x1xf32>
    %147 = vector.broadcast %146 : vector<8x16x1xf32> to vector<8x16x16xf32>
    %148 = arith.mulf %143, %147 : vector<8x16x16xf32>
    %149 = arith.truncf %148 : vector<8x16x16xf32> to vector<8x16x16xbf16>
    "tpu.trace_start"() <{level = 10 : i32, message = "tqk,tkd->tqd"}> : () -> ()
    %cst_49 = arith.constant dense<0.000000e+00> : vector<8x16x8xf32>
    %150 = tpu.matmul %149, %127, %cst_49 {dimension_numbers = #tpu.dot_dimension_numbers<[2], [1], [1], [2], [0, 0, 0, 1, 1, 2], [0], [0]>} : vector<8x16x16xbf16>, vector<8x16x8xbf16>, vector<8x16x8xf32> -> vector<8x16x8xf32>
    "tpu.trace_stop"() : () -> ()
    %151 = vector.extract_strided_slice %114 {offsets = [0, 0, 8], sizes = [8, 16, 8], strides = [1, 1, 1]} : vector<8x16x96xf32> to vector<8x16x8xf32>
    %152 = arith.truncf %151 : vector<8x16x8xf32> to vector<8x16x8xbf16>
    %153 = vector.extract_strided_slice %114 {offsets = [0, 0, 40], sizes = [8, 16, 8], strides = [1, 1, 1]} : vector<8x16x96xf32> to vector<8x16x8xf32>
    %154 = arith.truncf %153 : vector<8x16x8xf32> to vector<8x16x8xbf16>
    %155 = vector.extract_strided_slice %114 {offsets = [0, 0, 72], sizes = [8, 16, 8], strides = [1, 1, 1]} : vector<8x16x96xf32> to vector<8x16x8xf32>
    %156 = arith.truncf %155 : vector<8x16x8xf32> to vector<8x16x8xbf16>
    "tpu.trace_start"() <{level = 10 : i32, message = "tqd,tkd->tqk"}> : () -> ()
    %cst_50 = arith.constant dense<0.000000e+00> : vector<8x16x16xf32>
    %157 = tpu.matmul %152, %154, %cst_50 {dimension_numbers = #tpu.dot_dimension_numbers<[2], [2], [1], [1], [0, 0, 0, 1, 1, 1], [0], [0]>} : vector<8x16x8xbf16>, vector<8x16x8xbf16>, vector<8x16x16xf32> -> vector<8x16x16xf32>
    "tpu.trace_stop"() : () -> ()
    %cst_51 = arith.constant 0.353553385 : f32
    %158 = vector.broadcast %cst_51 : f32 to vector<8x16x16xf32>
    %159 = arith.mulf %157, %158 : vector<8x16x16xf32>
    %cst_52 = arith.constant -1.000000e+09 : f32
    %160 = vector.shape_cast %118 : vector<8x16x1xi1> to vector<8x16x1xi1>
    %161 = vector.broadcast %160 : vector<8x16x1xi1> to vector<8x16x16xi1>
    %162 = vector.broadcast %cst_52 : f32 to vector<8x16x16xf32>
    %163 = arith.select %161, %162, %159 : vector<8x16x16xi1>, vector<8x16x16xf32>
    %cst_53 = arith.constant -1.000000e+30 : f32
    %164 = vector.shape_cast %121 : vector<1x1x16xi1> to vector<1x1x16xi1>
    %165 = vector.broadcast %164 : vector<1x1x16xi1> to vector<8x16x16xi1>
    %166 = vector.broadcast %cst_53 : f32 to vector<8x16x16xf32>
    %167 = arith.select %165, %163, %166 : vector<8x16x16xi1>, vector<8x16x16xf32>
    %cst_54 = arith.constant dense<0xFF800000> : vector<8x16xf32>
    %168 = vector.multi_reduction <maximumf>, %167, %cst_54 [2] : vector<8x16x16xf32> to vector<8x16xf32>
    %169 = vector.shape_cast %168 : vector<8x16xf32> to vector<8x16x1xf32>
    %170 = vector.broadcast %169 : vector<8x16x1xf32> to vector<8x16x16xf32>
    %171 = arith.subf %167, %170 : vector<8x16x16xf32>
    %172 = math.exp %171 : vector<8x16x16xf32>
    %cst_55 = arith.constant dense<0.000000e+00> : vector<8x16xf32>
    %173 = vector.multi_reduction <add>, %172, %cst_55 [2] : vector<8x16x16xf32> to vector<8x16xf32>
    %174 = vector.shape_cast %173 : vector<8x16xf32> to vector<8x16x1xf32>
    %175 = tpu.reciprocal %174 {approx = true} : vector<8x16x1xf32> -> vector<8x16x1xf32>
    %176 = vector.broadcast %175 : vector<8x16x1xf32> to vector<8x16x16xf32>
    %177 = arith.mulf %172, %176 : vector<8x16x16xf32>
    %178 = arith.truncf %177 : vector<8x16x16xf32> to vector<8x16x16xbf16>
    "tpu.trace_start"() <{level = 10 : i32, message = "tqk,tkd->tqd"}> : () -> ()
    %cst_56 = arith.constant dense<0.000000e+00> : vector<8x16x8xf32>
    %179 = tpu.matmul %178, %156, %cst_56 {dimension_numbers = #tpu.dot_dimension_numbers<[2], [1], [1], [2], [0, 0, 0, 1, 1, 2], [0], [0]>} : vector<8x16x16xbf16>, vector<8x16x8xbf16>, vector<8x16x8xf32> -> vector<8x16x8xf32>
    "tpu.trace_stop"() : () -> ()
    %180 = vector.extract_strided_slice %114 {offsets = [0, 0, 16], sizes = [8, 16, 8], strides = [1, 1, 1]} : vector<8x16x96xf32> to vector<8x16x8xf32>
    %181 = arith.truncf %180 : vector<8x16x8xf32> to vector<8x16x8xbf16>
    %182 = vector.extract_strided_slice %114 {offsets = [0, 0, 48], sizes = [8, 16, 8], strides = [1, 1, 1]} : vector<8x16x96xf32> to vector<8x16x8xf32>
    %183 = arith.truncf %182 : vector<8x16x8xf32> to vector<8x16x8xbf16>
    %184 = vector.extract_strided_slice %114 {offsets = [0, 0, 80], sizes = [8, 16, 8], strides = [1, 1, 1]} : vector<8x16x96xf32> to vector<8x16x8xf32>
    %185 = arith.truncf %184 : vector<8x16x8xf32> to vector<8x16x8xbf16>
    "tpu.trace_start"() <{level = 10 : i32, message = "tqd,tkd->tqk"}> : () -> ()
    %cst_57 = arith.constant dense<0.000000e+00> : vector<8x16x16xf32>
    %186 = tpu.matmul %181, %183, %cst_57 {dimension_numbers = #tpu.dot_dimension_numbers<[2], [2], [1], [1], [0, 0, 0, 1, 1, 1], [0], [0]>} : vector<8x16x8xbf16>, vector<8x16x8xbf16>, vector<8x16x16xf32> -> vector<8x16x16xf32>
    "tpu.trace_stop"() : () -> ()
    %cst_58 = arith.constant 0.353553385 : f32
    %187 = vector.broadcast %cst_58 : f32 to vector<8x16x16xf32>
    %188 = arith.mulf %186, %187 : vector<8x16x16xf32>
    %cst_59 = arith.constant -1.000000e+09 : f32
    %189 = vector.shape_cast %118 : vector<8x16x1xi1> to vector<8x16x1xi1>
    %190 = vector.broadcast %189 : vector<8x16x1xi1> to vector<8x16x16xi1>
    %191 = vector.broadcast %cst_59 : f32 to vector<8x16x16xf32>
    %192 = arith.select %190, %191, %188 : vector<8x16x16xi1>, vector<8x16x16xf32>
    %cst_60 = arith.constant -1.000000e+30 : f32
    %193 = vector.shape_cast %121 : vector<1x1x16xi1> to vector<1x1x16xi1>
    %194 = vector.broadcast %193 : vector<1x1x16xi1> to vector<8x16x16xi1>
    %195 = vector.broadcast %cst_60 : f32 to vector<8x16x16xf32>
    %196 = arith.select %194, %192, %195 : vector<8x16x16xi1>, vector<8x16x16xf32>
    %cst_61 = arith.constant dense<0xFF800000> : vector<8x16xf32>
    %197 = vector.multi_reduction <maximumf>, %196, %cst_61 [2] : vector<8x16x16xf32> to vector<8x16xf32>
    %198 = vector.shape_cast %197 : vector<8x16xf32> to vector<8x16x1xf32>
    %199 = vector.broadcast %198 : vector<8x16x1xf32> to vector<8x16x16xf32>
    %200 = arith.subf %196, %199 : vector<8x16x16xf32>
    %201 = math.exp %200 : vector<8x16x16xf32>
    %cst_62 = arith.constant dense<0.000000e+00> : vector<8x16xf32>
    %202 = vector.multi_reduction <add>, %201, %cst_62 [2] : vector<8x16x16xf32> to vector<8x16xf32>
    %203 = vector.shape_cast %202 : vector<8x16xf32> to vector<8x16x1xf32>
    %204 = tpu.reciprocal %203 {approx = true} : vector<8x16x1xf32> -> vector<8x16x1xf32>
    %205 = vector.broadcast %204 : vector<8x16x1xf32> to vector<8x16x16xf32>
    %206 = arith.mulf %201, %205 : vector<8x16x16xf32>
    %207 = arith.truncf %206 : vector<8x16x16xf32> to vector<8x16x16xbf16>
    "tpu.trace_start"() <{level = 10 : i32, message = "tqk,tkd->tqd"}> : () -> ()
    %cst_63 = arith.constant dense<0.000000e+00> : vector<8x16x8xf32>
    %208 = tpu.matmul %207, %185, %cst_63 {dimension_numbers = #tpu.dot_dimension_numbers<[2], [1], [1], [2], [0, 0, 0, 1, 1, 2], [0], [0]>} : vector<8x16x16xbf16>, vector<8x16x8xbf16>, vector<8x16x8xf32> -> vector<8x16x8xf32>
    "tpu.trace_stop"() : () -> ()
    %209 = vector.extract_strided_slice %114 {offsets = [0, 0, 24], sizes = [8, 16, 8], strides = [1, 1, 1]} : vector<8x16x96xf32> to vector<8x16x8xf32>
    %210 = arith.truncf %209 : vector<8x16x8xf32> to vector<8x16x8xbf16>
    %211 = vector.extract_strided_slice %114 {offsets = [0, 0, 56], sizes = [8, 16, 8], strides = [1, 1, 1]} : vector<8x16x96xf32> to vector<8x16x8xf32>
    %212 = arith.truncf %211 : vector<8x16x8xf32> to vector<8x16x8xbf16>
    %213 = vector.extract_strided_slice %114 {offsets = [0, 0, 88], sizes = [8, 16, 8], strides = [1, 1, 1]} : vector<8x16x96xf32> to vector<8x16x8xf32>
    %214 = arith.truncf %213 : vector<8x16x8xf32> to vector<8x16x8xbf16>
    "tpu.trace_start"() <{level = 10 : i32, message = "tqd,tkd->tqk"}> : () -> ()
    %cst_64 = arith.constant dense<0.000000e+00> : vector<8x16x16xf32>
    %215 = tpu.matmul %210, %212, %cst_64 {dimension_numbers = #tpu.dot_dimension_numbers<[2], [2], [1], [1], [0, 0, 0, 1, 1, 1], [0], [0]>} : vector<8x16x8xbf16>, vector<8x16x8xbf16>, vector<8x16x16xf32> -> vector<8x16x16xf32>
    "tpu.trace_stop"() : () -> ()
    %cst_65 = arith.constant 0.353553385 : f32
    %216 = vector.broadcast %cst_65 : f32 to vector<8x16x16xf32>
    %217 = arith.mulf %215, %216 : vector<8x16x16xf32>
    %cst_66 = arith.constant -1.000000e+09 : f32
    %218 = vector.shape_cast %118 : vector<8x16x1xi1> to vector<8x16x1xi1>
    %219 = vector.broadcast %218 : vector<8x16x1xi1> to vector<8x16x16xi1>
    %220 = vector.broadcast %cst_66 : f32 to vector<8x16x16xf32>
    %221 = arith.select %219, %220, %217 : vector<8x16x16xi1>, vector<8x16x16xf32>
    %cst_67 = arith.constant -1.000000e+30 : f32
    %222 = vector.shape_cast %121 : vector<1x1x16xi1> to vector<1x1x16xi1>
    %223 = vector.broadcast %222 : vector<1x1x16xi1> to vector<8x16x16xi1>
    %224 = vector.broadcast %cst_67 : f32 to vector<8x16x16xf32>
    %225 = arith.select %223, %221, %224 : vector<8x16x16xi1>, vector<8x16x16xf32>
    %cst_68 = arith.constant dense<0xFF800000> : vector<8x16xf32>
    %226 = vector.multi_reduction <maximumf>, %225, %cst_68 [2] : vector<8x16x16xf32> to vector<8x16xf32>
    %227 = vector.shape_cast %226 : vector<8x16xf32> to vector<8x16x1xf32>
    %228 = vector.broadcast %227 : vector<8x16x1xf32> to vector<8x16x16xf32>
    %229 = arith.subf %225, %228 : vector<8x16x16xf32>
    %230 = math.exp %229 : vector<8x16x16xf32>
    %cst_69 = arith.constant dense<0.000000e+00> : vector<8x16xf32>
    %231 = vector.multi_reduction <add>, %230, %cst_69 [2] : vector<8x16x16xf32> to vector<8x16xf32>
    %232 = vector.shape_cast %231 : vector<8x16xf32> to vector<8x16x1xf32>
    %233 = tpu.reciprocal %232 {approx = true} : vector<8x16x1xf32> -> vector<8x16x1xf32>
    %234 = vector.broadcast %233 : vector<8x16x1xf32> to vector<8x16x16xf32>
    %235 = arith.mulf %230, %234 : vector<8x16x16xf32>
    %236 = arith.truncf %235 : vector<8x16x16xf32> to vector<8x16x16xbf16>
    "tpu.trace_start"() <{level = 10 : i32, message = "tqk,tkd->tqd"}> : () -> ()
    %cst_70 = arith.constant dense<0.000000e+00> : vector<8x16x8xf32>
    %237 = tpu.matmul %236, %214, %cst_70 {dimension_numbers = #tpu.dot_dimension_numbers<[2], [1], [1], [2], [0, 0, 0, 1, 1, 2], [0], [0]>} : vector<8x16x16xbf16>, vector<8x16x8xbf16>, vector<8x16x8xf32> -> vector<8x16x8xf32>
    "tpu.trace_stop"() : () -> ()
    %238 = tpu.concatenate %150, %179, %208, %237 in 2 : vector<8x16x8xf32>, vector<8x16x8xf32>, vector<8x16x8xf32>, vector<8x16x8xf32> -> vector<8x16x32xf32>
    %239 = vector.shape_cast %238 : vector<8x16x32xf32> to vector<128x32xf32>
    %240 = arith.truncf %239 : vector<128x32xf32> to vector<128x32xbf16>
    %c0_71 = arith.constant 0 : index
    %c0_72 = arith.constant 0 : index
    %241 = vector.load %arg10[%c0_71, %c0_72] : memref<32x32xbf16, #tpu.memory_space<vmem>>, vector<32x32xbf16>
    %cst_73 = arith.constant dense<0.000000e+00> : vector<128x32xf32>
    %242 = tpu.matmul %240, %241, %cst_73 {dimension_numbers = #tpu.dot_dimension_numbers<[1], [0], [0], [1], [0, 0, 1, 1], [], []>} : vector<128x32xbf16>, vector<32x32xbf16>, vector<128x32xf32> -> vector<128x32xf32>
    %243 = arith.addf %242, %242 : vector<128x32xf32>
    %cst_74 = arith.constant dense<0.000000e+00> : vector<128xf32>
    %244 = vector.multi_reduction <add>, %243, %cst_74 [1] : vector<128x32xf32> to vector<128xf32>
    %245 = vector.shape_cast %244 : vector<128xf32> to vector<128x1xf32>
    %cst_75 = arith.constant 3.200000e+01 : f32
    %246 = vector.broadcast %cst_75 : f32 to vector<128x1xf32>
    %247 = arith.divf %245, %246 : vector<128x1xf32>
    %248 = vector.broadcast %247 : vector<128x1xf32> to vector<128x32xf32>
    %249 = arith.subf %243, %248 : vector<128x32xf32>
    %250 = arith.mulf %249, %249 : vector<128x32xf32>
    %cst_76 = arith.constant dense<0.000000e+00> : vector<128xf32>
    %251 = vector.multi_reduction <add>, %250, %cst_76 [1] : vector<128x32xf32> to vector<128xf32>
    %252 = vector.shape_cast %251 : vector<128xf32> to vector<128x1xf32>
    %cst_77 = arith.constant 3.200000e+01 : f32
    %253 = vector.broadcast %cst_77 : f32 to vector<128x1xf32>
    %254 = arith.divf %252, %253 : vector<128x1xf32>
    %cst_78 = arith.constant 9.99999974E-6 : f32
    %255 = vector.broadcast %cst_78 : f32 to vector<128x1xf32>
    %256 = arith.addf %254, %255 : vector<128x1xf32>
    %257 = math.rsqrt %256 : vector<128x1xf32>
    %258 = vector.broadcast %257 : vector<128x1xf32> to vector<128x32xf32>
    %259 = arith.mulf %249, %258 : vector<128x32xf32>
    %260 = vector.broadcast %86 : vector<1x32xf32> to vector<128x32xf32>
    %261 = arith.mulf %259, %260 : vector<128x32xf32>
    %262 = vector.broadcast %87 : vector<1x32xf32> to vector<128x32xf32>
    %263 = arith.addf %261, %262 : vector<128x32xf32>
    %264 = arith.truncf %263 : vector<128x32xf32> to vector<128x32xbf16>
    %c0_79 = arith.constant 0 : index
    %c0_80 = arith.constant 0 : index
    %265 = vector.load %arg12[%c0_79, %c0_80] : memref<32x64xbf16, #tpu.memory_space<vmem>>, vector<32x64xbf16>
    %cst_81 = arith.constant dense<0.000000e+00> : vector<128x64xf32>
    %266 = tpu.matmul %264, %265, %cst_81 {dimension_numbers = #tpu.dot_dimension_numbers<[1], [0], [0], [1], [0, 0, 1, 1], [], []>} : vector<128x32xbf16>, vector<32x64xbf16>, vector<128x64xf32> -> vector<128x64xf32>
    %c0_82 = arith.constant 0 : index
    %c0_83 = arith.constant 0 : index
    %267 = vector.load %arg13[%c0_82, %c0_83] : memref<1x64xf32, #tpu.memory_space<vmem>>, vector<1x64xf32>
    %268 = vector.broadcast %267 : vector<1x64xf32> to vector<128x64xf32>
    %269 = arith.addf %266, %268 : vector<128x64xf32>
    %cst_84 = arith.constant 0.000000e+00 : f32
    %270 = vector.broadcast %cst_84 : f32 to vector<128x64xf32>
    %271 = arith.maximumf %269, %270 : vector<128x64xf32>
    %272 = arith.truncf %271 : vector<128x64xf32> to vector<128x64xbf16>
    %c0_85 = arith.constant 0 : index
    %c0_86 = arith.constant 0 : index
    %273 = vector.load %arg14[%c0_85, %c0_86] : memref<64x32xbf16, #tpu.memory_space<vmem>>, vector<64x32xbf16>
    %cst_87 = arith.constant dense<0.000000e+00> : vector<128x32xf32>
    %274 = tpu.matmul %272, %273, %cst_87 {dimension_numbers = #tpu.dot_dimension_numbers<[1], [0], [0], [1], [0, 0, 1, 1], [], []>} : vector<128x64xbf16>, vector<64x32xbf16>, vector<128x32xf32> -> vector<128x32xf32>
    %c0_88 = arith.constant 0 : index
    %c0_89 = arith.constant 0 : index
    %275 = vector.load %arg15[%c0_88, %c0_89] : memref<1x32xf32, #tpu.memory_space<vmem>>, vector<1x32xf32>
    %276 = vector.broadcast %275 : vector<1x32xf32> to vector<128x32xf32>
    %277 = arith.addf %274, %276 : vector<128x32xf32>
    %278 = arith.addf %277, %277 : vector<128x32xf32>
    %cst_90 = arith.constant dense<0.000000e+00> : vector<128xf32>
    %279 = vector.multi_reduction <add>, %278, %cst_90 [1] : vector<128x32xf32> to vector<128xf32>
    %280 = vector.shape_cast %279 : vector<128xf32> to vector<128x1xf32>
    %cst_91 = arith.constant 3.200000e+01 : f32
    %281 = vector.broadcast %cst_91 : f32 to vector<128x1xf32>
    %282 = arith.divf %280, %281 : vector<128x1xf32>
    %283 = vector.broadcast %282 : vector<128x1xf32> to vector<128x32xf32>
    %284 = arith.subf %278, %283 : vector<128x32xf32>
    %285 = arith.mulf %284, %284 : vector<128x32xf32>
    %cst_92 = arith.constant dense<0.000000e+00> : vector<128xf32>
    %286 = vector.multi_reduction <add>, %285, %cst_92 [1] : vector<128x32xf32> to vector<128xf32>
    %287 = vector.shape_cast %286 : vector<128xf32> to vector<128x1xf32>
    %cst_93 = arith.constant 3.200000e+01 : f32
    %288 = vector.broadcast %cst_93 : f32 to vector<128x1xf32>
    %289 = arith.divf %287, %288 : vector<128x1xf32>
    %cst_94 = arith.constant 9.99999974E-6 : f32
    %290 = vector.broadcast %cst_94 : f32 to vector<128x1xf32>
    %291 = arith.addf %289, %290 : vector<128x1xf32>
    %292 = math.rsqrt %291 : vector<128x1xf32>
    %293 = vector.broadcast %292 : vector<128x1xf32> to vector<128x32xf32>
    %294 = arith.mulf %284, %293 : vector<128x32xf32>
    %295 = vector.broadcast %88 : vector<1x32xf32> to vector<128x32xf32>
    %296 = arith.mulf %294, %295 : vector<128x32xf32>
    %297 = vector.broadcast %89 : vector<1x32xf32> to vector<128x32xf32>
    %298 = arith.addf %296, %297 : vector<128x32xf32>
    %c0_95 = arith.constant 0 : index
    %c0_96 = arith.constant 0 : index
    %299 = vector.load %arg16[%c0_95, %c0_96] : memref<128x32xf32, #tpu.memory_space<vmem>>, vector<128x32xf32>
    tpu.vector_store %arg16[%c0_95, %c0_96], %298 {strides = array<i32>} : memref<128x32xf32, #tpu.memory_space<vmem>>, vector<128x32xf32>,
    return
  }
  func.func @transform_0(%arg0: i32) -> (i32, i32) {
    %c0_i32 = arith.constant 0 : i32
    %c0_i32_0 = arith.constant 0 : i32
    return %arg0, %c0_i32 : i32, i32
  }
  func.func @transform_1(%arg0: i32) -> (i32, i32) {
    %c0_i32 = arith.constant 0 : i32
    %c0_i32_0 = arith.constant 0 : i32
    return %arg0, %c0_i32 : i32, i32
  }
  func.func @transform_2(%arg0: i32) -> (i32, i32, i32) {
    %c0_i32 = arith.constant 0 : i32
    %c0_i32_0 = arith.constant 0 : i32
    %c0_i32_1 = arith.constant 0 : i32
    return %arg0, %c0_i32, %c0_i32_0 : i32, i32, i32
  }
  func.func @transform_3(%arg0: i32) -> (i32, i32) {
    %c0_i32 = arith.constant 0 : i32
    %c0_i32_0 = arith.constant 0 : i32
    return %arg0, %c0_i32 : i32, i32
  }
  func.func @transform_4(%arg0: i32) -> (i32, i32) {
    %c0_i32 = arith.constant 0 : i32
    %c0_i32_0 = arith.constant 0 : i32
    return %arg0, %c0_i32 : i32, i32
  }
  func.func @transform_5(%arg0: i32) -> (i32, i32) {
    %c0_i32 = arith.constant 0 : i32
    %c0_i32_0 = arith.constant 0 : i32
    %c0_i32_1 = arith.constant 0 : i32
    return %c0_i32, %c0_i32_0 : i32, i32
  }
  func.func @transform_6(%arg0: i32) -> (i32, i32) {
    %c0_i32 = arith.constant 0 : i32
    %c0_i32_0 = arith.constant 0 : i32
    %c0_i32_1 = arith.constant 0 : i32
    return %c0_i32, %c0_i32_0 : i32, i32
  }
  func.func @transform_7(%arg0: i32) -> (i32, i32) {
    %c0_i32 = arith.constant 0 : i32
    %c0_i32_0 = arith.constant 0 : i32
    %c0_i32_1 = arith.constant 0 : i32
    return %c0_i32, %c0_i32_0 : i32, i32
  }
  func.func @transform_8(%arg0: i32) -> (i32, i32) {
    %c0_i32 = arith.constant 0 : i32
    %c0_i32_0 = arith.constant 0 : i32
    %c0_i32_1 = arith.constant 0 : i32
    return %c0_i32, %c0_i32_0 : i32, i32
  }
  func.func @transform_9(%arg0: i32) -> (i32, i32) {
    %c0_i32 = arith.constant 0 : i32
    %c0_i32_0 = arith.constant 0 : i32
    %c0_i32_1 = arith.constant 0 : i32
    return %c0_i32, %c0_i32_0 : i32, i32
  }
  func.func @transform_10(%arg0: i32) -> (i32, i32) {
    %c0_i32 = arith.constant 0 : i32
    %c0_i32_0 = arith.constant 0 : i32
    %c0_i32_1 = arith.constant 0 : i32
    return %c0_i32, %c0_i32_0 : i32, i32
  }
  func.func @transform_11(%arg0: i32) -> (i32, i32) {
    %c0_i32 = arith.constant 0 : i32
    %c0_i32_0 = arith.constant 0 : i32
    %c0_i32_1 = arith.constant 0 : i32
    return %c0_i32, %c0_i32_0 : i32, i32
  }
  func.func @transform_12(%arg0: i32) -> (i32, i32) {
    %c0_i32 = arith.constant 0 : i32
    %c0_i32_0 = arith.constant 0 : i32
    %c0_i32_1 = arith.constant 0 : i32
    return %c0_i32, %c0_i32_0 : i32, i32
  }
  func.func @transform_13(%arg0: i32) -> (i32, i32) {
    %c0_i32 = arith.constant 0 : i32
    %c0_i32_0 = arith.constant 0 : i32
    %c0_i32_1 = arith.constant 0 : i32
    return %c0_i32, %c0_i32_0 : i32, i32
  }
  func.func @transform_14(%arg0: i32) -> (i32, i32) {
    %c0_i32 = arith.constant 0 : i32
    %c0_i32_0 = arith.constant 0 : i32
    %c0_i32_1 = arith.constant 0 : i32
    return %c0_i32, %c0_i32_0 : i32, i32
  }
  func.func @transform_15(%arg0: i32) -> (i32, i32) {
    %c0_i32 = arith.constant 0 : i32
    %c0_i32_0 = arith.constant 0 : i32
    return %arg0, %c0_i32 : i32, i32
  }
}

</mosaic_0001>

<llo_original>
// kernel: tpu_custom_call.1
$region0: #{tpu_custom_call.1}
  #allocation0 [shape = 'u32[]', space=smem, size = 0x4, offset = 0x4, fixed_abs, tag = 'smem constant byte address 0x4 - core index']
  #allocation1 [shape = 'u32[72,128]{1,0:T(1,128)}', space=vmem, size = 0x9000, scoped, tag = 'internal scratch']
  %s0 = inlined_call_operand.vmem [shape: f32[256,32], index: 0, kind: input, shape index: {}]
  %s1 = inlined_call_operand.vmem [shape: s32[256,2], index: 1, kind: input, shape index: {}]
  %s2 = inlined_call_operand.vmem [shape: s32[2,8,128], index: 2, kind: input, shape index: {}]
  %s3 = inlined_call_operand.vmem [shape: f32[128,8], index: 3, kind: input, shape index: {}]
  %s4 = inlined_call_operand.vmem [shape: s32[256,1], index: 4, kind: input, shape index: {}]
  %s5 = inlined_call_operand.vmem [shape: bf16[32,32], index: 5, kind: input, shape index: {}]
  %s6 = inlined_call_operand.vmem [shape: bf16[32,2], index: 6, kind: input, shape index: {}]
  %s7 = inlined_call_operand.vmem [shape: bf16[8,1], index: 7, kind: input, shape index: {}]
  %s8 = inlined_call_operand.vmem [shape: bf16[32,96], index: 8, kind: input, shape index: {}]
  %s9 = inlined_call_operand.vmem [shape: bf16[32,32], index: 9, kind: input, shape index: {}]
  %s10 = inlined_call_operand.vmem [shape: f32[8,32], index: 10, kind: input, shape index: {}]
  %s11 = inlined_call_operand.vmem [shape: bf16[32,64], index: 11, kind: input, shape index: {}]
  %s12 = inlined_call_operand.vmem [shape: f32[1,64], index: 12, kind: input, shape index: {}]
  %s13 = inlined_call_operand.vmem [shape: bf16[64,32], index: 13, kind: input, shape index: {}]
  %s14 = inlined_call_operand.vmem [shape: f32[1,32], index: 14, kind: input, shape index: {}]
  %s15 = inlined_call_operand.vmem [shape: f32[256,32], index: 15, kind: output, shape index: {}]
  %s16 = sld [smem:[#allocation0]]
  $region93: #{tpu_custom_call.1} parent=0
    _
  %s18 = ssub.s32 1, %s16
  %s19 = scalar_select 0, %s18, %s16
  loop: start=0, step=1, limit=4
  $region2: #{tpu_custom_call.1} parent=0 // loop_pre_header
    _
  $region3: #{tpu_custom_call.1} parent=0 // loop_header
    %s21 = sphi 0, %s25
    %p22 = scmp.ge.s32.totalorder %s21, 4
    %s31 = sphi 0, %s33
    %s34 = sphi 0, %s31
    %s35 = sphi 0, %s34
    %s51 = sphi 0, %s35
    %s57 = sphi 0, %s59
    %s60 = sphi 0, %s57
    %s61 = sphi 0, %s60
    %s77 = sphi 0, %s61
    %s83 = sphi 0, %s85
    %s86 = sphi 0, %s83
    %s87 = sphi 0, %s86
    %s103 = sphi 0, %s87
    %s109 = sphi 0, %s111
    %s112 = sphi 0, %s109
    %s113 = sphi 0, %s112
    %s129 = sphi 0, %s113
    %s135 = sphi 0, %s137
    %s138 = sphi 0, %s135
    %s139 = sphi 0, %s138
    %s155 = sphi 0, %s139
    %s159 = sphi 0, %s159
    %s161 = sphi 0, %s159
    %s162 = sphi 0, %s161
    %s176 = sphi 0, %s162
    %s180 = sphi 0, %s180
    %s182 = sphi 0, %s180
    %s183 = sphi 0, %s182
    %s197 = sphi 0, %s183
    %s201 = sphi 0, %s201
    %s203 = sphi 0, %s201
    %s204 = sphi 0, %s203
    %s218 = sphi 0, %s204
    %s222 = sphi 0, %s222
    %s224 = sphi 0, %s222
    %s225 = sphi 0, %s224
    %s239 = sphi 0, %s225
    %s243 = sphi 0, %s243
    %s245 = sphi 0, %s243
    %s246 = sphi 0, %s245
    %s260 = sphi 0, %s246
    %s264 = sphi 0, %s264
    %s266 = sphi 0, %s264
    %s267 = sphi 0, %s266
    %s281 = sphi 0, %s267
    %s285 = sphi 0, %s285
    %s287 = sphi 0, %s285
    %s288 = sphi 0, %s287
    %s302 = sphi 0, %s288
    %s306 = sphi 0, %s306
    %s308 = sphi 0, %s306
    %s309 = sphi 0, %s308
    %s323 = sphi 0, %s309
    %s327 = sphi 0, %s327
    %s329 = sphi 0, %s327
    %s330 = sphi 0, %s329
    %s344 = sphi 0, %s330
    %s348 = sphi 0, %s348
    %s350 = sphi 0, %s348
    %s351 = sphi 0, %s350
    %s365 = sphi 0, %s351
    %s371 = sphi 0, %s373
    %s374 = sphi 0, %s371
    %s375 = sphi 0, %s374
    %s391 = sphi 0, %s375
  $region4: #{tpu_custom_call.1} parent=0 // loop_header_branch
    %24 = sbr.rel (%p22) target = $region8
  $region5: #{tpu_custom_call.1} parent=0 // loop_body
    %s26 = ssub.s32 %s21, 1
    %s27 = ssub.s32 %s21, 2
    %s28 = sadd.s32 %s21, 1
    %s29 = ssub.s32 %s21, %s28
    %p30 = scmp.eq.s32.totalorder %s29, 0
    %s32 = sadd.s32 %s31, 1
    %s33 = scalar_select %p30, %s31, %s32
    %p36 = pneg %p30
    %p37 = scmp.eq.s32.totalorder %s21, 1
    %p38 = por %p36, %p37
    %p39 = scmp.ne.s32.totalorder %s31, %s34
    %p40 = scmp.eq.s32.totalorder %s21, 0
    %p41 = por %p39, %p40
    %p42 = scmp.ne.s32.totalorder %s31, %s34
    %p43 = scmp.eq.s32.totalorder %s26, 1
    %p44 = por %p42, %p43
    %p45 = scmp.ne.s32.totalorder %s34, %s35
    %p46 = scmp.eq.s32.totalorder %s26, 0
    %p47 = por %p45, %p46
    %p48 = scmp.ne.s32.totalorder %s34, %s35
    %p49 = scmp.eq.s32.totalorder %s27, 1
    %p50 = por %p48, %p49
    %p52 = scmp.ne.s32.totalorder %s35, %s51
    %p53 = scmp.eq.s32.totalorder %s27, 0
    %p54 = por %p52, %p53
    %s55 = ssub.s32 %s21, %s28
    %p56 = scmp.eq.s32.totalorder %s55, 0
    %s58 = sadd.s32 %s57, 1
    %s59 = scalar_select %p56, %s57, %s58
    %p62 = pneg %p56
    %p63 = scmp.eq.s32.totalorder %s21, 1
    %p64 = por %p62, %p63
    %p65 = scmp.ne.s32.totalorder %s57, %s60
    %p66 = scmp.eq.s32.totalorder %s21, 0
    %p67 = por %p65, %p66
    %p68 = scmp.ne.s32.totalorder %s57, %s60
    %p69 = scmp.eq.s32.totalorder %s26, 1
    %p70 = por %p68, %p69
    %p71 = scmp.ne.s32.totalorder %s60, %s61
    %p72 = scmp.eq.s32.totalorder %s26, 0
    %p73 = por %p71, %p72
    %p74 = scmp.ne.s32.totalorder %s60, %s61
    %p75 = scmp.eq.s32.totalorder %s27, 1
    %p76 = por %p74, %p75
    %p78 = scmp.ne.s32.totalorder %s61, %s77
    %p79 = scmp.eq.s32.totalorder %s27, 0
    %p80 = por %p78, %p79
    %s81 = ssub.s32 %s21, %s28
    %p82 = scmp.eq.s32.totalorder %s81, 0
    %s84 = sadd.s32 %s83, 1
    %s85 = scalar_select %p82, %s83, %s84
    %p88 = pneg %p82
    %p89 = scmp.eq.s32.totalorder %s21, 1
    %p90 = por %p88, %p89
    %p91 = scmp.ne.s32.totalorder %s83, %s86
    %p92 = scmp.eq.s32.totalorder %s21, 0
    %p93 = por %p91, %p92
    %p94 = scmp.ne.s32.totalorder %s83, %s86
    %p95 = scmp.eq.s32.totalorder %s26, 1
    %p96 = por %p94, %p95
    %p97 = scmp.ne.s32.totalorder %s86, %s87
    %p98 = scmp.eq.s32.totalorder %s26, 0
    %p99 = por %p97, %p98
    %p100 = scmp.ne.s32.totalorder %s86, %s87
    %p101 = scmp.eq.s32.totalorder %s27, 1
    %p102 = por %p100, %p101
    %p104 = scmp.ne.s32.totalorder %s87, %s103
    %p105 = scmp.eq.s32.totalorder %s27, 0
    %p106 = por %p104, %p105
    %s107 = ssub.s32 %s21, %s28
    %p108 = scmp.eq.s32.totalorder %s107, 0
    %s110 = sadd.s32 %s109, 1
    %s111 = scalar_select %p108, %s109, %s110
    %p114 = pneg %p108
    %p115 = scmp.eq.s32.totalorder %s21, 1
    %p116 = por %p114, %p115
    %p117 = scmp.ne.s32.totalorder %s109, %s112
    %p118 = scmp.eq.s32.totalorder %s21, 0
    %p119 = por %p117, %p118
    %p120 = scmp.ne.s32.totalorder %s109, %s112
    %p121 = scmp.eq.s32.totalorder %s26, 1
    %p122 = por %p120, %p121
    %p123 = scmp.ne.s32.totalorder %s112, %s113
    %p124 = scmp.eq.s32.totalorder %s26, 0
    %p125 = por %p123, %p124
    %p126 = scmp.ne.s32.totalorder %s112, %s113
    %p127 = scmp.eq.s32.totalorder %s27, 1
    %p128 = por %p126, %p127
    %p130 = scmp.ne.s32.totalorder %s113, %s129
    %p131 = scmp.eq.s32.totalorder %s27, 0
    %p132 = por %p130, %p131
    %s133 = ssub.s32 %s21, %s28
    %p134 = scmp.eq.s32.totalorder %s133, 0
    %s136 = sadd.s32 %s135, 1
    %s137 = scalar_select %p134, %s135, %s136
    %p140 = pneg %p134
    %p141 = scmp.eq.s32.totalorder %s21, 1
    %p142 = por %p140, %p141
    %p143 = scmp.ne.s32.totalorder %s135, %s138
    %p144 = scmp.eq.s32.totalorder %s21, 0
    %p145 = por %p143, %p144
    %p146 = scmp.ne.s32.totalorder %s135, %s138
    %p147 = scmp.eq.s32.totalorder %s26, 1
    %p148 = por %p146, %p147
    %p149 = scmp.ne.s32.totalorder %s138, %s139
    %p150 = scmp.eq.s32.totalorder %s26, 0
    %p151 = por %p149, %p150
    %p152 = scmp.ne.s32.totalorder %s138, %s139
    %p153 = scmp.eq.s32.totalorder %s27, 1
    %p154 = por %p152, %p153
    %p156 = scmp.ne.s32.totalorder %s139, %s155
    %p157 = scmp.eq.s32.totalorder %s27, 0
    %p158 = por %p156, %p157
    %s160 = sadd.s32 %s159, 1
    %p163 = scmp.eq.s32.totalorder %s21, 1
    %p164 = scmp.ne.s32.totalorder %s159, %s161
    %p165 = scmp.eq.s32.totalorder %s21, 0
    %p166 = por %p164, %p165
    %p167 = scmp.ne.s32.totalorder %s159, %s161
    %p168 = scmp.eq.s32.totalorder %s26, 1
    %p169 = por %p167, %p168
    %p170 = scmp.ne.s32.totalorder %s161, %s162
    %p171 = scmp.eq.s32.totalorder %s26, 0
    %p172 = por %p170, %p171
    %p173 = scmp.ne.s32.totalorder %s161, %s162
    %p174 = scmp.eq.s32.totalorder %s27, 1
    %p175 = por %p173, %p174
    %p177 = scmp.ne.s32.totalorder %s162, %s176
    %p178 = scmp.eq.s32.totalorder %s27, 0
    %p179 = por %p177, %p178
    %s181 = sadd.s32 %s180, 1
    %p184 = scmp.eq.s32.totalorder %s21, 1
    %p185 = scmp.ne.s32.totalorder %s180, %s182
    %p186 = scmp.eq.s32.totalorder %s21, 0
    %p187 = por %p185, %p186
    %p188 = scmp.ne.s32.totalorder %s180, %s182
    %p189 = scmp.eq.s32.totalorder %s26, 1
    %p190 = por %p188, %p189
    %p191 = scmp.ne.s32.totalorder %s182, %s183
    %p192 = scmp.eq.s32.totalorder %s26, 0
    %p193 = por %p191, %p192
    %p194 = scmp.ne.s32.totalorder %s182, %s183
    %p195 = scmp.eq.s32.totalorder %s27, 1
    %p196 = por %p194, %p195
    %p198 = scmp.ne.s32.totalorder %s183, %s197
    %p199 = scmp.eq.s32.totalorder %s27, 0
    %p200 = por %p198, %p199
    %s202 = sadd.s32 %s201, 1
    %p205 = scmp.eq.s32.totalorder %s21, 1
    %p206 = scmp.ne.s32.totalorder %s201, %s203
    %p207 = scmp.eq.s32.totalorder %s21, 0
    %p208 = por %p206, %p207
    %p209 = scmp.ne.s32.totalorder %s201, %s203
    %p210 = scmp.eq.s32.totalorder %s26, 1
    %p211 = por %p209, %p210
    %p212 = scmp.ne.s32.totalorder %s203, %s204
    %p213 = scmp.eq.s32.totalorder %s26, 0
    %p214 = por %p212, %p213
    %p215 = scmp.ne.s32.totalorder %s203, %s204
    %p216 = scmp.eq.s32.totalorder %s27, 1
    %p217 = por %p215, %p216
    %p219 = scmp.ne.s32.totalorder %s204, %s218
    %p220 = scmp.eq.s32.totalorder %s27, 0
    %p221 = por %p219, %p220
    %s223 = sadd.s32 %s222, 1
    %p226 = scmp.eq.s32.totalorder %s21, 1
    %p227 = scmp.ne.s32.totalorder %s222, %s224
    %p228 = scmp.eq.s32.totalorder %s21, 0
    %p229 = por %p227, %p228
    %p230 = scmp.ne.s32.totalorder %s222, %s224
    %p231 = scmp.eq.s32.totalorder %s26, 1
    %p232 = por %p230, %p231
    %p233 = scmp.ne.s32.totalorder %s224, %s225
    %p234 = scmp.eq.s32.totalorder %s26, 0
    %p235 = por %p233, %p234
    %p236 = scmp.ne.s32.totalorder %s224, %s225
    %p237 = scmp.eq.s32.totalorder %s27, 1
    %p238 = por %p236, %p237
    %p240 = scmp.ne.s32.totalorder %s225, %s239
    %p241 = scmp.eq.s32.totalorder %s27, 0
    %p242 = por %p240, %p241
    %s244 = sadd.s32 %s243, 1
    %p247 = scmp.eq.s32.totalorder %s21, 1
    %p248 = scmp.ne.s32.totalorder %s243, %s245
    %p249 = scmp.eq.s32.totalorder %s21, 0
    %p250 = por %p248, %p249
    %p251 = scmp.ne.s32.totalorder %s243, %s245
    %p252 = scmp.eq.s32.totalorder %s26, 1
    %p253 = por %p251, %p252
    %p254 = scmp.ne.s32.totalorder %s245, %s246
    %p255 = scmp.eq.s32.totalorder %s26, 0
    %p256 = por %p254, %p255
    %p257 = scmp.ne.s32.totalorder %s245, %s246
    %p258 = scmp.eq.s32.totalorder %s27, 1
    %p259 = por %p257, %p258
    %p261 = scmp.ne.s32.totalorder %s246, %s260
    %p262 = scmp.eq.s32.totalorder %s27, 0
    %p263 = por %p261, %p262
    %s265 = sadd.s32 %s264, 1
    %p268 = scmp.eq.s32.totalorder %s21, 1
    %p269 = scmp.ne.s32.totalorder %s264, %s266
    %p270 = scmp.eq.s32.totalorder %s21, 0
    %p271 = por %p269, %p270
    %p272 = scmp.ne.s32.totalorder %s264, %s266
    %p273 = scmp.eq.s32.totalorder %s26, 1
    %p274 = por %p272, %p273
    %p275 = scmp.ne.s32.totalorder %s266, %s267
    %p276 = scmp.eq.s32.totalorder %s26, 0
    %p277 = por %p275, %p276
    %p278 = scmp.ne.s32.totalorder %s266, %s267
    %p279 = scmp.eq.s32.totalorder %s27, 1
    %p280 = por %p278, %p279
    %p282 = scmp.ne.s32.totalorder %s267, %s281
    %p283 = scmp.eq.s32.totalorder %s27, 0
    %p284 = por %p282, %p283
    %s286 = sadd.s32 %s285, 1
    %p289 = scmp.eq.s32.totalorder %s21, 1
    %p290 = scmp.ne.s32.totalorder %s285, %s287
    %p291 = scmp.eq.s32.totalorder %s21, 0
    %p292 = por %p290, %p291
    %p293 = scmp.ne.s32.totalorder %s285, %s287
    %p294 = scmp.eq.s32.totalorder %s26, 1
    %p295 = por %p293, %p294
    %p296 = scmp.ne.s32.totalorder %s287, %s288
    %p297 = scmp.eq.s32.totalorder %s26, 0
    %p298 = por %p296, %p297
    %p299 = scmp.ne.s32.totalorder %s287, %s288
    %p300 = scmp.eq.s32.totalorder %s27, 1
    %p301 = por %p299, %p300
    %p303 = scmp.ne.s32.totalorder %s288, %s302
    %p304 = scmp.eq.s32.totalorder %s27, 0
    %p305 = por %p303, %p304
    %s307 = sadd.s32 %s306, 1
    %p310 = scmp.eq.s32.totalorder %s21, 1
    %p311 = scmp.ne.s32.totalorder %s306, %s308
    %p312 = scmp.eq.s32.totalorder %s21, 0
    %p313 = por %p311, %p312
    %p314 = scmp.ne.s32.totalorder %s306, %s308
    %p315 = scmp.eq.s32.totalorder %s26, 1
    %p316 = por %p314, %p315
    %p317 = scmp.ne.s32.totalorder %s308, %s309
    %p318 = scmp.eq.s32.totalorder %s26, 0
    %p319 = por %p317, %p318
    %p320 = scmp.ne.s32.totalorder %s308, %s309
    %p321 = scmp.eq.s32.totalorder %s27, 1
    %p322 = por %p320, %p321
    %p324 = scmp.ne.s32.totalorder %s309, %s323
    %p325 = scmp.eq.s32.totalorder %s27, 0
    %p326 = por %p324, %p325
    %s328 = sadd.s32 %s327, 1
    %p331 = scmp.eq.s32.totalorder %s21, 1
    %p332 = scmp.ne.s32.totalorder %s327, %s329
    %p333 = scmp.eq.s32.totalorder %s21, 0
    %p334 = por %p332, %p333
    %p335 = scmp.ne.s32.totalorder %s327, %s329
    %p336 = scmp.eq.s32.totalorder %s26, 1
    %p337 = por %p335, %p336
    %p338 = scmp.ne.s32.totalorder %s329, %s330
    %p339 = scmp.eq.s32.totalorder %s26, 0
    %p340 = por %p338, %p339
    %p341 = scmp.ne.s32.totalorder %s329, %s330
    %p342 = scmp.eq.s32.totalorder %s27, 1
    %p343 = por %p341, %p342
    %p345 = scmp.ne.s32.totalorder %s330, %s344
    %p346 = scmp.eq.s32.totalorder %s27, 0
    %p347 = por %p345, %p346
    %s349 = sadd.s32 %s348, 1
    %p352 = scmp.eq.s32.totalorder %s21, 1
    %p353 = scmp.ne.s32.totalorder %s348, %s350
    %p354 = scmp.eq.s32.totalorder %s21, 0
    %p355 = por %p353, %p354
    %p356 = scmp.ne.s32.totalorder %s348, %s350
    %p357 = scmp.eq.s32.totalorder %s26, 1
    %p358 = por %p356, %p357
    %p359 = scmp.ne.s32.totalorder %s350, %s351
    %p360 = scmp.eq.s32.totalorder %s26, 0
    %p361 = por %p359, %p360
    %p362 = scmp.ne.s32.totalorder %s350, %s351
    %p363 = scmp.eq.s32.totalorder %s27, 1
    %p364 = por %p362, %p363
    %p366 = scmp.ne.s32.totalorder %s351, %s365
    %p367 = scmp.eq.s32.totalorder %s27, 0
    %p368 = por %p366, %p367
    %s369 = ssub.s32 %s21, %s28
    %p370 = scmp.eq.s32.totalorder %s369, 0
    %s372 = sadd.s32 %s371, 1
    %s373 = scalar_select %p370, %s371, %s372
    %p376 = pneg %p370
    %p377 = scmp.eq.s32.totalorder %s21, 1
    %p378 = por %p376, %p377
    %p379 = scmp.ne.s32.totalorder %s371, %s374
    %p380 = scmp.eq.s32.totalorder %s21, 0
    %p381 = por %p379, %p380
    %p382 = scmp.ne.s32.totalorder %s371, %s374
    %p383 = scmp.eq.s32.totalorder %s26, 1
    %p384 = por %p382, %p383
    %p385 = scmp.ne.s32.totalorder %s374, %s375
    %p386 = scmp.eq.s32.totalorder %s26, 0
    %p387 = por %p385, %p386
    %p388 = scmp.ne.s32.totalorder %s374, %s375
    %p389 = scmp.eq.s32.totalorder %s27, 1
    %p390 = por %p388, %p389
    %p392 = scmp.ne.s32.totalorder %s375, %s391
    %p393 = scmp.eq.s32.totalorder %s27, 0
    %p394 = por %p392, %p393
    %p395 = scmp.le.s32.totalorder 1, %s21
    %p396 = scmp.lt.s32.totalorder %s21, 3
    %p397 = pnand %p395, %p396
    %p398 = pneg %p397
    // Predicated region
    $region9: #{tpu_custom_call.1} parent=5 // pred_check
      _
    $region10: #{tpu_custom_call.1} parent=5 // pred_check_branch
      %400 = sbr.rel (%p397) target = $region12
    $region11: #{tpu_custom_call.1} parent=5 // pred_region
      %s401 = ssub.s32 %s21, 1
      // Predicated region
      $region13: #{tpu_custom_call.1} parent=11 // pred_check
        %p402 = pneg %p172
      $region14: #{tpu_custom_call.1} parent=11 // pred_check_branch
        %404 = sbr.rel (%p402) target = $region16
      $region15: #{tpu_custom_call.1} parent=11 // pred_region
        _
      $region16: #{tpu_custom_call.1} parent=11 // pred_fallthru
        _
      // Predicated region
      $region17: #{tpu_custom_call.1} parent=11 // pred_check
        %p405 = pneg %p193
      $region18: #{tpu_custom_call.1} parent=11 // pred_check_branch
        %407 = sbr.rel (%p405) target = $region20
      $region19: #{tpu_custom_call.1} parent=11 // pred_region
        _
      $region20: #{tpu_custom_call.1} parent=11 // pred_fallthru
        _
      // Predicated region
      $region21: #{tpu_custom_call.1} parent=11 // pred_check
        %p408 = pneg %p214
      $region22: #{tpu_custom_call.1} parent=11 // pred_check_branch
        %410 = sbr.rel (%p408) target = $region24
      $region23: #{tpu_custom_call.1} parent=11 // pred_region
        _
      $region24: #{tpu_custom_call.1} parent=11 // pred_fallthru
        _
      // Predicated region
      $region25: #{tpu_custom_call.1} parent=11 // pred_check
        %p411 = pneg %p235
      $region26: #{tpu_custom_call.1} parent=11 // pred_check_branch
        %413 = sbr.rel (%p411) target = $region28
      $region27: #{tpu_custom_call.1} parent=11 // pred_region
        _
      $region28: #{tpu_custom_call.1} parent=11 // pred_fallthru
        _
      // Predicated region
      $region29: #{tpu_custom_call.1} parent=11 // pred_check
        %p414 = pneg %p256
      $region30: #{tpu_custom_call.1} parent=11 // pred_check_branch
        %416 = sbr.rel (%p414) target = $region32
      $region31: #{tpu_custom_call.1} parent=11 // pred_region
        _
      $region32: #{tpu_custom_call.1} parent=11 // pred_fallthru
        _
      // Predicated region
      $region33: #{tpu_custom_call.1} parent=11 // pred_check
        %p417 = pneg %p277
      $region34: #{tpu_custom_call.1} parent=11 // pred_check_branch
        %419 = sbr.rel (%p417) target = $region36
      $region35: #{tpu_custom_call.1} parent=11 // pred_region
        _
      $region36: #{tpu_custom_call.1} parent=11 // pred_fallthru
        _
      // Predicated region
      $region37: #{tpu_custom_call.1} parent=11 // pred_check
        %p420 = pneg %p298
      $region38: #{tpu_custom_call.1} parent=11 // pred_check_branch
        %422 = sbr.rel (%p420) target = $region40
      $region39: #{tpu_custom_call.1} parent=11 // pred_region
        _
      $region40: #{tpu_custom_call.1} parent=11 // pred_fallthru
        _
      // Predicated region
      $region41: #{tpu_custom_call.1} parent=11 // pred_check
        %p423 = pneg %p319
      $region42: #{tpu_custom_call.1} parent=11 // pred_check_branch
        %425 = sbr.rel (%p423) target = $region44
      $region43: #{tpu_custom_call.1} parent=11 // pred_region
        _
      $region44: #{tpu_custom_call.1} parent=11 // pred_fallthru
        _
      // Predicated region
      $region45: #{tpu_custom_call.1} parent=11 // pred_check
        %p426 = pneg %p340
      $region46: #{tpu_custom_call.1} parent=11 // pred_check_branch
        %428 = sbr.rel (%p426) target = $region48
      $region47: #{tpu_custom_call.1} parent=11 // pred_region
        _
      $region48: #{tpu_custom_call.1} parent=11 // pred_fallthru
        _
      // Predicated region
      $region49: #{tpu_custom_call.1} parent=11 // pred_check
        %p429 = pneg %p361
      $region50: #{tpu_custom_call.1} parent=11 // pred_check_branch
        %431 = sbr.rel (%p429) target = $region52
      $region51: #{tpu_custom_call.1} parent=11 // pred_region
        _
      $region52: #{tpu_custom_call.1} parent=11 // pred_fallthru
        _
    $region12: #{tpu_custom_call.1} parent=5 // pred_fallthru
      _
    %p432 = scmp.lt.s32.totalorder %s21, 2
    // Predicated region
    $region53: #{tpu_custom_call.1} parent=5 // pred_check
      %p433 = pneg %p432
    $region54: #{tpu_custom_call.1} parent=5 // pred_check_branch
      %435 = sbr.rel (%p433) target = $region56
    $region55: #{tpu_custom_call.1} parent=5 // pred_region
      // Predicated region
      $region57: #{tpu_custom_call.1} parent=55 // pred_check
        %p436 = pneg %p41
      $region58: #{tpu_custom_call.1} parent=55 // pred_check_branch
        %438 = sbr.rel (%p436) target = $region60
      $region59: #{tpu_custom_call.1} parent=55 // pred_region
        %s439 = smul.u32 16, %s21
        %p440 = scmp.lt.s32.totalorder %s439, 31
        %s441 = scalar_select %p440, %s439, 31
        %s442 = smul.addr %s441, 8
        %s443 = scalar_lea.vmem %s0, %s442
        %s444 = smul.u32 16, %s21
      $region60: #{tpu_custom_call.1} parent=55 // pred_fallthru
        _
      // Predicated region
      $region61: #{tpu_custom_call.1} parent=55 // pred_check
        %p445 = pneg %p67
      $region62: #{tpu_custom_call.1} parent=55 // pred_check_branch
        %447 = sbr.rel (%p445) target = $region64
      $region63: #{tpu_custom_call.1} parent=55 // pred_region
        %s448 = smul.u32 16, %s21
        %p449 = scmp.lt.s32.totalorder %s448, 31
        %s450 = scalar_select %p449, %s448, 31
        %s451 = smul.addr %s450, 8
        %s452 = scalar_lea.vmem %s1, %s451
        %s453 = smul.u32 16, %s21
      $region64: #{tpu_custom_call.1} parent=55 // pred_fallthru
        _
      // Predicated region
      $region65: #{tpu_custom_call.1} parent=55 // pred_check
        %p454 = pneg %p93
      $region66: #{tpu_custom_call.1} parent=55 // pred_check_branch
        %456 = sbr.rel (%p454) target = $region68
      $region67: #{tpu_custom_call.1} parent=55 // pred_region
        %p457 = scmp.lt.s32.totalorder %s21, 1
        %s458 = scalar_select %p457, %s21, 1
        %s459 = smul.addr %s458, 8
        %s460 = scalar_lea.vmem %s2, %s459
      $region68: #{tpu_custom_call.1} parent=55 // pred_fallthru
        _
      // Predicated region
      $region69: #{tpu_custom_call.1} parent=55 // pred_check
        %p461 = pneg %p119
      $region70: #{tpu_custom_call.1} parent=55 // pred_check_branch
        %463 = sbr.rel (%p461) target = $region72
      $region71: #{tpu_custom_call.1} parent=55 // pred_region
        %s464 = smul.u32 8, %s21
        %p465 = scmp.lt.s32.totalorder %s464, 15
        %s466 = scalar_select %p465, %s464, 15
        %s467 = smul.addr %s466, 8
        %s468 = scalar_lea.vmem %s3, %s467
        %s469 = smul.u32 8, %s21
      $region72: #{tpu_custom_call.1} parent=55 // pred_fallthru
        _
      // Predicated region
      $region73: #{tpu_custom_call.1} parent=55 // pred_check
        %p470 = pneg %p145
      $region74: #{tpu_custom_call.1} parent=55 // pred_check_branch
        %472 = sbr.rel (%p470) target = $region76
      $region75: #{tpu_custom_call.1} parent=55 // pred_region
        %s473 = smul.u32 16, %s21
        %p474 = scmp.lt.s32.totalorder %s473, 31
        %s475 = scalar_select %p474, %s473, 31
        %s476 = smul.addr %s475, 8
        %s477 = scalar_lea.vmem %s4, %s476
        %s478 = smul.u32 16, %s21
      $region76: #{tpu_custom_call.1} parent=55 // pred_fallthru
        _
    $region56: #{tpu_custom_call.1} parent=5 // pred_fallthru
      _
    %p479 = scmp.le.s32.totalorder 1, %s21
    %p480 = scmp.lt.s32.totalorder %s21, 3
    %p481 = pnand %p479, %p480
    %p482 = pneg %p481
    // Predicated region
    $region77: #{tpu_custom_call.1} parent=5 // pred_check
      _
    $region78: #{tpu_custom_call.1} parent=5 // pred_check_branch
      %484 = sbr.rel (%p481) target = $region80
    $region79: #{tpu_custom_call.1} parent=5 // pred_region
      %s485 = ssub.s32 %s21, 1
      %s486 = smul.u32 16, %s26
      %p487 = scmp.lt.s32.totalorder %s486, 31
      %s488 = scalar_select %p487, %s486, 31
      %s489 = smul.addr %s488, 8
      %s490 = scalar_lea.vmem %s0, %s489
      %p491 = pneg %p47
      %p492 = pneg %p44
      %s493 = smul.u32 16, %s26
      %p494 = scmp.lt.s32.totalorder %s493, 31
      %s495 = scalar_select %p494, %s493, 31
      %s496 = smul.addr %s495, 8
      %s497 = scalar_lea.vmem %s1, %s496
      %p498 = pneg %p73
      %p499 = pneg %p70
      %p500 = scmp.lt.s32.totalorder %s26, 1
      %s501 = scalar_select %p500, %s26, 1
      %s502 = smul.addr %s501, 8
      %s503 = scalar_lea.vmem %s2, %s502
      %p504 = pneg %p99
      %p505 = pneg %p96
      %s506 = smul.u32 8, %s26
      %p507 = scmp.lt.s32.totalorder %s506, 15
      %s508 = scalar_select %p507, %s506, 15
      %s509 = smul.addr %s508, 8
      %s510 = scalar_lea.vmem %s3, %s509
      %p511 = pneg %p125
      %p512 = pneg %p122
      %s513 = smul.u32 16, %s26
      %p514 = scmp.lt.s32.totalorder %s513, 31
      %s515 = scalar_select %p514, %s513, 31
      %s516 = smul.addr %s515, 8
      %s517 = scalar_lea.vmem %s4, %s516
      %p518 = pneg %p151
      %p519 = pneg %p148
      %p520 = pneg %p172
      %p521 = pneg %p169
      %p522 = pneg %p193
      %p523 = pneg %p190
      %p524 = pneg %p214
      %p525 = pneg %p211
      %p526 = pneg %p235
      %p527 = pneg %p232
      %p528 = pneg %p256
      %p529 = pneg %p253
      %p530 = pneg %p277
      %p531 = pneg %p274
      %p532 = pneg %p298
      %p533 = pneg %p295
      %p534 = pneg %p319
      %p535 = pneg %p316
      %p536 = pneg %p340
      %p537 = pneg %p337
      %p538 = pneg %p361
      %p539 = pneg %p358
      %p540 = pneg %p387
      %p541 = pneg %p384
      %s542 = smul.u32 16, %s26
      %p543 = scmp.lt.s32.totalorder %s542, 31
      %s544 = scalar_select %p543, %s542, 31
      %s545 = smul.addr %s544, 8
      %s546 = scalar_lea.vmem %s15, %s545
      %s547 = smul.u32 16, %s26
      %p548 = scmp.lt.s32.totalorder %s547, 31
      %s549 = scalar_select %p548, %s547, 31
      %s550 = smul.addr %s549, 8
      %s551 = scalar_lea.vmem %s0, %s550
      %s552 = smul.u32 16, %s26
      %s553 = smul.u32 16, %s26
      %p554 = scmp.lt.s32.totalorder %s553, 31
      %s555 = scalar_select %p554, %s553, 31
      %s556 = smul.addr %s555, 8
      %s557 = scalar_lea.vmem %s1, %s556
      %s558 = smul.u32 16, %s26
      %p559 = scmp.lt.s32.totalorder %s26, 1
      %s560 = scalar_select %p559, %s26, 1
      %s561 = smul.addr %s560, 8
      %s562 = scalar_lea.vmem %s2, %s561
      %s563 = smul.u32 8, %s26
      %p564 = scmp.lt.s32.totalorder %s563, 15
      %s565 = scalar_select %p564, %s563, 15
      %s566 = smul.addr %s565, 8
      %s567 = scalar_lea.vmem %s3, %s566
      %s568 = smul.u32 8, %s26
      %s569 = smul.u32 16, %s26
      %p570 = scmp.lt.s32.totalorder %s569, 31
      %s571 = scalar_select %p570, %s569, 31
      %s572 = smul.addr %s571, 8
      %s573 = scalar_lea.vmem %s4, %s572
      %s574 = smul.u32 16, %s26
      %s575 = smul.u32 16, %s26
      %p576 = scmp.lt.s32.totalorder %s575, 31
      %s577 = scalar_select %p576, %s575, 31
      %s578 = smul.addr %s577, 8
      %s579 = scalar_lea.vmem %s15, %s578
      %s580 = smul.u32 16, %s26
      %v582 = vld [vmem:[%s551] sm:$0xff]
      %v583 = vld [vmem:[%s551 + $0x8] sm:$0xff]
      %v584 = vld [vmem:[%s551 + $0x10] sm:$0xff]
      %v585 = vld [vmem:[%s551 + $0x18] sm:$0xff]
      %v586 = vld [vmem:[%s551 + $0x20] sm:$0xff]
      %v587 = vld [vmem:[%s551 + $0x28] sm:$0xff]
      %v588 = vld [vmem:[%s551 + $0x30] sm:$0xff]
      %v589 = vld [vmem:[%s551 + $0x38] sm:$0xff]
      %v590 = vld [vmem:[%s551 + $0x40] sm:$0xff]
      %v591 = vld [vmem:[%s551 + $0x48] sm:$0xff]
      %v592 = vld [vmem:[%s551 + $0x50] sm:$0xff]
      %v593 = vld [vmem:[%s551 + $0x58] sm:$0xff]
      %v594 = vld [vmem:[%s551 + $0x60] sm:$0xff]
      %v595 = vld [vmem:[%s551 + $0x68] sm:$0xff]
      %v596 = vld [vmem:[%s551 + $0x70] sm:$0xff]
      %v597 = vld [vmem:[%s551 + $0x78] sm:$0xff]
      %v598 = vpack.c.bf16 %v583, %v582
      %v599 = vpack.c.bf16 %v585, %v584
      %v600 = vpack.c.bf16 %v587, %v586
      %v601 = vpack.c.bf16 %v589, %v588
      %v602 = vpack.c.bf16 %v591, %v590
      %v603 = vpack.c.bf16 %v593, %v592
      %v604 = vpack.c.bf16 %v595, %v594
      %v605 = vpack.c.bf16 %v597, %v596
      %v606 = vld [vmem:[%s5] sm:$0xf]
      %v607 = vld [vmem:[%s5 + $0x4] sm:$0xf]
      %v608 = vld [vmem:[%s5 + $0x8] sm:$0xf]
      %v609 = vld [vmem:[%s5 + $0xc] sm:$0xf]
      %v614 = vunpack.c.l.b16 %v606
      %v615 = vunpack.c.l.b16 %v607
      %v616 = vunpack.c.l.b16 %v608
      %v617 = vunpack.c.l.b16 %v609
      %v618 = vpack.c.b16 %v615, %v614
      %v619 = vpack.c.b16 %v617, %v616
      %vm622 = vcmask 261120
      %v624 = vsel %vm622, %v598, 0
      %v627 = vsel %vm622, %v599, 0
      %v630 = vsel %vm622, %v600, 0
      %v633 = vsel %vm622, %v601, 0
      %v636 = vsel %vm622, %v602, 0
      %v639 = vsel %vm622, %v603, 0
      %v642 = vsel %vm622, %v604, 0
      %v645 = vsel %vm622, %v605, 0
      %647 = vmatpush.bf16.msra.mxu0 0
      %648 = vmatpush.bf16.msra.mxu0 0
      %649 = vmatpush.bf16.msra.mxu0 0
      %650 = vmatpush.bf16.msra.mxu0 0
      %651 = vmatpush.bf16.msra.mxu0 0
      %652 = vmatpush.bf16.msra.mxu0 0
      %653 = vmatpush.bf16.msra.mxu0 %v619
      %654 = vmatpush.bf16.msra.mxu0 %v618
      %655 = vmatmul.bf16.gmra.mxu0 %v624
      %v656 = vpop.f32.mrf.mxu0
      %v657 = vadd.f32 0.0, %v656
      %v658 = vpop.f32.mrf.mxu0
      %v659 = vadd.f32 0.0, %v658
      %660 = vmatmul.bf16.gmra.mxu0 %v627
      %v661 = vpop.f32.mrf.mxu0
      %v662 = vadd.f32 0.0, %v661
      %v663 = vpop.f32.mrf.mxu0
      %v664 = vadd.f32 0.0, %v663
      %665 = vmatmul.bf16.gmra.mxu0 %v630
      %v666 = vpop.f32.mrf.mxu0
      %v667 = vadd.f32 0.0, %v666
      %v668 = vpop.f32.mrf.mxu0
      %v669 = vadd.f32 0.0, %v668
      %670 = vmatmul.bf16.gmra.mxu0 %v633
      %v671 = vpop.f32.mrf.mxu0
      %v672 = vadd.f32 0.0, %v671
      %v673 = vpop.f32.mrf.mxu0
      %v674 = vadd.f32 0.0, %v673
      %675 = vmatmul.bf16.gmra.mxu0 %v636
      %v676 = vpop.f32.mrf.mxu0
      %v677 = vadd.f32 0.0, %v676
      %v678 = vpop.f32.mrf.mxu0
      %v679 = vadd.f32 0.0, %v678
      %680 = vmatmul.bf16.gmra.mxu0 %v639
      %v681 = vpop.f32.mrf.mxu0
      %v682 = vadd.f32 0.0, %v681
      %v683 = vpop.f32.mrf.mxu0
      %v684 = vadd.f32 0.0, %v683
      %685 = vmatmul.bf16.gmra.mxu0 %v642
      %v686 = vpop.f32.mrf.mxu0
      %v687 = vadd.f32 0.0, %v686
      %v688 = vpop.f32.mrf.mxu0
      %v689 = vadd.f32 0.0, %v688
      %690 = vmatmul.bf16.gmra.mxu0 %v645
      %v691 = vpop.f32.mrf.mxu0
      %v692 = vadd.f32 0.0, %v691
      %v693 = vpop.f32.mrf.mxu0
      %v694 = vadd.f32 0.0, %v693
      %695 = vdwg.mxu0
      %v696 = vpack.c.bf16 %v659, %v657
      %v697 = vpack.c.bf16 %v664, %v662
      %v698 = vpack.c.bf16 %v669, %v667
      %v699 = vpack.c.bf16 %v674, %v672
      %v700 = vpack.c.bf16 %v679, %v677
      %v701 = vpack.c.bf16 %v684, %v682
      %v702 = vpack.c.bf16 %v689, %v687
      %v703 = vpack.c.bf16 %v694, %v692
      %v704 = vld [vmem:[%s557] sm:$0xff]
      %v705 = vld [vmem:[%s557 + $0x8] sm:$0xff]
      %v706 = vld [vmem:[%s557 + $0x10] sm:$0xff]
      %v707 = vld [vmem:[%s557 + $0x18] sm:$0xff]
      %v708 = vld [vmem:[%s557 + $0x20] sm:$0xff]
      %v709 = vld [vmem:[%s557 + $0x28] sm:$0xff]
      %v710 = vld [vmem:[%s557 + $0x30] sm:$0xff]
      %v711 = vld [vmem:[%s557 + $0x38] sm:$0xff]
      %v712 = vld [vmem:[%s557 + $0x40] sm:$0xff]
      %v713 = vld [vmem:[%s557 + $0x48] sm:$0xff]
      %v714 = vld [vmem:[%s557 + $0x50] sm:$0xff]
      %v715 = vld [vmem:[%s557 + $0x58] sm:$0xff]
      %v716 = vld [vmem:[%s557 + $0x60] sm:$0xff]
      %v717 = vld [vmem:[%s557 + $0x68] sm:$0xff]
      %v718 = vld [vmem:[%s557 + $0x70] sm:$0xff]
      %v719 = vld [vmem:[%s557 + $0x78] sm:$0xff]
      %v720 = vlaneseq
      %v721 = vand.u32 %v720, 127
      %722 = vset.pattern.permute.xlu0 0
      %723 = vperm.xlu0 %722, %v704
      %v724 = vpop.permute.xlu0 %723
      %725 = vset.pattern.permute.xlu0 0
      %726 = vperm.xlu0 %725, %v705
      %v727 = vpop.permute.xlu0 %726
      %728 = vset.pattern.permute.xlu0 0
      %729 = vperm.xlu0 %728, %v706
      %v730 = vpop.permute.xlu0 %729
      %731 = vset.pattern.permute.xlu0 0
      %732 = vperm.xlu0 %731, %v707
      %v733 = vpop.permute.xlu0 %732
      %734 = vset.pattern.permute.xlu0 0
      %735 = vperm.xlu0 %734, %v708
      %v736 = vpop.permute.xlu0 %735
      %737 = vset.pattern.permute.xlu0 0
      %738 = vperm.xlu0 %737, %v709
      %v739 = vpop.permute.xlu0 %738
      %740 = vset.pattern.permute.xlu0 0
      %741 = vperm.xlu0 %740, %v710
      %v742 = vpop.permute.xlu0 %741
      %743 = vset.pattern.permute.xlu0 0
      %744 = vperm.xlu0 %743, %v711
      %v745 = vpop.permute.xlu0 %744
      %746 = vset.pattern.permute.xlu0 0
      %747 = vperm.xlu0 %746, %v712
      %v748 = vpop.permute.xlu0 %747
      %749 = vset.pattern.permute.xlu0 0
      %750 = vperm.xlu0 %749, %v713
      %v751 = vpop.permute.xlu0 %750
      %752 = vset.pattern.permute.xlu0 0
      %753 = vperm.xlu0 %752, %v714
      %v754 = vpop.permute.xlu0 %753
      %755 = vset.pattern.permute.xlu0 0
      %756 = vperm.xlu0 %755, %v715
      %v757 = vpop.permute.xlu0 %756
      %758 = vset.pattern.permute.xlu0 0
      %759 = vperm.xlu0 %758, %v716
      %v760 = vpop.permute.xlu0 %759
      %761 = vset.pattern.permute.xlu0 0
      %762 = vperm.xlu0 %761, %v717
      %v763 = vpop.permute.xlu0 %762
      %764 = vset.pattern.permute.xlu0 0
      %765 = vperm.xlu0 %764, %v718
      %v766 = vpop.permute.xlu0 %765
      %767 = vset.pattern.permute.xlu0 0
      %768 = vperm.xlu0 %767, %v719
      %v769 = vpop.permute.xlu0 %768
      %vm770 = vcmp.eq.s32.totalorder %v721, %v724
      %vm771 = vcmp.eq.s32.totalorder %v721, %v727
      %vm772 = vcmp.eq.s32.totalorder %v721, %v730
      %vm773 = vcmp.eq.s32.totalorder %v721, %v733
      %vm774 = vcmp.eq.s32.totalorder %v721, %v736
      %vm775 = vcmp.eq.s32.totalorder %v721, %v739
      %vm776 = vcmp.eq.s32.totalorder %v721, %v742
      %vm777 = vcmp.eq.s32.totalorder %v721, %v745
      %vm778 = vcmp.eq.s32.totalorder %v721, %v748
      %vm779 = vcmp.eq.s32.totalorder %v721, %v751
      %vm780 = vcmp.eq.s32.totalorder %v721, %v754
      %vm781 = vcmp.eq.s32.totalorder %v721, %v757
      %vm782 = vcmp.eq.s32.totalorder %v721, %v760
      %vm783 = vcmp.eq.s32.totalorder %v721, %v763
      %vm784 = vcmp.eq.s32.totalorder %v721, %v766
      %vm785 = vcmp.eq.s32.totalorder %v721, %v769
      %v786 = vsel %vm770, 1, 0
      %v787 = vsel %vm771, 1, 0
      %v788 = vsel %vm772, 1, 0
      %v789 = vsel %vm773, 1, 0
      %v790 = vsel %vm774, 1, 0
      %v791 = vsel %vm775, 1, 0
      %v792 = vsel %vm776, 1, 0
      %v793 = vsel %vm777, 1, 0
      %v794 = vsel %vm778, 1, 0
      %v795 = vsel %vm779, 1, 0
      %v796 = vsel %vm780, 1, 0
      %v797 = vsel %vm781, 1, 0
      %v798 = vsel %vm782, 1, 0
      %v799 = vsel %vm783, 1, 0
      %v800 = vsel %vm784, 1, 0
      %v801 = vsel %vm785, 1, 0
      %v802 = vcvt.s32.f32 %v786
      %v803 = vcvt.s32.f32 %v787
      %v804 = vcvt.s32.f32 %v788
      %v805 = vcvt.s32.f32 %v789
      %v806 = vcvt.s32.f32 %v790
      %v807 = vcvt.s32.f32 %v791
      %v808 = vcvt.s32.f32 %v792
      %v809 = vcvt.s32.f32 %v793
      %v810 = vcvt.s32.f32 %v794
      %v811 = vcvt.s32.f32 %v795
      %v812 = vcvt.s32.f32 %v796
      %v813 = vcvt.s32.f32 %v797
      %v814 = vcvt.s32.f32 %v798
      %v815 = vcvt.s32.f32 %v799
      %v816 = vcvt.s32.f32 %v800
      %v817 = vcvt.s32.f32 %v801
      %v818 = vpack.c.bf16 %v803, %v802
      %v819 = vpack.c.bf16 %v805, %v804
      %v820 = vpack.c.bf16 %v807, %v806
      %v821 = vpack.c.bf16 %v809, %v808
      %v822 = vpack.c.bf16 %v811, %v810
      %v823 = vpack.c.bf16 %v813, %v812
      %v824 = vpack.c.bf16 %v815, %v814
      %v825 = vpack.c.bf16 %v817, %v816
      %826 = vmatpush.bf16.msra.mxu0 %v703
      %827 = vmatpush.bf16.msra.mxu0 %v702
      %828 = vmatpush.bf16.msra.mxu0 %v701
      %829 = vmatpush.bf16.msra.mxu0 %v700
      %830 = vmatpush.bf16.msra.mxu0 %v699
      %831 = vmatpush.bf16.msra.mxu0 %v698
      %832 = vmatpush.bf16.msra.mxu0 %v697
      %833 = vmatpush.bf16.msra.mxu0 %v696
      %834 = vmatmul.bf16.gmra.mxu0 %v818
      %v835 = vpop.f32.mrf.mxu0
      %v836 = vadd.f32 0.0, %v835
      %v837 = vpop.f32.mrf.mxu0
      %v838 = vadd.f32 0.0, %v837
      %839 = vmatmul.bf16.gmra.mxu0 %v819
      %v840 = vpop.f32.mrf.mxu0
      %v841 = vadd.f32 0.0, %v840
      %v842 = vpop.f32.mrf.mxu0
      %v843 = vadd.f32 0.0, %v842
      %844 = vmatmul.bf16.gmra.mxu0 %v820
      %v845 = vpop.f32.mrf.mxu0
      %v846 = vadd.f32 0.0, %v845
      %v847 = vpop.f32.mrf.mxu0
      %v848 = vadd.f32 0.0, %v847
      %849 = vmatmul.bf16.gmra.mxu0 %v821
      %v850 = vpop.f32.mrf.mxu0
      %v851 = vadd.f32 0.0, %v850
      %v852 = vpop.f32.mrf.mxu0
      %v853 = vadd.f32 0.0, %v852
      %854 = vmatmul.bf16.gmra.mxu0 %v822
      %v855 = vpop.f32.mrf.mxu0
      %v856 = vadd.f32 0.0, %v855
      %v857 = vpop.f32.mrf.mxu0
      %v858 = vadd.f32 0.0, %v857
      %859 = vmatmul.bf16.gmra.mxu0 %v823
      %v860 = vpop.f32.mrf.mxu0
      %v861 = vadd.f32 0.0, %v860
      %v862 = vpop.f32.mrf.mxu0
      %v863 = vadd.f32 0.0, %v862
      %864 = vmatmul.bf16.gmra.mxu0 %v824
      %v865 = vpop.f32.mrf.mxu0
      %v866 = vadd.f32 0.0, %v865
      %v867 = vpop.f32.mrf.mxu0
      %v868 = vadd.f32 0.0, %v867
      %869 = vmatmul.bf16.gmra.mxu0 %v825
      %v870 = vpop.f32.mrf.mxu0
      %v871 = vadd.f32 0.0, %v870
      %v872 = vpop.f32.mrf.mxu0
      %v873 = vadd.f32 0.0, %v872
      %874 = vdwg.mxu0
      %v875 = vpack.c.bf16 %v838, %v836
      %v876 = vpack.c.bf16 %v843, %v841
      %v877 = vpack.c.bf16 %v848, %v846
      %v878 = vpack.c.bf16 %v853, %v851
      %v879 = vpack.c.bf16 %v858, %v856
      %v880 = vpack.c.bf16 %v863, %v861
      %v881 = vpack.c.bf16 %v868, %v866
      %v882 = vpack.c.bf16 %v873, %v871
      %v883 = vld [vmem:[%s6] sm:$0xf]
      %v884 = vld [vmem:[%s6 + $0x4] sm:$0xf]
      %v885 = vld [vmem:[%s6 + $0x8] sm:$0xf]
      %v886 = vld [vmem:[%s6 + $0xc] sm:$0xf]
      %v891 = vunpack.c.l.b16 %v883
      %v892 = vunpack.c.l.b16 %v884
      %v893 = vunpack.c.l.b16 %v885
      %v894 = vunpack.c.l.b16 %v886
      %v895 = vpack.c.b16 %v892, %v891
      %v896 = vpack.c.b16 %v894, %v893
      %v900 = vsel %vm622, %v875, 0
      %v903 = vsel %vm622, %v876, 0
      %v906 = vsel %vm622, %v877, 0
      %v909 = vsel %vm622, %v878, 0
      %v912 = vsel %vm622, %v879, 0
      %v915 = vsel %vm622, %v880, 0
      %v918 = vsel %vm622, %v881, 0
      %v921 = vsel %vm622, %v882, 0
      %923 = vmatpush.bf16.msra.mxu0 0
      %924 = vmatpush.bf16.msra.mxu0 0
      %925 = vmatpush.bf16.msra.mxu0 0
      %926 = vmatpush.bf16.msra.mxu0 0
      %927 = vmatpush.bf16.msra.mxu0 0
      %928 = vmatpush.bf16.msra.mxu0 0
      %929 = vmatpush.bf16.msra.mxu0 %v896
      %930 = vmatpush.bf16.msra.mxu0 %v895
      %931 = vmatmul.bf16.gmra.mxu0 %v900
      %v932 = vpop.f32.mrf.mxu0
      %v933 = vadd.f32 0.0, %v932
      %v934 = vpop.f32.mrf.mxu0
      %v935 = vadd.f32 0.0, %v934
      %936 = vmatmul.bf16.gmra.mxu0 %v903
      %v937 = vpop.f32.mrf.mxu0
      %v938 = vadd.f32 0.0, %v937
      %v939 = vpop.f32.mrf.mxu0
      %v940 = vadd.f32 0.0, %v939
      %941 = vmatmul.bf16.gmra.mxu0 %v906
      %v942 = vpop.f32.mrf.mxu0
      %v943 = vadd.f32 0.0, %v942
      %v944 = vpop.f32.mrf.mxu0
      %v945 = vadd.f32 0.0, %v944
      %946 = vmatmul.bf16.gmra.mxu0 %v909
      %v947 = vpop.f32.mrf.mxu0
      %v948 = vadd.f32 0.0, %v947
      %v949 = vpop.f32.mrf.mxu0
      %v950 = vadd.f32 0.0, %v949
      %951 = vmatmul.bf16.gmra.mxu0 %v912
      %v952 = vpop.f32.mrf.mxu0
      %v953 = vadd.f32 0.0, %v952
      %v954 = vpop.f32.mrf.mxu0
      %v955 = vadd.f32 0.0, %v954
      %956 = vmatmul.bf16.gmra.mxu0 %v915
      %v957 = vpop.f32.mrf.mxu0
      %v958 = vadd.f32 0.0, %v957
      %v959 = vpop.f32.mrf.mxu0
      %v960 = vadd.f32 0.0, %v959
      %961 = vmatmul.bf16.gmra.mxu0 %v918
      %v962 = vpop.f32.mrf.mxu0
      %v963 = vadd.f32 0.0, %v962
      %v964 = vpop.f32.mrf.mxu0
      %v965 = vadd.f32 0.0, %v964
      %966 = vmatmul.bf16.gmra.mxu0 %v921
      %v967 = vpop.f32.mrf.mxu0
      %v968 = vadd.f32 0.0, %v967
      %v969 = vpop.f32.mrf.mxu0
      %v970 = vadd.f32 0.0, %v969
      %971 = vdwg.mxu0
      %v972 = vld [vmem:[%s567] sm:$0xff]
      %v973 = vld [vmem:[%s567 + $0x8] sm:$0xff]
      %v974 = vld [vmem:[%s567 + $0x10] sm:$0xff]
      %v975 = vld [vmem:[%s567 + $0x18] sm:$0xff]
      %v976 = vld [vmem:[%s567 + $0x20] sm:$0xff]
      %v977 = vld [vmem:[%s567 + $0x28] sm:$0xff]
      %v978 = vld [vmem:[%s567 + $0x30] sm:$0xff]
      %v979 = vld [vmem:[%s567 + $0x38] sm:$0xff]
      %v980 = vpack.c.bf16 %v973, %v972
      %v981 = vpack.c.bf16 %v975, %v974
      %v982 = vpack.c.bf16 %v977, %v976
      %v983 = vpack.c.bf16 %v979, %v978
      %v984 = vld [vmem:[%s7] sm:$0xf]
      %vm985 = vcmask 64512
      %v987 = vsel %vm985, %v980, 0
      %v990 = vsel %vm985, %v981, 0
      %v993 = vsel %vm985, %v982, 0
      %v996 = vsel %vm985, %v983, 0
      %vm998 = vcmask 1043456
      %v1000 = vsel %vm998, %v984, 0
      %1002 = vmatpush.bf16.msra.mxu0 0
      %1003 = vmatpush.bf16.msra.mxu0 0
      %1004 = vmatpush.bf16.msra.mxu0 0
      %1005 = vmatpush.bf16.msra.mxu0 0
      %1006 = vmatpush.bf16.msra.mxu0 0
      %1007 = vmatpush.bf16.msra.mxu0 0
      %1008 = vmatpush.bf16.msra.mxu0 0
      %1009 = vmatpush.bf16.msra.mxu0 %v1000
      %1010 = vmatmul.bf16.gmra.mxu0 %v987
      %v1011 = vpop.f32.mrf.mxu0
      %v1012 = vadd.f32 0.0, %v1011
      %v1013 = vpop.f32.mrf.mxu0
      %v1014 = vadd.f32 0.0, %v1013
      %1015 = vmatmul.bf16.gmra.mxu0 %v990
      %v1016 = vpop.f32.mrf.mxu0
      %v1017 = vadd.f32 0.0, %v1016
      %v1018 = vpop.f32.mrf.mxu0
      %v1019 = vadd.f32 0.0, %v1018
      %1020 = vmatmul.bf16.gmra.mxu0 %v993
      %v1021 = vpop.f32.mrf.mxu0
      %v1022 = vadd.f32 0.0, %v1021
      %v1023 = vpop.f32.mrf.mxu0
      %v1024 = vadd.f32 0.0, %v1023
      %1025 = vmatmul.bf16.gmra.mxu0 %v996
      %v1026 = vpop.f32.mrf.mxu0
      %v1027 = vadd.f32 0.0, %v1026
      %v1028 = vpop.f32.mrf.mxu0
      %v1029 = vadd.f32 0.0, %v1028
      %1030 = vdwg.mxu0
      %1039 = vrot.lane.b32.xlu0 %v953, 127
      %v1040 = vpop.permute.xlu0 %1039
      %1041 = vrot.lane.b32.xlu0 %v955, 127
      %v1042 = vpop.permute.xlu0 %1041
      %1043 = vrot.lane.b32.xlu0 %v958, 127
      %v1044 = vpop.permute.xlu0 %1043
      %1045 = vrot.lane.b32.xlu0 %v960, 127
      %v1046 = vpop.permute.xlu0 %1045
      %1047 = vrot.lane.b32.xlu0 %v963, 127
      %v1048 = vpop.permute.xlu0 %1047
      %1049 = vrot.lane.b32.xlu0 %v965, 127
      %v1050 = vpop.permute.xlu0 %1049
      %1051 = vrot.lane.b32.xlu0 %v968, 127
      %v1052 = vpop.permute.xlu0 %1051
      %1053 = vrot.lane.b32.xlu0 %v970, 127
      %v1054 = vpop.permute.xlu0 %1053
      %v1063 = vadd.f32 %v933, %v1040
      %v1064 = vadd.f32 %v935, %v1042
      %v1065 = vadd.f32 %v938, %v1044
      %v1066 = vadd.f32 %v940, %v1046
      %v1067 = vadd.f32 %v943, %v1048
      %v1068 = vadd.f32 %v945, %v1050
      %v1069 = vadd.f32 %v948, %v1052
      %v1070 = vadd.f32 %v950, %v1054
      %v1071 = vadd.f32 %v1063, %v1012
      %v1072 = vadd.f32 %v1064, %v1014
      %v1073 = vadd.f32 %v1065, %v1017
      %v1074 = vadd.f32 %v1066, %v1019
      %v1075 = vadd.f32 %v1067, %v1022
      %v1076 = vadd.f32 %v1068, %v1024
      %v1077 = vadd.f32 %v1069, %v1027
      %v1078 = vadd.f32 %v1070, %v1029
      %vm1079 = vcmp.gt.f32.partialorder %v1071, 0.0
      %vm1080 = vcmp.gt.f32.partialorder %v1072, 0.0
      %vm1081 = vcmp.gt.f32.partialorder %v1073, 0.0
      %vm1082 = vcmp.gt.f32.partialorder %v1074, 0.0
      %vm1083 = vcmp.gt.f32.partialorder %v1075, 0.0
      %vm1084 = vcmp.gt.f32.partialorder %v1076, 0.0
      %vm1085 = vcmp.gt.f32.partialorder %v1077, 0.0
      %vm1086 = vcmp.gt.f32.partialorder %v1078, 0.0
      %v1087 = vmul.f32 %v1071, 0.2
      %v1088 = vmul.f32 %v1072, 0.2
      %v1089 = vmul.f32 %v1073, 0.2
      %v1090 = vmul.f32 %v1074, 0.2
      %v1091 = vmul.f32 %v1075, 0.2
      %v1092 = vmul.f32 %v1076, 0.2
      %v1093 = vmul.f32 %v1077, 0.2
      %v1094 = vmul.f32 %v1078, 0.2
      %v1095 = vsel %vm1079, %v1071, %v1087
      %v1096 = vsel %vm1080, %v1072, %v1088
      %v1097 = vsel %vm1081, %v1073, %v1089
      %v1098 = vsel %vm1082, %v1074, %v1090
      %v1099 = vsel %vm1083, %v1075, %v1091
      %v1100 = vsel %vm1084, %v1076, %v1092
      %v1101 = vsel %vm1085, %v1077, %v1093
      %v1102 = vsel %vm1086, %v1078, %v1094
      %vm1103 = vcmp.gt.s32.totalorder %v704, 0
      %vm1104 = vcmp.gt.s32.totalorder %v705, 0
      %vm1105 = vcmp.gt.s32.totalorder %v706, 0
      %vm1106 = vcmp.gt.s32.totalorder %v707, 0
      %vm1107 = vcmp.gt.s32.totalorder %v708, 0
      %vm1108 = vcmp.gt.s32.totalorder %v709, 0
      %vm1109 = vcmp.gt.s32.totalorder %v710, 0
      %vm1110 = vcmp.gt.s32.totalorder %v711, 0
      %1119 = vrot.lane.b32.xlu0 %v1095, 1
      %v1120 = vpop.permute.xlu0 %1119
      %1121 = vrot.lane.b32.xlu0 %v1096, 1
      %v1122 = vpop.permute.xlu0 %1121
      %1123 = vrot.lane.b32.xlu0 %v1097, 1
      %v1124 = vpop.permute.xlu0 %1123
      %1125 = vrot.lane.b32.xlu0 %v1098, 1
      %v1126 = vpop.permute.xlu0 %1125
      %1127 = vrot.lane.b32.xlu0 %v1099, 1
      %v1128 = vpop.permute.xlu0 %1127
      %1129 = vrot.lane.b32.xlu0 %v1100, 1
      %v1130 = vpop.permute.xlu0 %1129
      %1131 = vrot.lane.b32.xlu0 %v1101, 1
      %v1132 = vpop.permute.xlu0 %1131
      %1133 = vrot.lane.b32.xlu0 %v1102, 1
      %v1134 = vpop.permute.xlu0 %1133
      %v1143 = vsel %vm1103, %v1120, -1e+30
      %v1144 = vsel %vm1104, %v1122, -1e+30
      %v1145 = vsel %vm1105, %v1124, -1e+30
      %v1146 = vsel %vm1106, %v1126, -1e+30
      %v1147 = vsel %vm1107, %v1128, -1e+30
      %v1148 = vsel %vm1108, %v1130, -1e+30
      %v1149 = vsel %vm1109, %v1132, -1e+30
      %v1150 = vsel %vm1110, %v1134, -1e+30
      %vm1151 = vcmask 15368
      %v1152 = vsel %vm1151, %v704, 0
      %v1153 = vrot.slane %v1152, 4
      %v1154 = vadd.s32 %v1152, %v1153
      %v1155 = vrot.slane %v1154, 2
      %v1156 = vadd.s32 %v1154, %v1155
      %v1157 = vrot.slane %v1156, 1
      %v1158 = vadd.s32 %v1156, %v1157
      %v1159 = vsel %vm1151, %v705, 0
      %v1160 = vrot.slane %v1159, 4
      %v1161 = vadd.s32 %v1159, %v1160
      %v1162 = vrot.slane %v1161, 2
      %v1163 = vadd.s32 %v1161, %v1162
      %v1164 = vrot.slane %v1163, 1
      %v1165 = vadd.s32 %v1163, %v1164
      %v1166 = vsel %vm1151, %v706, 0
      %v1167 = vrot.slane %v1166, 4
      %v1168 = vadd.s32 %v1166, %v1167
      %v1169 = vrot.slane %v1168, 2
      %v1170 = vadd.s32 %v1168, %v1169
      %v1171 = vrot.slane %v1170, 1
      %v1172 = vadd.s32 %v1170, %v1171
      %v1173 = vsel %vm1151, %v707, 0
      %v1174 = vrot.slane %v1173, 4
      %v1175 = vadd.s32 %v1173, %v1174
      %v1176 = vrot.slane %v1175, 2
      %v1177 = vadd.s32 %v1175, %v1176
      %v1178 = vrot.slane %v1177, 1
      %v1179 = vadd.s32 %v1177, %v1178
      %v1180 = vsel %vm1151, %v708, 0
      %v1181 = vrot.slane %v1180, 4
      %v1182 = vadd.s32 %v1180, %v1181
      %v1183 = vrot.slane %v1182, 2
      %v1184 = vadd.s32 %v1182, %v1183
      %v1185 = vrot.slane %v1184, 1
      %v1186 = vadd.s32 %v1184, %v1185
      %v1187 = vsel %vm1151, %v709, 0
      %v1188 = vrot.slane %v1187, 4
      %v1189 = vadd.s32 %v1187, %v1188
      %v1190 = vrot.slane %v1189, 2
      %v1191 = vadd.s32 %v1189, %v1190
      %v1192 = vrot.slane %v1191, 1
      %v1193 = vadd.s32 %v1191, %v1192
      %v1194 = vsel %vm1151, %v710, 0
      %v1195 = vrot.slane %v1194, 4
      %v1196 = vadd.s32 %v1194, %v1195
      %v1197 = vrot.slane %v1196, 2
      %v1198 = vadd.s32 %v1196, %v1197
      %v1199 = vrot.slane %v1198, 1
      %v1200 = vadd.s32 %v1198, %v1199
      %v1201 = vsel %vm1151, %v711, 0
      %v1202 = vrot.slane %v1201, 4
      %v1203 = vadd.s32 %v1201, %v1202
      %v1204 = vrot.slane %v1203, 2
      %v1205 = vadd.s32 %v1203, %v1204
      %v1206 = vrot.slane %v1205, 1
      %v1207 = vadd.s32 %v1205, %v1206
      %vm1208 = vcmp.gt.s32.totalorder %v1158, 0
      %vm1209 = vcmp.gt.s32.totalorder %v1165, 0
      %vm1210 = vcmp.gt.s32.totalorder %v1172, 0
      %vm1211 = vcmp.gt.s32.totalorder %v1179, 0
      %vm1212 = vcmp.gt.s32.totalorder %v1186, 0
      %vm1213 = vcmp.gt.s32.totalorder %v1193, 0
      %vm1214 = vcmp.gt.s32.totalorder %v1200, 0
      %vm1215 = vcmp.gt.s32.totalorder %v1207, 0
      %v1216 = vlaneseq
      %v1217 = vshrl.u32 %v1216, 7
      %vm1218 = vcmp.lt.s32.totalorder %v1217, 8
      %v1219 = vsel %vm1218, 0.0, -1e+30
      %v1220 = vsel %vm1208, 1, 0
      %v1221 = vsel %vm1209, 1, 0
      %v1222 = vsel %vm1210, 1, 0
      %v1223 = vsel %vm1211, 1, 0
      %v1224 = vsel %vm1212, 1, 0
      %v1225 = vsel %vm1213, 1, 0
      %v1226 = vsel %vm1214, 1, 0
      %v1227 = vsel %vm1215, 1, 0
      %vm1228 = vcmp.eq.s32.totalorder %v1220, 1
      %vm1229 = vcmp.eq.s32.totalorder %v1221, 1
      %vm1230 = vcmp.eq.s32.totalorder %v1222, 1
      %vm1231 = vcmp.eq.s32.totalorder %v1223, 1
      %vm1232 = vcmp.eq.s32.totalorder %v1224, 1
      %vm1233 = vcmp.eq.s32.totalorder %v1225, 1
      %vm1234 = vcmp.eq.s32.totalorder %v1226, 1
      %vm1235 = vcmp.eq.s32.totalorder %v1227, 1
      %v1236 = vsel %vm1228, %v1143, %v1219
      %v1237 = vsel %vm1229, %v1144, %v1219
      %v1238 = vsel %vm1230, %v1145, %v1219
      %v1239 = vsel %vm1231, %v1146, %v1219
      %v1240 = vsel %vm1232, %v1147, %v1219
      %v1241 = vsel %vm1233, %v1148, %v1219
      %v1242 = vsel %vm1234, %v1149, %v1219
      %v1243 = vsel %vm1235, %v1150, %v1219
      %v1244 = vsel %vm1151, %v1236, -inf
      %v1245 = vrot.slane %v1244, 4
      %v1246 = vmax.f32 %v1244, %v1245
      %v1247 = vrot.slane %v1246, 2
      %v1248 = vmax.f32 %v1246, %v1247
      %v1249 = vrot.slane %v1248, 1
      %v1250 = vmax.f32 %v1248, %v1249
      %v1251 = vsel %vm1151, %v1237, -inf
      %v1252 = vrot.slane %v1251, 4
      %v1253 = vmax.f32 %v1251, %v1252
      %v1254 = vrot.slane %v1253, 2
      %v1255 = vmax.f32 %v1253, %v1254
      %v1256 = vrot.slane %v1255, 1
      %v1257 = vmax.f32 %v1255, %v1256
      %v1258 = vsel %vm1151, %v1238, -inf
      %v1259 = vrot.slane %v1258, 4
      %v1260 = vmax.f32 %v1258, %v1259
      %v1261 = vrot.slane %v1260, 2
      %v1262 = vmax.f32 %v1260, %v1261
      %v1263 = vrot.slane %v1262, 1
      %v1264 = vmax.f32 %v1262, %v1263
      %v1265 = vsel %vm1151, %v1239, -inf
      %v1266 = vrot.slane %v1265, 4
      %v1267 = vmax.f32 %v1265, %v1266
      %v1268 = vrot.slane %v1267, 2
      %v1269 = vmax.f32 %v1267, %v1268
      %v1270 = vrot.slane %v1269, 1
      %v1271 = vmax.f32 %v1269, %v1270
      %v1272 = vsel %vm1151, %v1240, -inf
      %v1273 = vrot.slane %v1272, 4
      %v1274 = vmax.f32 %v1272, %v1273
      %v1275 = vrot.slane %v1274, 2
      %v1276 = vmax.f32 %v1274, %v1275
      %v1277 = vrot.slane %v1276, 1
      %v1278 = vmax.f32 %v1276, %v1277
      %v1279 = vsel %vm1151, %v1241, -inf
      %v1280 = vrot.slane %v1279, 4
      %v1281 = vmax.f32 %v1279, %v1280
      %v1282 = vrot.slane %v1281, 2
      %v1283 = vmax.f32 %v1281, %v1282
      %v1284 = vrot.slane %v1283, 1
      %v1285 = vmax.f32 %v1283, %v1284
      %v1286 = vsel %vm1151, %v1242, -inf
      %v1287 = vrot.slane %v1286, 4
      %v1288 = vmax.f32 %v1286, %v1287
      %v1289 = vrot.slane %v1288, 2
      %v1290 = vmax.f32 %v1288, %v1289
      %v1291 = vrot.slane %v1290, 1
      %v1292 = vmax.f32 %v1290, %v1291
      %v1293 = vsel %vm1151, %v1243, -inf
      %v1294 = vrot.slane %v1293, 4
      %v1295 = vmax.f32 %v1293, %v1294
      %v1296 = vrot.slane %v1295, 2
      %v1297 = vmax.f32 %v1295, %v1296
      %v1298 = vrot.slane %v1297, 1
      %v1299 = vmax.f32 %v1297, %v1298
      %v1300 = vsub.f32 %v1236, %v1250
      %v1301 = vsub.f32 %v1237, %v1257
      %v1302 = vsub.f32 %v1238, %v1264
      %v1303 = vsub.f32 %v1239, %v1271
      %v1304 = vsub.f32 %v1240, %v1278
      %v1305 = vsub.f32 %v1241, %v1285
      %v1306 = vsub.f32 %v1242, %v1292
      %v1307 = vsub.f32 %v1243, %v1299
      %v1308 = vmul.f32 %v1300, 1.442695
      %v1309 = vpow.pop %v1308
      %v1310 = vmul.f32 %v1301, 1.442695
      %v1311 = vpow.pop %v1310
      %v1312 = vmul.f32 %v1302, 1.442695
      %v1313 = vpow.pop %v1312
      %v1314 = vmul.f32 %v1303, 1.442695
      %v1315 = vpow.pop %v1314
      %v1316 = vmul.f32 %v1304, 1.442695
      %v1317 = vpow.pop %v1316
      %v1318 = vmul.f32 %v1305, 1.442695
      %v1319 = vpow.pop %v1318
      %v1320 = vmul.f32 %v1306, 1.442695
      %v1321 = vpow.pop %v1320
      %v1322 = vmul.f32 %v1307, 1.442695
      %v1323 = vpow.pop %v1322
      %v1324 = vsel %vm1151, %v1309, 0.0
      %v1325 = vrot.slane %v1324, 4
      %v1326 = vadd.f32 %v1324, %v1325
      %v1327 = vrot.slane %v1326, 2
      %v1328 = vadd.f32 %v1326, %v1327
      %v1329 = vrot.slane %v1328, 1
      %v1330 = vadd.f32 %v1328, %v1329
      %v1331 = vsel %vm1151, %v1311, 0.0
      %v1332 = vrot.slane %v1331, 4
      %v1333 = vadd.f32 %v1331, %v1332
      %v1334 = vrot.slane %v1333, 2
      %v1335 = vadd.f32 %v1333, %v1334
      %v1336 = vrot.slane %v1335, 1
      %v1337 = vadd.f32 %v1335, %v1336
      %v1338 = vsel %vm1151, %v1313, 0.0
      %v1339 = vrot.slane %v1338, 4
      %v1340 = vadd.f32 %v1338, %v1339
      %v1341 = vrot.slane %v1340, 2
      %v1342 = vadd.f32 %v1340, %v1341
      %v1343 = vrot.slane %v1342, 1
      %v1344 = vadd.f32 %v1342, %v1343
      %v1345 = vsel %vm1151, %v1315, 0.0
      %v1346 = vrot.slane %v1345, 4
      %v1347 = vadd.f32 %v1345, %v1346
      %v1348 = vrot.slane %v1347, 2
      %v1349 = vadd.f32 %v1347, %v1348
      %v1350 = vrot.slane %v1349, 1
      %v1351 = vadd.f32 %v1349, %v1350
      %v1352 = vsel %vm1151, %v1317, 0.0
      %v1353 = vrot.slane %v1352, 4
      %v1354 = vadd.f32 %v1352, %v1353
      %v1355 = vrot.slane %v1354, 2
      %v1356 = vadd.f32 %v1354, %v1355
      %v1357 = vrot.slane %v1356, 1
      %v1358 = vadd.f32 %v1356, %v1357
      %v1359 = vsel %vm1151, %v1319, 0.0
      %v1360 = vrot.slane %v1359, 4
      %v1361 = vadd.f32 %v1359, %v1360
      %v1362 = vrot.slane %v1361, 2
      %v1363 = vadd.f32 %v1361, %v1362
      %v1364 = vrot.slane %v1363, 1
      %v1365 = vadd.f32 %v1363, %v1364
      %v1366 = vsel %vm1151, %v1321, 0.0
      %v1367 = vrot.slane %v1366, 4
      %v1368 = vadd.f32 %v1366, %v1367
      %v1369 = vrot.slane %v1368, 2
      %v1370 = vadd.f32 %v1368, %v1369
      %v1371 = vrot.slane %v1370, 1
      %v1372 = vadd.f32 %v1370, %v1371
      %v1373 = vsel %vm1151, %v1323, 0.0
      %v1374 = vrot.slane %v1373, 4
      %v1375 = vadd.f32 %v1373, %v1374
      %v1376 = vrot.slane %v1375, 2
      %v1377 = vadd.f32 %v1375, %v1376
      %v1378 = vrot.slane %v1377, 1
      %v1379 = vadd.f32 %v1377, %v1378
      %v1380 = vrcp.pop %v1330
      %v1381 = vrcp.pop %v1337
      %v1382 = vrcp.pop %v1344
      %v1383 = vrcp.pop %v1351
      %v1384 = vrcp.pop %v1358
      %v1385 = vrcp.pop %v1365
      %v1386 = vrcp.pop %v1372
      %v1387 = vrcp.pop %v1379
      %v1388 = vmul.f32 %v1309, %v1380
      %v1389 = vmul.f32 %v1311, %v1381
      %v1390 = vmul.f32 %v1313, %v1382
      %v1391 = vmul.f32 %v1315, %v1383
      %v1392 = vmul.f32 %v1317, %v1384
      %v1393 = vmul.f32 %v1319, %v1385
      %v1394 = vmul.f32 %v1321, %v1386
      %v1395 = vmul.f32 %v1323, %v1387
      %1397 = vset.pattern.permute.xlu0 1
      %1398 = vperm.xlu0 %1397, %v1388
      %v1399 = vpop.permute.xlu0 %1398
      %1402 = vset.pattern.permute.xlu0 1
      %1403 = vperm.xlu0 %1402, %v1389
      %v1404 = vpop.permute.xlu0 %1403
      %1407 = vset.pattern.permute.xlu0 1
      %1408 = vperm.xlu0 %1407, %v1390
      %v1409 = vpop.permute.xlu0 %1408
      %1412 = vset.pattern.permute.xlu0 1
      %1413 = vperm.xlu0 %1412, %v1391
      %v1414 = vpop.permute.xlu0 %1413
      %1417 = vset.pattern.permute.xlu0 1
      %1418 = vperm.xlu0 %1417, %v1392
      %v1419 = vpop.permute.xlu0 %1418
      %1422 = vset.pattern.permute.xlu0 1
      %1423 = vperm.xlu0 %1422, %v1393
      %v1424 = vpop.permute.xlu0 %1423
      %1427 = vset.pattern.permute.xlu0 1
      %1428 = vperm.xlu0 %1427, %v1394
      %v1429 = vpop.permute.xlu0 %1428
      %1432 = vset.pattern.permute.xlu0 1
      %1433 = vperm.xlu0 %1432, %v1395
      %v1434 = vpop.permute.xlu0 %1433
      %v1436 = vmul.f32 %v836, %v1399
      %v1437 = vmul.f32 %v838, %v1404
      %v1438 = vmul.f32 %v841, %v1409
      %v1439 = vmul.f32 %v843, %v1414
      %v1440 = vmul.f32 %v846, %v1419
      %v1441 = vmul.f32 %v848, %v1424
      %v1442 = vmul.f32 %v851, %v1429
      %v1443 = vmul.f32 %v853, %v1434
      %v1444 = vmul.f32 %v856, %v1399
      %v1445 = vmul.f32 %v858, %v1404
      %v1446 = vmul.f32 %v861, %v1409
      %v1447 = vmul.f32 %v863, %v1414
      %v1448 = vmul.f32 %v866, %v1419
      %v1449 = vmul.f32 %v868, %v1424
      %v1450 = vmul.f32 %v871, %v1429
      %v1451 = vmul.f32 %v873, %v1434
      %v1452 = vpack.c.bf16 %v1437, %v1436
      %v1453 = vpack.c.bf16 %v1439, %v1438
      %v1454 = vpack.c.bf16 %v1441, %v1440
      %v1455 = vpack.c.bf16 %v1443, %v1442
      %v1456 = vpack.c.bf16 %v1445, %v1444
      %v1457 = vpack.c.bf16 %v1447, %v1446
      %v1458 = vpack.c.bf16 %v1449, %v1448
      %v1459 = vpack.c.bf16 %v1451, %v1450
      %v1460 = vld [vmem:[%s562] sm:$0xff]
      %v1461 = vadd.s32 %v1217, 8
      %v1462 = vadd.s32 %v1217, 16
      %v1463 = vadd.s32 %v1217, 24
      %v1464 = vadd.s32 %v1217, 32
      %v1465 = vadd.s32 %v1217, 40
      %v1466 = vadd.s32 %v1217, 48
      %v1467 = vadd.s32 %v1217, 56
      %v1468 = vadd.s32 %v1217, 64
      %v1469 = vadd.s32 %v1217, 72
      %v1470 = vadd.s32 %v1217, 80
      %v1471 = vadd.s32 %v1217, 88
      %v1472 = vadd.s32 %v1217, 96
      %v1473 = vadd.s32 %v1217, 104
      %v1474 = vadd.s32 %v1217, 112
      %v1475 = vadd.s32 %v1217, 120
      %v1476 = vperm.slane %v1460, 0
      %vm1477 = vcmp.eq.s32.totalorder %v1217, %v1476
      %vm1478 = vcmp.eq.s32.totalorder %v1461, %v1476
      %vm1479 = vcmp.eq.s32.totalorder %v1462, %v1476
      %vm1480 = vcmp.eq.s32.totalorder %v1463, %v1476
      %vm1481 = vcmp.eq.s32.totalorder %v1464, %v1476
      %vm1482 = vcmp.eq.s32.totalorder %v1465, %v1476
      %vm1483 = vcmp.eq.s32.totalorder %v1466, %v1476
      %vm1484 = vcmp.eq.s32.totalorder %v1467, %v1476
      %vm1485 = vcmp.eq.s32.totalorder %v1468, %v1476
      %vm1486 = vcmp.eq.s32.totalorder %v1469, %v1476
      %vm1487 = vcmp.eq.s32.totalorder %v1470, %v1476
      %vm1488 = vcmp.eq.s32.totalorder %v1471, %v1476
      %vm1489 = vcmp.eq.s32.totalorder %v1472, %v1476
      %vm1490 = vcmp.eq.s32.totalorder %v1473, %v1476
      %vm1491 = vcmp.eq.s32.totalorder %v1474, %v1476
      %vm1492 = vcmp.eq.s32.totalorder %v1475, %v1476
      %v1493 = vsel %vm1477, 1, 0
      %v1494 = vsel %vm1478, 1, 0
      %v1495 = vsel %vm1479, 1, 0
      %v1496 = vsel %vm1480, 1, 0
      %v1497 = vsel %vm1481, 1, 0
      %v1498 = vsel %vm1482, 1, 0
      %v1499 = vsel %vm1483, 1, 0
      %v1500 = vsel %vm1484, 1, 0
      %v1501 = vsel %vm1485, 1, 0
      %v1502 = vsel %vm1486, 1, 0
      %v1503 = vsel %vm1487, 1, 0
      %v1504 = vsel %vm1488, 1, 0
      %v1505 = vsel %vm1489, 1, 0
      %v1506 = vsel %vm1490, 1, 0
      %v1507 = vsel %vm1491, 1, 0
      %v1508 = vsel %vm1492, 1, 0
      %v1509 = vcvt.s32.f32 %v1493
      %v1510 = vcvt.s32.f32 %v1494
      %v1511 = vcvt.s32.f32 %v1495
      %v1512 = vcvt.s32.f32 %v1496
      %v1513 = vcvt.s32.f32 %v1497
      %v1514 = vcvt.s32.f32 %v1498
      %v1515 = vcvt.s32.f32 %v1499
      %v1516 = vcvt.s32.f32 %v1500
      %v1517 = vcvt.s32.f32 %v1501
      %v1518 = vcvt.s32.f32 %v1502
      %v1519 = vcvt.s32.f32 %v1503
      %v1520 = vcvt.s32.f32 %v1504
      %v1521 = vcvt.s32.f32 %v1505
      %v1522 = vcvt.s32.f32 %v1506
      %v1523 = vcvt.s32.f32 %v1507
      %v1524 = vcvt.s32.f32 %v1508
      %v1525 = vpack.c.bf16 %v1510, %v1509
      %v1526 = vpack.c.bf16 %v1512, %v1511
      %v1527 = vpack.c.bf16 %v1514, %v1513
      %v1528 = vpack.c.bf16 %v1516, %v1515
      %v1529 = vpack.c.bf16 %v1518, %v1517
      %v1530 = vpack.c.bf16 %v1520, %v1519
      %v1531 = vpack.c.bf16 %v1522, %v1521
      %v1532 = vpack.c.bf16 %v1524, %v1523
      %1533 = vmatpush.bf16.msra.mxu0 %v1459
      %1534 = vmatpush.bf16.msra.mxu0 %v1458
      %1535 = vmatpush.bf16.msra.mxu0 %v1457
      %1536 = vmatpush.bf16.msra.mxu0 %v1456
      %1537 = vmatpush.bf16.msra.mxu0 %v1455
      %1538 = vmatpush.bf16.msra.mxu0 %v1454
      %1539 = vmatpush.bf16.msra.mxu0 %v1453
      %1540 = vmatpush.bf16.msra.mxu0 %v1452
      %1541 = vmatmul.bf16.gmra.mxu0 %v1525
      %v1542 = vpop.f32.mrf.mxu0
      %v1543 = vadd.f32 0.0, %v1542
      %v1544 = vpop.f32.mrf.mxu0
      %v1545 = vadd.f32 0.0, %v1544
      %1546 = vmatmul.bf16.gmra.mxu0 %v1526
      %v1547 = vpop.f32.mrf.mxu0
      %v1548 = vadd.f32 0.0, %v1547
      %v1549 = vpop.f32.mrf.mxu0
      %v1550 = vadd.f32 0.0, %v1549
      %1551 = vmatmul.bf16.gmra.mxu0 %v1527
      %v1552 = vpop.f32.mrf.mxu0
      %v1553 = vadd.f32 0.0, %v1552
      %v1554 = vpop.f32.mrf.mxu0
      %v1555 = vadd.f32 0.0, %v1554
      %1556 = vmatmul.bf16.gmra.mxu0 %v1528
      %v1557 = vpop.f32.mrf.mxu0
      %v1558 = vadd.f32 0.0, %v1557
      %v1559 = vpop.f32.mrf.mxu0
      %v1560 = vadd.f32 0.0, %v1559
      %1561 = vmatmul.bf16.gmra.mxu0 %v1529
      %v1562 = vpop.f32.mrf.mxu0
      %v1563 = vadd.f32 0.0, %v1562
      %v1564 = vpop.f32.mrf.mxu0
      %v1565 = vadd.f32 0.0, %v1564
      %1566 = vmatmul.bf16.gmra.mxu0 %v1530
      %v1567 = vpop.f32.mrf.mxu0
      %v1568 = vadd.f32 0.0, %v1567
      %v1569 = vpop.f32.mrf.mxu0
      %v1570 = vadd.f32 0.0, %v1569
      %1571 = vmatmul.bf16.gmra.mxu0 %v1531
      %v1572 = vpop.f32.mrf.mxu0
      %v1573 = vadd.f32 0.0, %v1572
      %v1574 = vpop.f32.mrf.mxu0
      %v1575 = vadd.f32 0.0, %v1574
      %1576 = vmatmul.bf16.gmra.mxu0 %v1532
      %v1577 = vpop.f32.mrf.mxu0
      %v1578 = vadd.f32 0.0, %v1577
      %v1579 = vpop.f32.mrf.mxu0
      %v1580 = vadd.f32 0.0, %v1579
      %1581 = vdwg.mxu0
      %vm1582 = vcmp.gt.f32.partialorder %v1543, 0.0
      %vm1583 = vcmp.gt.f32.partialorder %v1545, 0.0
      %vm1584 = vcmp.gt.f32.partialorder %v1548, 0.0
      %vm1585 = vcmp.gt.f32.partialorder %v1550, 0.0
      %vm1586 = vcmp.gt.f32.partialorder %v1553, 0.0
      %vm1587 = vcmp.gt.f32.partialorder %v1555, 0.0
      %vm1588 = vcmp.gt.f32.partialorder %v1558, 0.0
      %vm1589 = vcmp.gt.f32.partialorder %v1560, 0.0
      %vm1590 = vcmp.gt.f32.partialorder %v1563, 0.0
      %vm1591 = vcmp.gt.f32.partialorder %v1565, 0.0
      %vm1592 = vcmp.gt.f32.partialorder %v1568, 0.0
      %vm1593 = vcmp.gt.f32.partialorder %v1570, 0.0
      %vm1594 = vcmp.gt.f32.partialorder %v1573, 0.0
      %vm1595 = vcmp.gt.f32.partialorder %v1575, 0.0
      %vm1596 = vcmp.gt.f32.partialorder %v1578, 0.0
      %vm1597 = vcmp.gt.f32.partialorder %v1580, 0.0
      %v1598 = vmin.f32 %v1543, 0.0
      %v1599 = vmin.f32 %v1545, 0.0
      %v1600 = vmin.f32 %v1548, 0.0
      %v1601 = vmin.f32 %v1550, 0.0
      %v1602 = vmin.f32 %v1553, 0.0
      %v1603 = vmin.f32 %v1555, 0.0
      %v1604 = vmin.f32 %v1558, 0.0
      %v1605 = vmin.f32 %v1560, 0.0
      %v1606 = vmin.f32 %v1563, 0.0
      %v1607 = vmin.f32 %v1565, 0.0
      %v1608 = vmin.f32 %v1568, 0.0
      %v1609 = vmin.f32 %v1570, 0.0
      %v1610 = vmin.f32 %v1573, 0.0
      %v1611 = vmin.f32 %v1575, 0.0
      %v1612 = vmin.f32 %v1578, 0.0
      %v1613 = vmin.f32 %v1580, 0.0
      %v1614 = vmul.f32 %v1598, 1.442695
      %v1615 = vpow.pop %v1614
      %v1616 = vmul.f32 %v1599, 1.442695
      %v1617 = vpow.pop %v1616
      %v1618 = vmul.f32 %v1600, 1.442695
      %v1619 = vpow.pop %v1618
      %v1620 = vmul.f32 %v1601, 1.442695
      %v1621 = vpow.pop %v1620
      %v1622 = vmul.f32 %v1602, 1.442695
      %v1623 = vpow.pop %v1622
      %v1624 = vmul.f32 %v1603, 1.442695
      %v1625 = vpow.pop %v1624
      %v1626 = vmul.f32 %v1604, 1.442695
      %v1627 = vpow.pop %v1626
      %v1628 = vmul.f32 %v1605, 1.442695
      %v1629 = vpow.pop %v1628
      %v1630 = vmul.f32 %v1606, 1.442695
      %v1631 = vpow.pop %v1630
      %v1632 = vmul.f32 %v1607, 1.442695
      %v1633 = vpow.pop %v1632
      %v1634 = vmul.f32 %v1608, 1.442695
      %v1635 = vpow.pop %v1634
      %v1636 = vmul.f32 %v1609, 1.442695
      %v1637 = vpow.pop %v1636
      %v1638 = vmul.f32 %v1610, 1.442695
      %v1639 = vpow.pop %v1638
      %v1640 = vmul.f32 %v1611, 1.442695
      %v1641 = vpow.pop %v1640
      %v1642 = vmul.f32 %v1612, 1.442695
      %v1643 = vpow.pop %v1642
      %v1644 = vmul.f32 %v1613, 1.442695
      %v1645 = vpow.pop %v1644
      %v1646 = vsub.f32 %v1615, 1.0
      %v1647 = vsub.f32 %v1617, 1.0
      %v1648 = vsub.f32 %v1619, 1.0
      %v1649 = vsub.f32 %v1621, 1.0
      %v1650 = vsub.f32 %v1623, 1.0
      %v1651 = vsub.f32 %v1625, 1.0
      %v1652 = vsub.f32 %v1627, 1.0
      %v1653 = vsub.f32 %v1629, 1.0
      %v1654 = vsub.f32 %v1631, 1.0
      %v1655 = vsub.f32 %v1633, 1.0
      %v1656 = vsub.f32 %v1635, 1.0
      %v1657 = vsub.f32 %v1637, 1.0
      %v1658 = vsub.f32 %v1639, 1.0
      %v1659 = vsub.f32 %v1641, 1.0
      %v1660 = vsub.f32 %v1643, 1.0
      %v1661 = vsub.f32 %v1645, 1.0
      %v1662 = vsel %vm1582, %v1543, %v1646
      %v1663 = vsel %vm1583, %v1545, %v1647
      %v1664 = vsel %vm1584, %v1548, %v1648
      %v1665 = vsel %vm1585, %v1550, %v1649
      %v1666 = vsel %vm1586, %v1553, %v1650
      %v1667 = vsel %vm1587, %v1555, %v1651
      %v1668 = vsel %vm1588, %v1558, %v1652
      %v1669 = vsel %vm1589, %v1560, %v1653
      %v1670 = vsel %vm1590, %v1563, %v1654
      %v1671 = vsel %vm1591, %v1565, %v1655
      %v1672 = vsel %vm1592, %v1568, %v1656
      %v1673 = vsel %vm1593, %v1570, %v1657
      %v1674 = vsel %vm1594, %v1573, %v1658
      %v1675 = vsel %vm1595, %v1575, %v1659
      %v1676 = vsel %vm1596, %v1578, %v1660
      %v1677 = vsel %vm1597, %v1580, %v1661
      %v1678 = vld [vmem:[%s10] sm:$0xff]
      %v1679 = vadd.f32 %v1662, %v1662
      %v1680 = vadd.f32 %v1663, %v1663
      %v1681 = vadd.f32 %v1664, %v1664
      %v1682 = vadd.f32 %v1665, %v1665
      %v1683 = vadd.f32 %v1666, %v1666
      %v1684 = vadd.f32 %v1667, %v1667
      %v1685 = vadd.f32 %v1668, %v1668
      %v1686 = vadd.f32 %v1669, %v1669
      %v1687 = vadd.f32 %v1670, %v1670
      %v1688 = vadd.f32 %v1671, %v1671
      %v1689 = vadd.f32 %v1672, %v1672
      %v1690 = vadd.f32 %v1673, %v1673
      %v1691 = vadd.f32 %v1674, %v1674
      %v1692 = vadd.f32 %v1675, %v1675
      %v1693 = vadd.f32 %v1676, %v1676
      %v1694 = vadd.f32 %v1677, %v1677
      %v1695 = vsel %vm622, %v1679, 0.0
      %1696 = vadd.xlane.f32.xlu0 %v1695
      %v1697 = vpop.xlane.xlu0 %1696
      %v1698 = vsel %vm622, %v1680, 0.0
      %1699 = vadd.xlane.f32.xlu0 %v1698
      %v1700 = vpop.xlane.xlu0 %1699
      %v1701 = vsel %vm622, %v1681, 0.0
      %1702 = vadd.xlane.f32.xlu0 %v1701
      %v1703 = vpop.xlane.xlu0 %1702
      %v1704 = vsel %vm622, %v1682, 0.0
      %1705 = vadd.xlane.f32.xlu0 %v1704
      %v1706 = vpop.xlane.xlu0 %1705
      %v1707 = vsel %vm622, %v1683, 0.0
      %1708 = vadd.xlane.f32.xlu0 %v1707
      %v1709 = vpop.xlane.xlu0 %1708
      %v1710 = vsel %vm622, %v1684, 0.0
      %1711 = vadd.xlane.f32.xlu0 %v1710
      %v1712 = vpop.xlane.xlu0 %1711
      %v1713 = vsel %vm622, %v1685, 0.0
      %1714 = vadd.xlane.f32.xlu0 %v1713
      %v1715 = vpop.xlane.xlu0 %1714
      %v1716 = vsel %vm622, %v1686, 0.0
      %1717 = vadd.xlane.f32.xlu0 %v1716
      %v1718 = vpop.xlane.xlu0 %1717
      %v1719 = vsel %vm622, %v1687, 0.0
      %1720 = vadd.xlane.f32.xlu0 %v1719
      %v1721 = vpop.xlane.xlu0 %1720
      %v1722 = vsel %vm622, %v1688, 0.0
      %1723 = vadd.xlane.f32.xlu0 %v1722
      %v1724 = vpop.xlane.xlu0 %1723
      %v1725 = vsel %vm622, %v1689, 0.0
      %1726 = vadd.xlane.f32.xlu0 %v1725
      %v1727 = vpop.xlane.xlu0 %1726
      %v1728 = vsel %vm622, %v1690, 0.0
      %1729 = vadd.xlane.f32.xlu0 %v1728
      %v1730 = vpop.xlane.xlu0 %1729
      %v1731 = vsel %vm622, %v1691, 0.0
      %1732 = vadd.xlane.f32.xlu0 %v1731
      %v1733 = vpop.xlane.xlu0 %1732
      %v1734 = vsel %vm622, %v1692, 0.0
      %1735 = vadd.xlane.f32.xlu0 %v1734
      %v1736 = vpop.xlane.xlu0 %1735
      %v1737 = vsel %vm622, %v1693, 0.0
      %1738 = vadd.xlane.f32.xlu0 %v1737
      %v1739 = vpop.xlane.xlu0 %1738
      %v1740 = vsel %vm622, %v1694, 0.0
      %1741 = vadd.xlane.f32.xlu0 %v1740
      %v1742 = vpop.xlane.xlu0 %1741
      %v1743 = vrcp.pop 32.0
      %v1744 = vmul.f32 32.0, %v1743
      %v1745 = vsub.f32 1.0, %v1744
      %v1746 = vmul.f32 %v1743, %v1745
      %v1747 = vadd.f32 %v1743, %v1746
      %vm1748 = vweird.f32 %v1743
      %v1749 = vsel %vm1748, %v1743, %v1747
      %v1750 = vmul.f32 %v1697, %v1749
      %v1751 = vmul.f32 %v1700, %v1749
      %v1752 = vmul.f32 %v1703, %v1749
      %v1753 = vmul.f32 %v1706, %v1749
      %v1754 = vmul.f32 %v1709, %v1749
      %v1755 = vmul.f32 %v1712, %v1749
      %v1756 = vmul.f32 %v1715, %v1749
      %v1757 = vmul.f32 %v1718, %v1749
      %v1758 = vmul.f32 %v1721, %v1749
      %v1759 = vmul.f32 %v1724, %v1749
      %v1760 = vmul.f32 %v1727, %v1749
      %v1761 = vmul.f32 %v1730, %v1749
      %v1762 = vmul.f32 %v1733, %v1749
      %v1763 = vmul.f32 %v1736, %v1749
      %v1764 = vmul.f32 %v1739, %v1749
      %v1765 = vmul.f32 %v1742, %v1749
      %v1766 = vsub.f32 %v1679, %v1750
      %v1767 = vsub.f32 %v1680, %v1751
      %v1768 = vsub.f32 %v1681, %v1752
      %v1769 = vsub.f32 %v1682, %v1753
      %v1770 = vsub.f32 %v1683, %v1754
      %v1771 = vsub.f32 %v1684, %v1755
      %v1772 = vsub.f32 %v1685, %v1756
      %v1773 = vsub.f32 %v1686, %v1757
      %v1774 = vsub.f32 %v1687, %v1758
      %v1775 = vsub.f32 %v1688, %v1759
      %v1776 = vsub.f32 %v1689, %v1760
      %v1777 = vsub.f32 %v1690, %v1761
      %v1778 = vsub.f32 %v1691, %v1762
      %v1779 = vsub.f32 %v1692, %v1763
      %v1780 = vsub.f32 %v1693, %v1764
      %v1781 = vsub.f32 %v1694, %v1765
      %v1782 = vmul.f32 %v1766, %v1766
      %v1783 = vmul.f32 %v1767, %v1767
      %v1784 = vmul.f32 %v1768, %v1768
      %v1785 = vmul.f32 %v1769, %v1769
      %v1786 = vmul.f32 %v1770, %v1770
      %v1787 = vmul.f32 %v1771, %v1771
      %v1788 = vmul.f32 %v1772, %v1772
      %v1789 = vmul.f32 %v1773, %v1773
      %v1790 = vmul.f32 %v1774, %v1774
      %v1791 = vmul.f32 %v1775, %v1775
      %v1792 = vmul.f32 %v1776, %v1776
      %v1793 = vmul.f32 %v1777, %v1777
      %v1794 = vmul.f32 %v1778, %v1778
      %v1795 = vmul.f32 %v1779, %v1779
      %v1796 = vmul.f32 %v1780, %v1780
      %v1797 = vmul.f32 %v1781, %v1781
      %v1798 = vsel %vm622, %v1782, 0.0
      %1799 = vadd.xlane.f32.xlu0 %v1798
      %v1800 = vpop.xlane.xlu0 %1799
      %v1801 = vsel %vm622, %v1783, 0.0
      %1802 = vadd.xlane.f32.xlu0 %v1801
      %v1803 = vpop.xlane.xlu0 %1802
      %v1804 = vsel %vm622, %v1784, 0.0
      %1805 = vadd.xlane.f32.xlu0 %v1804
      %v1806 = vpop.xlane.xlu0 %1805
      %v1807 = vsel %vm622, %v1785, 0.0
      %1808 = vadd.xlane.f32.xlu0 %v1807
      %v1809 = vpop.xlane.xlu0 %1808
      %v1810 = vsel %vm622, %v1786, 0.0
      %1811 = vadd.xlane.f32.xlu0 %v1810
      %v1812 = vpop.xlane.xlu0 %1811
      %v1813 = vsel %vm622, %v1787, 0.0
      %1814 = vadd.xlane.f32.xlu0 %v1813
      %v1815 = vpop.xlane.xlu0 %1814
      %v1816 = vsel %vm622, %v1788, 0.0
      %1817 = vadd.xlane.f32.xlu0 %v1816
      %v1818 = vpop.xlane.xlu0 %1817
      %v1819 = vsel %vm622, %v1789, 0.0
      %1820 = vadd.xlane.f32.xlu0 %v1819
      %v1821 = vpop.xlane.xlu0 %1820
      %v1822 = vsel %vm622, %v1790, 0.0
      %1823 = vadd.xlane.f32.xlu0 %v1822
      %v1824 = vpop.xlane.xlu0 %1823
      %v1825 = vsel %vm622, %v1791, 0.0
      %1826 = vadd.xlane.f32.xlu0 %v1825
      %v1827 = vpop.xlane.xlu0 %1826
      %v1828 = vsel %vm622, %v1792, 0.0
      %1829 = vadd.xlane.f32.xlu0 %v1828
      %v1830 = vpop.xlane.xlu0 %1829
      %v1831 = vsel %vm622, %v1793, 0.0
      %1832 = vadd.xlane.f32.xlu0 %v1831
      %v1833 = vpop.xlane.xlu0 %1832
      %v1834 = vsel %vm622, %v1794, 0.0
      %1835 = vadd.xlane.f32.xlu0 %v1834
      %v1836 = vpop.xlane.xlu0 %1835
      %v1837 = vsel %vm622, %v1795, 0.0
      %1838 = vadd.xlane.f32.xlu0 %v1837
      %v1839 = vpop.xlane.xlu0 %1838
      %v1840 = vsel %vm622, %v1796, 0.0
      %1841 = vadd.xlane.f32.xlu0 %v1840
      %v1842 = vpop.xlane.xlu0 %1841
      %v1843 = vsel %vm622, %v1797, 0.0
      %1844 = vadd.xlane.f32.xlu0 %v1843
      %v1845 = vpop.xlane.xlu0 %1844
      %v1846 = vmul.f32 %v1800, %v1749
      %v1847 = vmul.f32 %v1803, %v1749
      %v1848 = vmul.f32 %v1806, %v1749
      %v1849 = vmul.f32 %v1809, %v1749
      %v1850 = vmul.f32 %v1812, %v1749
      %v1851 = vmul.f32 %v1815, %v1749
      %v1852 = vmul.f32 %v1818, %v1749
      %v1853 = vmul.f32 %v1821, %v1749
      %v1854 = vmul.f32 %v1824, %v1749
      %v1855 = vmul.f32 %v1827, %v1749
      %v1856 = vmul.f32 %v1830, %v1749
      %v1857 = vmul.f32 %v1833, %v1749
      %v1858 = vmul.f32 %v1836, %v1749
      %v1859 = vmul.f32 %v1839, %v1749
      %v1860 = vmul.f32 %v1842, %v1749
      %v1861 = vmul.f32 %v1845, %v1749
      %v1862 = vadd.f32 %v1846, 1e-05
      %v1863 = vadd.f32 %v1847, 1e-05
      %v1864 = vadd.f32 %v1848, 1e-05
      %v1865 = vadd.f32 %v1849, 1e-05
      %v1866 = vadd.f32 %v1850, 1e-05
      %v1867 = vadd.f32 %v1851, 1e-05
      %v1868 = vadd.f32 %v1852, 1e-05
      %v1869 = vadd.f32 %v1853, 1e-05
      %v1870 = vadd.f32 %v1854, 1e-05
      %v1871 = vadd.f32 %v1855, 1e-05
      %v1872 = vadd.f32 %v1856, 1e-05
      %v1873 = vadd.f32 %v1857, 1e-05
      %v1874 = vadd.f32 %v1858, 1e-05
      %v1875 = vadd.f32 %v1859, 1e-05
      %v1876 = vadd.f32 %v1860, 1e-05
      %v1877 = vadd.f32 %v1861, 1e-05
      %v1878 = vrsqrt.pop %v1862
      %v1879 = vmul.f32 %v1878, %v1862
      %v1880 = vmul.f32 %v1879, %v1878
      %v1881 = vmul.f32 0.5, %v1880
      %v1882 = vsub.f32 1.5, %v1881
      %v1883 = vmul.f32 %v1878, %v1882
      %vm1884 = vweird.f32 %v1862
      %vm1885 = vweird.f32 %v1878
      %vm1886 = vmor %vm1884, %vm1885
      %v1887 = vsel %vm1886, %v1878, %v1883
      %v1888 = vrsqrt.pop %v1863
      %v1889 = vmul.f32 %v1888, %v1863
      %v1890 = vmul.f32 %v1889, %v1888
      %v1891 = vmul.f32 0.5, %v1890
      %v1892 = vsub.f32 1.5, %v1891
      %v1893 = vmul.f32 %v1888, %v1892
      %vm1894 = vweird.f32 %v1863
      %vm1895 = vweird.f32 %v1888
      %vm1896 = vmor %vm1894, %vm1895
      %v1897 = vsel %vm1896, %v1888, %v1893
      %v1898 = vrsqrt.pop %v1864
      %v1899 = vmul.f32 %v1898, %v1864
      %v1900 = vmul.f32 %v1899, %v1898
      %v1901 = vmul.f32 0.5, %v1900
      %v1902 = vsub.f32 1.5, %v1901
      %v1903 = vmul.f32 %v1898, %v1902
      %vm1904 = vweird.f32 %v1864
      %vm1905 = vweird.f32 %v1898
      %vm1906 = vmor %vm1904, %vm1905
      %v1907 = vsel %vm1906, %v1898, %v1903
      %v1908 = vrsqrt.pop %v1865
      %v1909 = vmul.f32 %v1908, %v1865
      %v1910 = vmul.f32 %v1909, %v1908
      %v1911 = vmul.f32 0.5, %v1910
      %v1912 = vsub.f32 1.5, %v1911
      %v1913 = vmul.f32 %v1908, %v1912
      %vm1914 = vweird.f32 %v1865
      %vm1915 = vweird.f32 %v1908
      %vm1916 = vmor %vm1914, %vm1915
      %v1917 = vsel %vm1916, %v1908, %v1913
      %v1918 = vrsqrt.pop %v1866
      %v1919 = vmul.f32 %v1918, %v1866
      %v1920 = vmul.f32 %v1919, %v1918
      %v1921 = vmul.f32 0.5, %v1920
      %v1922 = vsub.f32 1.5, %v1921
      %v1923 = vmul.f32 %v1918, %v1922
      %vm1924 = vweird.f32 %v1866
      %vm1925 = vweird.f32 %v1918
      %vm1926 = vmor %vm1924, %vm1925
      %v1927 = vsel %vm1926, %v1918, %v1923
      %v1928 = vrsqrt.pop %v1867
      %v1929 = vmul.f32 %v1928, %v1867
      %v1930 = vmul.f32 %v1929, %v1928
      %v1931 = vmul.f32 0.5, %v1930
      %v1932 = vsub.f32 1.5, %v1931
      %v1933 = vmul.f32 %v1928, %v1932
      %vm1934 = vweird.f32 %v1867
      %vm1935 = vweird.f32 %v1928
      %vm1936 = vmor %vm1934, %vm1935
      %v1937 = vsel %vm1936, %v1928, %v1933
      %v1938 = vrsqrt.pop %v1868
      %v1939 = vmul.f32 %v1938, %v1868
      %v1940 = vmul.f32 %v1939, %v1938
      %v1941 = vmul.f32 0.5, %v1940
      %v1942 = vsub.f32 1.5, %v1941
      %v1943 = vmul.f32 %v1938, %v1942
      %vm1944 = vweird.f32 %v1868
      %vm1945 = vweird.f32 %v1938
      %vm1946 = vmor %vm1944, %vm1945
      %v1947 = vsel %vm1946, %v1938, %v1943
      %v1948 = vrsqrt.pop %v1869
      %v1949 = vmul.f32 %v1948, %v1869
      %v1950 = vmul.f32 %v1949, %v1948
      %v1951 = vmul.f32 0.5, %v1950
      %v1952 = vsub.f32 1.5, %v1951
      %v1953 = vmul.f32 %v1948, %v1952
      %vm1954 = vweird.f32 %v1869
      %vm1955 = vweird.f32 %v1948
      %vm1956 = vmor %vm1954, %vm1955
      %v1957 = vsel %vm1956, %v1948, %v1953
      %v1958 = vrsqrt.pop %v1870
      %v1959 = vmul.f32 %v1958, %v1870
      %v1960 = vmul.f32 %v1959, %v1958
      %v1961 = vmul.f32 0.5, %v1960
      %v1962 = vsub.f32 1.5, %v1961
      %v1963 = vmul.f32 %v1958, %v1962
      %vm1964 = vweird.f32 %v1870
      %vm1965 = vweird.f32 %v1958
      %vm1966 = vmor %vm1964, %vm1965
      %v1967 = vsel %vm1966, %v1958, %v1963
      %v1968 = vrsqrt.pop %v1871
      %v1969 = vmul.f32 %v1968, %v1871
      %v1970 = vmul.f32 %v1969, %v1968
      %v1971 = vmul.f32 0.5, %v1970
      %v1972 = vsub.f32 1.5, %v1971
      %v1973 = vmul.f32 %v1968, %v1972
      %vm1974 = vweird.f32 %v1871
      %vm1975 = vweird.f32 %v1968
      %vm1976 = vmor %vm1974, %vm1975
      %v1977 = vsel %vm1976, %v1968, %v1973
      %v1978 = vrsqrt.pop %v1872
      %v1979 = vmul.f32 %v1978, %v1872
      %v1980 = vmul.f32 %v1979, %v1978
      %v1981 = vmul.f32 0.5, %v1980
      %v1982 = vsub.f32 1.5, %v1981
      %v1983 = vmul.f32 %v1978, %v1982
      %vm1984 = vweird.f32 %v1872
      %vm1985 = vweird.f32 %v1978
      %vm1986 = vmor %vm1984, %vm1985
      %v1987 = vsel %vm1986, %v1978, %v1983
      %v1988 = vrsqrt.pop %v1873
      %v1989 = vmul.f32 %v1988, %v1873
      %v1990 = vmul.f32 %v1989, %v1988
      %v1991 = vmul.f32 0.5, %v1990
      %v1992 = vsub.f32 1.5, %v1991
      %v1993 = vmul.f32 %v1988, %v1992
      %vm1994 = vweird.f32 %v1873
      %vm1995 = vweird.f32 %v1988
      %vm1996 = vmor %vm1994, %vm1995
      %v1997 = vsel %vm1996, %v1988, %v1993
      %v1998 = vrsqrt.pop %v1874
      %v1999 = vmul.f32 %v1998, %v1874
      %v2000 = vmul.f32 %v1999, %v1998
      %v2001 = vmul.f32 0.5, %v2000
      %v2002 = vsub.f32 1.5, %v2001
      %v2003 = vmul.f32 %v1998, %v2002
      %vm2004 = vweird.f32 %v1874
      %vm2005 = vweird.f32 %v1998
      %vm2006 = vmor %vm2004, %vm2005
      %v2007 = vsel %vm2006, %v1998, %v2003
      %v2008 = vrsqrt.pop %v1875
      %v2009 = vmul.f32 %v2008, %v1875
      %v2010 = vmul.f32 %v2009, %v2008
      %v2011 = vmul.f32 0.5, %v2010
      %v2012 = vsub.f32 1.5, %v2011
      %v2013 = vmul.f32 %v2008, %v2012
      %vm2014 = vweird.f32 %v1875
      %vm2015 = vweird.f32 %v2008
      %vm2016 = vmor %vm2014, %vm2015
      %v2017 = vsel %vm2016, %v2008, %v2013
      %v2018 = vrsqrt.pop %v1876
      %v2019 = vmul.f32 %v2018, %v1876
      %v2020 = vmul.f32 %v2019, %v2018
      %v2021 = vmul.f32 0.5, %v2020
      %v2022 = vsub.f32 1.5, %v2021
      %v2023 = vmul.f32 %v2018, %v2022
      %vm2024 = vweird.f32 %v1876
      %vm2025 = vweird.f32 %v2018
      %vm2026 = vmor %vm2024, %vm2025
      %v2027 = vsel %vm2026, %v2018, %v2023
      %v2028 = vrsqrt.pop %v1877
      %v2029 = vmul.f32 %v2028, %v1877
      %v2030 = vmul.f32 %v2029, %v2028
      %v2031 = vmul.f32 0.5, %v2030
      %v2032 = vsub.f32 1.5, %v2031
      %v2033 = vmul.f32 %v2028, %v2032
      %vm2034 = vweird.f32 %v1877
      %vm2035 = vweird.f32 %v2028
      %vm2036 = vmor %vm2034, %vm2035
      %v2037 = vsel %vm2036, %v2028, %v2033
      %v2038 = vmul.f32 %v1766, %v1887
      %v2039 = vmul.f32 %v1767, %v1897
      %v2040 = vmul.f32 %v1768, %v1907
      %v2041 = vmul.f32 %v1769, %v1917
      %v2042 = vmul.f32 %v1770, %v1927
      %v2043 = vmul.f32 %v1771, %v1937
      %v2044 = vmul.f32 %v1772, %v1947
      %v2045 = vmul.f32 %v1773, %v1957
      %v2046 = vmul.f32 %v1774, %v1967
      %v2047 = vmul.f32 %v1775, %v1977
      %v2048 = vmul.f32 %v1776, %v1987
      %v2049 = vmul.f32 %v1777, %v1997
      %v2050 = vmul.f32 %v1778, %v2007
      %v2051 = vmul.f32 %v1779, %v2017
      %v2052 = vmul.f32 %v1780, %v2027
      %v2053 = vmul.f32 %v1781, %v2037
      %v2054 = vperm.slane %v1678, 0
      %v2055 = vmul.f32 %v2038, %v2054
      %v2056 = vmul.f32 %v2039, %v2054
      %v2057 = vmul.f32 %v2040, %v2054
      %v2058 = vmul.f32 %v2041, %v2054
      %v2059 = vmul.f32 %v2042, %v2054
      %v2060 = vmul.f32 %v2043, %v2054
      %v2061 = vmul.f32 %v2044, %v2054
      %v2062 = vmul.f32 %v2045, %v2054
      %v2063 = vmul.f32 %v2046, %v2054
      %v2064 = vmul.f32 %v2047, %v2054
      %v2065 = vmul.f32 %v2048, %v2054
      %v2066 = vmul.f32 %v2049, %v2054
      %v2067 = vmul.f32 %v2050, %v2054
      %v2068 = vmul.f32 %v2051, %v2054
      %v2069 = vmul.f32 %v2052, %v2054
      %v2070 = vmul.f32 %v2053, %v2054
      %v2071 = vperm.slane %v1678, 1
      %v2072 = vadd.f32 %v2055, %v2071
      %v2073 = vadd.f32 %v2056, %v2071
      %v2074 = vadd.f32 %v2057, %v2071
      %v2075 = vadd.f32 %v2058, %v2071
      %v2076 = vadd.f32 %v2059, %v2071
      %v2077 = vadd.f32 %v2060, %v2071
      %v2078 = vadd.f32 %v2061, %v2071
      %v2079 = vadd.f32 %v2062, %v2071
      %v2080 = vadd.f32 %v2063, %v2071
      %v2081 = vadd.f32 %v2064, %v2071
      %v2082 = vadd.f32 %v2065, %v2071
      %v2083 = vadd.f32 %v2066, %v2071
      %v2084 = vadd.f32 %v2067, %v2071
      %v2085 = vadd.f32 %v2068, %v2071
      %v2086 = vadd.f32 %v2069, %v2071
      %v2087 = vadd.f32 %v2070, %v2071
      %v2088 = vpack.c.bf16 %v2073, %v2072
      %v2089 = vpack.c.bf16 %v2075, %v2074
      %v2090 = vpack.c.bf16 %v2077, %v2076
      %v2091 = vpack.c.bf16 %v2079, %v2078
      %v2092 = vpack.c.bf16 %v2081, %v2080
      %v2093 = vpack.c.bf16 %v2083, %v2082
      %v2094 = vpack.c.bf16 %v2085, %v2084
      %v2095 = vpack.c.bf16 %v2087, %v2086
      %v2096 = vld [vmem:[%s8] sm:$0xf]
      %v2097 = vld [vmem:[%s8 + $0x4] sm:$0xf]
      %v2098 = vld [vmem:[%s8 + $0x8] sm:$0xf]
      %v2099 = vld [vmem:[%s8 + $0xc] sm:$0xf]
      %v2104 = vunpack.c.l.b16 %v2096
      %v2105 = vunpack.c.l.b16 %v2097
      %v2106 = vunpack.c.l.b16 %v2098
      %v2107 = vunpack.c.l.b16 %v2099
      %v2108 = vpack.c.b16 %v2105, %v2104
      %v2109 = vpack.c.b16 %v2107, %v2106
      %v2113 = vsel %vm622, %v2088, 0
      %v2116 = vsel %vm622, %v2089, 0
      %v2119 = vsel %vm622, %v2090, 0
      %v2122 = vsel %vm622, %v2091, 0
      %v2125 = vsel %vm622, %v2092, 0
      %v2128 = vsel %vm622, %v2093, 0
      %v2131 = vsel %vm622, %v2094, 0
      %v2134 = vsel %vm622, %v2095, 0
      %2136 = vmatpush.bf16.msra.mxu0 0
      %2137 = vmatpush.bf16.msra.mxu0 0
      %2138 = vmatpush.bf16.msra.mxu0 0
      %2139 = vmatpush.bf16.msra.mxu0 0
      %2140 = vmatpush.bf16.msra.mxu0 0
      %2141 = vmatpush.bf16.msra.mxu0 0
      %2142 = vmatpush.bf16.msra.mxu0 %v2109
      %2143 = vmatpush.bf16.msra.mxu0 %v2108
      %2144 = vmatmul.bf16.gmra.mxu0 %v2113
      %v2145 = vpop.f32.mrf.mxu0
      %v2146 = vadd.f32 0.0, %v2145
      %v2147 = vpop.f32.mrf.mxu0
      %v2148 = vadd.f32 0.0, %v2147
      %2149 = vmatmul.bf16.gmra.mxu0 %v2116
      %v2150 = vpop.f32.mrf.mxu0
      %v2151 = vadd.f32 0.0, %v2150
      %v2152 = vpop.f32.mrf.mxu0
      %v2153 = vadd.f32 0.0, %v2152
      %2154 = vmatmul.bf16.gmra.mxu0 %v2119
      %v2155 = vpop.f32.mrf.mxu0
      %v2156 = vadd.f32 0.0, %v2155
      %v2157 = vpop.f32.mrf.mxu0
      %v2158 = vadd.f32 0.0, %v2157
      %2159 = vmatmul.bf16.gmra.mxu0 %v2122
      %v2160 = vpop.f32.mrf.mxu0
      %v2161 = vadd.f32 0.0, %v2160
      %v2162 = vpop.f32.mrf.mxu0
      %v2163 = vadd.f32 0.0, %v2162
      %2164 = vmatmul.bf16.gmra.mxu0 %v2125
      %v2165 = vpop.f32.mrf.mxu0
      %v2166 = vadd.f32 0.0, %v2165
      %v2167 = vpop.f32.mrf.mxu0
      %v2168 = vadd.f32 0.0, %v2167
      %2169 = vmatmul.bf16.gmra.mxu0 %v2128
      %v2170 = vpop.f32.mrf.mxu0
      %v2171 = vadd.f32 0.0, %v2170
      %v2172 = vpop.f32.mrf.mxu0
      %v2173 = vadd.f32 0.0, %v2172
      %2174 = vmatmul.bf16.gmra.mxu0 %v2131
      %v2175 = vpop.f32.mrf.mxu0
      %v2176 = vadd.f32 0.0, %v2175
      %v2177 = vpop.f32.mrf.mxu0
      %v2178 = vadd.f32 0.0, %v2177
      %2179 = vmatmul.bf16.gmra.mxu0 %v2134
      %v2180 = vpop.f32.mrf.mxu0
      %v2181 = vadd.f32 0.0, %v2180
      %v2182 = vpop.f32.mrf.mxu0
      %v2183 = vadd.f32 0.0, %v2182
      %2184 = vdwg.mxu0
      %v2185 = vld [vmem:[%s573] sm:$0xff]
      %v2186 = vld [vmem:[%s573 + $0x8] sm:$0xff]
      %v2187 = vld [vmem:[%s573 + $0x10] sm:$0xff]
      %v2188 = vld [vmem:[%s573 + $0x18] sm:$0xff]
      %v2189 = vld [vmem:[%s573 + $0x20] sm:$0xff]
      %v2190 = vld [vmem:[%s573 + $0x28] sm:$0xff]
      %v2191 = vld [vmem:[%s573 + $0x30] sm:$0xff]
      %v2192 = vld [vmem:[%s573 + $0x38] sm:$0xff]
      %v2193 = vld [vmem:[%s573 + $0x40] sm:$0xff]
      %v2194 = vld [vmem:[%s573 + $0x48] sm:$0xff]
      %v2195 = vld [vmem:[%s573 + $0x50] sm:$0xff]
      %v2196 = vld [vmem:[%s573 + $0x58] sm:$0xff]
      %v2197 = vld [vmem:[%s573 + $0x60] sm:$0xff]
      %v2198 = vld [vmem:[%s573 + $0x68] sm:$0xff]
      %v2199 = vld [vmem:[%s573 + $0x70] sm:$0xff]
      %v2200 = vld [vmem:[%s573 + $0x78] sm:$0xff]
      %vm2201 = vcmp.ne.s32.totalorder %v2185, 0
      %vm2202 = vcmp.ne.s32.totalorder %v2186, 0
      %vm2203 = vcmp.ne.s32.totalorder %v2187, 0
      %vm2204 = vcmp.ne.s32.totalorder %v2188, 0
      %vm2205 = vcmp.ne.s32.totalorder %v2189, 0
      %vm2206 = vcmp.ne.s32.totalorder %v2190, 0
      %vm2207 = vcmp.ne.s32.totalorder %v2191, 0
      %vm2208 = vcmp.ne.s32.totalorder %v2192, 0
      %vm2209 = vcmp.ne.s32.totalorder %v2193, 0
      %vm2210 = vcmp.ne.s32.totalorder %v2194, 0
      %vm2211 = vcmp.ne.s32.totalorder %v2195, 0
      %vm2212 = vcmp.ne.s32.totalorder %v2196, 0
      %vm2213 = vcmp.ne.s32.totalorder %v2197, 0
      %vm2214 = vcmp.ne.s32.totalorder %v2198, 0
      %vm2215 = vcmp.ne.s32.totalorder %v2199, 0
      %vm2216 = vcmp.ne.s32.totalorder %v2200, 0
      %vm2217 = vcmp.lt.s32.totalorder %v721, 9
      %v2218 = vpack.c.bf16 %v2146, %v2146
      %v2219 = vpack.c.bf16 %v2148, %v2148
      %v2220 = vpack.c.bf16 %v2151, %v2151
      %v2221 = vpack.c.bf16 %v2153, %v2153
      %v2222 = vpack.c.bf16 %v2156, %v2156
      %v2223 = vpack.c.bf16 %v2158, %v2158
      %v2224 = vpack.c.bf16 %v2161, %v2161
      %v2225 = vpack.c.bf16 %v2163, %v2163
      %v2226 = vpack.c.bf16 %v2166, %v2166
      %v2227 = vpack.c.bf16 %v2168, %v2168
      %v2228 = vpack.c.bf16 %v2171, %v2171
      %v2229 = vpack.c.bf16 %v2173, %v2173
      %v2230 = vpack.c.bf16 %v2176, %v2176
      %v2231 = vpack.c.bf16 %v2178, %v2178
      %v2232 = vpack.c.bf16 %v2181, %v2181
      %v2233 = vpack.c.bf16 %v2183, %v2183
      %v2236 = vunpack.c.l.b16 %v2218
      %v2237 = vunpack.c.l.b16 %v2219
      %v2238 = vpack.c.b16 %v2237, %v2236
      %2239 = vrot.lane.b32.xlu0 %v2238, 96
      %v2240 = vpop.permute.xlu0 %2239
      %v2242 = vsel %vm985, %v2238, 0
      %v2245 = vsel %vm985, %v2240, 0
      %2247 = vmatpush.bf16.xpose.msra.mxu0 0
      %2248 = vmatpush.bf16.xpose.msra.mxu0 0
      %2249 = vmatpush.bf16.xpose.msra.mxu0 0
      %2250 = vmatpush.bf16.xpose.msra.mxu0 0
      %2251 = vmatpush.bf16.xpose.msra.mxu0 0
      %2252 = vmatpush.bf16.xpose.msra.mxu0 0
      %2253 = vmatpush.bf16.xpose.msra.mxu0 0
      %2254 = vmatpush.bf16.xpose.msra.mxu0 %v2245
      %2255 = vmatmul.bf16.gmra.mxu0 %v2242
      %v2256 = vpop.f32.mrf.mxu0
      %v2257 = vadd.f32 0.0, %v2256
      %v2258 = vpop.f32.mrf.mxu0
      %v2259 = vadd.f32 0.0, %v2258
      %2260 = vdwg.mxu0
      %v2263 = vunpack.c.l.b16 %v2220
      %v2264 = vunpack.c.l.b16 %v2221
      %v2265 = vpack.c.b16 %v2264, %v2263
      %2266 = vrot.lane.b32.xlu0 %v2265, 96
      %v2267 = vpop.permute.xlu0 %2266
      %v2269 = vsel %vm985, %v2265, 0
      %v2272 = vsel %vm985, %v2267, 0
      %2274 = vmatpush.bf16.xpose.msra.mxu0 0
      %2275 = vmatpush.bf16.xpose.msra.mxu0 0
      %2276 = vmatpush.bf16.xpose.msra.mxu0 0
      %2277 = vmatpush.bf16.xpose.msra.mxu0 0
      %2278 = vmatpush.bf16.xpose.msra.mxu0 0
      %2279 = vmatpush.bf16.xpose.msra.mxu0 0
      %2280 = vmatpush.bf16.xpose.msra.mxu0 0
      %2281 = vmatpush.bf16.xpose.msra.mxu0 %v2272
      %2282 = vmatmul.bf16.gmra.mxu0 %v2269
      %v2283 = vpop.f32.mrf.mxu0
      %v2284 = vadd.f32 0.0, %v2283
      %v2285 = vpop.f32.mrf.mxu0
      %v2286 = vadd.f32 0.0, %v2285
      %2287 = vdwg.mxu0
      %v2290 = vunpack.c.l.b16 %v2222
      %v2291 = vunpack.c.l.b16 %v2223
      %v2292 = vpack.c.b16 %v2291, %v2290
      %2293 = vrot.lane.b32.xlu0 %v2292, 96
      %v2294 = vpop.permute.xlu0 %2293
      %v2296 = vsel %vm985, %v2292, 0
      %v2299 = vsel %vm985, %v2294, 0
      %2301 = vmatpush.bf16.xpose.msra.mxu0 0
      %2302 = vmatpush.bf16.xpose.msra.mxu0 0
      %2303 = vmatpush.bf16.xpose.msra.mxu0 0
      %2304 = vmatpush.bf16.xpose.msra.mxu0 0
      %2305 = vmatpush.bf16.xpose.msra.mxu0 0
      %2306 = vmatpush.bf16.xpose.msra.mxu0 0
      %2307 = vmatpush.bf16.xpose.msra.mxu0 0
      %2308 = vmatpush.bf16.xpose.msra.mxu0 %v2299
      %2309 = vmatmul.bf16.gmra.mxu0 %v2296
      %v2310 = vpop.f32.mrf.mxu0
      %v2311 = vadd.f32 0.0, %v2310
      %v2312 = vpop.f32.mrf.mxu0
      %v2313 = vadd.f32 0.0, %v2312
      %2314 = vdwg.mxu0
      %v2317 = vunpack.c.l.b16 %v2224
      %v2318 = vunpack.c.l.b16 %v2225
      %v2319 = vpack.c.b16 %v2318, %v2317
      %2320 = vrot.lane.b32.xlu0 %v2319, 96
      %v2321 = vpop.permute.xlu0 %2320
      %v2323 = vsel %vm985, %v2319, 0
      %v2326 = vsel %vm985, %v2321, 0
      %2328 = vmatpush.bf16.xpose.msra.mxu0 0
      %2329 = vmatpush.bf16.xpose.msra.mxu0 0
      %2330 = vmatpush.bf16.xpose.msra.mxu0 0
      %2331 = vmatpush.bf16.xpose.msra.mxu0 0
      %2332 = vmatpush.bf16.xpose.msra.mxu0 0
      %2333 = vmatpush.bf16.xpose.msra.mxu0 0
      %2334 = vmatpush.bf16.xpose.msra.mxu0 0
      %2335 = vmatpush.bf16.xpose.msra.mxu0 %v2326
      %2336 = vmatmul.bf16.gmra.mxu0 %v2323
      %v2337 = vpop.f32.mrf.mxu0
      %v2338 = vadd.f32 0.0, %v2337
      %v2339 = vpop.f32.mrf.mxu0
      %v2340 = vadd.f32 0.0, %v2339
      %2341 = vdwg.mxu0
      %v2344 = vunpack.c.l.b16 %v2226
      %v2345 = vunpack.c.l.b16 %v2227
      %v2346 = vpack.c.b16 %v2345, %v2344
      %2347 = vrot.lane.b32.xlu0 %v2346, 96
      %v2348 = vpop.permute.xlu0 %2347
      %v2350 = vsel %vm985, %v2346, 0
      %v2353 = vsel %vm985, %v2348, 0
      %2355 = vmatpush.bf16.xpose.msra.mxu0 0
      %2356 = vmatpush.bf16.xpose.msra.mxu0 0
      %2357 = vmatpush.bf16.xpose.msra.mxu0 0
      %2358 = vmatpush.bf16.xpose.msra.mxu0 0
      %2359 = vmatpush.bf16.xpose.msra.mxu0 0
      %2360 = vmatpush.bf16.xpose.msra.mxu0 0
      %2361 = vmatpush.bf16.xpose.msra.mxu0 0
      %2362 = vmatpush.bf16.xpose.msra.mxu0 %v2353
      %2363 = vmatmul.bf16.gmra.mxu0 %v2350
      %v2364 = vpop.f32.mrf.mxu0
      %v2365 = vadd.f32 0.0, %v2364
      %v2366 = vpop.f32.mrf.mxu0
      %v2367 = vadd.f32 0.0, %v2366
      %2368 = vdwg.mxu0
      %v2371 = vunpack.c.l.b16 %v2228
      %v2372 = vunpack.c.l.b16 %v2229
      %v2373 = vpack.c.b16 %v2372, %v2371
      %2374 = vrot.lane.b32.xlu0 %v2373, 96
      %v2375 = vpop.permute.xlu0 %2374
      %v2377 = vsel %vm985, %v2373, 0
      %v2380 = vsel %vm985, %v2375, 0
      %2382 = vmatpush.bf16.xpose.msra.mxu0 0
      %2383 = vmatpush.bf16.xpose.msra.mxu0 0
      %2384 = vmatpush.bf16.xpose.msra.mxu0 0
      %2385 = vmatpush.bf16.xpose.msra.mxu0 0
      %2386 = vmatpush.bf16.xpose.msra.mxu0 0
      %2387 = vmatpush.bf16.xpose.msra.mxu0 0
      %2388 = vmatpush.bf16.xpose.msra.mxu0 0
      %2389 = vmatpush.bf16.xpose.msra.mxu0 %v2380
      %2390 = vmatmul.bf16.gmra.mxu0 %v2377
      %v2391 = vpop.f32.mrf.mxu0
      %v2392 = vadd.f32 0.0, %v2391
      %v2393 = vpop.f32.mrf.mxu0
      %v2394 = vadd.f32 0.0, %v2393
      %2395 = vdwg.mxu0
      %v2398 = vunpack.c.l.b16 %v2230
      %v2399 = vunpack.c.l.b16 %v2231
      %v2400 = vpack.c.b16 %v2399, %v2398
      %2401 = vrot.lane.b32.xlu0 %v2400, 96
      %v2402 = vpop.permute.xlu0 %2401
      %v2404 = vsel %vm985, %v2400, 0
      %v2407 = vsel %vm985, %v2402, 0
      %2409 = vmatpush.bf16.xpose.msra.mxu0 0
      %2410 = vmatpush.bf16.xpose.msra.mxu0 0
      %2411 = vmatpush.bf16.xpose.msra.mxu0 0
      %2412 = vmatpush.bf16.xpose.msra.mxu0 0
      %2413 = vmatpush.bf16.xpose.msra.mxu0 0
      %2414 = vmatpush.bf16.xpose.msra.mxu0 0
      %2415 = vmatpush.bf16.xpose.msra.mxu0 0
      %2416 = vmatpush.bf16.xpose.msra.mxu0 %v2407
      %2417 = vmatmul.bf16.gmra.mxu0 %v2404
      %v2418 = vpop.f32.mrf.mxu0
      %v2419 = vadd.f32 0.0, %v2418
      %v2420 = vpop.f32.mrf.mxu0
      %v2421 = vadd.f32 0.0, %v2420
      %2422 = vdwg.mxu0
      %v2425 = vunpack.c.l.b16 %v2232
      %v2426 = vunpack.c.l.b16 %v2233
      %v2427 = vpack.c.b16 %v2426, %v2425
      %2428 = vrot.lane.b32.xlu0 %v2427, 96
      %v2429 = vpop.permute.xlu0 %2428
      %v2431 = vsel %vm985, %v2427, 0
      %v2434 = vsel %vm985, %v2429, 0
      %2436 = vmatpush.bf16.xpose.msra.mxu0 0
      %2437 = vmatpush.bf16.xpose.msra.mxu0 0
      %2438 = vmatpush.bf16.xpose.msra.mxu0 0
      %2439 = vmatpush.bf16.xpose.msra.mxu0 0
      %2440 = vmatpush.bf16.xpose.msra.mxu0 0
      %2441 = vmatpush.bf16.xpose.msra.mxu0 0
      %2442 = vmatpush.bf16.xpose.msra.mxu0 0
      %2443 = vmatpush.bf16.xpose.msra.mxu0 %v2434
      %2444 = vmatmul.bf16.gmra.mxu0 %v2431
      %v2445 = vpop.f32.mrf.mxu0
      %v2446 = vadd.f32 0.0, %v2445
      %v2447 = vpop.f32.mrf.mxu0
      %v2448 = vadd.f32 0.0, %v2447
      %2449 = vdwg.mxu0
      %v2450 = vmul.f32 %v2257, 0.35355338
      %v2451 = vmul.f32 %v2259, 0.35355338
      %v2452 = vmul.f32 %v2284, 0.35355338
      %v2453 = vmul.f32 %v2286, 0.35355338
      %v2454 = vmul.f32 %v2311, 0.35355338
      %v2455 = vmul.f32 %v2313, 0.35355338
      %v2456 = vmul.f32 %v2338, 0.35355338
      %v2457 = vmul.f32 %v2340, 0.35355338
      %v2458 = vmul.f32 %v2365, 0.35355338
      %v2459 = vmul.f32 %v2367, 0.35355338
      %v2460 = vmul.f32 %v2392, 0.35355338
      %v2461 = vmul.f32 %v2394, 0.35355338
      %v2462 = vmul.f32 %v2419, 0.35355338
      %v2463 = vmul.f32 %v2421, 0.35355338
      %v2464 = vmul.f32 %v2446, 0.35355338
      %v2465 = vmul.f32 %v2448, 0.35355338
      %v2466 = vsel %vm2201, 1, 0
      %v2467 = vsel %vm2202, 1, 0
      %v2468 = vsel %vm2203, 1, 0
      %v2469 = vsel %vm2204, 1, 0
      %v2470 = vsel %vm2205, 1, 0
      %v2471 = vsel %vm2206, 1, 0
      %v2472 = vsel %vm2207, 1, 0
      %v2473 = vsel %vm2208, 1, 0
      %v2474 = vsel %vm2209, 1, 0
      %v2475 = vsel %vm2210, 1, 0
      %v2476 = vsel %vm2211, 1, 0
      %v2477 = vsel %vm2212, 1, 0
      %v2478 = vsel %vm2213, 1, 0
      %v2479 = vsel %vm2214, 1, 0
      %v2480 = vsel %vm2215, 1, 0
      %v2481 = vsel %vm2216, 1, 0
      %2482 = vset.pattern.permute.xlu0 0
      %2483 = vperm.xlu0 %2482, %v2466
      %v2484 = vpop.permute.xlu0 %2483
      %2485 = vset.pattern.permute.xlu0 0
      %2486 = vperm.xlu0 %2485, %v2467
      %v2487 = vpop.permute.xlu0 %2486
      %2488 = vset.pattern.permute.xlu0 0
      %2489 = vperm.xlu0 %2488, %v2468
      %v2490 = vpop.permute.xlu0 %2489
      %2491 = vset.pattern.permute.xlu0 0
      %2492 = vperm.xlu0 %2491, %v2469
      %v2493 = vpop.permute.xlu0 %2492
      %2494 = vset.pattern.permute.xlu0 0
      %2495 = vperm.xlu0 %2494, %v2470
      %v2496 = vpop.permute.xlu0 %2495
      %2497 = vset.pattern.permute.xlu0 0
      %2498 = vperm.xlu0 %2497, %v2471
      %v2499 = vpop.permute.xlu0 %2498
      %2500 = vset.pattern.permute.xlu0 0
      %2501 = vperm.xlu0 %2500, %v2472
      %v2502 = vpop.permute.xlu0 %2501
      %2503 = vset.pattern.permute.xlu0 0
      %2504 = vperm.xlu0 %2503, %v2473
      %v2505 = vpop.permute.xlu0 %2504
      %2506 = vset.pattern.permute.xlu0 0
      %2507 = vperm.xlu0 %2506, %v2474
      %v2508 = vpop.permute.xlu0 %2507
      %2509 = vset.pattern.permute.xlu0 0
      %2510 = vperm.xlu0 %2509, %v2475
      %v2511 = vpop.permute.xlu0 %2510
      %2512 = vset.pattern.permute.xlu0 0
      %2513 = vperm.xlu0 %2512, %v2476
      %v2514 = vpop.permute.xlu0 %2513
      %2515 = vset.pattern.permute.xlu0 0
      %2516 = vperm.xlu0 %2515, %v2477
      %v2517 = vpop.permute.xlu0 %2516
      %2518 = vset.pattern.permute.xlu0 0
      %2519 = vperm.xlu0 %2518, %v2478
      %v2520 = vpop.permute.xlu0 %2519
      %2521 = vset.pattern.permute.xlu0 0
      %2522 = vperm.xlu0 %2521, %v2479
      %v2523 = vpop.permute.xlu0 %2522
      %2524 = vset.pattern.permute.xlu0 0
      %2525 = vperm.xlu0 %2524, %v2480
      %v2526 = vpop.permute.xlu0 %2525
      %2527 = vset.pattern.permute.xlu0 0
      %2528 = vperm.xlu0 %2527, %v2481
      %v2529 = vpop.permute.xlu0 %2528
      %vm2530 = vcmp.eq.s32.totalorder %v2484, 1
      %vm2531 = vcmp.eq.s32.totalorder %v2487, 1
      %vm2532 = vcmp.eq.s32.totalorder %v2490, 1
      %vm2533 = vcmp.eq.s32.totalorder %v2493, 1
      %vm2534 = vcmp.eq.s32.totalorder %v2496, 1
      %vm2535 = vcmp.eq.s32.totalorder %v2499, 1
      %vm2536 = vcmp.eq.s32.totalorder %v2502, 1
      %vm2537 = vcmp.eq.s32.totalorder %v2505, 1
      %vm2538 = vcmp.eq.s32.totalorder %v2508, 1
      %vm2539 = vcmp.eq.s32.totalorder %v2511, 1
      %vm2540 = vcmp.eq.s32.totalorder %v2514, 1
      %vm2541 = vcmp.eq.s32.totalorder %v2517, 1
      %vm2542 = vcmp.eq.s32.totalorder %v2520, 1
      %vm2543 = vcmp.eq.s32.totalorder %v2523, 1
      %vm2544 = vcmp.eq.s32.totalorder %v2526, 1
      %vm2545 = vcmp.eq.s32.totalorder %v2529, 1
      %v2546 = vsel %vm2530, -1e+09, %v2450
      %v2547 = vsel %vm2531, -1e+09, %v2451
      %v2548 = vsel %vm2532, -1e+09, %v2452
      %v2549 = vsel %vm2533, -1e+09, %v2453
      %v2550 = vsel %vm2534, -1e+09, %v2454
      %v2551 = vsel %vm2535, -1e+09, %v2455
      %v2552 = vsel %vm2536, -1e+09, %v2456
      %v2553 = vsel %vm2537, -1e+09, %v2457
      %v2554 = vsel %vm2538, -1e+09, %v2458
      %v2555 = vsel %vm2539, -1e+09, %v2459
      %v2556 = vsel %vm2540, -1e+09, %v2460
      %v2557 = vsel %vm2541, -1e+09, %v2461
      %v2558 = vsel %vm2542, -1e+09, %v2462
      %v2559 = vsel %vm2543, -1e+09, %v2463
      %v2560 = vsel %vm2544, -1e+09, %v2464
      %v2561 = vsel %vm2545, -1e+09, %v2465
      %v2562 = vsel %vm2217, 1, 0
      %vm2563 = vcmp.eq.s32.totalorder %v2562, 1
      %v2564 = vsel %vm2563, %v2546, -1e+30
      %v2565 = vsel %vm2563, %v2547, -1e+30
      %v2566 = vsel %vm2563, %v2548, -1e+30
      %v2567 = vsel %vm2563, %v2549, -1e+30
      %v2568 = vsel %vm2563, %v2550, -1e+30
      %v2569 = vsel %vm2563, %v2551, -1e+30
      %v2570 = vsel %vm2563, %v2552, -1e+30
      %v2571 = vsel %vm2563, %v2553, -1e+30
      %v2572 = vsel %vm2563, %v2554, -1e+30
      %v2573 = vsel %vm2563, %v2555, -1e+30
      %v2574 = vsel %vm2563, %v2556, -1e+30
      %v2575 = vsel %vm2563, %v2557, -1e+30
      %v2576 = vsel %vm2563, %v2558, -1e+30
      %v2577 = vsel %vm2563, %v2559, -1e+30
      %v2578 = vsel %vm2563, %v2560, -1e+30
      %v2579 = vsel %vm2563, %v2561, -1e+30
      %vm2580 = vcmask 130048
      %v2581 = vsel %vm2580, %v2564, -inf
      %2582 = vmax.xlane.f32.xlu0 %v2581
      %v2583 = vpop.xlane.xlu0 %2582
      %v2584 = vsel %vm2580, %v2565, -inf
      %2585 = vmax.xlane.f32.xlu0 %v2584
      %v2586 = vpop.xlane.xlu0 %2585
      %v2587 = vsel %vm2580, %v2566, -inf
      %2588 = vmax.xlane.f32.xlu0 %v2587
      %v2589 = vpop.xlane.xlu0 %2588
      %v2590 = vsel %vm2580, %v2567, -inf
      %2591 = vmax.xlane.f32.xlu0 %v2590
      %v2592 = vpop.xlane.xlu0 %2591
      %v2593 = vsel %vm2580, %v2568, -inf
      %2594 = vmax.xlane.f32.xlu0 %v2593
      %v2595 = vpop.xlane.xlu0 %2594
      %v2596 = vsel %vm2580, %v2569, -inf
      %2597 = vmax.xlane.f32.xlu0 %v2596
      %v2598 = vpop.xlane.xlu0 %2597
      %v2599 = vsel %vm2580, %v2570, -inf
      %2600 = vmax.xlane.f32.xlu0 %v2599
      %v2601 = vpop.xlane.xlu0 %2600
      %v2602 = vsel %vm2580, %v2571, -inf
      %2603 = vmax.xlane.f32.xlu0 %v2602
      %v2604 = vpop.xlane.xlu0 %2603
      %v2605 = vsel %vm2580, %v2572, -inf
      %2606 = vmax.xlane.f32.xlu0 %v2605
      %v2607 = vpop.xlane.xlu0 %2606
      %v2608 = vsel %vm2580, %v2573, -inf
      %2609 = vmax.xlane.f32.xlu0 %v2608
      %v2610 = vpop.xlane.xlu0 %2609
      %v2611 = vsel %vm2580, %v2574, -inf
      %2612 = vmax.xlane.f32.xlu0 %v2611
      %v2613 = vpop.xlane.xlu0 %2612
      %v2614 = vsel %vm2580, %v2575, -inf
      %2615 = vmax.xlane.f32.xlu0 %v2614
      %v2616 = vpop.xlane.xlu0 %2615
      %v2617 = vsel %vm2580, %v2576, -inf
      %2618 = vmax.xlane.f32.xlu0 %v2617
      %v2619 = vpop.xlane.xlu0 %2618
      %v2620 = vsel %vm2580, %v2577, -inf
      %2621 = vmax.xlane.f32.xlu0 %v2620
      %v2622 = vpop.xlane.xlu0 %2621
      %v2623 = vsel %vm2580, %v2578, -inf
      %2624 = vmax.xlane.f32.xlu0 %v2623
      %v2625 = vpop.xlane.xlu0 %2624
      %v2626 = vsel %vm2580, %v2579, -inf
      %2627 = vmax.xlane.f32.xlu0 %v2626
      %v2628 = vpop.xlane.xlu0 %2627
      %v2629 = vsub.f32 %v2564, %v2583
      %v2630 = vsub.f32 %v2565, %v2586
      %v2631 = vsub.f32 %v2566, %v2589
      %v2632 = vsub.f32 %v2567, %v2592
      %v2633 = vsub.f32 %v2568, %v2595
      %v2634 = vsub.f32 %v2569, %v2598
      %v2635 = vsub.f32 %v2570, %v2601
      %v2636 = vsub.f32 %v2571, %v2604
      %v2637 = vsub.f32 %v2572, %v2607
      %v2638 = vsub.f32 %v2573, %v2610
      %v2639 = vsub.f32 %v2574, %v2613
      %v2640 = vsub.f32 %v2575, %v2616
      %v2641 = vsub.f32 %v2576, %v2619
      %v2642 = vsub.f32 %v2577, %v2622
      %v2643 = vsub.f32 %v2578, %v2625
      %v2644 = vsub.f32 %v2579, %v2628
      %v2645 = vmul.f32 %v2629, 1.442695
      %v2646 = vpow.pop %v2645
      %v2647 = vmul.f32 %v2630, 1.442695
      %v2648 = vpow.pop %v2647
      %v2649 = vmul.f32 %v2631, 1.442695
      %v2650 = vpow.pop %v2649
      %v2651 = vmul.f32 %v2632, 1.442695
      %v2652 = vpow.pop %v2651
      %v2653 = vmul.f32 %v2633, 1.442695
      %v2654 = vpow.pop %v2653
      %v2655 = vmul.f32 %v2634, 1.442695
      %v2656 = vpow.pop %v2655
      %v2657 = vmul.f32 %v2635, 1.442695
      %v2658 = vpow.pop %v2657
      %v2659 = vmul.f32 %v2636, 1.442695
      %v2660 = vpow.pop %v2659
      %v2661 = vmul.f32 %v2637, 1.442695
      %v2662 = vpow.pop %v2661
      %v2663 = vmul.f32 %v2638, 1.442695
      %v2664 = vpow.pop %v2663
      %v2665 = vmul.f32 %v2639, 1.442695
      %v2666 = vpow.pop %v2665
      %v2667 = vmul.f32 %v2640, 1.442695
      %v2668 = vpow.pop %v2667
      %v2669 = vmul.f32 %v2641, 1.442695
      %v2670 = vpow.pop %v2669
      %v2671 = vmul.f32 %v2642, 1.442695
      %v2672 = vpow.pop %v2671
      %v2673 = vmul.f32 %v2643, 1.442695
      %v2674 = vpow.pop %v2673
      %v2675 = vmul.f32 %v2644, 1.442695
      %v2676 = vpow.pop %v2675
      %v2677 = vsel %vm2580, %v2646, 0.0
      %2678 = vadd.xlane.f32.xlu0 %v2677
      %v2679 = vpop.xlane.xlu0 %2678
      %v2680 = vsel %vm2580, %v2648, 0.0
      %2681 = vadd.xlane.f32.xlu0 %v2680
      %v2682 = vpop.xlane.xlu0 %2681
      %v2683 = vsel %vm2580, %v2650, 0.0
      %2684 = vadd.xlane.f32.xlu0 %v2683
      %v2685 = vpop.xlane.xlu0 %2684
      %v2686 = vsel %vm2580, %v2652, 0.0
      %2687 = vadd.xlane.f32.xlu0 %v2686
      %v2688 = vpop.xlane.xlu0 %2687
      %v2689 = vsel %vm2580, %v2654, 0.0
      %2690 = vadd.xlane.f32.xlu0 %v2689
      %v2691 = vpop.xlane.xlu0 %2690
      %v2692 = vsel %vm2580, %v2656, 0.0
      %2693 = vadd.xlane.f32.xlu0 %v2692
      %v2694 = vpop.xlane.xlu0 %2693
      %v2695 = vsel %vm2580, %v2658, 0.0
      %2696 = vadd.xlane.f32.xlu0 %v2695
      %v2697 = vpop.xlane.xlu0 %2696
      %v2698 = vsel %vm2580, %v2660, 0.0
      %2699 = vadd.xlane.f32.xlu0 %v2698
      %v2700 = vpop.xlane.xlu0 %2699
      %v2701 = vsel %vm2580, %v2662, 0.0
      %2702 = vadd.xlane.f32.xlu0 %v2701
      %v2703 = vpop.xlane.xlu0 %2702
      %v2704 = vsel %vm2580, %v2664, 0.0
      %2705 = vadd.xlane.f32.xlu0 %v2704
      %v2706 = vpop.xlane.xlu0 %2705
      %v2707 = vsel %vm2580, %v2666, 0.0
      %2708 = vadd.xlane.f32.xlu0 %v2707
      %v2709 = vpop.xlane.xlu0 %2708
      %v2710 = vsel %vm2580, %v2668, 0.0
      %2711 = vadd.xlane.f32.xlu0 %v2710
      %v2712 = vpop.xlane.xlu0 %2711
      %v2713 = vsel %vm2580, %v2670, 0.0
      %2714 = vadd.xlane.f32.xlu0 %v2713
      %v2715 = vpop.xlane.xlu0 %2714
      %v2716 = vsel %vm2580, %v2672, 0.0
      %2717 = vadd.xlane.f32.xlu0 %v2716
      %v2718 = vpop.xlane.xlu0 %2717
      %v2719 = vsel %vm2580, %v2674, 0.0
      %2720 = vadd.xlane.f32.xlu0 %v2719
      %v2721 = vpop.xlane.xlu0 %2720
      %v2722 = vsel %vm2580, %v2676, 0.0
      %2723 = vadd.xlane.f32.xlu0 %v2722
      %v2724 = vpop.xlane.xlu0 %2723
      %v2725 = vrcp.pop %v2679
      %v2726 = vrcp.pop %v2682
      %v2727 = vrcp.pop %v2685
      %v2728 = vrcp.pop %v2688
      %v2729 = vrcp.pop %v2691
      %v2730 = vrcp.pop %v2694
      %v2731 = vrcp.pop %v2697
      %v2732 = vrcp.pop %v2700
      %v2733 = vrcp.pop %v2703
      %v2734 = vrcp.pop %v2706
      %v2735 = vrcp.pop %v2709
      %v2736 = vrcp.pop %v2712
      %v2737 = vrcp.pop %v2715
      %v2738 = vrcp.pop %v2718
      %v2739 = vrcp.pop %v2721
      %v2740 = vrcp.pop %v2724
      %v2741 = vmul.f32 %v2646, %v2725
      %v2742 = vmul.f32 %v2648, %v2726
      %v2743 = vmul.f32 %v2650, %v2727
      %v2744 = vmul.f32 %v2652, %v2728
      %v2745 = vmul.f32 %v2654, %v2729
      %v2746 = vmul.f32 %v2656, %v2730
      %v2747 = vmul.f32 %v2658, %v2731
      %v2748 = vmul.f32 %v2660, %v2732
      %v2749 = vmul.f32 %v2662, %v2733
      %v2750 = vmul.f32 %v2664, %v2734
      %v2751 = vmul.f32 %v2666, %v2735
      %v2752 = vmul.f32 %v2668, %v2736
      %v2753 = vmul.f32 %v2670, %v2737
      %v2754 = vmul.f32 %v2672, %v2738
      %v2755 = vmul.f32 %v2674, %v2739
      %v2756 = vmul.f32 %v2676, %v2740
      %v2757 = vpack.c.bf16 %v2741, %v2741
      %v2758 = vpack.c.bf16 %v2742, %v2742
      %v2759 = vpack.c.bf16 %v2743, %v2743
      %v2760 = vpack.c.bf16 %v2744, %v2744
      %v2761 = vpack.c.bf16 %v2745, %v2745
      %v2762 = vpack.c.bf16 %v2746, %v2746
      %v2763 = vpack.c.bf16 %v2747, %v2747
      %v2764 = vpack.c.bf16 %v2748, %v2748
      %v2765 = vpack.c.bf16 %v2749, %v2749
      %v2766 = vpack.c.bf16 %v2750, %v2750
      %v2767 = vpack.c.bf16 %v2751, %v2751
      %v2768 = vpack.c.bf16 %v2752, %v2752
      %v2769 = vpack.c.bf16 %v2753, %v2753
      %v2770 = vpack.c.bf16 %v2754, %v2754
      %v2771 = vpack.c.bf16 %v2755, %v2755
      %v2772 = vpack.c.bf16 %v2756, %v2756
      %v2775 = vunpack.c.l.b16 %v2757
      %v2776 = vunpack.c.l.b16 %v2758
      %v2777 = vpack.c.b16 %v2776, %v2775
      %2778 = vrot.lane.b32.xlu0 %v2238, 64
      %v2779 = vpop.permute.xlu0 %2778
      %v2782 = vsel %vm2580, %v2777, 0
      %2784 = vmatpush.bf16.msra.mxu0 0
      %2785 = vmatpush.bf16.msra.mxu0 0
      %2786 = vmatpush.bf16.msra.mxu0 0
      %2787 = vmatpush.bf16.msra.mxu0 0
      %2788 = vmatpush.bf16.msra.mxu0 0
      %2789 = vmatpush.bf16.msra.mxu0 0
      %2790 = vmatpush.bf16.msra.mxu0 0
      %2791 = vmatpush.bf16.msra.mxu0 %v2779
      %2792 = vmatmul.bf16.gmra.mxu0 %v2782
      %v2793 = vpop.f32.mrf.mxu0
      %v2794 = vadd.f32 0.0, %v2793
      %v2795 = vpop.f32.mrf.mxu0
      %v2796 = vadd.f32 0.0, %v2795
      %2797 = vdwg.mxu0
      %v2800 = vunpack.c.l.b16 %v2759
      %v2801 = vunpack.c.l.b16 %v2760
      %v2802 = vpack.c.b16 %v2801, %v2800
      %2803 = vrot.lane.b32.xlu0 %v2265, 64
      %v2804 = vpop.permute.xlu0 %2803
      %v2807 = vsel %vm2580, %v2802, 0
      %2809 = vmatpush.bf16.msra.mxu0 0
      %2810 = vmatpush.bf16.msra.mxu0 0
      %2811 = vmatpush.bf16.msra.mxu0 0
      %2812 = vmatpush.bf16.msra.mxu0 0
      %2813 = vmatpush.bf16.msra.mxu0 0
      %2814 = vmatpush.bf16.msra.mxu0 0
      %2815 = vmatpush.bf16.msra.mxu0 0
      %2816 = vmatpush.bf16.msra.mxu0 %v2804
      %2817 = vmatmul.bf16.gmra.mxu0 %v2807
      %v2818 = vpop.f32.mrf.mxu0
      %v2819 = vadd.f32 0.0, %v2818
      %v2820 = vpop.f32.mrf.mxu0
      %v2821 = vadd.f32 0.0, %v2820
      %2822 = vdwg.mxu0
      %v2825 = vunpack.c.l.b16 %v2761
      %v2826 = vunpack.c.l.b16 %v2762
      %v2827 = vpack.c.b16 %v2826, %v2825
      %2828 = vrot.lane.b32.xlu0 %v2292, 64
      %v2829 = vpop.permute.xlu0 %2828
      %v2832 = vsel %vm2580, %v2827, 0
      %2834 = vmatpush.bf16.msra.mxu0 0
      %2835 = vmatpush.bf16.msra.mxu0 0
      %2836 = vmatpush.bf16.msra.mxu0 0
      %2837 = vmatpush.bf16.msra.mxu0 0
      %2838 = vmatpush.bf16.msra.mxu0 0
      %2839 = vmatpush.bf16.msra.mxu0 0
      %2840 = vmatpush.bf16.msra.mxu0 0
      %2841 = vmatpush.bf16.msra.mxu0 %v2829
      %2842 = vmatmul.bf16.gmra.mxu0 %v2832
      %v2843 = vpop.f32.mrf.mxu0
      %v2844 = vadd.f32 0.0, %v2843
      %v2845 = vpop.f32.mrf.mxu0
      %v2846 = vadd.f32 0.0, %v2845
      %2847 = vdwg.mxu0
      %v2850 = vunpack.c.l.b16 %v2763
      %v2851 = vunpack.c.l.b16 %v2764
      %v2852 = vpack.c.b16 %v2851, %v2850
      %2853 = vrot.lane.b32.xlu0 %v2319, 64
      %v2854 = vpop.permute.xlu0 %2853
      %v2857 = vsel %vm2580, %v2852, 0
      %2859 = vmatpush.bf16.msra.mxu0 0
      %2860 = vmatpush.bf16.msra.mxu0 0
      %2861 = vmatpush.bf16.msra.mxu0 0
      %2862 = vmatpush.bf16.msra.mxu0 0
      %2863 = vmatpush.bf16.msra.mxu0 0
      %2864 = vmatpush.bf16.msra.mxu0 0
      %2865 = vmatpush.bf16.msra.mxu0 0
      %2866 = vmatpush.bf16.msra.mxu0 %v2854
      %2867 = vmatmul.bf16.gmra.mxu0 %v2857
      %v2868 = vpop.f32.mrf.mxu0
      %v2869 = vadd.f32 0.0, %v2868
      %v2870 = vpop.f32.mrf.mxu0
      %v2871 = vadd.f32 0.0, %v2870
      %2872 = vdwg.mxu0
      %v2875 = vunpack.c.l.b16 %v2765
      %v2876 = vunpack.c.l.b16 %v2766
      %v2877 = vpack.c.b16 %v2876, %v2875
      %2878 = vrot.lane.b32.xlu0 %v2346, 64
      %v2879 = vpop.permute.xlu0 %2878
      %v2882 = vsel %vm2580, %v2877, 0
      %2884 = vmatpush.bf16.msra.mxu0 0
      %2885 = vmatpush.bf16.msra.mxu0 0
      %2886 = vmatpush.bf16.msra.mxu0 0
      %2887 = vmatpush.bf16.msra.mxu0 0
      %2888 = vmatpush.bf16.msra.mxu0 0
      %2889 = vmatpush.bf16.msra.mxu0 0
      %2890 = vmatpush.bf16.msra.mxu0 0
      %2891 = vmatpush.bf16.msra.mxu0 %v2879
      %2892 = vmatmul.bf16.gmra.mxu0 %v2882
      %v2893 = vpop.f32.mrf.mxu0
      %v2894 = vadd.f32 0.0, %v2893
      %v2895 = vpop.f32.mrf.mxu0
      %v2896 = vadd.f32 0.0, %v2895
      %2897 = vdwg.mxu0
      %v2900 = vunpack.c.l.b16 %v2767
      %v2901 = vunpack.c.l.b16 %v2768
      %v2902 = vpack.c.b16 %v2901, %v2900
      %2903 = vrot.lane.b32.xlu0 %v2373, 64
      %v2904 = vpop.permute.xlu0 %2903
      %v2907 = vsel %vm2580, %v2902, 0
      %2909 = vmatpush.bf16.msra.mxu0 0
      %2910 = vmatpush.bf16.msra.mxu0 0
      %2911 = vmatpush.bf16.msra.mxu0 0
      %2912 = vmatpush.bf16.msra.mxu0 0
      %2913 = vmatpush.bf16.msra.mxu0 0
      %2914 = vmatpush.bf16.msra.mxu0 0
      %2915 = vmatpush.bf16.msra.mxu0 0
      %2916 = vmatpush.bf16.msra.mxu0 %v2904
      %2917 = vmatmul.bf16.gmra.mxu0 %v2907
      %v2918 = vpop.f32.mrf.mxu0
      %v2919 = vadd.f32 0.0, %v2918
      %v2920 = vpop.f32.mrf.mxu0
      %v2921 = vadd.f32 0.0, %v2920
      %2922 = vdwg.mxu0
      %v2925 = vunpack.c.l.b16 %v2769
      %v2926 = vunpack.c.l.b16 %v2770
      %v2927 = vpack.c.b16 %v2926, %v2925
      %2928 = vrot.lane.b32.xlu0 %v2400, 64
      %v2929 = vpop.permute.xlu0 %2928
      %v2932 = vsel %vm2580, %v2927, 0
      %2934 = vmatpush.bf16.msra.mxu0 0
      %2935 = vmatpush.bf16.msra.mxu0 0
      %2936 = vmatpush.bf16.msra.mxu0 0
      %2937 = vmatpush.bf16.msra.mxu0 0
      %2938 = vmatpush.bf16.msra.mxu0 0
      %2939 = vmatpush.bf16.msra.mxu0 0
      %2940 = vmatpush.bf16.msra.mxu0 0
      %2941 = vmatpush.bf16.msra.mxu0 %v2929
      %2942 = vmatmul.bf16.gmra.mxu0 %v2932
      %v2943 = vpop.f32.mrf.mxu0
      %v2944 = vadd.f32 0.0, %v2943
      %v2945 = vpop.f32.mrf.mxu0
      %v2946 = vadd.f32 0.0, %v2945
      %2947 = vdwg.mxu0
      %v2950 = vunpack.c.l.b16 %v2771
      %v2951 = vunpack.c.l.b16 %v2772
      %v2952 = vpack.c.b16 %v2951, %v2950
      %2953 = vrot.lane.b32.xlu0 %v2427, 64
      %v2954 = vpop.permute.xlu0 %2953
      %v2957 = vsel %vm2580, %v2952, 0
      %2959 = vmatpush.bf16.msra.mxu0 0
      %2960 = vmatpush.bf16.msra.mxu0 0
      %2961 = vmatpush.bf16.msra.mxu0 0
      %2962 = vmatpush.bf16.msra.mxu0 0
      %2963 = vmatpush.bf16.msra.mxu0 0
      %2964 = vmatpush.bf16.msra.mxu0 0
      %2965 = vmatpush.bf16.msra.mxu0 0
      %2966 = vmatpush.bf16.msra.mxu0 %v2954
      %2967 = vmatmul.bf16.gmra.mxu0 %v2957
      %v2968 = vpop.f32.mrf.mxu0
      %v2969 = vadd.f32 0.0, %v2968
      %v2970 = vpop.f32.mrf.mxu0
      %v2971 = vadd.f32 0.0, %v2970
      %2972 = vdwg.mxu0
      %2973 = vrot.lane.b32.xlu0 %v2238, 120
      %v2974 = vpop.permute.xlu0 %2973
      %2975 = vrot.lane.b32.xlu0 %v2238, 88
      %v2976 = vpop.permute.xlu0 %2975
      %v2978 = vsel %vm985, %v2974, 0
      %v2981 = vsel %vm985, %v2976, 0
      %2983 = vmatpush.bf16.xpose.msra.mxu0 0
      %2984 = vmatpush.bf16.xpose.msra.mxu0 0
      %2985 = vmatpush.bf16.xpose.msra.mxu0 0
      %2986 = vmatpush.bf16.xpose.msra.mxu0 0
      %2987 = vmatpush.bf16.xpose.msra.mxu0 0
      %2988 = vmatpush.bf16.xpose.msra.mxu0 0
      %2989 = vmatpush.bf16.xpose.msra.mxu0 0
      %2990 = vmatpush.bf16.xpose.msra.mxu0 %v2981
      %2991 = vmatmul.bf16.gmra.mxu0 %v2978
      %v2992 = vpop.f32.mrf.mxu0
      %v2993 = vadd.f32 0.0, %v2992
      %v2994 = vpop.f32.mrf.mxu0
      %v2995 = vadd.f32 0.0, %v2994
      %2996 = vdwg.mxu0
      %2997 = vrot.lane.b32.xlu0 %v2265, 120
      %v2998 = vpop.permute.xlu0 %2997
      %2999 = vrot.lane.b32.xlu0 %v2265, 88
      %v3000 = vpop.permute.xlu0 %2999
      %v3002 = vsel %vm985, %v2998, 0
      %v3005 = vsel %vm985, %v3000, 0
      %3007 = vmatpush.bf16.xpose.msra.mxu0 0
      %3008 = vmatpush.bf16.xpose.msra.mxu0 0
      %3009 = vmatpush.bf16.xpose.msra.mxu0 0
      %3010 = vmatpush.bf16.xpose.msra.mxu0 0
      %3011 = vmatpush.bf16.xpose.msra.mxu0 0
      %3012 = vmatpush.bf16.xpose.msra.mxu0 0
      %3013 = vmatpush.bf16.xpose.msra.mxu0 0
      %3014 = vmatpush.bf16.xpose.msra.mxu0 %v3005
      %3015 = vmatmul.bf16.gmra.mxu0 %v3002
      %v3016 = vpop.f32.mrf.mxu0
      %v3017 = vadd.f32 0.0, %v3016
      %v3018 = vpop.f32.mrf.mxu0
      %v3019 = vadd.f32 0.0, %v3018
      %3020 = vdwg.mxu0
      %3021 = vrot.lane.b32.xlu0 %v2292, 120
      %v3022 = vpop.permute.xlu0 %3021
      %3023 = vrot.lane.b32.xlu0 %v2292, 88
      %v3024 = vpop.permute.xlu0 %3023
      %v3026 = vsel %vm985, %v3022, 0
      %v3029 = vsel %vm985, %v3024, 0
      %3031 = vmatpush.bf16.xpose.msra.mxu0 0
      %3032 = vmatpush.bf16.xpose.msra.mxu0 0
      %3033 = vmatpush.bf16.xpose.msra.mxu0 0
      %3034 = vmatpush.bf16.xpose.msra.mxu0 0
      %3035 = vmatpush.bf16.xpose.msra.mxu0 0
      %3036 = vmatpush.bf16.xpose.msra.mxu0 0
      %3037 = vmatpush.bf16.xpose.msra.mxu0 0
      %3038 = vmatpush.bf16.xpose.msra.mxu0 %v3029
      %3039 = vmatmul.bf16.gmra.mxu0 %v3026
      %v3040 = vpop.f32.mrf.mxu0
      %v3041 = vadd.f32 0.0, %v3040
      %v3042 = vpop.f32.mrf.mxu0
      %v3043 = vadd.f32 0.0, %v3042
      %3044 = vdwg.mxu0
      %3045 = vrot.lane.b32.xlu0 %v2319, 120
      %v3046 = vpop.permute.xlu0 %3045
      %3047 = vrot.lane.b32.xlu0 %v2319, 88
      %v3048 = vpop.permute.xlu0 %3047
      %v3050 = vsel %vm985, %v3046, 0
      %v3053 = vsel %vm985, %v3048, 0
      %3055 = vmatpush.bf16.xpose.msra.mxu0 0
      %3056 = vmatpush.bf16.xpose.msra.mxu0 0
      %3057 = vmatpush.bf16.xpose.msra.mxu0 0
      %3058 = vmatpush.bf16.xpose.msra.mxu0 0
      %3059 = vmatpush.bf16.xpose.msra.mxu0 0
      %3060 = vmatpush.bf16.xpose.msra.mxu0 0
      %3061 = vmatpush.bf16.xpose.msra.mxu0 0
      %3062 = vmatpush.bf16.xpose.msra.mxu0 %v3053
      %3063 = vmatmul.bf16.gmra.mxu0 %v3050
      %v3064 = vpop.f32.mrf.mxu0
      %v3065 = vadd.f32 0.0, %v3064
      %v3066 = vpop.f32.mrf.mxu0
      %v3067 = vadd.f32 0.0, %v3066
      %3068 = vdwg.mxu0
      %3069 = vrot.lane.b32.xlu0 %v2346, 120
      %v3070 = vpop.permute.xlu0 %3069
      %3071 = vrot.lane.b32.xlu0 %v2346, 88
      %v3072 = vpop.permute.xlu0 %3071
      %v3074 = vsel %vm985, %v3070, 0
      %v3077 = vsel %vm985, %v3072, 0
      %3079 = vmatpush.bf16.xpose.msra.mxu0 0
      %3080 = vmatpush.bf16.xpose.msra.mxu0 0
      %3081 = vmatpush.bf16.xpose.msra.mxu0 0
      %3082 = vmatpush.bf16.xpose.msra.mxu0 0
      %3083 = vmatpush.bf16.xpose.msra.mxu0 0
      %3084 = vmatpush.bf16.xpose.msra.mxu0 0
      %3085 = vmatpush.bf16.xpose.msra.mxu0 0
      %3086 = vmatpush.bf16.xpose.msra.mxu0 %v3077
      %3087 = vmatmul.bf16.gmra.mxu0 %v3074
      %v3088 = vpop.f32.mrf.mxu0
      %v3089 = vadd.f32 0.0, %v3088
      %v3090 = vpop.f32.mrf.mxu0
      %v3091 = vadd.f32 0.0, %v3090
      %3092 = vdwg.mxu0
      %3093 = vrot.lane.b32.xlu0 %v2373, 120
      %v3094 = vpop.permute.xlu0 %3093
      %3095 = vrot.lane.b32.xlu0 %v2373, 88
      %v3096 = vpop.permute.xlu0 %3095
      %v3098 = vsel %vm985, %v3094, 0
      %v3101 = vsel %vm985, %v3096, 0
      %3103 = vmatpush.bf16.xpose.msra.mxu0 0
      %3104 = vmatpush.bf16.xpose.msra.mxu0 0
      %3105 = vmatpush.bf16.xpose.msra.mxu0 0
      %3106 = vmatpush.bf16.xpose.msra.mxu0 0
      %3107 = vmatpush.bf16.xpose.msra.mxu0 0
      %3108 = vmatpush.bf16.xpose.msra.mxu0 0
      %3109 = vmatpush.bf16.xpose.msra.mxu0 0
      %3110 = vmatpush.bf16.xpose.msra.mxu0 %v3101
      %3111 = vmatmul.bf16.gmra.mxu0 %v3098
      %v3112 = vpop.f32.mrf.mxu0
      %v3113 = vadd.f32 0.0, %v3112
      %v3114 = vpop.f32.mrf.mxu0
      %v3115 = vadd.f32 0.0, %v3114
      %3116 = vdwg.mxu0
      %3117 = vrot.lane.b32.xlu0 %v2400, 120
      %v3118 = vpop.permute.xlu0 %3117
      %3119 = vrot.lane.b32.xlu0 %v2400, 88
      %v3120 = vpop.permute.xlu0 %3119
      %v3122 = vsel %vm985, %v3118, 0
      %v3125 = vsel %vm985, %v3120, 0
      %3127 = vmatpush.bf16.xpose.msra.mxu0 0
      %3128 = vmatpush.bf16.xpose.msra.mxu0 0
      %3129 = vmatpush.bf16.xpose.msra.mxu0 0
      %3130 = vmatpush.bf16.xpose.msra.mxu0 0
      %3131 = vmatpush.bf16.xpose.msra.mxu0 0
      %3132 = vmatpush.bf16.xpose.msra.mxu0 0
      %3133 = vmatpush.bf16.xpose.msra.mxu0 0
      %3134 = vmatpush.bf16.xpose.msra.mxu0 %v3125
      %3135 = vmatmul.bf16.gmra.mxu0 %v3122
      %v3136 = vpop.f32.mrf.mxu0
      %v3137 = vadd.f32 0.0, %v3136
      %v3138 = vpop.f32.mrf.mxu0
      %v3139 = vadd.f32 0.0, %v3138
      %3140 = vdwg.mxu0
      %3141 = vrot.lane.b32.xlu0 %v2427, 120
      %v3142 = vpop.permute.xlu0 %3141
      %3143 = vrot.lane.b32.xlu0 %v2427, 88
      %v3144 = vpop.permute.xlu0 %3143
      %v3146 = vsel %vm985, %v3142, 0
      %v3149 = vsel %vm985, %v3144, 0
      %3151 = vmatpush.bf16.xpose.msra.mxu0 0
      %3152 = vmatpush.bf16.xpose.msra.mxu0 0
      %3153 = vmatpush.bf16.xpose.msra.mxu0 0
      %3154 = vmatpush.bf16.xpose.msra.mxu0 0
      %3155 = vmatpush.bf16.xpose.msra.mxu0 0
      %3156 = vmatpush.bf16.xpose.msra.mxu0 0
      %3157 = vmatpush.bf16.xpose.msra.mxu0 0
      %3158 = vmatpush.bf16.xpose.msra.mxu0 %v3149
      %3159 = vmatmul.bf16.gmra.mxu0 %v3146
      %v3160 = vpop.f32.mrf.mxu0
      %v3161 = vadd.f32 0.0, %v3160
      %v3162 = vpop.f32.mrf.mxu0
      %v3163 = vadd.f32 0.0, %v3162
      %3164 = vdwg.mxu0
      %v3165 = vmul.f32 %v2993, 0.35355338
      %v3166 = vmul.f32 %v2995, 0.35355338
      %v3167 = vmul.f32 %v3017, 0.35355338
      %v3168 = vmul.f32 %v3019, 0.35355338
      %v3169 = vmul.f32 %v3041, 0.35355338
      %v3170 = vmul.f32 %v3043, 0.35355338
      %v3171 = vmul.f32 %v3065, 0.35355338
      %v3172 = vmul.f32 %v3067, 0.35355338
      %v3173 = vmul.f32 %v3089, 0.35355338
      %v3174 = vmul.f32 %v3091, 0.35355338
      %v3175 = vmul.f32 %v3113, 0.35355338
      %v3176 = vmul.f32 %v3115, 0.35355338
      %v3177 = vmul.f32 %v3137, 0.35355338
      %v3178 = vmul.f32 %v3139, 0.35355338
      %v3179 = vmul.f32 %v3161, 0.35355338
      %v3180 = vmul.f32 %v3163, 0.35355338
      %v3181 = vsel %vm2530, -1e+09, %v3165
      %v3182 = vsel %vm2531, -1e+09, %v3166
      %v3183 = vsel %vm2532, -1e+09, %v3167
      %v3184 = vsel %vm2533, -1e+09, %v3168
      %v3185 = vsel %vm2534, -1e+09, %v3169
      %v3186 = vsel %vm2535, -1e+09, %v3170
      %v3187 = vsel %vm2536, -1e+09, %v3171
      %v3188 = vsel %vm2537, -1e+09, %v3172
      %v3189 = vsel %vm2538, -1e+09, %v3173
      %v3190 = vsel %vm2539, -1e+09, %v3174
      %v3191 = vsel %vm2540, -1e+09, %v3175
      %v3192 = vsel %vm2541, -1e+09, %v3176
      %v3193 = vsel %vm2542, -1e+09, %v3177
      %v3194 = vsel %vm2543, -1e+09, %v3178
      %v3195 = vsel %vm2544, -1e+09, %v3179
      %v3196 = vsel %vm2545, -1e+09, %v3180
      %v3197 = vsel %vm2563, %v3181, -1e+30
      %v3198 = vsel %vm2563, %v3182, -1e+30
      %v3199 = vsel %vm2563, %v3183, -1e+30
      %v3200 = vsel %vm2563, %v3184, -1e+30
      %v3201 = vsel %vm2563, %v3185, -1e+30
      %v3202 = vsel %vm2563, %v3186, -1e+30
      %v3203 = vsel %vm2563, %v3187, -1e+30
      %v3204 = vsel %vm2563, %v3188, -1e+30
      %v3205 = vsel %vm2563, %v3189, -1e+30
      %v3206 = vsel %vm2563, %v3190, -1e+30
      %v3207 = vsel %vm2563, %v3191, -1e+30
      %v3208 = vsel %vm2563, %v3192, -1e+30
      %v3209 = vsel %vm2563, %v3193, -1e+30
      %v3210 = vsel %vm2563, %v3194, -1e+30
      %v3211 = vsel %vm2563, %v3195, -1e+30
      %v3212 = vsel %vm2563, %v3196, -1e+30
      %v3213 = vsel %vm2580, %v3197, -inf
      %3214 = vmax.xlane.f32.xlu0 %v3213
      %v3215 = vpop.xlane.xlu0 %3214
      %v3216 = vsel %vm2580, %v3198, -inf
      %3217 = vmax.xlane.f32.xlu0 %v3216
      %v3218 = vpop.xlane.xlu0 %3217
      %v3219 = vsel %vm2580, %v3199, -inf
      %3220 = vmax.xlane.f32.xlu0 %v3219
      %v3221 = vpop.xlane.xlu0 %3220
      %v3222 = vsel %vm2580, %v3200, -inf
      %3223 = vmax.xlane.f32.xlu0 %v3222
      %v3224 = vpop.xlane.xlu0 %3223
      %v3225 = vsel %vm2580, %v3201, -inf
      %3226 = vmax.xlane.f32.xlu0 %v3225
      %v3227 = vpop.xlane.xlu0 %3226
      %v3228 = vsel %vm2580, %v3202, -inf
      %3229 = vmax.xlane.f32.xlu0 %v3228
      %v3230 = vpop.xlane.xlu0 %3229
      %v3231 = vsel %vm2580, %v3203, -inf
      %3232 = vmax.xlane.f32.xlu0 %v3231
      %v3233 = vpop.xlane.xlu0 %3232
      %v3234 = vsel %vm2580, %v3204, -inf
      %3235 = vmax.xlane.f32.xlu0 %v3234
      %v3236 = vpop.xlane.xlu0 %3235
      %v3237 = vsel %vm2580, %v3205, -inf
      %3238 = vmax.xlane.f32.xlu0 %v3237
      %v3239 = vpop.xlane.xlu0 %3238
      %v3240 = vsel %vm2580, %v3206, -inf
      %3241 = vmax.xlane.f32.xlu0 %v3240
      %v3242 = vpop.xlane.xlu0 %3241
      %v3243 = vsel %vm2580, %v3207, -inf
      %3244 = vmax.xlane.f32.xlu0 %v3243
      %v3245 = vpop.xlane.xlu0 %3244
      %v3246 = vsel %vm2580, %v3208, -inf
      %3247 = vmax.xlane.f32.xlu0 %v3246
      %v3248 = vpop.xlane.xlu0 %3247
      %v3249 = vsel %vm2580, %v3209, -inf
      %3250 = vmax.xlane.f32.xlu0 %v3249
      %v3251 = vpop.xlane.xlu0 %3250
      %v3252 = vsel %vm2580, %v3210, -inf
      %3253 = vmax.xlane.f32.xlu0 %v3252
      %v3254 = vpop.xlane.xlu0 %3253
      %v3255 = vsel %vm2580, %v3211, -inf
      %3256 = vmax.xlane.f32.xlu0 %v3255
      %v3257 = vpop.xlane.xlu0 %3256
      %v3258 = vsel %vm2580, %v3212, -inf
      %3259 = vmax.xlane.f32.xlu0 %v3258
      %v3260 = vpop.xlane.xlu0 %3259
      %v3261 = vsub.f32 %v3197, %v3215
      %v3262 = vsub.f32 %v3198, %v3218
      %v3263 = vsub.f32 %v3199, %v3221
      %v3264 = vsub.f32 %v3200, %v3224
      %v3265 = vsub.f32 %v3201, %v3227
      %v3266 = vsub.f32 %v3202, %v3230
      %v3267 = vsub.f32 %v3203, %v3233
      %v3268 = vsub.f32 %v3204, %v3236
      %v3269 = vsub.f32 %v3205, %v3239
      %v3270 = vsub.f32 %v3206, %v3242
      %v3271 = vsub.f32 %v3207, %v3245
      %v3272 = vsub.f32 %v3208, %v3248
      %v3273 = vsub.f32 %v3209, %v3251
      %v3274 = vsub.f32 %v3210, %v3254
      %v3275 = vsub.f32 %v3211, %v3257
      %v3276 = vsub.f32 %v3212, %v3260
      %v3277 = vmul.f32 %v3261, 1.442695
      %v3278 = vpow.pop %v3277
      %v3279 = vmul.f32 %v3262, 1.442695
      %v3280 = vpow.pop %v3279
      %v3281 = vmul.f32 %v3263, 1.442695
      %v3282 = vpow.pop %v3281
      %v3283 = vmul.f32 %v3264, 1.442695
      %v3284 = vpow.pop %v3283
      %v3285 = vmul.f32 %v3265, 1.442695
      %v3286 = vpow.pop %v3285
      %v3287 = vmul.f32 %v3266, 1.442695
      %v3288 = vpow.pop %v3287
      %v3289 = vmul.f32 %v3267, 1.442695
      %v3290 = vpow.pop %v3289
      %v3291 = vmul.f32 %v3268, 1.442695
      %v3292 = vpow.pop %v3291
      %v3293 = vmul.f32 %v3269, 1.442695
      %v3294 = vpow.pop %v3293
      %v3295 = vmul.f32 %v3270, 1.442695
      %v3296 = vpow.pop %v3295
      %v3297 = vmul.f32 %v3271, 1.442695
      %v3298 = vpow.pop %v3297
      %v3299 = vmul.f32 %v3272, 1.442695
      %v3300 = vpow.pop %v3299
      %v3301 = vmul.f32 %v3273, 1.442695
      %v3302 = vpow.pop %v3301
      %v3303 = vmul.f32 %v3274, 1.442695
      %v3304 = vpow.pop %v3303
      %v3305 = vmul.f32 %v3275, 1.442695
      %v3306 = vpow.pop %v3305
      %v3307 = vmul.f32 %v3276, 1.442695
      %v3308 = vpow.pop %v3307
      %v3309 = vsel %vm2580, %v3278, 0.0
      %3310 = vadd.xlane.f32.xlu0 %v3309
      %v3311 = vpop.xlane.xlu0 %3310
      %v3312 = vsel %vm2580, %v3280, 0.0
      %3313 = vadd.xlane.f32.xlu0 %v3312
      %v3314 = vpop.xlane.xlu0 %3313
      %v3315 = vsel %vm2580, %v3282, 0.0
      %3316 = vadd.xlane.f32.xlu0 %v3315
      %v3317 = vpop.xlane.xlu0 %3316
      %v3318 = vsel %vm2580, %v3284, 0.0
      %3319 = vadd.xlane.f32.xlu0 %v3318
      %v3320 = vpop.xlane.xlu0 %3319
      %v3321 = vsel %vm2580, %v3286, 0.0
      %3322 = vadd.xlane.f32.xlu0 %v3321
      %v3323 = vpop.xlane.xlu0 %3322
      %v3324 = vsel %vm2580, %v3288, 0.0
      %3325 = vadd.xlane.f32.xlu0 %v3324
      %v3326 = vpop.xlane.xlu0 %3325
      %v3327 = vsel %vm2580, %v3290, 0.0
      %3328 = vadd.xlane.f32.xlu0 %v3327
      %v3329 = vpop.xlane.xlu0 %3328
      %v3330 = vsel %vm2580, %v3292, 0.0
      %3331 = vadd.xlane.f32.xlu0 %v3330
      %v3332 = vpop.xlane.xlu0 %3331
      %v3333 = vsel %vm2580, %v3294, 0.0
      %3334 = vadd.xlane.f32.xlu0 %v3333
      %v3335 = vpop.xlane.xlu0 %3334
      %v3336 = vsel %vm2580, %v3296, 0.0
      %3337 = vadd.xlane.f32.xlu0 %v3336
      %v3338 = vpop.xlane.xlu0 %3337
      %v3339 = vsel %vm2580, %v3298, 0.0
      %3340 = vadd.xlane.f32.xlu0 %v3339
      %v3341 = vpop.xlane.xlu0 %3340
      %v3342 = vsel %vm2580, %v3300, 0.0
      %3343 = vadd.xlane.f32.xlu0 %v3342
      %v3344 = vpop.xlane.xlu0 %3343
      %v3345 = vsel %vm2580, %v3302, 0.0
      %3346 = vadd.xlane.f32.xlu0 %v3345
      %v3347 = vpop.xlane.xlu0 %3346
      %v3348 = vsel %vm2580, %v3304, 0.0
      %3349 = vadd.xlane.f32.xlu0 %v3348
      %v3350 = vpop.xlane.xlu0 %3349
      %v3351 = vsel %vm2580, %v3306, 0.0
      %3352 = vadd.xlane.f32.xlu0 %v3351
      %v3353 = vpop.xlane.xlu0 %3352
      %v3354 = vsel %vm2580, %v3308, 0.0
      %3355 = vadd.xlane.f32.xlu0 %v3354
      %v3356 = vpop.xlane.xlu0 %3355
      %v3357 = vrcp.pop %v3311
      %v3358 = vrcp.pop %v3314
      %v3359 = vrcp.pop %v3317
      %v3360 = vrcp.pop %v3320
      %v3361 = vrcp.pop %v3323
      %v3362 = vrcp.pop %v3326
      %v3363 = vrcp.pop %v3329
      %v3364 = vrcp.pop %v3332
      %v3365 = vrcp.pop %v3335
      %v3366 = vrcp.pop %v3338
      %v3367 = vrcp.pop %v3341
      %v3368 = vrcp.pop %v3344
      %v3369 = vrcp.pop %v3347
      %v3370 = vrcp.pop %v3350
      %v3371 = vrcp.pop %v3353
      %v3372 = vrcp.pop %v3356
      %v3373 = vmul.f32 %v3278, %v3357
      %v3374 = vmul.f32 %v3280, %v3358
      %v3375 = vmul.f32 %v3282, %v3359
      %v3376 = vmul.f32 %v3284, %v3360
      %v3377 = vmul.f32 %v3286, %v3361
      %v3378 = vmul.f32 %v3288, %v3362
      %v3379 = vmul.f32 %v3290, %v3363
      %v3380 = vmul.f32 %v3292, %v3364
      %v3381 = vmul.f32 %v3294, %v3365
      %v3382 = vmul.f32 %v3296, %v3366
      %v3383 = vmul.f32 %v3298, %v3367
      %v3384 = vmul.f32 %v3300, %v3368
      %v3385 = vmul.f32 %v3302, %v3369
      %v3386 = vmul.f32 %v3304, %v3370
      %v3387 = vmul.f32 %v3306, %v3371
      %v3388 = vmul.f32 %v3308, %v3372
      %v3389 = vpack.c.bf16 %v3373, %v3373
      %v3390 = vpack.c.bf16 %v3374, %v3374
      %v3391 = vpack.c.bf16 %v3375, %v3375
      %v3392 = vpack.c.bf16 %v3376, %v3376
      %v3393 = vpack.c.bf16 %v3377, %v3377
      %v3394 = vpack.c.bf16 %v3378, %v3378
      %v3395 = vpack.c.bf16 %v3379, %v3379
      %v3396 = vpack.c.bf16 %v3380, %v3380
      %v3397 = vpack.c.bf16 %v3381, %v3381
      %v3398 = vpack.c.bf16 %v3382, %v3382
      %v3399 = vpack.c.bf16 %v3383, %v3383
      %v3400 = vpack.c.bf16 %v3384, %v3384
      %v3401 = vpack.c.bf16 %v3385, %v3385
      %v3402 = vpack.c.bf16 %v3386, %v3386
      %v3403 = vpack.c.bf16 %v3387, %v3387
      %v3404 = vpack.c.bf16 %v3388, %v3388
      %v3407 = vunpack.c.l.b16 %v3389
      %v3408 = vunpack.c.l.b16 %v3390
      %v3409 = vpack.c.b16 %v3408, %v3407
      %3410 = vrot.lane.b32.xlu0 %v2238, 56
      %v3411 = vpop.permute.xlu0 %3410
      %v3414 = vsel %vm2580, %v3409, 0
      %3416 = vmatpush.bf16.msra.mxu0 0
      %3417 = vmatpush.bf16.msra.mxu0 0
      %3418 = vmatpush.bf16.msra.mxu0 0
      %3419 = vmatpush.bf16.msra.mxu0 0
      %3420 = vmatpush.bf16.msra.mxu0 0
      %3421 = vmatpush.bf16.msra.mxu0 0
      %3422 = vmatpush.bf16.msra.mxu0 0
      %3423 = vmatpush.bf16.msra.mxu0 %v3411
      %3424 = vmatmul.bf16.gmra.mxu0 %v3414
      %v3425 = vpop.f32.mrf.mxu0
      %v3426 = vadd.f32 0.0, %v3425
      %v3427 = vpop.f32.mrf.mxu0
      %v3428 = vadd.f32 0.0, %v3427
      %3429 = vdwg.mxu0
      %v3432 = vunpack.c.l.b16 %v3391
      %v3433 = vunpack.c.l.b16 %v3392
      %v3434 = vpack.c.b16 %v3433, %v3432
      %3435 = vrot.lane.b32.xlu0 %v2265, 56
      %v3436 = vpop.permute.xlu0 %3435
      %v3439 = vsel %vm2580, %v3434, 0
      %3441 = vmatpush.bf16.msra.mxu0 0
      %3442 = vmatpush.bf16.msra.mxu0 0
      %3443 = vmatpush.bf16.msra.mxu0 0
      %3444 = vmatpush.bf16.msra.mxu0 0
      %3445 = vmatpush.bf16.msra.mxu0 0
      %3446 = vmatpush.bf16.msra.mxu0 0
      %3447 = vmatpush.bf16.msra.mxu0 0
      %3448 = vmatpush.bf16.msra.mxu0 %v3436
      %3449 = vmatmul.bf16.gmra.mxu0 %v3439
      %v3450 = vpop.f32.mrf.mxu0
      %v3451 = vadd.f32 0.0, %v3450
      %v3452 = vpop.f32.mrf.mxu0
      %v3453 = vadd.f32 0.0, %v3452
      %3454 = vdwg.mxu0
      %v3457 = vunpack.c.l.b16 %v3393
      %v3458 = vunpack.c.l.b16 %v3394
      %v3459 = vpack.c.b16 %v3458, %v3457
      %3460 = vrot.lane.b32.xlu0 %v2292, 56
      %v3461 = vpop.permute.xlu0 %3460
      %v3464 = vsel %vm2580, %v3459, 0
      %3466 = vmatpush.bf16.msra.mxu0 0
      %3467 = vmatpush.bf16.msra.mxu0 0
      %3468 = vmatpush.bf16.msra.mxu0 0
      %3469 = vmatpush.bf16.msra.mxu0 0
      %3470 = vmatpush.bf16.msra.mxu0 0
      %3471 = vmatpush.bf16.msra.mxu0 0
      %3472 = vmatpush.bf16.msra.mxu0 0
      %3473 = vmatpush.bf16.msra.mxu0 %v3461
      %3474 = vmatmul.bf16.gmra.mxu0 %v3464
      %v3475 = vpop.f32.mrf.mxu0
      %v3476 = vadd.f32 0.0, %v3475
      %v3477 = vpop.f32.mrf.mxu0
      %v3478 = vadd.f32 0.0, %v3477
      %3479 = vdwg.mxu0
      %v3482 = vunpack.c.l.b16 %v3395
      %v3483 = vunpack.c.l.b16 %v3396
      %v3484 = vpack.c.b16 %v3483, %v3482
      %3485 = vrot.lane.b32.xlu0 %v2319, 56
      %v3486 = vpop.permute.xlu0 %3485
      %v3489 = vsel %vm2580, %v3484, 0
      %3491 = vmatpush.bf16.msra.mxu0 0
      %3492 = vmatpush.bf16.msra.mxu0 0
      %3493 = vmatpush.bf16.msra.mxu0 0
      %3494 = vmatpush.bf16.msra.mxu0 0
      %3495 = vmatpush.bf16.msra.mxu0 0
      %3496 = vmatpush.bf16.msra.mxu0 0
      %3497 = vmatpush.bf16.msra.mxu0 0
      %3498 = vmatpush.bf16.msra.mxu0 %v3486
      %3499 = vmatmul.bf16.gmra.mxu0 %v3489
      %v3500 = vpop.f32.mrf.mxu0
      %v3501 = vadd.f32 0.0, %v3500
      %v3502 = vpop.f32.mrf.mxu0
      %v3503 = vadd.f32 0.0, %v3502
      %3504 = vdwg.mxu0
      %v3507 = vunpack.c.l.b16 %v3397
      %v3508 = vunpack.c.l.b16 %v3398
      %v3509 = vpack.c.b16 %v3508, %v3507
      %3510 = vrot.lane.b32.xlu0 %v2346, 56
      %v3511 = vpop.permute.xlu0 %3510
      %v3514 = vsel %vm2580, %v3509, 0
      %3516 = vmatpush.bf16.msra.mxu0 0
      %3517 = vmatpush.bf16.msra.mxu0 0
      %3518 = vmatpush.bf16.msra.mxu0 0
      %3519 = vmatpush.bf16.msra.mxu0 0
      %3520 = vmatpush.bf16.msra.mxu0 0
      %3521 = vmatpush.bf16.msra.mxu0 0
      %3522 = vmatpush.bf16.msra.mxu0 0
      %3523 = vmatpush.bf16.msra.mxu0 %v3511
      %3524 = vmatmul.bf16.gmra.mxu0 %v3514
      %v3525 = vpop.f32.mrf.mxu0
      %v3526 = vadd.f32 0.0, %v3525
      %v3527 = vpop.f32.mrf.mxu0
      %v3528 = vadd.f32 0.0, %v3527
      %3529 = vdwg.mxu0
      %v3532 = vunpack.c.l.b16 %v3399
      %v3533 = vunpack.c.l.b16 %v3400
      %v3534 = vpack.c.b16 %v3533, %v3532
      %3535 = vrot.lane.b32.xlu0 %v2373, 56
      %v3536 = vpop.permute.xlu0 %3535
      %v3539 = vsel %vm2580, %v3534, 0
      %3541 = vmatpush.bf16.msra.mxu0 0
      %3542 = vmatpush.bf16.msra.mxu0 0
      %3543 = vmatpush.bf16.msra.mxu0 0
      %3544 = vmatpush.bf16.msra.mxu0 0
      %3545 = vmatpush.bf16.msra.mxu0 0
      %3546 = vmatpush.bf16.msra.mxu0 0
      %3547 = vmatpush.bf16.msra.mxu0 0
      %3548 = vmatpush.bf16.msra.mxu0 %v3536
      %3549 = vmatmul.bf16.gmra.mxu0 %v3539
      %v3550 = vpop.f32.mrf.mxu0
      %v3551 = vadd.f32 0.0, %v3550
      %v3552 = vpop.f32.mrf.mxu0
      %v3553 = vadd.f32 0.0, %v3552
      %3554 = vdwg.mxu0
      %v3557 = vunpack.c.l.b16 %v3401
      %v3558 = vunpack.c.l.b16 %v3402
      %v3559 = vpack.c.b16 %v3558, %v3557
      %3560 = vrot.lane.b32.xlu0 %v2400, 56
      %v3561 = vpop.permute.xlu0 %3560
      %v3564 = vsel %vm2580, %v3559, 0
      %3566 = vmatpush.bf16.msra.mxu0 0
      %3567 = vmatpush.bf16.msra.mxu0 0
      %3568 = vmatpush.bf16.msra.mxu0 0
      %3569 = vmatpush.bf16.msra.mxu0 0
      %3570 = vmatpush.bf16.msra.mxu0 0
      %3571 = vmatpush.bf16.msra.mxu0 0
      %3572 = vmatpush.bf16.msra.mxu0 0
      %3573 = vmatpush.bf16.msra.mxu0 %v3561
      %3574 = vmatmul.bf16.gmra.mxu0 %v3564
      %v3575 = vpop.f32.mrf.mxu0
      %v3576 = vadd.f32 0.0, %v3575
      %v3577 = vpop.f32.mrf.mxu0
      %v3578 = vadd.f32 0.0, %v3577
      %3579 = vdwg.mxu0
      %v3582 = vunpack.c.l.b16 %v3403
      %v3583 = vunpack.c.l.b16 %v3404
      %v3584 = vpack.c.b16 %v3583, %v3582
      %3585 = vrot.lane.b32.xlu0 %v2427, 56
      %v3586 = vpop.permute.xlu0 %3585
      %v3589 = vsel %vm2580, %v3584, 0
      %3591 = vmatpush.bf16.msra.mxu0 0
      %3592 = vmatpush.bf16.msra.mxu0 0
      %3593 = vmatpush.bf16.msra.mxu0 0
      %3594 = vmatpush.bf16.msra.mxu0 0
      %3595 = vmatpush.bf16.msra.mxu0 0
      %3596 = vmatpush.bf16.msra.mxu0 0
      %3597 = vmatpush.bf16.msra.mxu0 0
      %3598 = vmatpush.bf16.msra.mxu0 %v3586
      %3599 = vmatmul.bf16.gmra.mxu0 %v3589
      %v3600 = vpop.f32.mrf.mxu0
      %v3601 = vadd.f32 0.0, %v3600
      %v3602 = vpop.f32.mrf.mxu0
      %v3603 = vadd.f32 0.0, %v3602
      %3604 = vdwg.mxu0
      %3605 = vrot.lane.b32.xlu0 %v2238, 112
      %v3606 = vpop.permute.xlu0 %3605
      %3607 = vrot.lane.b32.xlu0 %v2238, 80
      %v3608 = vpop.permute.xlu0 %3607
      %v3610 = vsel %vm985, %v3606, 0
      %v3613 = vsel %vm985, %v3608, 0
      %3615 = vmatpush.bf16.xpose.msra.mxu0 0
      %3616 = vmatpush.bf16.xpose.msra.mxu0 0
      %3617 = vmatpush.bf16.xpose.msra.mxu0 0
      %3618 = vmatpush.bf16.xpose.msra.mxu0 0
      %3619 = vmatpush.bf16.xpose.msra.mxu0 0
      %3620 = vmatpush.bf16.xpose.msra.mxu0 0
      %3621 = vmatpush.bf16.xpose.msra.mxu0 0
      %3622 = vmatpush.bf16.xpose.msra.mxu0 %v3613
      %3623 = vmatmul.bf16.gmra.mxu0 %v3610
      %v3624 = vpop.f32.mrf.mxu0
      %v3625 = vadd.f32 0.0, %v3624
      %v3626 = vpop.f32.mrf.mxu0
      %v3627 = vadd.f32 0.0, %v3626
      %3628 = vdwg.mxu0
      %3629 = vrot.lane.b32.xlu0 %v2265, 112
      %v3630 = vpop.permute.xlu0 %3629
      %3631 = vrot.lane.b32.xlu0 %v2265, 80
      %v3632 = vpop.permute.xlu0 %3631
      %v3634 = vsel %vm985, %v3630, 0
      %v3637 = vsel %vm985, %v3632, 0
      %3639 = vmatpush.bf16.xpose.msra.mxu0 0
      %3640 = vmatpush.bf16.xpose.msra.mxu0 0
      %3641 = vmatpush.bf16.xpose.msra.mxu0 0
      %3642 = vmatpush.bf16.xpose.msra.mxu0 0
      %3643 = vmatpush.bf16.xpose.msra.mxu0 0
      %3644 = vmatpush.bf16.xpose.msra.mxu0 0
      %3645 = vmatpush.bf16.xpose.msra.mxu0 0
      %3646 = vmatpush.bf16.xpose.msra.mxu0 %v3637
      %3647 = vmatmul.bf16.gmra.mxu0 %v3634
      %v3648 = vpop.f32.mrf.mxu0
      %v3649 = vadd.f32 0.0, %v3648
      %v3650 = vpop.f32.mrf.mxu0
      %v3651 = vadd.f32 0.0, %v3650
      %3652 = vdwg.mxu0
      %3653 = vrot.lane.b32.xlu0 %v2292, 112
      %v3654 = vpop.permute.xlu0 %3653
      %3655 = vrot.lane.b32.xlu0 %v2292, 80
      %v3656 = vpop.permute.xlu0 %3655
      %v3658 = vsel %vm985, %v3654, 0
      %v3661 = vsel %vm985, %v3656, 0
      %3663 = vmatpush.bf16.xpose.msra.mxu0 0
      %3664 = vmatpush.bf16.xpose.msra.mxu0 0
      %3665 = vmatpush.bf16.xpose.msra.mxu0 0
      %3666 = vmatpush.bf16.xpose.msra.mxu0 0
      %3667 = vmatpush.bf16.xpose.msra.mxu0 0
      %3668 = vmatpush.bf16.xpose.msra.mxu0 0
      %3669 = vmatpush.bf16.xpose.msra.mxu0 0
      %3670 = vmatpush.bf16.xpose.msra.mxu0 %v3661
      %3671 = vmatmul.bf16.gmra.mxu0 %v3658
      %v3672 = vpop.f32.mrf.mxu0
      %v3673 = vadd.f32 0.0, %v3672
      %v3674 = vpop.f32.mrf.mxu0
      %v3675 = vadd.f32 0.0, %v3674
      %3676 = vdwg.mxu0
      %3677 = vrot.lane.b32.xlu0 %v2319, 112
      %v3678 = vpop.permute.xlu0 %3677
      %3679 = vrot.lane.b32.xlu0 %v2319, 80
      %v3680 = vpop.permute.xlu0 %3679
      %v3682 = vsel %vm985, %v3678, 0
      %v3685 = vsel %vm985, %v3680, 0
      %3687 = vmatpush.bf16.xpose.msra.mxu0 0
      %3688 = vmatpush.bf16.xpose.msra.mxu0 0
      %3689 = vmatpush.bf16.xpose.msra.mxu0 0
      %3690 = vmatpush.bf16.xpose.msra.mxu0 0
      %3691 = vmatpush.bf16.xpose.msra.mxu0 0
      %3692 = vmatpush.bf16.xpose.msra.mxu0 0
      %3693 = vmatpush.bf16.xpose.msra.mxu0 0
      %3694 = vmatpush.bf16.xpose.msra.mxu0 %v3685
      %3695 = vmatmul.bf16.gmra.mxu0 %v3682
      %v3696 = vpop.f32.mrf.mxu0
      %v3697 = vadd.f32 0.0, %v3696
      %v3698 = vpop.f32.mrf.mxu0
      %v3699 = vadd.f32 0.0, %v3698
      %3700 = vdwg.mxu0
      %3701 = vrot.lane.b32.xlu0 %v2346, 112
      %v3702 = vpop.permute.xlu0 %3701
      %3703 = vrot.lane.b32.xlu0 %v2346, 80
      %v3704 = vpop.permute.xlu0 %3703
      %v3706 = vsel %vm985, %v3702, 0
      %v3709 = vsel %vm985, %v3704, 0
      %3711 = vmatpush.bf16.xpose.msra.mxu0 0
      %3712 = vmatpush.bf16.xpose.msra.mxu0 0
      %3713 = vmatpush.bf16.xpose.msra.mxu0 0
      %3714 = vmatpush.bf16.xpose.msra.mxu0 0
      %3715 = vmatpush.bf16.xpose.msra.mxu0 0
      %3716 = vmatpush.bf16.xpose.msra.mxu0 0
      %3717 = vmatpush.bf16.xpose.msra.mxu0 0
      %3718 = vmatpush.bf16.xpose.msra.mxu0 %v3709
      %3719 = vmatmul.bf16.gmra.mxu0 %v3706
      %v3720 = vpop.f32.mrf.mxu0
      %v3721 = vadd.f32 0.0, %v3720
      %v3722 = vpop.f32.mrf.mxu0
      %v3723 = vadd.f32 0.0, %v3722
      %3724 = vdwg.mxu0
      %3725 = vrot.lane.b32.xlu0 %v2373, 112
      %v3726 = vpop.permute.xlu0 %3725
      %3727 = vrot.lane.b32.xlu0 %v2373, 80
      %v3728 = vpop.permute.xlu0 %3727
      %v3730 = vsel %vm985, %v3726, 0
      %v3733 = vsel %vm985, %v3728, 0
      %3735 = vmatpush.bf16.xpose.msra.mxu0 0
      %3736 = vmatpush.bf16.xpose.msra.mxu0 0
      %3737 = vmatpush.bf16.xpose.msra.mxu0 0
      %3738 = vmatpush.bf16.xpose.msra.mxu0 0
      %3739 = vmatpush.bf16.xpose.msra.mxu0 0
      %3740 = vmatpush.bf16.xpose.msra.mxu0 0
      %3741 = vmatpush.bf16.xpose.msra.mxu0 0
      %3742 = vmatpush.bf16.xpose.msra.mxu0 %v3733
      %3743 = vmatmul.bf16.gmra.mxu0 %v3730
      %v3744 = vpop.f32.mrf.mxu0
      %v3745 = vadd.f32 0.0, %v3744
      %v3746 = vpop.f32.mrf.mxu0
      %v3747 = vadd.f32 0.0, %v3746
      %3748 = vdwg.mxu0
      %3749 = vrot.lane.b32.xlu0 %v2400, 112
      %v3750 = vpop.permute.xlu0 %3749
      %3751 = vrot.lane.b32.xlu0 %v2400, 80
      %v3752 = vpop.permute.xlu0 %3751
      %v3754 = vsel %vm985, %v3750, 0
      %v3757 = vsel %vm985, %v3752, 0
      %3759 = vmatpush.bf16.xpose.msra.mxu0 0
      %3760 = vmatpush.bf16.xpose.msra.mxu0 0
      %3761 = vmatpush.bf16.xpose.msra.mxu0 0
      %3762 = vmatpush.bf16.xpose.msra.mxu0 0
      %3763 = vmatpush.bf16.xpose.msra.mxu0 0
      %3764 = vmatpush.bf16.xpose.msra.mxu0 0
      %3765 = vmatpush.bf16.xpose.msra.mxu0 0
      %3766 = vmatpush.bf16.xpose.msra.mxu0 %v3757
      %3767 = vmatmul.bf16.gmra.mxu0 %v3754
      %v3768 = vpop.f32.mrf.mxu0
      %v3769 = vadd.f32 0.0, %v3768
      %v3770 = vpop.f32.mrf.mxu0
      %v3771 = vadd.f32 0.0, %v3770
      %3772 = vdwg.mxu0
      %3773 = vrot.lane.b32.xlu0 %v2427, 112
      %v3774 = vpop.permute.xlu0 %3773
      %3775 = vrot.lane.b32.xlu0 %v2427, 80
      %v3776 = vpop.permute.xlu0 %3775
      %v3778 = vsel %vm985, %v3774, 0
      %v3781 = vsel %vm985, %v3776, 0
      %3783 = vmatpush.bf16.xpose.msra.mxu0 0
      %3784 = vmatpush.bf16.xpose.msra.mxu0 0
      %3785 = vmatpush.bf16.xpose.msra.mxu0 0
      %3786 = vmatpush.bf16.xpose.msra.mxu0 0
      %3787 = vmatpush.bf16.xpose.msra.mxu0 0
      %3788 = vmatpush.bf16.xpose.msra.mxu0 0
      %3789 = vmatpush.bf16.xpose.msra.mxu0 0
      %3790 = vmatpush.bf16.xpose.msra.mxu0 %v3781
      %3791 = vmatmul.bf16.gmra.mxu0 %v3778
      %v3792 = vpop.f32.mrf.mxu0
      %v3793 = vadd.f32 0.0, %v3792
      %v3794 = vpop.f32.mrf.mxu0
      %v3795 = vadd.f32 0.0, %v3794
      %3796 = vdwg.mxu0
      %v3797 = vmul.f32 %v3625, 0.35355338
      %v3798 = vmul.f32 %v3627, 0.35355338
      %v3799 = vmul.f32 %v3649, 0.35355338
      %v3800 = vmul.f32 %v3651, 0.35355338
      %v3801 = vmul.f32 %v3673, 0.35355338
      %v3802 = vmul.f32 %v3675, 0.35355338
      %v3803 = vmul.f32 %v3697, 0.35355338
      %v3804 = vmul.f32 %v3699, 0.35355338
      %v3805 = vmul.f32 %v3721, 0.35355338
      %v3806 = vmul.f32 %v3723, 0.35355338
      %v3807 = vmul.f32 %v3745, 0.35355338
      %v3808 = vmul.f32 %v3747, 0.35355338
      %v3809 = vmul.f32 %v3769, 0.35355338
      %v3810 = vmul.f32 %v3771, 0.35355338
      %v3811 = vmul.f32 %v3793, 0.35355338
      %v3812 = vmul.f32 %v3795, 0.35355338
      %v3813 = vsel %vm2530, -1e+09, %v3797
      %v3814 = vsel %vm2531, -1e+09, %v3798
      %v3815 = vsel %vm2532, -1e+09, %v3799
      %v3816 = vsel %vm2533, -1e+09, %v3800
      %v3817 = vsel %vm2534, -1e+09, %v3801
      %v3818 = vsel %vm2535, -1e+09, %v3802
      %v3819 = vsel %vm2536, -1e+09, %v3803
      %v3820 = vsel %vm2537, -1e+09, %v3804
      %v3821 = vsel %vm2538, -1e+09, %v3805
      %v3822 = vsel %vm2539, -1e+09, %v3806
      %v3823 = vsel %vm2540, -1e+09, %v3807
      %v3824 = vsel %vm2541, -1e+09, %v3808
      %v3825 = vsel %vm2542, -1e+09, %v3809
      %v3826 = vsel %vm2543, -1e+09, %v3810
      %v3827 = vsel %vm2544, -1e+09, %v3811
      %v3828 = vsel %vm2545, -1e+09, %v3812
      %v3829 = vsel %vm2563, %v3813, -1e+30
      %v3830 = vsel %vm2563, %v3814, -1e+30
      %v3831 = vsel %vm2563, %v3815, -1e+30
      %v3832 = vsel %vm2563, %v3816, -1e+30
      %v3833 = vsel %vm2563, %v3817, -1e+30
      %v3834 = vsel %vm2563, %v3818, -1e+30
      %v3835 = vsel %vm2563, %v3819, -1e+30
      %v3836 = vsel %vm2563, %v3820, -1e+30
      %v3837 = vsel %vm2563, %v3821, -1e+30
      %v3838 = vsel %vm2563, %v3822, -1e+30
      %v3839 = vsel %vm2563, %v3823, -1e+30
      %v3840 = vsel %vm2563, %v3824, -1e+30
      %v3841 = vsel %vm2563, %v3825, -1e+30
      %v3842 = vsel %vm2563, %v3826, -1e+30
      %v3843 = vsel %vm2563, %v3827, -1e+30
      %v3844 = vsel %vm2563, %v3828, -1e+30
      %v3845 = vsel %vm2580, %v3829, -inf
      %3846 = vmax.xlane.f32.xlu0 %v3845
      %v3847 = vpop.xlane.xlu0 %3846
      %v3848 = vsel %vm2580, %v3830, -inf
      %3849 = vmax.xlane.f32.xlu0 %v3848
      %v3850 = vpop.xlane.xlu0 %3849
      %v3851 = vsel %vm2580, %v3831, -inf
      %3852 = vmax.xlane.f32.xlu0 %v3851
      %v3853 = vpop.xlane.xlu0 %3852
      %v3854 = vsel %vm2580, %v3832, -inf
      %3855 = vmax.xlane.f32.xlu0 %v3854
      %v3856 = vpop.xlane.xlu0 %3855
      %v3857 = vsel %vm2580, %v3833, -inf
      %3858 = vmax.xlane.f32.xlu0 %v3857
      %v3859 = vpop.xlane.xlu0 %3858
      %v3860 = vsel %vm2580, %v3834, -inf
      %3861 = vmax.xlane.f32.xlu0 %v3860
      %v3862 = vpop.xlane.xlu0 %3861
      %v3863 = vsel %vm2580, %v3835, -inf
      %3864 = vmax.xlane.f32.xlu0 %v3863
      %v3865 = vpop.xlane.xlu0 %3864
      %v3866 = vsel %vm2580, %v3836, -inf
      %3867 = vmax.xlane.f32.xlu0 %v3866
      %v3868 = vpop.xlane.xlu0 %3867
      %v3869 = vsel %vm2580, %v3837, -inf
      %3870 = vmax.xlane.f32.xlu0 %v3869
      %v3871 = vpop.xlane.xlu0 %3870
      %v3872 = vsel %vm2580, %v3838, -inf
      %3873 = vmax.xlane.f32.xlu0 %v3872
      %v3874 = vpop.xlane.xlu0 %3873
      %v3875 = vsel %vm2580, %v3839, -inf
      %3876 = vmax.xlane.f32.xlu0 %v3875
      %v3877 = vpop.xlane.xlu0 %3876
      %v3878 = vsel %vm2580, %v3840, -inf
      %3879 = vmax.xlane.f32.xlu0 %v3878
      %v3880 = vpop.xlane.xlu0 %3879
      %v3881 = vsel %vm2580, %v3841, -inf
      %3882 = vmax.xlane.f32.xlu0 %v3881
      %v3883 = vpop.xlane.xlu0 %3882
      %v3884 = vsel %vm2580, %v3842, -inf
      %3885 = vmax.xlane.f32.xlu0 %v3884
      %v3886 = vpop.xlane.xlu0 %3885
      %v3887 = vsel %vm2580, %v3843, -inf
      %3888 = vmax.xlane.f32.xlu0 %v3887
      %v3889 = vpop.xlane.xlu0 %3888
      %v3890 = vsel %vm2580, %v3844, -inf
      %3891 = vmax.xlane.f32.xlu0 %v3890
      %v3892 = vpop.xlane.xlu0 %3891
      %v3893 = vsub.f32 %v3829, %v3847
      %v3894 = vsub.f32 %v3830, %v3850
      %v3895 = vsub.f32 %v3831, %v3853
      %v3896 = vsub.f32 %v3832, %v3856
      %v3897 = vsub.f32 %v3833, %v3859
      %v3898 = vsub.f32 %v3834, %v3862
      %v3899 = vsub.f32 %v3835, %v3865
      %v3900 = vsub.f32 %v3836, %v3868
      %v3901 = vsub.f32 %v3837, %v3871
      %v3902 = vsub.f32 %v3838, %v3874
      %v3903 = vsub.f32 %v3839, %v3877
      %v3904 = vsub.f32 %v3840, %v3880
      %v3905 = vsub.f32 %v3841, %v3883
      %v3906 = vsub.f32 %v3842, %v3886
      %v3907 = vsub.f32 %v3843, %v3889
      %v3908 = vsub.f32 %v3844, %v3892
      %v3909 = vmul.f32 %v3893, 1.442695
      %v3910 = vpow.pop %v3909
      %v3911 = vmul.f32 %v3894, 1.442695
      %v3912 = vpow.pop %v3911
      %v3913 = vmul.f32 %v3895, 1.442695
      %v3914 = vpow.pop %v3913
      %v3915 = vmul.f32 %v3896, 1.442695
      %v3916 = vpow.pop %v3915
      %v3917 = vmul.f32 %v3897, 1.442695
      %v3918 = vpow.pop %v3917
      %v3919 = vmul.f32 %v3898, 1.442695
      %v3920 = vpow.pop %v3919
      %v3921 = vmul.f32 %v3899, 1.442695
      %v3922 = vpow.pop %v3921
      %v3923 = vmul.f32 %v3900, 1.442695
      %v3924 = vpow.pop %v3923
      %v3925 = vmul.f32 %v3901, 1.442695
      %v3926 = vpow.pop %v3925
      %v3927 = vmul.f32 %v3902, 1.442695
      %v3928 = vpow.pop %v3927
      %v3929 = vmul.f32 %v3903, 1.442695
      %v3930 = vpow.pop %v3929
      %v3931 = vmul.f32 %v3904, 1.442695
      %v3932 = vpow.pop %v3931
      %v3933 = vmul.f32 %v3905, 1.442695
      %v3934 = vpow.pop %v3933
      %v3935 = vmul.f32 %v3906, 1.442695
      %v3936 = vpow.pop %v3935
      %v3937 = vmul.f32 %v3907, 1.442695
      %v3938 = vpow.pop %v3937
      %v3939 = vmul.f32 %v3908, 1.442695
      %v3940 = vpow.pop %v3939
      %v3941 = vsel %vm2580, %v3910, 0.0
      %3942 = vadd.xlane.f32.xlu0 %v3941
      %v3943 = vpop.xlane.xlu0 %3942
      %v3944 = vsel %vm2580, %v3912, 0.0
      %3945 = vadd.xlane.f32.xlu0 %v3944
      %v3946 = vpop.xlane.xlu0 %3945
      %v3947 = vsel %vm2580, %v3914, 0.0
      %3948 = vadd.xlane.f32.xlu0 %v3947
      %v3949 = vpop.xlane.xlu0 %3948
      %v3950 = vsel %vm2580, %v3916, 0.0
      %3951 = vadd.xlane.f32.xlu0 %v3950
      %v3952 = vpop.xlane.xlu0 %3951
      %v3953 = vsel %vm2580, %v3918, 0.0
      %3954 = vadd.xlane.f32.xlu0 %v3953
      %v3955 = vpop.xlane.xlu0 %3954
      %v3956 = vsel %vm2580, %v3920, 0.0
      %3957 = vadd.xlane.f32.xlu0 %v3956
      %v3958 = vpop.xlane.xlu0 %3957
      %v3959 = vsel %vm2580, %v3922, 0.0
      %3960 = vadd.xlane.f32.xlu0 %v3959
      %v3961 = vpop.xlane.xlu0 %3960
      %v3962 = vsel %vm2580, %v3924, 0.0
      %3963 = vadd.xlane.f32.xlu0 %v3962
      %v3964 = vpop.xlane.xlu0 %3963
      %v3965 = vsel %vm2580, %v3926, 0.0
      %3966 = vadd.xlane.f32.xlu0 %v3965
      %v3967 = vpop.xlane.xlu0 %3966
      %v3968 = vsel %vm2580, %v3928, 0.0
      %3969 = vadd.xlane.f32.xlu0 %v3968
      %v3970 = vpop.xlane.xlu0 %3969
      %v3971 = vsel %vm2580, %v3930, 0.0
      %3972 = vadd.xlane.f32.xlu0 %v3971
      %v3973 = vpop.xlane.xlu0 %3972
      %v3974 = vsel %vm2580, %v3932, 0.0
      %3975 = vadd.xlane.f32.xlu0 %v3974
      %v3976 = vpop.xlane.xlu0 %3975
      %v3977 = vsel %vm2580, %v3934, 0.0
      %3978 = vadd.xlane.f32.xlu0 %v3977
      %v3979 = vpop.xlane.xlu0 %3978
      %v3980 = vsel %vm2580, %v3936, 0.0
      %3981 = vadd.xlane.f32.xlu0 %v3980
      %v3982 = vpop.xlane.xlu0 %3981
      %v3983 = vsel %vm2580, %v3938, 0.0
      %3984 = vadd.xlane.f32.xlu0 %v3983
      %v3985 = vpop.xlane.xlu0 %3984
      %v3986 = vsel %vm2580, %v3940, 0.0
      %3987 = vadd.xlane.f32.xlu0 %v3986
      %v3988 = vpop.xlane.xlu0 %3987
      %v3989 = vrcp.pop %v3943
      %v3990 = vrcp.pop %v3946
      %v3991 = vrcp.pop %v3949
      %v3992 = vrcp.pop %v3952
      %v3993 = vrcp.pop %v3955
      %v3994 = vrcp.pop %v3958
      %v3995 = vrcp.pop %v3961
      %v3996 = vrcp.pop %v3964
      %v3997 = vrcp.pop %v3967
      %v3998 = vrcp.pop %v3970
      %v3999 = vrcp.pop %v3973
      %v4000 = vrcp.pop %v3976
      %v4001 = vrcp.pop %v3979
      %v4002 = vrcp.pop %v3982
      %v4003 = vrcp.pop %v3985
      %v4004 = vrcp.pop %v3988
      %v4005 = vmul.f32 %v3910, %v3989
      %v4006 = vmul.f32 %v3912, %v3990
      %v4007 = vmul.f32 %v3914, %v3991
      %v4008 = vmul.f32 %v3916, %v3992
      %v4009 = vmul.f32 %v3918, %v3993
      %v4010 = vmul.f32 %v3920, %v3994
      %v4011 = vmul.f32 %v3922, %v3995
      %v4012 = vmul.f32 %v3924, %v3996
      %v4013 = vmul.f32 %v3926, %v3997
      %v4014 = vmul.f32 %v3928, %v3998
      %v4015 = vmul.f32 %v3930, %v3999
      %v4016 = vmul.f32 %v3932, %v4000
      %v4017 = vmul.f32 %v3934, %v4001
      %v4018 = vmul.f32 %v3936, %v4002
      %v4019 = vmul.f32 %v3938, %v4003
      %v4020 = vmul.f32 %v3940, %v4004
      %v4021 = vpack.c.bf16 %v4005, %v4005
      %v4022 = vpack.c.bf16 %v4006, %v4006
      %v4023 = vpack.c.bf16 %v4007, %v4007
      %v4024 = vpack.c.bf16 %v4008, %v4008
      %v4025 = vpack.c.bf16 %v4009, %v4009
      %v4026 = vpack.c.bf16 %v4010, %v4010
      %v4027 = vpack.c.bf16 %v4011, %v4011
      %v4028 = vpack.c.bf16 %v4012, %v4012
      %v4029 = vpack.c.bf16 %v4013, %v4013
      %v4030 = vpack.c.bf16 %v4014, %v4014
      %v4031 = vpack.c.bf16 %v4015, %v4015
      %v4032 = vpack.c.bf16 %v4016, %v4016
      %v4033 = vpack.c.bf16 %v4017, %v4017
      %v4034 = vpack.c.bf16 %v4018, %v4018
      %v4035 = vpack.c.bf16 %v4019, %v4019
      %v4036 = vpack.c.bf16 %v4020, %v4020
      %v4039 = vunpack.c.l.b16 %v4021
      %v4040 = vunpack.c.l.b16 %v4022
      %v4041 = vpack.c.b16 %v4040, %v4039
      %4042 = vrot.lane.b32.xlu0 %v2238, 48
      %v4043 = vpop.permute.xlu0 %4042
      %v4046 = vsel %vm2580, %v4041, 0
      %4048 = vmatpush.bf16.msra.mxu0 0
      %4049 = vmatpush.bf16.msra.mxu0 0
      %4050 = vmatpush.bf16.msra.mxu0 0
      %4051 = vmatpush.bf16.msra.mxu0 0
      %4052 = vmatpush.bf16.msra.mxu0 0
      %4053 = vmatpush.bf16.msra.mxu0 0
      %4054 = vmatpush.bf16.msra.mxu0 0
      %4055 = vmatpush.bf16.msra.mxu0 %v4043
      %4056 = vmatmul.bf16.gmra.mxu0 %v4046
      %v4057 = vpop.f32.mrf.mxu0
      %v4058 = vadd.f32 0.0, %v4057
      %v4059 = vpop.f32.mrf.mxu0
      %v4060 = vadd.f32 0.0, %v4059
      %4061 = vdwg.mxu0
      %v4064 = vunpack.c.l.b16 %v4023
      %v4065 = vunpack.c.l.b16 %v4024
      %v4066 = vpack.c.b16 %v4065, %v4064
      %4067 = vrot.lane.b32.xlu0 %v2265, 48
      %v4068 = vpop.permute.xlu0 %4067
      %v4071 = vsel %vm2580, %v4066, 0
      %4073 = vmatpush.bf16.msra.mxu0 0
      %4074 = vmatpush.bf16.msra.mxu0 0
      %4075 = vmatpush.bf16.msra.mxu0 0
      %4076 = vmatpush.bf16.msra.mxu0 0
      %4077 = vmatpush.bf16.msra.mxu0 0
      %4078 = vmatpush.bf16.msra.mxu0 0
      %4079 = vmatpush.bf16.msra.mxu0 0
      %4080 = vmatpush.bf16.msra.mxu0 %v4068
      %4081 = vmatmul.bf16.gmra.mxu0 %v4071
      %v4082 = vpop.f32.mrf.mxu0
      %v4083 = vadd.f32 0.0, %v4082
      %v4084 = vpop.f32.mrf.mxu0
      %v4085 = vadd.f32 0.0, %v4084
      %4086 = vdwg.mxu0
      %v4089 = vunpack.c.l.b16 %v4025
      %v4090 = vunpack.c.l.b16 %v4026
      %v4091 = vpack.c.b16 %v4090, %v4089
      %4092 = vrot.lane.b32.xlu0 %v2292, 48
      %v4093 = vpop.permute.xlu0 %4092
      %v4096 = vsel %vm2580, %v4091, 0
      %4098 = vmatpush.bf16.msra.mxu0 0
      %4099 = vmatpush.bf16.msra.mxu0 0
      %4100 = vmatpush.bf16.msra.mxu0 0
      %4101 = vmatpush.bf16.msra.mxu0 0
      %4102 = vmatpush.bf16.msra.mxu0 0
      %4103 = vmatpush.bf16.msra.mxu0 0
      %4104 = vmatpush.bf16.msra.mxu0 0
      %4105 = vmatpush.bf16.msra.mxu0 %v4093
      %4106 = vmatmul.bf16.gmra.mxu0 %v4096
      %v4107 = vpop.f32.mrf.mxu0
      %v4108 = vadd.f32 0.0, %v4107
      %v4109 = vpop.f32.mrf.mxu0
      %v4110 = vadd.f32 0.0, %v4109
      %4111 = vdwg.mxu0
      %v4114 = vunpack.c.l.b16 %v4027
      %v4115 = vunpack.c.l.b16 %v4028
      %v4116 = vpack.c.b16 %v4115, %v4114
      %4117 = vrot.lane.b32.xlu0 %v2319, 48
      %v4118 = vpop.permute.xlu0 %4117
      %v4121 = vsel %vm2580, %v4116, 0
      %4123 = vmatpush.bf16.msra.mxu0 0
      %4124 = vmatpush.bf16.msra.mxu0 0
      %4125 = vmatpush.bf16.msra.mxu0 0
      %4126 = vmatpush.bf16.msra.mxu0 0
      %4127 = vmatpush.bf16.msra.mxu0 0
      %4128 = vmatpush.bf16.msra.mxu0 0
      %4129 = vmatpush.bf16.msra.mxu0 0
      %4130 = vmatpush.bf16.msra.mxu0 %v4118
      %4131 = vmatmul.bf16.gmra.mxu0 %v4121
      %v4132 = vpop.f32.mrf.mxu0
      %v4133 = vadd.f32 0.0, %v4132
      %v4134 = vpop.f32.mrf.mxu0
      %v4135 = vadd.f32 0.0, %v4134
      %4136 = vdwg.mxu0
      %v4139 = vunpack.c.l.b16 %v4029
      %v4140 = vunpack.c.l.b16 %v4030
      %v4141 = vpack.c.b16 %v4140, %v4139
      %4142 = vrot.lane.b32.xlu0 %v2346, 48
      %v4143 = vpop.permute.xlu0 %4142
      %v4146 = vsel %vm2580, %v4141, 0
      %4148 = vmatpush.bf16.msra.mxu0 0
      %4149 = vmatpush.bf16.msra.mxu0 0
      %4150 = vmatpush.bf16.msra.mxu0 0
      %4151 = vmatpush.bf16.msra.mxu0 0
      %4152 = vmatpush.bf16.msra.mxu0 0
      %4153 = vmatpush.bf16.msra.mxu0 0
      %4154 = vmatpush.bf16.msra.mxu0 0
      %4155 = vmatpush.bf16.msra.mxu0 %v4143
      %4156 = vmatmul.bf16.gmra.mxu0 %v4146
      %v4157 = vpop.f32.mrf.mxu0
      %v4158 = vadd.f32 0.0, %v4157
      %v4159 = vpop.f32.mrf.mxu0
      %v4160 = vadd.f32 0.0, %v4159
      %4161 = vdwg.mxu0
      %v4164 = vunpack.c.l.b16 %v4031
      %v4165 = vunpack.c.l.b16 %v4032
      %v4166 = vpack.c.b16 %v4165, %v4164
      %4167 = vrot.lane.b32.xlu0 %v2373, 48
      %v4168 = vpop.permute.xlu0 %4167
      %v4171 = vsel %vm2580, %v4166, 0
      %4173 = vmatpush.bf16.msra.mxu0 0
      %4174 = vmatpush.bf16.msra.mxu0 0
      %4175 = vmatpush.bf16.msra.mxu0 0
      %4176 = vmatpush.bf16.msra.mxu0 0
      %4177 = vmatpush.bf16.msra.mxu0 0
      %4178 = vmatpush.bf16.msra.mxu0 0
      %4179 = vmatpush.bf16.msra.mxu0 0
      %4180 = vmatpush.bf16.msra.mxu0 %v4168
      %4181 = vmatmul.bf16.gmra.mxu0 %v4171
      %v4182 = vpop.f32.mrf.mxu0
      %v4183 = vadd.f32 0.0, %v4182
      %v4184 = vpop.f32.mrf.mxu0
      %v4185 = vadd.f32 0.0, %v4184
      %4186 = vdwg.mxu0
      %v4189 = vunpack.c.l.b16 %v4033
      %v4190 = vunpack.c.l.b16 %v4034
      %v4191 = vpack.c.b16 %v4190, %v4189
      %4192 = vrot.lane.b32.xlu0 %v2400, 48
      %v4193 = vpop.permute.xlu0 %4192
      %v4196 = vsel %vm2580, %v4191, 0
      %4198 = vmatpush.bf16.msra.mxu0 0
      %4199 = vmatpush.bf16.msra.mxu0 0
      %4200 = vmatpush.bf16.msra.mxu0 0
      %4201 = vmatpush.bf16.msra.mxu0 0
      %4202 = vmatpush.bf16.msra.mxu0 0
      %4203 = vmatpush.bf16.msra.mxu0 0
      %4204 = vmatpush.bf16.msra.mxu0 0
      %4205 = vmatpush.bf16.msra.mxu0 %v4193
      %4206 = vmatmul.bf16.gmra.mxu0 %v4196
      %v4207 = vpop.f32.mrf.mxu0
      %v4208 = vadd.f32 0.0, %v4207
      %v4209 = vpop.f32.mrf.mxu0
      %v4210 = vadd.f32 0.0, %v4209
      %4211 = vdwg.mxu0
      %v4214 = vunpack.c.l.b16 %v4035
      %v4215 = vunpack.c.l.b16 %v4036
      %v4216 = vpack.c.b16 %v4215, %v4214
      %4217 = vrot.lane.b32.xlu0 %v2427, 48
      %v4218 = vpop.permute.xlu0 %4217
      %v4221 = vsel %vm2580, %v4216, 0
      %4223 = vmatpush.bf16.msra.mxu0 0
      %4224 = vmatpush.bf16.msra.mxu0 0
      %4225 = vmatpush.bf16.msra.mxu0 0
      %4226 = vmatpush.bf16.msra.mxu0 0
      %4227 = vmatpush.bf16.msra.mxu0 0
      %4228 = vmatpush.bf16.msra.mxu0 0
      %4229 = vmatpush.bf16.msra.mxu0 0
      %4230 = vmatpush.bf16.msra.mxu0 %v4218
      %4231 = vmatmul.bf16.gmra.mxu0 %v4221
      %v4232 = vpop.f32.mrf.mxu0
      %v4233 = vadd.f32 0.0, %v4232
      %v4234 = vpop.f32.mrf.mxu0
      %v4235 = vadd.f32 0.0, %v4234
      %4236 = vdwg.mxu0
      %4237 = vrot.lane.b32.xlu0 %v2238, 104
      %v4238 = vpop.permute.xlu0 %4237
      %4239 = vrot.lane.b32.xlu0 %v2238, 72
      %v4240 = vpop.permute.xlu0 %4239
      %v4242 = vsel %vm985, %v4238, 0
      %v4245 = vsel %vm985, %v4240, 0
      %4247 = vmatpush.bf16.xpose.msra.mxu0 0
      %4248 = vmatpush.bf16.xpose.msra.mxu0 0
      %4249 = vmatpush.bf16.xpose.msra.mxu0 0
      %4250 = vmatpush.bf16.xpose.msra.mxu0 0
      %4251 = vmatpush.bf16.xpose.msra.mxu0 0
      %4252 = vmatpush.bf16.xpose.msra.mxu0 0
      %4253 = vmatpush.bf16.xpose.msra.mxu0 0
      %4254 = vmatpush.bf16.xpose.msra.mxu0 %v4245
      %4255 = vmatmul.bf16.gmra.mxu0 %v4242
      %v4256 = vpop.f32.mrf.mxu0
      %v4257 = vadd.f32 0.0, %v4256
      %v4258 = vpop.f32.mrf.mxu0
      %v4259 = vadd.f32 0.0, %v4258
      %4260 = vdwg.mxu0
      %4261 = vrot.lane.b32.xlu0 %v2265, 104
      %v4262 = vpop.permute.xlu0 %4261
      %4263 = vrot.lane.b32.xlu0 %v2265, 72
      %v4264 = vpop.permute.xlu0 %4263
      %v4266 = vsel %vm985, %v4262, 0
      %v4269 = vsel %vm985, %v4264, 0
      %4271 = vmatpush.bf16.xpose.msra.mxu0 0
      %4272 = vmatpush.bf16.xpose.msra.mxu0 0
      %4273 = vmatpush.bf16.xpose.msra.mxu0 0
      %4274 = vmatpush.bf16.xpose.msra.mxu0 0
      %4275 = vmatpush.bf16.xpose.msra.mxu0 0
      %4276 = vmatpush.bf16.xpose.msra.mxu0 0
      %4277 = vmatpush.bf16.xpose.msra.mxu0 0
      %4278 = vmatpush.bf16.xpose.msra.mxu0 %v4269
      %4279 = vmatmul.bf16.gmra.mxu0 %v4266
      %v4280 = vpop.f32.mrf.mxu0
      %v4281 = vadd.f32 0.0, %v4280
      %v4282 = vpop.f32.mrf.mxu0
      %v4283 = vadd.f32 0.0, %v4282
      %4284 = vdwg.mxu0
      %4285 = vrot.lane.b32.xlu0 %v2292, 104
      %v4286 = vpop.permute.xlu0 %4285
      %4287 = vrot.lane.b32.xlu0 %v2292, 72
      %v4288 = vpop.permute.xlu0 %4287
      %v4290 = vsel %vm985, %v4286, 0
      %v4293 = vsel %vm985, %v4288, 0
      %4295 = vmatpush.bf16.xpose.msra.mxu0 0
      %4296 = vmatpush.bf16.xpose.msra.mxu0 0
      %4297 = vmatpush.bf16.xpose.msra.mxu0 0
      %4298 = vmatpush.bf16.xpose.msra.mxu0 0
      %4299 = vmatpush.bf16.xpose.msra.mxu0 0
      %4300 = vmatpush.bf16.xpose.msra.mxu0 0
      %4301 = vmatpush.bf16.xpose.msra.mxu0 0
      %4302 = vmatpush.bf16.xpose.msra.mxu0 %v4293
      %4303 = vmatmul.bf16.gmra.mxu0 %v4290
      %v4304 = vpop.f32.mrf.mxu0
      %v4305 = vadd.f32 0.0, %v4304
      %v4306 = vpop.f32.mrf.mxu0
      %v4307 = vadd.f32 0.0, %v4306
      %4308 = vdwg.mxu0
      %4309 = vrot.lane.b32.xlu0 %v2319, 104
      %v4310 = vpop.permute.xlu0 %4309
      %4311 = vrot.lane.b32.xlu0 %v2319, 72
      %v4312 = vpop.permute.xlu0 %4311
      %v4314 = vsel %vm985, %v4310, 0
      %v4317 = vsel %vm985, %v4312, 0
      %4319 = vmatpush.bf16.xpose.msra.mxu0 0
      %4320 = vmatpush.bf16.xpose.msra.mxu0 0
      %4321 = vmatpush.bf16.xpose.msra.mxu0 0
      %4322 = vmatpush.bf16.xpose.msra.mxu0 0
      %4323 = vmatpush.bf16.xpose.msra.mxu0 0
      %4324 = vmatpush.bf16.xpose.msra.mxu0 0
      %4325 = vmatpush.bf16.xpose.msra.mxu0 0
      %4326 = vmatpush.bf16.xpose.msra.mxu0 %v4317
      %4327 = vmatmul.bf16.gmra.mxu0 %v4314
      %v4328 = vpop.f32.mrf.mxu0
      %v4329 = vadd.f32 0.0, %v4328
      %v4330 = vpop.f32.mrf.mxu0
      %v4331 = vadd.f32 0.0, %v4330
      %4332 = vdwg.mxu0
      %4333 = vrot.lane.b32.xlu0 %v2346, 104
      %v4334 = vpop.permute.xlu0 %4333
      %4335 = vrot.lane.b32.xlu0 %v2346, 72
      %v4336 = vpop.permute.xlu0 %4335
      %v4338 = vsel %vm985, %v4334, 0
      %v4341 = vsel %vm985, %v4336, 0
      %4343 = vmatpush.bf16.xpose.msra.mxu0 0
      %4344 = vmatpush.bf16.xpose.msra.mxu0 0
      %4345 = vmatpush.bf16.xpose.msra.mxu0 0
      %4346 = vmatpush.bf16.xpose.msra.mxu0 0
      %4347 = vmatpush.bf16.xpose.msra.mxu0 0
      %4348 = vmatpush.bf16.xpose.msra.mxu0 0
      %4349 = vmatpush.bf16.xpose.msra.mxu0 0
      %4350 = vmatpush.bf16.xpose.msra.mxu0 %v4341
      %4351 = vmatmul.bf16.gmra.mxu0 %v4338
      %v4352 = vpop.f32.mrf.mxu0
      %v4353 = vadd.f32 0.0, %v4352
      %v4354 = vpop.f32.mrf.mxu0
      %v4355 = vadd.f32 0.0, %v4354
      %4356 = vdwg.mxu0
      %4357 = vrot.lane.b32.xlu0 %v2373, 104
      %v4358 = vpop.permute.xlu0 %4357
      %4359 = vrot.lane.b32.xlu0 %v2373, 72
      %v4360 = vpop.permute.xlu0 %4359
      %v4362 = vsel %vm985, %v4358, 0
      %v4365 = vsel %vm985, %v4360, 0
      %4367 = vmatpush.bf16.xpose.msra.mxu0 0
      %4368 = vmatpush.bf16.xpose.msra.mxu0 0
      %4369 = vmatpush.bf16.xpose.msra.mxu0 0
      %4370 = vmatpush.bf16.xpose.msra.mxu0 0
      %4371 = vmatpush.bf16.xpose.msra.mxu0 0
      %4372 = vmatpush.bf16.xpose.msra.mxu0 0
      %4373 = vmatpush.bf16.xpose.msra.mxu0 0
      %4374 = vmatpush.bf16.xpose.msra.mxu0 %v4365
      %4375 = vmatmul.bf16.gmra.mxu0 %v4362
      %v4376 = vpop.f32.mrf.mxu0
      %v4377 = vadd.f32 0.0, %v4376
      %v4378 = vpop.f32.mrf.mxu0
      %v4379 = vadd.f32 0.0, %v4378
      %4380 = vdwg.mxu0
      %4381 = vrot.lane.b32.xlu0 %v2400, 104
      %v4382 = vpop.permute.xlu0 %4381
      %4383 = vrot.lane.b32.xlu0 %v2400, 72
      %v4384 = vpop.permute.xlu0 %4383
      %v4386 = vsel %vm985, %v4382, 0
      %v4389 = vsel %vm985, %v4384, 0
      %4391 = vmatpush.bf16.xpose.msra.mxu0 0
      %4392 = vmatpush.bf16.xpose.msra.mxu0 0
      %4393 = vmatpush.bf16.xpose.msra.mxu0 0
      %4394 = vmatpush.bf16.xpose.msra.mxu0 0
      %4395 = vmatpush.bf16.xpose.msra.mxu0 0
      %4396 = vmatpush.bf16.xpose.msra.mxu0 0
      %4397 = vmatpush.bf16.xpose.msra.mxu0 0
      %4398 = vmatpush.bf16.xpose.msra.mxu0 %v4389
      %4399 = vmatmul.bf16.gmra.mxu0 %v4386
      %v4400 = vpop.f32.mrf.mxu0
      %v4401 = vadd.f32 0.0, %v4400
      %v4402 = vpop.f32.mrf.mxu0
      %v4403 = vadd.f32 0.0, %v4402
      %4404 = vdwg.mxu0
      %4405 = vrot.lane.b32.xlu0 %v2427, 104
      %v4406 = vpop.permute.xlu0 %4405
      %4407 = vrot.lane.b32.xlu0 %v2427, 72
      %v4408 = vpop.permute.xlu0 %4407
      %v4410 = vsel %vm985, %v4406, 0
      %v4413 = vsel %vm985, %v4408, 0
      %4415 = vmatpush.bf16.xpose.msra.mxu0 0
      %4416 = vmatpush.bf16.xpose.msra.mxu0 0
      %4417 = vmatpush.bf16.xpose.msra.mxu0 0
      %4418 = vmatpush.bf16.xpose.msra.mxu0 0
      %4419 = vmatpush.bf16.xpose.msra.mxu0 0
      %4420 = vmatpush.bf16.xpose.msra.mxu0 0
      %4421 = vmatpush.bf16.xpose.msra.mxu0 0
      %4422 = vmatpush.bf16.xpose.msra.mxu0 %v4413
      %4423 = vmatmul.bf16.gmra.mxu0 %v4410
      %v4424 = vpop.f32.mrf.mxu0
      %v4425 = vadd.f32 0.0, %v4424
      %v4426 = vpop.f32.mrf.mxu0
      %v4427 = vadd.f32 0.0, %v4426
      %4428 = vdwg.mxu0
      %v4429 = vmul.f32 %v4257, 0.35355338
      %v4430 = vmul.f32 %v4259, 0.35355338
      %v4431 = vmul.f32 %v4281, 0.35355338
      %v4432 = vmul.f32 %v4283, 0.35355338
      %v4433 = vmul.f32 %v4305, 0.35355338
      %v4434 = vmul.f32 %v4307, 0.35355338
      %v4435 = vmul.f32 %v4329, 0.35355338
      %v4436 = vmul.f32 %v4331, 0.35355338
      %v4437 = vmul.f32 %v4353, 0.35355338
      %v4438 = vmul.f32 %v4355, 0.35355338
      %v4439 = vmul.f32 %v4377, 0.35355338
      %v4440 = vmul.f32 %v4379, 0.35355338
      %v4441 = vmul.f32 %v4401, 0.35355338
      %v4442 = vmul.f32 %v4403, 0.35355338
      %v4443 = vmul.f32 %v4425, 0.35355338
      %v4444 = vmul.f32 %v4427, 0.35355338
      %v4445 = vsel %vm2530, -1e+09, %v4429
      %v4446 = vsel %vm2531, -1e+09, %v4430
      %v4447 = vsel %vm2532, -1e+09, %v4431
      %v4448 = vsel %vm2533, -1e+09, %v4432
      %v4449 = vsel %vm2534, -1e+09, %v4433
      %v4450 = vsel %vm2535, -1e+09, %v4434
      %v4451 = vsel %vm2536, -1e+09, %v4435
      %v4452 = vsel %vm2537, -1e+09, %v4436
      %v4453 = vsel %vm2538, -1e+09, %v4437
      %v4454 = vsel %vm2539, -1e+09, %v4438
      %v4455 = vsel %vm2540, -1e+09, %v4439
      %v4456 = vsel %vm2541, -1e+09, %v4440
      %v4457 = vsel %vm2542, -1e+09, %v4441
      %v4458 = vsel %vm2543, -1e+09, %v4442
      %v4459 = vsel %vm2544, -1e+09, %v4443
      %v4460 = vsel %vm2545, -1e+09, %v4444
      %v4461 = vsel %vm2563, %v4445, -1e+30
      %v4462 = vsel %vm2563, %v4446, -1e+30
      %v4463 = vsel %vm2563, %v4447, -1e+30
      %v4464 = vsel %vm2563, %v4448, -1e+30
      %v4465 = vsel %vm2563, %v4449, -1e+30
      %v4466 = vsel %vm2563, %v4450, -1e+30
      %v4467 = vsel %vm2563, %v4451, -1e+30
      %v4468 = vsel %vm2563, %v4452, -1e+30
      %v4469 = vsel %vm2563, %v4453, -1e+30
      %v4470 = vsel %vm2563, %v4454, -1e+30
      %v4471 = vsel %vm2563, %v4455, -1e+30
      %v4472 = vsel %vm2563, %v4456, -1e+30
      %v4473 = vsel %vm2563, %v4457, -1e+30
      %v4474 = vsel %vm2563, %v4458, -1e+30
      %v4475 = vsel %vm2563, %v4459, -1e+30
      %v4476 = vsel %vm2563, %v4460, -1e+30
      %v4477 = vsel %vm2580, %v4461, -inf
      %4478 = vmax.xlane.f32.xlu0 %v4477
      %v4479 = vpop.xlane.xlu0 %4478
      %v4480 = vsel %vm2580, %v4462, -inf
      %4481 = vmax.xlane.f32.xlu0 %v4480
      %v4482 = vpop.xlane.xlu0 %4481
      %v4483 = vsel %vm2580, %v4463, -inf
      %4484 = vmax.xlane.f32.xlu0 %v4483
      %v4485 = vpop.xlane.xlu0 %4484
      %v4486 = vsel %vm2580, %v4464, -inf
      %4487 = vmax.xlane.f32.xlu0 %v4486
      %v4488 = vpop.xlane.xlu0 %4487
      %v4489 = vsel %vm2580, %v4465, -inf
      %4490 = vmax.xlane.f32.xlu0 %v4489
      %v4491 = vpop.xlane.xlu0 %4490
      %v4492 = vsel %vm2580, %v4466, -inf
      %4493 = vmax.xlane.f32.xlu0 %v4492
      %v4494 = vpop.xlane.xlu0 %4493
      %v4495 = vsel %vm2580, %v4467, -inf
      %4496 = vmax.xlane.f32.xlu0 %v4495
      %v4497 = vpop.xlane.xlu0 %4496
      %v4498 = vsel %vm2580, %v4468, -inf
      %4499 = vmax.xlane.f32.xlu0 %v4498
      %v4500 = vpop.xlane.xlu0 %4499
      %v4501 = vsel %vm2580, %v4469, -inf
      %4502 = vmax.xlane.f32.xlu0 %v4501
      %v4503 = vpop.xlane.xlu0 %4502
      %v4504 = vsel %vm2580, %v4470, -inf
      %4505 = vmax.xlane.f32.xlu0 %v4504
      %v4506 = vpop.xlane.xlu0 %4505
      %v4507 = vsel %vm2580, %v4471, -inf
      %4508 = vmax.xlane.f32.xlu0 %v4507
      %v4509 = vpop.xlane.xlu0 %4508
      %v4510 = vsel %vm2580, %v4472, -inf
      %4511 = vmax.xlane.f32.xlu0 %v4510
      %v4512 = vpop.xlane.xlu0 %4511
      %v4513 = vsel %vm2580, %v4473, -inf
      %4514 = vmax.xlane.f32.xlu0 %v4513
      %v4515 = vpop.xlane.xlu0 %4514
      %v4516 = vsel %vm2580, %v4474, -inf
      %4517 = vmax.xlane.f32.xlu0 %v4516
      %v4518 = vpop.xlane.xlu0 %4517
      %v4519 = vsel %vm2580, %v4475, -inf
      %4520 = vmax.xlane.f32.xlu0 %v4519
      %v4521 = vpop.xlane.xlu0 %4520
      %v4522 = vsel %vm2580, %v4476, -inf
      %4523 = vmax.xlane.f32.xlu0 %v4522
      %v4524 = vpop.xlane.xlu0 %4523
      %v4525 = vsub.f32 %v4461, %v4479
      %v4526 = vsub.f32 %v4462, %v4482
      %v4527 = vsub.f32 %v4463, %v4485
      %v4528 = vsub.f32 %v4464, %v4488
      %v4529 = vsub.f32 %v4465, %v4491
      %v4530 = vsub.f32 %v4466, %v4494
      %v4531 = vsub.f32 %v4467, %v4497
      %v4532 = vsub.f32 %v4468, %v4500
      %v4533 = vsub.f32 %v4469, %v4503
      %v4534 = vsub.f32 %v4470, %v4506
      %v4535 = vsub.f32 %v4471, %v4509
      %v4536 = vsub.f32 %v4472, %v4512
      %v4537 = vsub.f32 %v4473, %v4515
      %v4538 = vsub.f32 %v4474, %v4518
      %v4539 = vsub.f32 %v4475, %v4521
      %v4540 = vsub.f32 %v4476, %v4524
      %v4541 = vmul.f32 %v4525, 1.442695
      %v4542 = vpow.pop %v4541
      %v4543 = vmul.f32 %v4526, 1.442695
      %v4544 = vpow.pop %v4543
      %v4545 = vmul.f32 %v4527, 1.442695
      %v4546 = vpow.pop %v4545
      %v4547 = vmul.f32 %v4528, 1.442695
      %v4548 = vpow.pop %v4547
      %v4549 = vmul.f32 %v4529, 1.442695
      %v4550 = vpow.pop %v4549
      %v4551 = vmul.f32 %v4530, 1.442695
      %v4552 = vpow.pop %v4551
      %v4553 = vmul.f32 %v4531, 1.442695
      %v4554 = vpow.pop %v4553
      %v4555 = vmul.f32 %v4532, 1.442695
      %v4556 = vpow.pop %v4555
      %v4557 = vmul.f32 %v4533, 1.442695
      %v4558 = vpow.pop %v4557
      %v4559 = vmul.f32 %v4534, 1.442695
      %v4560 = vpow.pop %v4559
      %v4561 = vmul.f32 %v4535, 1.442695
      %v4562 = vpow.pop %v4561
      %v4563 = vmul.f32 %v4536, 1.442695
      %v4564 = vpow.pop %v4563
      %v4565 = vmul.f32 %v4537, 1.442695
      %v4566 = vpow.pop %v4565
      %v4567 = vmul.f32 %v4538, 1.442695
      %v4568 = vpow.pop %v4567
      %v4569 = vmul.f32 %v4539, 1.442695
      %v4570 = vpow.pop %v4569
      %v4571 = vmul.f32 %v4540, 1.442695
      %v4572 = vpow.pop %v4571
      %v4573 = vsel %vm2580, %v4542, 0.0
      %4574 = vadd.xlane.f32.xlu0 %v4573
      %v4575 = vpop.xlane.xlu0 %4574
      %v4576 = vsel %vm2580, %v4544, 0.0
      %4577 = vadd.xlane.f32.xlu0 %v4576
      %v4578 = vpop.xlane.xlu0 %4577
      %v4579 = vsel %vm2580, %v4546, 0.0
      %4580 = vadd.xlane.f32.xlu0 %v4579
      %v4581 = vpop.xlane.xlu0 %4580
      %v4582 = vsel %vm2580, %v4548, 0.0
      %4583 = vadd.xlane.f32.xlu0 %v4582
      %v4584 = vpop.xlane.xlu0 %4583
      %v4585 = vsel %vm2580, %v4550, 0.0
      %4586 = vadd.xlane.f32.xlu0 %v4585
      %v4587 = vpop.xlane.xlu0 %4586
      %v4588 = vsel %vm2580, %v4552, 0.0
      %4589 = vadd.xlane.f32.xlu0 %v4588
      %v4590 = vpop.xlane.xlu0 %4589
      %v4591 = vsel %vm2580, %v4554, 0.0
      %4592 = vadd.xlane.f32.xlu0 %v4591
      %v4593 = vpop.xlane.xlu0 %4592
      %v4594 = vsel %vm2580, %v4556, 0.0
      %4595 = vadd.xlane.f32.xlu0 %v4594
      %v4596 = vpop.xlane.xlu0 %4595
      %v4597 = vsel %vm2580, %v4558, 0.0
      %4598 = vadd.xlane.f32.xlu0 %v4597
      %v4599 = vpop.xlane.xlu0 %4598
      %v4600 = vsel %vm2580, %v4560, 0.0
      %4601 = vadd.xlane.f32.xlu0 %v4600
      %v4602 = vpop.xlane.xlu0 %4601
      %v4603 = vsel %vm2580, %v4562, 0.0
      %4604 = vadd.xlane.f32.xlu0 %v4603
      %v4605 = vpop.xlane.xlu0 %4604
      %v4606 = vsel %vm2580, %v4564, 0.0
      %4607 = vadd.xlane.f32.xlu0 %v4606
      %v4608 = vpop.xlane.xlu0 %4607
      %v4609 = vsel %vm2580, %v4566, 0.0
      %4610 = vadd.xlane.f32.xlu0 %v4609
      %v4611 = vpop.xlane.xlu0 %4610
      %v4612 = vsel %vm2580, %v4568, 0.0
      %4613 = vadd.xlane.f32.xlu0 %v4612
      %v4614 = vpop.xlane.xlu0 %4613
      %v4615 = vsel %vm2580, %v4570, 0.0
      %4616 = vadd.xlane.f32.xlu0 %v4615
      %v4617 = vpop.xlane.xlu0 %4616
      %v4618 = vsel %vm2580, %v4572, 0.0
      %4619 = vadd.xlane.f32.xlu0 %v4618
      %v4620 = vpop.xlane.xlu0 %4619
      %v4621 = vrcp.pop %v4575
      %v4622 = vrcp.pop %v4578
      %v4623 = vrcp.pop %v4581
      %v4624 = vrcp.pop %v4584
      %v4625 = vrcp.pop %v4587
      %v4626 = vrcp.pop %v4590
      %v4627 = vrcp.pop %v4593
      %v4628 = vrcp.pop %v4596
      %v4629 = vrcp.pop %v4599
      %v4630 = vrcp.pop %v4602
      %v4631 = vrcp.pop %v4605
      %v4632 = vrcp.pop %v4608
      %v4633 = vrcp.pop %v4611
      %v4634 = vrcp.pop %v4614
      %v4635 = vrcp.pop %v4617
      %v4636 = vrcp.pop %v4620
      %v4637 = vmul.f32 %v4542, %v4621
      %v4638 = vmul.f32 %v4544, %v4622
      %v4639 = vmul.f32 %v4546, %v4623
      %v4640 = vmul.f32 %v4548, %v4624
      %v4641 = vmul.f32 %v4550, %v4625
      %v4642 = vmul.f32 %v4552, %v4626
      %v4643 = vmul.f32 %v4554, %v4627
      %v4644 = vmul.f32 %v4556, %v4628
      %v4645 = vmul.f32 %v4558, %v4629
      %v4646 = vmul.f32 %v4560, %v4630
      %v4647 = vmul.f32 %v4562, %v4631
      %v4648 = vmul.f32 %v4564, %v4632
      %v4649 = vmul.f32 %v4566, %v4633
      %v4650 = vmul.f32 %v4568, %v4634
      %v4651 = vmul.f32 %v4570, %v4635
      %v4652 = vmul.f32 %v4572, %v4636
      %v4653 = vpack.c.bf16 %v4637, %v4637
      %v4654 = vpack.c.bf16 %v4638, %v4638
      %v4655 = vpack.c.bf16 %v4639, %v4639
      %v4656 = vpack.c.bf16 %v4640, %v4640
      %v4657 = vpack.c.bf16 %v4641, %v4641
      %v4658 = vpack.c.bf16 %v4642, %v4642
      %v4659 = vpack.c.bf16 %v4643, %v4643
      %v4660 = vpack.c.bf16 %v4644, %v4644
      %v4661 = vpack.c.bf16 %v4645, %v4645
      %v4662 = vpack.c.bf16 %v4646, %v4646
      %v4663 = vpack.c.bf16 %v4647, %v4647
      %v4664 = vpack.c.bf16 %v4648, %v4648
      %v4665 = vpack.c.bf16 %v4649, %v4649
      %v4666 = vpack.c.bf16 %v4650, %v4650
      %v4667 = vpack.c.bf16 %v4651, %v4651
      %v4668 = vpack.c.bf16 %v4652, %v4652
      %v4671 = vunpack.c.l.b16 %v4653
      %v4672 = vunpack.c.l.b16 %v4654
      %v4673 = vpack.c.b16 %v4672, %v4671
      %4674 = vrot.lane.b32.xlu0 %v2238, 40
      %v4675 = vpop.permute.xlu0 %4674
      %v4678 = vsel %vm2580, %v4673, 0
      %4680 = vmatpush.bf16.msra.mxu0 0
      %4681 = vmatpush.bf16.msra.mxu0 0
      %4682 = vmatpush.bf16.msra.mxu0 0
      %4683 = vmatpush.bf16.msra.mxu0 0
      %4684 = vmatpush.bf16.msra.mxu0 0
      %4685 = vmatpush.bf16.msra.mxu0 0
      %4686 = vmatpush.bf16.msra.mxu0 0
      %4687 = vmatpush.bf16.msra.mxu0 %v4675
      %4688 = vmatmul.bf16.gmra.mxu0 %v4678
      %v4689 = vpop.f32.mrf.mxu0
      %v4690 = vadd.f32 0.0, %v4689
      %v4691 = vpop.f32.mrf.mxu0
      %v4692 = vadd.f32 0.0, %v4691
      %4693 = vdwg.mxu0
      %v4696 = vunpack.c.l.b16 %v4655
      %v4697 = vunpack.c.l.b16 %v4656
      %v4698 = vpack.c.b16 %v4697, %v4696
      %4699 = vrot.lane.b32.xlu0 %v2265, 40
      %v4700 = vpop.permute.xlu0 %4699
      %v4703 = vsel %vm2580, %v4698, 0
      %4705 = vmatpush.bf16.msra.mxu0 0
      %4706 = vmatpush.bf16.msra.mxu0 0
      %4707 = vmatpush.bf16.msra.mxu0 0
      %4708 = vmatpush.bf16.msra.mxu0 0
      %4709 = vmatpush.bf16.msra.mxu0 0
      %4710 = vmatpush.bf16.msra.mxu0 0
      %4711 = vmatpush.bf16.msra.mxu0 0
      %4712 = vmatpush.bf16.msra.mxu0 %v4700
      %4713 = vmatmul.bf16.gmra.mxu0 %v4703
      %v4714 = vpop.f32.mrf.mxu0
      %v4715 = vadd.f32 0.0, %v4714
      %v4716 = vpop.f32.mrf.mxu0
      %v4717 = vadd.f32 0.0, %v4716
      %4718 = vdwg.mxu0
      %v4721 = vunpack.c.l.b16 %v4657
      %v4722 = vunpack.c.l.b16 %v4658
      %v4723 = vpack.c.b16 %v4722, %v4721
      %4724 = vrot.lane.b32.xlu0 %v2292, 40
      %v4725 = vpop.permute.xlu0 %4724
      %v4728 = vsel %vm2580, %v4723, 0
      %4730 = vmatpush.bf16.msra.mxu0 0
      %4731 = vmatpush.bf16.msra.mxu0 0
      %4732 = vmatpush.bf16.msra.mxu0 0
      %4733 = vmatpush.bf16.msra.mxu0 0
      %4734 = vmatpush.bf16.msra.mxu0 0
      %4735 = vmatpush.bf16.msra.mxu0 0
      %4736 = vmatpush.bf16.msra.mxu0 0
      %4737 = vmatpush.bf16.msra.mxu0 %v4725
      %4738 = vmatmul.bf16.gmra.mxu0 %v4728
      %v4739 = vpop.f32.mrf.mxu0
      %v4740 = vadd.f32 0.0, %v4739
      %v4741 = vpop.f32.mrf.mxu0
      %v4742 = vadd.f32 0.0, %v4741
      %4743 = vdwg.mxu0
      %v4746 = vunpack.c.l.b16 %v4659
      %v4747 = vunpack.c.l.b16 %v4660
      %v4748 = vpack.c.b16 %v4747, %v4746
      %4749 = vrot.lane.b32.xlu0 %v2319, 40
      %v4750 = vpop.permute.xlu0 %4749
      %v4753 = vsel %vm2580, %v4748, 0
      %4755 = vmatpush.bf16.msra.mxu0 0
      %4756 = vmatpush.bf16.msra.mxu0 0
      %4757 = vmatpush.bf16.msra.mxu0 0
      %4758 = vmatpush.bf16.msra.mxu0 0
      %4759 = vmatpush.bf16.msra.mxu0 0
      %4760 = vmatpush.bf16.msra.mxu0 0
      %4761 = vmatpush.bf16.msra.mxu0 0
      %4762 = vmatpush.bf16.msra.mxu0 %v4750
      %4763 = vmatmul.bf16.gmra.mxu0 %v4753
      %v4764 = vpop.f32.mrf.mxu0
      %v4765 = vadd.f32 0.0, %v4764
      %v4766 = vpop.f32.mrf.mxu0
      %v4767 = vadd.f32 0.0, %v4766
      %4768 = vdwg.mxu0
      %v4771 = vunpack.c.l.b16 %v4661
      %v4772 = vunpack.c.l.b16 %v4662
      %v4773 = vpack.c.b16 %v4772, %v4771
      %4774 = vrot.lane.b32.xlu0 %v2346, 40
      %v4775 = vpop.permute.xlu0 %4774
      %v4778 = vsel %vm2580, %v4773, 0
      %4780 = vmatpush.bf16.msra.mxu0 0
      %4781 = vmatpush.bf16.msra.mxu0 0
      %4782 = vmatpush.bf16.msra.mxu0 0
      %4783 = vmatpush.bf16.msra.mxu0 0
      %4784 = vmatpush.bf16.msra.mxu0 0
      %4785 = vmatpush.bf16.msra.mxu0 0
      %4786 = vmatpush.bf16.msra.mxu0 0
      %4787 = vmatpush.bf16.msra.mxu0 %v4775
      %4788 = vmatmul.bf16.gmra.mxu0 %v4778
      %v4789 = vpop.f32.mrf.mxu0
      %v4790 = vadd.f32 0.0, %v4789
      %v4791 = vpop.f32.mrf.mxu0
      %v4792 = vadd.f32 0.0, %v4791
      %4793 = vdwg.mxu0
      %v4796 = vunpack.c.l.b16 %v4663
      %v4797 = vunpack.c.l.b16 %v4664
      %v4798 = vpack.c.b16 %v4797, %v4796
      %4799 = vrot.lane.b32.xlu0 %v2373, 40
      %v4800 = vpop.permute.xlu0 %4799
      %v4803 = vsel %vm2580, %v4798, 0
      %4805 = vmatpush.bf16.msra.mxu0 0
      %4806 = vmatpush.bf16.msra.mxu0 0
      %4807 = vmatpush.bf16.msra.mxu0 0
      %4808 = vmatpush.bf16.msra.mxu0 0
      %4809 = vmatpush.bf16.msra.mxu0 0
      %4810 = vmatpush.bf16.msra.mxu0 0
      %4811 = vmatpush.bf16.msra.mxu0 0
      %4812 = vmatpush.bf16.msra.mxu0 %v4800
      %4813 = vmatmul.bf16.gmra.mxu0 %v4803
      %v4814 = vpop.f32.mrf.mxu0
      %v4815 = vadd.f32 0.0, %v4814
      %v4816 = vpop.f32.mrf.mxu0
      %v4817 = vadd.f32 0.0, %v4816
      %4818 = vdwg.mxu0
      %v4821 = vunpack.c.l.b16 %v4665
      %v4822 = vunpack.c.l.b16 %v4666
      %v4823 = vpack.c.b16 %v4822, %v4821
      %4824 = vrot.lane.b32.xlu0 %v2400, 40
      %v4825 = vpop.permute.xlu0 %4824
      %v4828 = vsel %vm2580, %v4823, 0
      %4830 = vmatpush.bf16.msra.mxu0 0
      %4831 = vmatpush.bf16.msra.mxu0 0
      %4832 = vmatpush.bf16.msra.mxu0 0
      %4833 = vmatpush.bf16.msra.mxu0 0
      %4834 = vmatpush.bf16.msra.mxu0 0
      %4835 = vmatpush.bf16.msra.mxu0 0
      %4836 = vmatpush.bf16.msra.mxu0 0
      %4837 = vmatpush.bf16.msra.mxu0 %v4825
      %4838 = vmatmul.bf16.gmra.mxu0 %v4828
      %v4839 = vpop.f32.mrf.mxu0
      %v4840 = vadd.f32 0.0, %v4839
      %v4841 = vpop.f32.mrf.mxu0
      %v4842 = vadd.f32 0.0, %v4841
      %4843 = vdwg.mxu0
      %v4846 = vunpack.c.l.b16 %v4667
      %v4847 = vunpack.c.l.b16 %v4668
      %v4848 = vpack.c.b16 %v4847, %v4846
      %4849 = vrot.lane.b32.xlu0 %v2427, 40
      %v4850 = vpop.permute.xlu0 %4849
      %v4853 = vsel %vm2580, %v4848, 0
      %4855 = vmatpush.bf16.msra.mxu0 0
      %4856 = vmatpush.bf16.msra.mxu0 0
      %4857 = vmatpush.bf16.msra.mxu0 0
      %4858 = vmatpush.bf16.msra.mxu0 0
      %4859 = vmatpush.bf16.msra.mxu0 0
      %4860 = vmatpush.bf16.msra.mxu0 0
      %4861 = vmatpush.bf16.msra.mxu0 0
      %4862 = vmatpush.bf16.msra.mxu0 %v4850
      %4863 = vmatmul.bf16.gmra.mxu0 %v4853
      %v4864 = vpop.f32.mrf.mxu0
      %v4865 = vadd.f32 0.0, %v4864
      %v4866 = vpop.f32.mrf.mxu0
      %v4867 = vadd.f32 0.0, %v4866
      %4868 = vdwg.mxu0
      %4885 = vrot.lane.b32.xlu0 %v3426, 8
      %v4886 = vpop.permute.xlu0 %4885
      %4887 = vrot.lane.b32.xlu0 %v3428, 8
      %v4888 = vpop.permute.xlu0 %4887
      %4889 = vrot.lane.b32.xlu0 %v3451, 8
      %v4890 = vpop.permute.xlu0 %4889
      %4891 = vrot.lane.b32.xlu0 %v3453, 8
      %v4892 = vpop.permute.xlu0 %4891
      %4893 = vrot.lane.b32.xlu0 %v3476, 8
      %v4894 = vpop.permute.xlu0 %4893
      %4895 = vrot.lane.b32.xlu0 %v3478, 8
      %v4896 = vpop.permute.xlu0 %4895
      %4897 = vrot.lane.b32.xlu0 %v3501, 8
      %v4898 = vpop.permute.xlu0 %4897
      %4899 = vrot.lane.b32.xlu0 %v3503, 8
      %v4900 = vpop.permute.xlu0 %4899
      %4901 = vrot.lane.b32.xlu0 %v3526, 8
      %v4902 = vpop.permute.xlu0 %4901
      %4903 = vrot.lane.b32.xlu0 %v3528, 8
      %v4904 = vpop.permute.xlu0 %4903
      %4905 = vrot.lane.b32.xlu0 %v3551, 8
      %v4906 = vpop.permute.xlu0 %4905
      %4907 = vrot.lane.b32.xlu0 %v3553, 8
      %v4908 = vpop.permute.xlu0 %4907
      %4909 = vrot.lane.b32.xlu0 %v3576, 8
      %v4910 = vpop.permute.xlu0 %4909
      %4911 = vrot.lane.b32.xlu0 %v3578, 8
      %v4912 = vpop.permute.xlu0 %4911
      %4913 = vrot.lane.b32.xlu0 %v3601, 8
      %v4914 = vpop.permute.xlu0 %4913
      %4915 = vrot.lane.b32.xlu0 %v3603, 8
      %v4916 = vpop.permute.xlu0 %4915
      %4949 = vrot.lane.b32.xlu0 %v4058, 16
      %v4950 = vpop.permute.xlu0 %4949
      %4951 = vrot.lane.b32.xlu0 %v4060, 16
      %v4952 = vpop.permute.xlu0 %4951
      %4953 = vrot.lane.b32.xlu0 %v4083, 16
      %v4954 = vpop.permute.xlu0 %4953
      %4955 = vrot.lane.b32.xlu0 %v4085, 16
      %v4956 = vpop.permute.xlu0 %4955
      %4957 = vrot.lane.b32.xlu0 %v4108, 16
      %v4958 = vpop.permute.xlu0 %4957
      %4959 = vrot.lane.b32.xlu0 %v4110, 16
      %v4960 = vpop.permute.xlu0 %4959
      %4961 = vrot.lane.b32.xlu0 %v4133, 16
      %v4962 = vpop.permute.xlu0 %4961
      %4963 = vrot.lane.b32.xlu0 %v4135, 16
      %v4964 = vpop.permute.xlu0 %4963
      %4965 = vrot.lane.b32.xlu0 %v4158, 16
      %v4966 = vpop.permute.xlu0 %4965
      %4967 = vrot.lane.b32.xlu0 %v4160, 16
      %v4968 = vpop.permute.xlu0 %4967
      %4969 = vrot.lane.b32.xlu0 %v4183, 16
      %v4970 = vpop.permute.xlu0 %4969
      %4971 = vrot.lane.b32.xlu0 %v4185, 16
      %v4972 = vpop.permute.xlu0 %4971
      %4973 = vrot.lane.b32.xlu0 %v4208, 16
      %v4974 = vpop.permute.xlu0 %4973
      %4975 = vrot.lane.b32.xlu0 %v4210, 16
      %v4976 = vpop.permute.xlu0 %4975
      %4977 = vrot.lane.b32.xlu0 %v4233, 16
      %v4978 = vpop.permute.xlu0 %4977
      %4979 = vrot.lane.b32.xlu0 %v4235, 16
      %v4980 = vpop.permute.xlu0 %4979
      %5013 = vrot.lane.b32.xlu0 %v4690, 24
      %v5014 = vpop.permute.xlu0 %5013
      %5015 = vrot.lane.b32.xlu0 %v4692, 24
      %v5016 = vpop.permute.xlu0 %5015
      %5017 = vrot.lane.b32.xlu0 %v4715, 24
      %v5018 = vpop.permute.xlu0 %5017
      %5019 = vrot.lane.b32.xlu0 %v4717, 24
      %v5020 = vpop.permute.xlu0 %5019
      %5021 = vrot.lane.b32.xlu0 %v4740, 24
      %v5022 = vpop.permute.xlu0 %5021
      %5023 = vrot.lane.b32.xlu0 %v4742, 24
      %v5024 = vpop.permute.xlu0 %5023
      %5025 = vrot.lane.b32.xlu0 %v4765, 24
      %v5026 = vpop.permute.xlu0 %5025
      %5027 = vrot.lane.b32.xlu0 %v4767, 24
      %v5028 = vpop.permute.xlu0 %5027
      %5029 = vrot.lane.b32.xlu0 %v4790, 24
      %v5030 = vpop.permute.xlu0 %5029
      %5031 = vrot.lane.b32.xlu0 %v4792, 24
      %v5032 = vpop.permute.xlu0 %5031
      %5033 = vrot.lane.b32.xlu0 %v4815, 24
      %v5034 = vpop.permute.xlu0 %5033
      %5035 = vrot.lane.b32.xlu0 %v4817, 24
      %v5036 = vpop.permute.xlu0 %5035
      %5037 = vrot.lane.b32.xlu0 %v4840, 24
      %v5038 = vpop.permute.xlu0 %5037
      %5039 = vrot.lane.b32.xlu0 %v4842, 24
      %v5040 = vpop.permute.xlu0 %5039
      %5041 = vrot.lane.b32.xlu0 %v4865, 24
      %v5042 = vpop.permute.xlu0 %5041
      %5043 = vrot.lane.b32.xlu0 %v4867, 24
      %v5044 = vpop.permute.xlu0 %5043
      %v5061 = vsel %vm985, %v2794, %v4886
      %v5062 = vsel %vm985, %v2796, %v4888
      %v5063 = vsel %vm985, %v2819, %v4890
      %v5064 = vsel %vm985, %v2821, %v4892
      %v5065 = vsel %vm985, %v2844, %v4894
      %v5066 = vsel %vm985, %v2846, %v4896
      %v5067 = vsel %vm985, %v2869, %v4898
      %v5068 = vsel %vm985, %v2871, %v4900
      %v5069 = vsel %vm985, %v2894, %v4902
      %v5070 = vsel %vm985, %v2896, %v4904
      %v5071 = vsel %vm985, %v2919, %v4906
      %v5072 = vsel %vm985, %v2921, %v4908
      %v5073 = vsel %vm985, %v2944, %v4910
      %v5074 = vsel %vm985, %v2946, %v4912
      %v5075 = vsel %vm985, %v2969, %v4914
      %v5076 = vsel %vm985, %v2971, %v4916
      %v5077 = vsel %vm2580, %v5061, %v4950
      %v5078 = vsel %vm2580, %v5062, %v4952
      %v5079 = vsel %vm2580, %v5063, %v4954
      %v5080 = vsel %vm2580, %v5064, %v4956
      %v5081 = vsel %vm2580, %v5065, %v4958
      %v5082 = vsel %vm2580, %v5066, %v4960
      %v5083 = vsel %vm2580, %v5067, %v4962
      %v5084 = vsel %vm2580, %v5068, %v4964
      %v5085 = vsel %vm2580, %v5069, %v4966
      %v5086 = vsel %vm2580, %v5070, %v4968
      %v5087 = vsel %vm2580, %v5071, %v4970
      %v5088 = vsel %vm2580, %v5072, %v4972
      %v5089 = vsel %vm2580, %v5073, %v4974
      %v5090 = vsel %vm2580, %v5074, %v4976
      %v5091 = vsel %vm2580, %v5075, %v4978
      %v5092 = vsel %vm2580, %v5076, %v4980
      %vm5093 = vcmask 195584
      %v5094 = vsel %vm5093, %v5077, %v5014
      %v5095 = vsel %vm5093, %v5078, %v5016
      %v5096 = vsel %vm5093, %v5079, %v5018
      %v5097 = vsel %vm5093, %v5080, %v5020
      %v5098 = vsel %vm5093, %v5081, %v5022
      %v5099 = vsel %vm5093, %v5082, %v5024
      %v5100 = vsel %vm5093, %v5083, %v5026
      %v5101 = vsel %vm5093, %v5084, %v5028
      %v5102 = vsel %vm5093, %v5085, %v5030
      %v5103 = vsel %vm5093, %v5086, %v5032
      %v5104 = vsel %vm5093, %v5087, %v5034
      %v5105 = vsel %vm5093, %v5088, %v5036
      %v5106 = vsel %vm5093, %v5089, %v5038
      %v5107 = vsel %vm5093, %v5090, %v5040
      %v5108 = vsel %vm5093, %v5091, %v5042
      %v5109 = vsel %vm5093, %v5092, %v5044
      %v5110 = vpack.c.bf16 %v5095, %v5094
      %v5111 = vpack.c.bf16 %v5097, %v5096
      %v5112 = vpack.c.bf16 %v5099, %v5098
      %v5113 = vpack.c.bf16 %v5101, %v5100
      %v5114 = vpack.c.bf16 %v5103, %v5102
      %v5115 = vpack.c.bf16 %v5105, %v5104
      %v5116 = vpack.c.bf16 %v5107, %v5106
      %v5117 = vpack.c.bf16 %v5109, %v5108
      %v5118 = vld [vmem:[%s9] sm:$0xf]
      %v5119 = vld [vmem:[%s9 + $0x4] sm:$0xf]
      %v5120 = vld [vmem:[%s9 + $0x8] sm:$0xf]
      %v5121 = vld [vmem:[%s9 + $0xc] sm:$0xf]
      %v5126 = vunpack.c.l.b16 %v5118
      %v5127 = vunpack.c.l.b16 %v5119
      %v5128 = vunpack.c.l.b16 %v5120
      %v5129 = vunpack.c.l.b16 %v5121
      %v5130 = vpack.c.b16 %v5127, %v5126
      %v5131 = vpack.c.b16 %v5129, %v5128
      %v5135 = vsel %vm622, %v5110, 0
      %v5138 = vsel %vm622, %v5111, 0
      %v5141 = vsel %vm622, %v5112, 0
      %v5144 = vsel %vm622, %v5113, 0
      %v5147 = vsel %vm622, %v5114, 0
      %v5150 = vsel %vm622, %v5115, 0
      %v5153 = vsel %vm622, %v5116, 0
      %v5156 = vsel %vm622, %v5117, 0
      %5158 = vmatpush.bf16.msra.mxu0 0
      %5159 = vmatpush.bf16.msra.mxu0 0
      %5160 = vmatpush.bf16.msra.mxu0 0
      %5161 = vmatpush.bf16.msra.mxu0 0
      %5162 = vmatpush.bf16.msra.mxu0 0
      %5163 = vmatpush.bf16.msra.mxu0 0
      %5164 = vmatpush.bf16.msra.mxu0 %v5131
      %5165 = vmatpush.bf16.msra.mxu0 %v5130
      %5166 = vmatmul.bf16.gmra.mxu0 %v5135
      %v5167 = vpop.f32.mrf.mxu0
      %v5168 = vadd.f32 0.0, %v5167
      %v5169 = vpop.f32.mrf.mxu0
      %v5170 = vadd.f32 0.0, %v5169
      %5171 = vmatmul.bf16.gmra.mxu0 %v5138
      %v5172 = vpop.f32.mrf.mxu0
      %v5173 = vadd.f32 0.0, %v5172
      %v5174 = vpop.f32.mrf.mxu0
      %v5175 = vadd.f32 0.0, %v5174
      %5176 = vmatmul.bf16.gmra.mxu0 %v5141
      %v5177 = vpop.f32.mrf.mxu0
      %v5178 = vadd.f32 0.0, %v5177
      %v5179 = vpop.f32.mrf.mxu0
      %v5180 = vadd.f32 0.0, %v5179
      %5181 = vmatmul.bf16.gmra.mxu0 %v5144
      %v5182 = vpop.f32.mrf.mxu0
      %v5183 = vadd.f32 0.0, %v5182
      %v5184 = vpop.f32.mrf.mxu0
      %v5185 = vadd.f32 0.0, %v5184
      %5186 = vmatmul.bf16.gmra.mxu0 %v5147
      %v5187 = vpop.f32.mrf.mxu0
      %v5188 = vadd.f32 0.0, %v5187
      %v5189 = vpop.f32.mrf.mxu0
      %v5190 = vadd.f32 0.0, %v5189
      %5191 = vmatmul.bf16.gmra.mxu0 %v5150
      %v5192 = vpop.f32.mrf.mxu0
      %v5193 = vadd.f32 0.0, %v5192
      %v5194 = vpop.f32.mrf.mxu0
      %v5195 = vadd.f32 0.0, %v5194
      %5196 = vmatmul.bf16.gmra.mxu0 %v5153
      %v5197 = vpop.f32.mrf.mxu0
      %v5198 = vadd.f32 0.0, %v5197
      %v5199 = vpop.f32.mrf.mxu0
      %v5200 = vadd.f32 0.0, %v5199
      %5201 = vmatmul.bf16.gmra.mxu0 %v5156
      %v5202 = vpop.f32.mrf.mxu0
      %v5203 = vadd.f32 0.0, %v5202
      %v5204 = vpop.f32.mrf.mxu0
      %v5205 = vadd.f32 0.0, %v5204
      %5206 = vdwg.mxu0
      %v5207 = vadd.f32 %v5168, %v5168
      %v5208 = vadd.f32 %v5170, %v5170
      %v5209 = vadd.f32 %v5173, %v5173
      %v5210 = vadd.f32 %v5175, %v5175
      %v5211 = vadd.f32 %v5178, %v5178
      %v5212 = vadd.f32 %v5180, %v5180
      %v5213 = vadd.f32 %v5183, %v5183
      %v5214 = vadd.f32 %v5185, %v5185
      %v5215 = vadd.f32 %v5188, %v5188
      %v5216 = vadd.f32 %v5190, %v5190
      %v5217 = vadd.f32 %v5193, %v5193
      %v5218 = vadd.f32 %v5195, %v5195
      %v5219 = vadd.f32 %v5198, %v5198
      %v5220 = vadd.f32 %v5200, %v5200
      %v5221 = vadd.f32 %v5203, %v5203
      %v5222 = vadd.f32 %v5205, %v5205
      %v5223 = vsel %vm622, %v5207, 0.0
      %5224 = vadd.xlane.f32.xlu0 %v5223
      %v5225 = vpop.xlane.xlu0 %5224
      %v5226 = vsel %vm622, %v5208, 0.0
      %5227 = vadd.xlane.f32.xlu0 %v5226
      %v5228 = vpop.xlane.xlu0 %5227
      %v5229 = vsel %vm622, %v5209, 0.0
      %5230 = vadd.xlane.f32.xlu0 %v5229
      %v5231 = vpop.xlane.xlu0 %5230
      %v5232 = vsel %vm622, %v5210, 0.0
      %5233 = vadd.xlane.f32.xlu0 %v5232
      %v5234 = vpop.xlane.xlu0 %5233
      %v5235 = vsel %vm622, %v5211, 0.0
      %5236 = vadd.xlane.f32.xlu0 %v5235
      %v5237 = vpop.xlane.xlu0 %5236
      %v5238 = vsel %vm622, %v5212, 0.0
      %5239 = vadd.xlane.f32.xlu0 %v5238
      %v5240 = vpop.xlane.xlu0 %5239
      %v5241 = vsel %vm622, %v5213, 0.0
      %5242 = vadd.xlane.f32.xlu0 %v5241
      %v5243 = vpop.xlane.xlu0 %5242
      %v5244 = vsel %vm622, %v5214, 0.0
      %5245 = vadd.xlane.f32.xlu0 %v5244
      %v5246 = vpop.xlane.xlu0 %5245
      %v5247 = vsel %vm622, %v5215, 0.0
      %5248 = vadd.xlane.f32.xlu0 %v5247
      %v5249 = vpop.xlane.xlu0 %5248
      %v5250 = vsel %vm622, %v5216, 0.0
      %5251 = vadd.xlane.f32.xlu0 %v5250
      %v5252 = vpop.xlane.xlu0 %5251
      %v5253 = vsel %vm622, %v5217, 0.0
      %5254 = vadd.xlane.f32.xlu0 %v5253
      %v5255 = vpop.xlane.xlu0 %5254
      %v5256 = vsel %vm622, %v5218, 0.0
      %5257 = vadd.xlane.f32.xlu0 %v5256
      %v5258 = vpop.xlane.xlu0 %5257
      %v5259 = vsel %vm622, %v5219, 0.0
      %5260 = vadd.xlane.f32.xlu0 %v5259
      %v5261 = vpop.xlane.xlu0 %5260
      %v5262 = vsel %vm622, %v5220, 0.0
      %5263 = vadd.xlane.f32.xlu0 %v5262
      %v5264 = vpop.xlane.xlu0 %5263
      %v5265 = vsel %vm622, %v5221, 0.0
      %5266 = vadd.xlane.f32.xlu0 %v5265
      %v5267 = vpop.xlane.xlu0 %5266
      %v5268 = vsel %vm622, %v5222, 0.0
      %5269 = vadd.xlane.f32.xlu0 %v5268
      %v5270 = vpop.xlane.xlu0 %5269
      %v5271 = vmul.f32 %v5225, %v1749
      %v5272 = vmul.f32 %v5228, %v1749
      %v5273 = vmul.f32 %v5231, %v1749
      %v5274 = vmul.f32 %v5234, %v1749
      %v5275 = vmul.f32 %v5237, %v1749
      %v5276 = vmul.f32 %v5240, %v1749
      %v5277 = vmul.f32 %v5243, %v1749
      %v5278 = vmul.f32 %v5246, %v1749
      %v5279 = vmul.f32 %v5249, %v1749
      %v5280 = vmul.f32 %v5252, %v1749
      %v5281 = vmul.f32 %v5255, %v1749
      %v5282 = vmul.f32 %v5258, %v1749
      %v5283 = vmul.f32 %v5261, %v1749
      %v5284 = vmul.f32 %v5264, %v1749
      %v5285 = vmul.f32 %v5267, %v1749
      %v5286 = vmul.f32 %v5270, %v1749
      %v5287 = vsub.f32 %v5207, %v5271
      %v5288 = vsub.f32 %v5208, %v5272
      %v5289 = vsub.f32 %v5209, %v5273
      %v5290 = vsub.f32 %v5210, %v5274
      %v5291 = vsub.f32 %v5211, %v5275
      %v5292 = vsub.f32 %v5212, %v5276
      %v5293 = vsub.f32 %v5213, %v5277
      %v5294 = vsub.f32 %v5214, %v5278
      %v5295 = vsub.f32 %v5215, %v5279
      %v5296 = vsub.f32 %v5216, %v5280
      %v5297 = vsub.f32 %v5217, %v5281
      %v5298 = vsub.f32 %v5218, %v5282
      %v5299 = vsub.f32 %v5219, %v5283
      %v5300 = vsub.f32 %v5220, %v5284
      %v5301 = vsub.f32 %v5221, %v5285
      %v5302 = vsub.f32 %v5222, %v5286
      %v5303 = vmul.f32 %v5287, %v5287
      %v5304 = vmul.f32 %v5288, %v5288
      %v5305 = vmul.f32 %v5289, %v5289
      %v5306 = vmul.f32 %v5290, %v5290
      %v5307 = vmul.f32 %v5291, %v5291
      %v5308 = vmul.f32 %v5292, %v5292
      %v5309 = vmul.f32 %v5293, %v5293
      %v5310 = vmul.f32 %v5294, %v5294
      %v5311 = vmul.f32 %v5295, %v5295
      %v5312 = vmul.f32 %v5296, %v5296
      %v5313 = vmul.f32 %v5297, %v5297
      %v5314 = vmul.f32 %v5298, %v5298
      %v5315 = vmul.f32 %v5299, %v5299
      %v5316 = vmul.f32 %v5300, %v5300
      %v5317 = vmul.f32 %v5301, %v5301
      %v5318 = vmul.f32 %v5302, %v5302
      %v5319 = vsel %vm622, %v5303, 0.0
      %5320 = vadd.xlane.f32.xlu0 %v5319
      %v5321 = vpop.xlane.xlu0 %5320
      %v5322 = vsel %vm622, %v5304, 0.0
      %5323 = vadd.xlane.f32.xlu0 %v5322
      %v5324 = vpop.xlane.xlu0 %5323
      %v5325 = vsel %vm622, %v5305, 0.0
      %5326 = vadd.xlane.f32.xlu0 %v5325
      %v5327 = vpop.xlane.xlu0 %5326
      %v5328 = vsel %vm622, %v5306, 0.0
      %5329 = vadd.xlane.f32.xlu0 %v5328
      %v5330 = vpop.xlane.xlu0 %5329
      %v5331 = vsel %vm622, %v5307, 0.0
      %5332 = vadd.xlane.f32.xlu0 %v5331
      %v5333 = vpop.xlane.xlu0 %5332
      %v5334 = vsel %vm622, %v5308, 0.0
      %5335 = vadd.xlane.f32.xlu0 %v5334
      %v5336 = vpop.xlane.xlu0 %5335
      %v5337 = vsel %vm622, %v5309, 0.0
      %5338 = vadd.xlane.f32.xlu0 %v5337
      %v5339 = vpop.xlane.xlu0 %5338
      %v5340 = vsel %vm622, %v5310, 0.0
      %5341 = vadd.xlane.f32.xlu0 %v5340
      %v5342 = vpop.xlane.xlu0 %5341
      %v5343 = vsel %vm622, %v5311, 0.0
      %5344 = vadd.xlane.f32.xlu0 %v5343
      %v5345 = vpop.xlane.xlu0 %5344
      %v5346 = vsel %vm622, %v5312, 0.0
      %5347 = vadd.xlane.f32.xlu0 %v5346
      %v5348 = vpop.xlane.xlu0 %5347
      %v5349 = vsel %vm622, %v5313, 0.0
      %5350 = vadd.xlane.f32.xlu0 %v5349
      %v5351 = vpop.xlane.xlu0 %5350
      %v5352 = vsel %vm622, %v5314, 0.0
      %5353 = vadd.xlane.f32.xlu0 %v5352
      %v5354 = vpop.xlane.xlu0 %5353
      %v5355 = vsel %vm622, %v5315, 0.0
      %5356 = vadd.xlane.f32.xlu0 %v5355
      %v5357 = vpop.xlane.xlu0 %5356
      %v5358 = vsel %vm622, %v5316, 0.0
      %5359 = vadd.xlane.f32.xlu0 %v5358
      %v5360 = vpop.xlane.xlu0 %5359
      %v5361 = vsel %vm622, %v5317, 0.0
      %5362 = vadd.xlane.f32.xlu0 %v5361
      %v5363 = vpop.xlane.xlu0 %5362
      %v5364 = vsel %vm622, %v5318, 0.0
      %5365 = vadd.xlane.f32.xlu0 %v5364
      %v5366 = vpop.xlane.xlu0 %5365
      %v5367 = vmul.f32 %v5321, %v1749
      %v5368 = vmul.f32 %v5324, %v1749
      %v5369 = vmul.f32 %v5327, %v1749
      %v5370 = vmul.f32 %v5330, %v1749
      %v5371 = vmul.f32 %v5333, %v1749
      %v5372 = vmul.f32 %v5336, %v1749
      %v5373 = vmul.f32 %v5339, %v1749
      %v5374 = vmul.f32 %v5342, %v1749
      %v5375 = vmul.f32 %v5345, %v1749
      %v5376 = vmul.f32 %v5348, %v1749
      %v5377 = vmul.f32 %v5351, %v1749
      %v5378 = vmul.f32 %v5354, %v1749
      %v5379 = vmul.f32 %v5357, %v1749
      %v5380 = vmul.f32 %v5360, %v1749
      %v5381 = vmul.f32 %v5363, %v1749
      %v5382 = vmul.f32 %v5366, %v1749
      %v5383 = vadd.f32 %v5367, 1e-05
      %v5384 = vadd.f32 %v5368, 1e-05
      %v5385 = vadd.f32 %v5369, 1e-05
      %v5386 = vadd.f32 %v5370, 1e-05
      %v5387 = vadd.f32 %v5371, 1e-05
      %v5388 = vadd.f32 %v5372, 1e-05
      %v5389 = vadd.f32 %v5373, 1e-05
      %v5390 = vadd.f32 %v5374, 1e-05
      %v5391 = vadd.f32 %v5375, 1e-05
      %v5392 = vadd.f32 %v5376, 1e-05
      %v5393 = vadd.f32 %v5377, 1e-05
      %v5394 = vadd.f32 %v5378, 1e-05
      %v5395 = vadd.f32 %v5379, 1e-05
      %v5396 = vadd.f32 %v5380, 1e-05
      %v5397 = vadd.f32 %v5381, 1e-05
      %v5398 = vadd.f32 %v5382, 1e-05
      %v5399 = vrsqrt.pop %v5383
      %v5400 = vmul.f32 %v5399, %v5383
      %v5401 = vmul.f32 %v5400, %v5399
      %v5402 = vmul.f32 0.5, %v5401
      %v5403 = vsub.f32 1.5, %v5402
      %v5404 = vmul.f32 %v5399, %v5403
      %vm5405 = vweird.f32 %v5383
      %vm5406 = vweird.f32 %v5399
      %vm5407 = vmor %vm5405, %vm5406
      %v5408 = vsel %vm5407, %v5399, %v5404
      %v5409 = vrsqrt.pop %v5384
      %v5410 = vmul.f32 %v5409, %v5384
      %v5411 = vmul.f32 %v5410, %v5409
      %v5412 = vmul.f32 0.5, %v5411
      %v5413 = vsub.f32 1.5, %v5412
      %v5414 = vmul.f32 %v5409, %v5413
      %vm5415 = vweird.f32 %v5384
      %vm5416 = vweird.f32 %v5409
      %vm5417 = vmor %vm5415, %vm5416
      %v5418 = vsel %vm5417, %v5409, %v5414
      %v5419 = vrsqrt.pop %v5385
      %v5420 = vmul.f32 %v5419, %v5385
      %v5421 = vmul.f32 %v5420, %v5419
      %v5422 = vmul.f32 0.5, %v5421
      %v5423 = vsub.f32 1.5, %v5422
      %v5424 = vmul.f32 %v5419, %v5423
      %vm5425 = vweird.f32 %v5385
      %vm5426 = vweird.f32 %v5419
      %vm5427 = vmor %vm5425, %vm5426
      %v5428 = vsel %vm5427, %v5419, %v5424
      %v5429 = vrsqrt.pop %v5386
      %v5430 = vmul.f32 %v5429, %v5386
      %v5431 = vmul.f32 %v5430, %v5429
      %v5432 = vmul.f32 0.5, %v5431
      %v5433 = vsub.f32 1.5, %v5432
      %v5434 = vmul.f32 %v5429, %v5433
      %vm5435 = vweird.f32 %v5386
      %vm5436 = vweird.f32 %v5429
      %vm5437 = vmor %vm5435, %vm5436
      %v5438 = vsel %vm5437, %v5429, %v5434
      %v5439 = vrsqrt.pop %v5387
      %v5440 = vmul.f32 %v5439, %v5387
      %v5441 = vmul.f32 %v5440, %v5439
      %v5442 = vmul.f32 0.5, %v5441
      %v5443 = vsub.f32 1.5, %v5442
      %v5444 = vmul.f32 %v5439, %v5443
      %vm5445 = vweird.f32 %v5387
      %vm5446 = vweird.f32 %v5439
      %vm5447 = vmor %vm5445, %vm5446
      %v5448 = vsel %vm5447, %v5439, %v5444
      %v5449 = vrsqrt.pop %v5388
      %v5450 = vmul.f32 %v5449, %v5388
      %v5451 = vmul.f32 %v5450, %v5449
      %v5452 = vmul.f32 0.5, %v5451
      %v5453 = vsub.f32 1.5, %v5452
      %v5454 = vmul.f32 %v5449, %v5453
      %vm5455 = vweird.f32 %v5388
      %vm5456 = vweird.f32 %v5449
      %vm5457 = vmor %vm5455, %vm5456
      %v5458 = vsel %vm5457, %v5449, %v5454
      %v5459 = vrsqrt.pop %v5389
      %v5460 = vmul.f32 %v5459, %v5389
      %v5461 = vmul.f32 %v5460, %v5459
      %v5462 = vmul.f32 0.5, %v5461
      %v5463 = vsub.f32 1.5, %v5462
      %v5464 = vmul.f32 %v5459, %v5463
      %vm5465 = vweird.f32 %v5389
      %vm5466 = vweird.f32 %v5459
      %vm5467 = vmor %vm5465, %vm5466
      %v5468 = vsel %vm5467, %v5459, %v5464
      %v5469 = vrsqrt.pop %v5390
      %v5470 = vmul.f32 %v5469, %v5390
      %v5471 = vmul.f32 %v5470, %v5469
      %v5472 = vmul.f32 0.5, %v5471
      %v5473 = vsub.f32 1.5, %v5472
      %v5474 = vmul.f32 %v5469, %v5473
      %vm5475 = vweird.f32 %v5390
      %vm5476 = vweird.f32 %v5469
      %vm5477 = vmor %vm5475, %vm5476
      %v5478 = vsel %vm5477, %v5469, %v5474
      %v5479 = vrsqrt.pop %v5391
      %v5480 = vmul.f32 %v5479, %v5391
      %v5481 = vmul.f32 %v5480, %v5479
      %v5482 = vmul.f32 0.5, %v5481
      %v5483 = vsub.f32 1.5, %v5482
      %v5484 = vmul.f32 %v5479, %v5483
      %vm5485 = vweird.f32 %v5391
      %vm5486 = vweird.f32 %v5479
      %vm5487 = vmor %vm5485, %vm5486
      %v5488 = vsel %vm5487, %v5479, %v5484
      %v5489 = vrsqrt.pop %v5392
      %v5490 = vmul.f32 %v5489, %v5392
      %v5491 = vmul.f32 %v5490, %v5489
      %v5492 = vmul.f32 0.5, %v5491
      %v5493 = vsub.f32 1.5, %v5492
      %v5494 = vmul.f32 %v5489, %v5493
      %vm5495 = vweird.f32 %v5392
      %vm5496 = vweird.f32 %v5489
      %vm5497 = vmor %vm5495, %vm5496
      %v5498 = vsel %vm5497, %v5489, %v5494
      %v5499 = vrsqrt.pop %v5393
      %v5500 = vmul.f32 %v5499, %v5393
      %v5501 = vmul.f32 %v5500, %v5499
      %v5502 = vmul.f32 0.5, %v5501
      %v5503 = vsub.f32 1.5, %v5502
      %v5504 = vmul.f32 %v5499, %v5503
      %vm5505 = vweird.f32 %v5393
      %vm5506 = vweird.f32 %v5499
      %vm5507 = vmor %vm5505, %vm5506
      %v5508 = vsel %vm5507, %v5499, %v5504
      %v5509 = vrsqrt.pop %v5394
      %v5510 = vmul.f32 %v5509, %v5394
      %v5511 = vmul.f32 %v5510, %v5509
      %v5512 = vmul.f32 0.5, %v5511
      %v5513 = vsub.f32 1.5, %v5512
      %v5514 = vmul.f32 %v5509, %v5513
      %vm5515 = vweird.f32 %v5394
      %vm5516 = vweird.f32 %v5509
      %vm5517 = vmor %vm5515, %vm5516
      %v5518 = vsel %vm5517, %v5509, %v5514
      %v5519 = vrsqrt.pop %v5395
      %v5520 = vmul.f32 %v5519, %v5395
      %v5521 = vmul.f32 %v5520, %v5519
      %v5522 = vmul.f32 0.5, %v5521
      %v5523 = vsub.f32 1.5, %v5522
      %v5524 = vmul.f32 %v5519, %v5523
      %vm5525 = vweird.f32 %v5395
      %vm5526 = vweird.f32 %v5519
      %vm5527 = vmor %vm5525, %vm5526
      %v5528 = vsel %vm5527, %v5519, %v5524
      %v5529 = vrsqrt.pop %v5396
      %v5530 = vmul.f32 %v5529, %v5396
      %v5531 = vmul.f32 %v5530, %v5529
      %v5532 = vmul.f32 0.5, %v5531
      %v5533 = vsub.f32 1.5, %v5532
      %v5534 = vmul.f32 %v5529, %v5533
      %vm5535 = vweird.f32 %v5396
      %vm5536 = vweird.f32 %v5529
      %vm5537 = vmor %vm5535, %vm5536
      %v5538 = vsel %vm5537, %v5529, %v5534
      %v5539 = vrsqrt.pop %v5397
      %v5540 = vmul.f32 %v5539, %v5397
      %v5541 = vmul.f32 %v5540, %v5539
      %v5542 = vmul.f32 0.5, %v5541
      %v5543 = vsub.f32 1.5, %v5542
      %v5544 = vmul.f32 %v5539, %v5543
      %vm5545 = vweird.f32 %v5397
      %vm5546 = vweird.f32 %v5539
      %vm5547 = vmor %vm5545, %vm5546
      %v5548 = vsel %vm5547, %v5539, %v5544
      %v5549 = vrsqrt.pop %v5398
      %v5550 = vmul.f32 %v5549, %v5398
      %v5551 = vmul.f32 %v5550, %v5549
      %v5552 = vmul.f32 0.5, %v5551
      %v5553 = vsub.f32 1.5, %v5552
      %v5554 = vmul.f32 %v5549, %v5553
      %vm5555 = vweird.f32 %v5398
      %vm5556 = vweird.f32 %v5549
      %vm5557 = vmor %vm5555, %vm5556
      %v5558 = vsel %vm5557, %v5549, %v5554
      %v5559 = vmul.f32 %v5287, %v5408
      %v5560 = vmul.f32 %v5288, %v5418
      %v5561 = vmul.f32 %v5289, %v5428
      %v5562 = vmul.f32 %v5290, %v5438
      %v5563 = vmul.f32 %v5291, %v5448
      %v5564 = vmul.f32 %v5292, %v5458
      %v5565 = vmul.f32 %v5293, %v5468
      %v5566 = vmul.f32 %v5294, %v5478
      %v5567 = vmul.f32 %v5295, %v5488
      %v5568 = vmul.f32 %v5296, %v5498
      %v5569 = vmul.f32 %v5297, %v5508
      %v5570 = vmul.f32 %v5298, %v5518
      %v5571 = vmul.f32 %v5299, %v5528
      %v5572 = vmul.f32 %v5300, %v5538
      %v5573 = vmul.f32 %v5301, %v5548
      %v5574 = vmul.f32 %v5302, %v5558
      %v5575 = vperm.slane %v1678, 2
      %v5576 = vmul.f32 %v5559, %v5575
      %v5577 = vmul.f32 %v5560, %v5575
      %v5578 = vmul.f32 %v5561, %v5575
      %v5579 = vmul.f32 %v5562, %v5575
      %v5580 = vmul.f32 %v5563, %v5575
      %v5581 = vmul.f32 %v5564, %v5575
      %v5582 = vmul.f32 %v5565, %v5575
      %v5583 = vmul.f32 %v5566, %v5575
      %v5584 = vmul.f32 %v5567, %v5575
      %v5585 = vmul.f32 %v5568, %v5575
      %v5586 = vmul.f32 %v5569, %v5575
      %v5587 = vmul.f32 %v5570, %v5575
      %v5588 = vmul.f32 %v5571, %v5575
      %v5589 = vmul.f32 %v5572, %v5575
      %v5590 = vmul.f32 %v5573, %v5575
      %v5591 = vmul.f32 %v5574, %v5575
      %v5592 = vperm.slane %v1678, 3
      %v5593 = vadd.f32 %v5576, %v5592
      %v5594 = vadd.f32 %v5577, %v5592
      %v5595 = vadd.f32 %v5578, %v5592
      %v5596 = vadd.f32 %v5579, %v5592
      %v5597 = vadd.f32 %v5580, %v5592
      %v5598 = vadd.f32 %v5581, %v5592
      %v5599 = vadd.f32 %v5582, %v5592
      %v5600 = vadd.f32 %v5583, %v5592
      %v5601 = vadd.f32 %v5584, %v5592
      %v5602 = vadd.f32 %v5585, %v5592
      %v5603 = vadd.f32 %v5586, %v5592
      %v5604 = vadd.f32 %v5587, %v5592
      %v5605 = vadd.f32 %v5588, %v5592
      %v5606 = vadd.f32 %v5589, %v5592
      %v5607 = vadd.f32 %v5590, %v5592
      %v5608 = vadd.f32 %v5591, %v5592
      %v5609 = vpack.c.bf16 %v5594, %v5593
      %v5610 = vpack.c.bf16 %v5596, %v5595
      %v5611 = vpack.c.bf16 %v5598, %v5597
      %v5612 = vpack.c.bf16 %v5600, %v5599
      %v5613 = vpack.c.bf16 %v5602, %v5601
      %v5614 = vpack.c.bf16 %v5604, %v5603
      %v5615 = vpack.c.bf16 %v5606, %v5605
      %v5616 = vpack.c.bf16 %v5608, %v5607
      %v5617 = vld [vmem:[%s11] sm:$0xf]
      %v5618 = vld [vmem:[%s11 + $0x4] sm:$0xf]
      %v5619 = vld [vmem:[%s11 + $0x8] sm:$0xf]
      %v5620 = vld [vmem:[%s11 + $0xc] sm:$0xf]
      %v5621 = vld [vmem:[%s12] sm:$0x1]
      %v5623 = vperm.slane %v5621, 0
      %v5629 = vunpack.c.l.b16 %v5617
      %v5630 = vunpack.c.l.b16 %v5618
      %v5631 = vunpack.c.l.b16 %v5619
      %v5632 = vunpack.c.l.b16 %v5620
      %v5633 = vpack.c.b16 %v5630, %v5629
      %v5634 = vpack.c.b16 %v5632, %v5631
      %v5638 = vsel %vm622, %v5609, 0
      %v5641 = vsel %vm622, %v5610, 0
      %v5644 = vsel %vm622, %v5611, 0
      %v5647 = vsel %vm622, %v5612, 0
      %v5650 = vsel %vm622, %v5613, 0
      %v5653 = vsel %vm622, %v5614, 0
      %v5656 = vsel %vm622, %v5615, 0
      %v5659 = vsel %vm622, %v5616, 0
      %5661 = vmatpush.bf16.msra.mxu0 0
      %5662 = vmatpush.bf16.msra.mxu0 0
      %5663 = vmatpush.bf16.msra.mxu0 0
      %5664 = vmatpush.bf16.msra.mxu0 0
      %5665 = vmatpush.bf16.msra.mxu0 0
      %5666 = vmatpush.bf16.msra.mxu0 0
      %5667 = vmatpush.bf16.msra.mxu0 %v5634
      %5668 = vmatpush.bf16.msra.mxu0 %v5633
      %5669 = vmatmul.bf16.gmra.mxu0 %v5638
      %v5670 = vpop.f32.mrf.mxu0
      %v5671 = vadd.f32 %v5623, %v5670
      %v5672 = vpop.f32.mrf.mxu0
      %v5673 = vadd.f32 %v5623, %v5672
      %5674 = vmatmul.bf16.gmra.mxu0 %v5641
      %v5675 = vpop.f32.mrf.mxu0
      %v5676 = vadd.f32 %v5623, %v5675
      %v5677 = vpop.f32.mrf.mxu0
      %v5678 = vadd.f32 %v5623, %v5677
      %5679 = vmatmul.bf16.gmra.mxu0 %v5644
      %v5680 = vpop.f32.mrf.mxu0
      %v5681 = vadd.f32 %v5623, %v5680
      %v5682 = vpop.f32.mrf.mxu0
      %v5683 = vadd.f32 %v5623, %v5682
      %5684 = vmatmul.bf16.gmra.mxu0 %v5647
      %v5685 = vpop.f32.mrf.mxu0
      %v5686 = vadd.f32 %v5623, %v5685
      %v5687 = vpop.f32.mrf.mxu0
      %v5688 = vadd.f32 %v5623, %v5687
      %5689 = vmatmul.bf16.gmra.mxu0 %v5650
      %v5690 = vpop.f32.mrf.mxu0
      %v5691 = vadd.f32 %v5623, %v5690
      %v5692 = vpop.f32.mrf.mxu0
      %v5693 = vadd.f32 %v5623, %v5692
      %5694 = vmatmul.bf16.gmra.mxu0 %v5653
      %v5695 = vpop.f32.mrf.mxu0
      %v5696 = vadd.f32 %v5623, %v5695
      %v5697 = vpop.f32.mrf.mxu0
      %v5698 = vadd.f32 %v5623, %v5697
      %5699 = vmatmul.bf16.gmra.mxu0 %v5656
      %v5700 = vpop.f32.mrf.mxu0
      %v5701 = vadd.f32 %v5623, %v5700
      %v5702 = vpop.f32.mrf.mxu0
      %v5703 = vadd.f32 %v5623, %v5702
      %5704 = vmatmul.bf16.gmra.mxu0 %v5659
      %v5705 = vpop.f32.mrf.mxu0
      %v5706 = vadd.f32 %v5623, %v5705
      %v5707 = vpop.f32.mrf.mxu0
      %v5708 = vadd.f32 %v5623, %v5707
      %5709 = vdwg.mxu0
      %v5710 = vmax.f32 %v5671, 0.0
      %v5711 = vmax.f32 %v5673, 0.0
      %v5712 = vmax.f32 %v5676, 0.0
      %v5713 = vmax.f32 %v5678, 0.0
      %v5714 = vmax.f32 %v5681, 0.0
      %v5715 = vmax.f32 %v5683, 0.0
      %v5716 = vmax.f32 %v5686, 0.0
      %v5717 = vmax.f32 %v5688, 0.0
      %v5718 = vmax.f32 %v5691, 0.0
      %v5719 = vmax.f32 %v5693, 0.0
      %v5720 = vmax.f32 %v5696, 0.0
      %v5721 = vmax.f32 %v5698, 0.0
      %v5722 = vmax.f32 %v5701, 0.0
      %v5723 = vmax.f32 %v5703, 0.0
      %v5724 = vmax.f32 %v5706, 0.0
      %v5725 = vmax.f32 %v5708, 0.0
      %v5726 = vpack.c.bf16 %v5711, %v5710
      %v5727 = vpack.c.bf16 %v5713, %v5712
      %v5728 = vpack.c.bf16 %v5715, %v5714
      %v5729 = vpack.c.bf16 %v5717, %v5716
      %v5730 = vpack.c.bf16 %v5719, %v5718
      %v5731 = vpack.c.bf16 %v5721, %v5720
      %v5732 = vpack.c.bf16 %v5723, %v5722
      %v5733 = vpack.c.bf16 %v5725, %v5724
      %v5734 = vld [vmem:[%s13] sm:$0xf]
      %v5735 = vld [vmem:[%s13 + $0x4] sm:$0xf]
      %v5736 = vld [vmem:[%s13 + $0x8] sm:$0xf]
      %v5737 = vld [vmem:[%s13 + $0xc] sm:$0xf]
      %v5738 = vld [vmem:[%s13 + $0x10] sm:$0xf]
      %v5739 = vld [vmem:[%s13 + $0x14] sm:$0xf]
      %v5740 = vld [vmem:[%s13 + $0x18] sm:$0xf]
      %v5741 = vld [vmem:[%s13 + $0x1c] sm:$0xf]
      %v5742 = vld [vmem:[%s14] sm:$0x1]
      %v5744 = vperm.slane %v5742, 0
      %v5754 = vunpack.c.l.b16 %v5734
      %v5755 = vunpack.c.l.b16 %v5735
      %v5756 = vunpack.c.l.b16 %v5736
      %v5757 = vunpack.c.l.b16 %v5737
      %v5758 = vunpack.c.l.b16 %v5738
      %v5759 = vunpack.c.l.b16 %v5739
      %v5760 = vunpack.c.l.b16 %v5740
      %v5761 = vunpack.c.l.b16 %v5741
      %v5762 = vpack.c.b16 %v5755, %v5754
      %v5763 = vpack.c.b16 %v5757, %v5756
      %v5764 = vpack.c.b16 %v5759, %v5758
      %v5765 = vpack.c.b16 %v5761, %v5760
      %vm5770 = vcmask 523264
      %v5772 = vsel %vm5770, %v5726, 0
      %v5775 = vsel %vm5770, %v5727, 0
      %v5778 = vsel %vm5770, %v5728, 0
      %v5781 = vsel %vm5770, %v5729, 0
      %v5784 = vsel %vm5770, %v5730, 0
      %v5787 = vsel %vm5770, %v5731, 0
      %v5790 = vsel %vm5770, %v5732, 0
      %v5793 = vsel %vm5770, %v5733, 0
      %5795 = vmatpush.bf16.msra.mxu0 0
      %5796 = vmatpush.bf16.msra.mxu0 0
      %5797 = vmatpush.bf16.msra.mxu0 0
      %5798 = vmatpush.bf16.msra.mxu0 0
      %5799 = vmatpush.bf16.msra.mxu0 %v5765
      %5800 = vmatpush.bf16.msra.mxu0 %v5764
      %5801 = vmatpush.bf16.msra.mxu0 %v5763
      %5802 = vmatpush.bf16.msra.mxu0 %v5762
      %5803 = vmatmul.bf16.gmra.mxu0 %v5772
      %v5804 = vpop.f32.mrf.mxu0
      %v5805 = vadd.f32 %v5744, %v5804
      %v5806 = vpop.f32.mrf.mxu0
      %v5807 = vadd.f32 %v5744, %v5806
      %5808 = vmatmul.bf16.gmra.mxu0 %v5775
      %v5809 = vpop.f32.mrf.mxu0
      %v5810 = vadd.f32 %v5744, %v5809
      %v5811 = vpop.f32.mrf.mxu0
      %v5812 = vadd.f32 %v5744, %v5811
      %5813 = vmatmul.bf16.gmra.mxu0 %v5778
      %v5814 = vpop.f32.mrf.mxu0
      %v5815 = vadd.f32 %v5744, %v5814
      %v5816 = vpop.f32.mrf.mxu0
      %v5817 = vadd.f32 %v5744, %v5816
      %5818 = vmatmul.bf16.gmra.mxu0 %v5781
      %v5819 = vpop.f32.mrf.mxu0
      %v5820 = vadd.f32 %v5744, %v5819
      %v5821 = vpop.f32.mrf.mxu0
      %v5822 = vadd.f32 %v5744, %v5821
      %5823 = vmatmul.bf16.gmra.mxu0 %v5784
      %v5824 = vpop.f32.mrf.mxu0
      %v5825 = vadd.f32 %v5744, %v5824
      %v5826 = vpop.f32.mrf.mxu0
      %v5827 = vadd.f32 %v5744, %v5826
      %5828 = vmatmul.bf16.gmra.mxu0 %v5787
      %v5829 = vpop.f32.mrf.mxu0
      %v5830 = vadd.f32 %v5744, %v5829
      %v5831 = vpop.f32.mrf.mxu0
      %v5832 = vadd.f32 %v5744, %v5831
      %5833 = vmatmul.bf16.gmra.mxu0 %v5790
      %v5834 = vpop.f32.mrf.mxu0
      %v5835 = vadd.f32 %v5744, %v5834
      %v5836 = vpop.f32.mrf.mxu0
      %v5837 = vadd.f32 %v5744, %v5836
      %5838 = vmatmul.bf16.gmra.mxu0 %v5793
      %v5839 = vpop.f32.mrf.mxu0
      %v5840 = vadd.f32 %v5744, %v5839
      %v5841 = vpop.f32.mrf.mxu0
      %v5842 = vadd.f32 %v5744, %v5841
      %5843 = vdwg.mxu0
      %v5844 = vadd.f32 %v5805, %v5805
      %v5845 = vadd.f32 %v5807, %v5807
      %v5846 = vadd.f32 %v5810, %v5810
      %v5847 = vadd.f32 %v5812, %v5812
      %v5848 = vadd.f32 %v5815, %v5815
      %v5849 = vadd.f32 %v5817, %v5817
      %v5850 = vadd.f32 %v5820, %v5820
      %v5851 = vadd.f32 %v5822, %v5822
      %v5852 = vadd.f32 %v5825, %v5825
      %v5853 = vadd.f32 %v5827, %v5827
      %v5854 = vadd.f32 %v5830, %v5830
      %v5855 = vadd.f32 %v5832, %v5832
      %v5856 = vadd.f32 %v5835, %v5835
      %v5857 = vadd.f32 %v5837, %v5837
      %v5858 = vadd.f32 %v5840, %v5840
      %v5859 = vadd.f32 %v5842, %v5842
      %v5860 = vsel %vm622, %v5844, 0.0
      %5861 = vadd.xlane.f32.xlu0 %v5860
      %v5862 = vpop.xlane.xlu0 %5861
      %v5863 = vsel %vm622, %v5845, 0.0
      %5864 = vadd.xlane.f32.xlu0 %v5863
      %v5865 = vpop.xlane.xlu0 %5864
      %v5866 = vsel %vm622, %v5846, 0.0
      %5867 = vadd.xlane.f32.xlu0 %v5866
      %v5868 = vpop.xlane.xlu0 %5867
      %v5869 = vsel %vm622, %v5847, 0.0
      %5870 = vadd.xlane.f32.xlu0 %v5869
      %v5871 = vpop.xlane.xlu0 %5870
      %v5872 = vsel %vm622, %v5848, 0.0
      %5873 = vadd.xlane.f32.xlu0 %v5872
      %v5874 = vpop.xlane.xlu0 %5873
      %v5875 = vsel %vm622, %v5849, 0.0
      %5876 = vadd.xlane.f32.xlu0 %v5875
      %v5877 = vpop.xlane.xlu0 %5876
      %v5878 = vsel %vm622, %v5850, 0.0
      %5879 = vadd.xlane.f32.xlu0 %v5878
      %v5880 = vpop.xlane.xlu0 %5879
      %v5881 = vsel %vm622, %v5851, 0.0
      %5882 = vadd.xlane.f32.xlu0 %v5881
      %v5883 = vpop.xlane.xlu0 %5882
      %v5884 = vsel %vm622, %v5852, 0.0
      %5885 = vadd.xlane.f32.xlu0 %v5884
      %v5886 = vpop.xlane.xlu0 %5885
      %v5887 = vsel %vm622, %v5853, 0.0
      %5888 = vadd.xlane.f32.xlu0 %v5887
      %v5889 = vpop.xlane.xlu0 %5888
      %v5890 = vsel %vm622, %v5854, 0.0
      %5891 = vadd.xlane.f32.xlu0 %v5890
      %v5892 = vpop.xlane.xlu0 %5891
      %v5893 = vsel %vm622, %v5855, 0.0
      %5894 = vadd.xlane.f32.xlu0 %v5893
      %v5895 = vpop.xlane.xlu0 %5894
      %v5896 = vsel %vm622, %v5856, 0.0
      %5897 = vadd.xlane.f32.xlu0 %v5896
      %v5898 = vpop.xlane.xlu0 %5897
      %v5899 = vsel %vm622, %v5857, 0.0
      %5900 = vadd.xlane.f32.xlu0 %v5899
      %v5901 = vpop.xlane.xlu0 %5900
      %v5902 = vsel %vm622, %v5858, 0.0
      %5903 = vadd.xlane.f32.xlu0 %v5902
      %v5904 = vpop.xlane.xlu0 %5903
      %v5905 = vsel %vm622, %v5859, 0.0
      %5906 = vadd.xlane.f32.xlu0 %v5905
      %v5907 = vpop.xlane.xlu0 %5906
      %v5908 = vmul.f32 %v5862, %v1749
      %v5909 = vmul.f32 %v5865, %v1749
      %v5910 = vmul.f32 %v5868, %v1749
      %v5911 = vmul.f32 %v5871, %v1749
      %v5912 = vmul.f32 %v5874, %v1749
      %v5913 = vmul.f32 %v5877, %v1749
      %v5914 = vmul.f32 %v5880, %v1749
      %v5915 = vmul.f32 %v5883, %v1749
      %v5916 = vmul.f32 %v5886, %v1749
      %v5917 = vmul.f32 %v5889, %v1749
      %v5918 = vmul.f32 %v5892, %v1749
      %v5919 = vmul.f32 %v5895, %v1749
      %v5920 = vmul.f32 %v5898, %v1749
      %v5921 = vmul.f32 %v5901, %v1749
      %v5922 = vmul.f32 %v5904, %v1749
      %v5923 = vmul.f32 %v5907, %v1749
      %v5924 = vsub.f32 %v5844, %v5908
      %v5925 = vsub.f32 %v5845, %v5909
      %v5926 = vsub.f32 %v5846, %v5910
      %v5927 = vsub.f32 %v5847, %v5911
      %v5928 = vsub.f32 %v5848, %v5912
      %v5929 = vsub.f32 %v5849, %v5913
      %v5930 = vsub.f32 %v5850, %v5914
      %v5931 = vsub.f32 %v5851, %v5915
      %v5932 = vsub.f32 %v5852, %v5916
      %v5933 = vsub.f32 %v5853, %v5917
      %v5934 = vsub.f32 %v5854, %v5918
      %v5935 = vsub.f32 %v5855, %v5919
      %v5936 = vsub.f32 %v5856, %v5920
      %v5937 = vsub.f32 %v5857, %v5921
      %v5938 = vsub.f32 %v5858, %v5922
      %v5939 = vsub.f32 %v5859, %v5923
      %v5940 = vmul.f32 %v5924, %v5924
      %v5941 = vmul.f32 %v5925, %v5925
      %v5942 = vmul.f32 %v5926, %v5926
      %v5943 = vmul.f32 %v5927, %v5927
      %v5944 = vmul.f32 %v5928, %v5928
      %v5945 = vmul.f32 %v5929, %v5929
      %v5946 = vmul.f32 %v5930, %v5930
      %v5947 = vmul.f32 %v5931, %v5931
      %v5948 = vmul.f32 %v5932, %v5932
      %v5949 = vmul.f32 %v5933, %v5933
      %v5950 = vmul.f32 %v5934, %v5934
      %v5951 = vmul.f32 %v5935, %v5935
      %v5952 = vmul.f32 %v5936, %v5936
      %v5953 = vmul.f32 %v5937, %v5937
      %v5954 = vmul.f32 %v5938, %v5938
      %v5955 = vmul.f32 %v5939, %v5939
      %v5956 = vsel %vm622, %v5940, 0.0
      %5957 = vadd.xlane.f32.xlu0 %v5956
      %v5958 = vpop.xlane.xlu0 %5957
      %v5959 = vsel %vm622, %v5941, 0.0
      %5960 = vadd.xlane.f32.xlu0 %v5959
      %v5961 = vpop.xlane.xlu0 %5960
      %v5962 = vsel %vm622, %v5942, 0.0
      %5963 = vadd.xlane.f32.xlu0 %v5962
      %v5964 = vpop.xlane.xlu0 %5963
      %v5965 = vsel %vm622, %v5943, 0.0
      %5966 = vadd.xlane.f32.xlu0 %v5965
      %v5967 = vpop.xlane.xlu0 %5966
      %v5968 = vsel %vm622, %v5944, 0.0
      %5969 = vadd.xlane.f32.xlu0 %v5968
      %v5970 = vpop.xlane.xlu0 %5969
      %v5971 = vsel %vm622, %v5945, 0.0
      %5972 = vadd.xlane.f32.xlu0 %v5971
      %v5973 = vpop.xlane.xlu0 %5972
      %v5974 = vsel %vm622, %v5946, 0.0
      %5975 = vadd.xlane.f32.xlu0 %v5974
      %v5976 = vpop.xlane.xlu0 %5975
      %v5977 = vsel %vm622, %v5947, 0.0
      %5978 = vadd.xlane.f32.xlu0 %v5977
      %v5979 = vpop.xlane.xlu0 %5978
      %v5980 = vsel %vm622, %v5948, 0.0
      %5981 = vadd.xlane.f32.xlu0 %v5980
      %v5982 = vpop.xlane.xlu0 %5981
      %v5983 = vsel %vm622, %v5949, 0.0
      %5984 = vadd.xlane.f32.xlu0 %v5983
      %v5985 = vpop.xlane.xlu0 %5984
      %v5986 = vsel %vm622, %v5950, 0.0
      %5987 = vadd.xlane.f32.xlu0 %v5986
      %v5988 = vpop.xlane.xlu0 %5987
      %v5989 = vsel %vm622, %v5951, 0.0
      %5990 = vadd.xlane.f32.xlu0 %v5989
      %v5991 = vpop.xlane.xlu0 %5990
      %v5992 = vsel %vm622, %v5952, 0.0
      %5993 = vadd.xlane.f32.xlu0 %v5992
      %v5994 = vpop.xlane.xlu0 %5993
      %v5995 = vsel %vm622, %v5953, 0.0
      %5996 = vadd.xlane.f32.xlu0 %v5995
      %v5997 = vpop.xlane.xlu0 %5996
      %v5998 = vsel %vm622, %v5954, 0.0
      %5999 = vadd.xlane.f32.xlu0 %v5998
      %v6000 = vpop.xlane.xlu0 %5999
      %v6001 = vsel %vm622, %v5955, 0.0
      %6002 = vadd.xlane.f32.xlu0 %v6001
      %v6003 = vpop.xlane.xlu0 %6002
      %v6004 = vmul.f32 %v5958, %v1749
      %v6005 = vmul.f32 %v5961, %v1749
      %v6006 = vmul.f32 %v5964, %v1749
      %v6007 = vmul.f32 %v5967, %v1749
      %v6008 = vmul.f32 %v5970, %v1749
      %v6009 = vmul.f32 %v5973, %v1749
      %v6010 = vmul.f32 %v5976, %v1749
      %v6011 = vmul.f32 %v5979, %v1749
      %v6012 = vmul.f32 %v5982, %v1749
      %v6013 = vmul.f32 %v5985, %v1749
      %v6014 = vmul.f32 %v5988, %v1749
      %v6015 = vmul.f32 %v5991, %v1749
      %v6016 = vmul.f32 %v5994, %v1749
      %v6017 = vmul.f32 %v5997, %v1749
      %v6018 = vmul.f32 %v6000, %v1749
      %v6019 = vmul.f32 %v6003, %v1749
      %v6020 = vadd.f32 %v6004, 1e-05
      %v6021 = vadd.f32 %v6005, 1e-05
      %v6022 = vadd.f32 %v6006, 1e-05
      %v6023 = vadd.f32 %v6007, 1e-05
      %v6024 = vadd.f32 %v6008, 1e-05
      %v6025 = vadd.f32 %v6009, 1e-05
      %v6026 = vadd.f32 %v6010, 1e-05
      %v6027 = vadd.f32 %v6011, 1e-05
      %v6028 = vadd.f32 %v6012, 1e-05
      %v6029 = vadd.f32 %v6013, 1e-05
      %v6030 = vadd.f32 %v6014, 1e-05
      %v6031 = vadd.f32 %v6015, 1e-05
      %v6032 = vadd.f32 %v6016, 1e-05
      %v6033 = vadd.f32 %v6017, 1e-05
      %v6034 = vadd.f32 %v6018, 1e-05
      %v6035 = vadd.f32 %v6019, 1e-05
      %v6036 = vrsqrt.pop %v6020
      %v6037 = vmul.f32 %v6036, %v6020
      %v6038 = vmul.f32 %v6037, %v6036
      %v6039 = vmul.f32 0.5, %v6038
      %v6040 = vsub.f32 1.5, %v6039
      %v6041 = vmul.f32 %v6036, %v6040
      %vm6042 = vweird.f32 %v6020
      %vm6043 = vweird.f32 %v6036
      %vm6044 = vmor %vm6042, %vm6043
      %v6045 = vsel %vm6044, %v6036, %v6041
      %v6046 = vrsqrt.pop %v6021
      %v6047 = vmul.f32 %v6046, %v6021
      %v6048 = vmul.f32 %v6047, %v6046
      %v6049 = vmul.f32 0.5, %v6048
      %v6050 = vsub.f32 1.5, %v6049
      %v6051 = vmul.f32 %v6046, %v6050
      %vm6052 = vweird.f32 %v6021
      %vm6053 = vweird.f32 %v6046
      %vm6054 = vmor %vm6052, %vm6053
      %v6055 = vsel %vm6054, %v6046, %v6051
      %v6056 = vrsqrt.pop %v6022
      %v6057 = vmul.f32 %v6056, %v6022
      %v6058 = vmul.f32 %v6057, %v6056
      %v6059 = vmul.f32 0.5, %v6058
      %v6060 = vsub.f32 1.5, %v6059
      %v6061 = vmul.f32 %v6056, %v6060
      %vm6062 = vweird.f32 %v6022
      %vm6063 = vweird.f32 %v6056
      %vm6064 = vmor %vm6062, %vm6063
      %v6065 = vsel %vm6064, %v6056, %v6061
      %v6066 = vrsqrt.pop %v6023
      %v6067 = vmul.f32 %v6066, %v6023
      %v6068 = vmul.f32 %v6067, %v6066
      %v6069 = vmul.f32 0.5, %v6068
      %v6070 = vsub.f32 1.5, %v6069
      %v6071 = vmul.f32 %v6066, %v6070
      %vm6072 = vweird.f32 %v6023
      %vm6073 = vweird.f32 %v6066
      %vm6074 = vmor %vm6072, %vm6073
      %v6075 = vsel %vm6074, %v6066, %v6071
      %v6076 = vrsqrt.pop %v6024
      %v6077 = vmul.f32 %v6076, %v6024
      %v6078 = vmul.f32 %v6077, %v6076
      %v6079 = vmul.f32 0.5, %v6078
      %v6080 = vsub.f32 1.5, %v6079
      %v6081 = vmul.f32 %v6076, %v6080
      %vm6082 = vweird.f32 %v6024
      %vm6083 = vweird.f32 %v6076
      %vm6084 = vmor %vm6082, %vm6083
      %v6085 = vsel %vm6084, %v6076, %v6081
      %v6086 = vrsqrt.pop %v6025
      %v6087 = vmul.f32 %v6086, %v6025
      %v6088 = vmul.f32 %v6087, %v6086
      %v6089 = vmul.f32 0.5, %v6088
      %v6090 = vsub.f32 1.5, %v6089
      %v6091 = vmul.f32 %v6086, %v6090
      %vm6092 = vweird.f32 %v6025
      %vm6093 = vweird.f32 %v6086
      %vm6094 = vmor %vm6092, %vm6093
      %v6095 = vsel %vm6094, %v6086, %v6091
      %v6096 = vrsqrt.pop %v6026
      %v6097 = vmul.f32 %v6096, %v6026
      %v6098 = vmul.f32 %v6097, %v6096
      %v6099 = vmul.f32 0.5, %v6098
      %v6100 = vsub.f32 1.5, %v6099
      %v6101 = vmul.f32 %v6096, %v6100
      %vm6102 = vweird.f32 %v6026
      %vm6103 = vweird.f32 %v6096
      %vm6104 = vmor %vm6102, %vm6103
      %v6105 = vsel %vm6104, %v6096, %v6101
      %v6106 = vrsqrt.pop %v6027
      %v6107 = vmul.f32 %v6106, %v6027
      %v6108 = vmul.f32 %v6107, %v6106
      %v6109 = vmul.f32 0.5, %v6108
      %v6110 = vsub.f32 1.5, %v6109
      %v6111 = vmul.f32 %v6106, %v6110
      %vm6112 = vweird.f32 %v6027
      %vm6113 = vweird.f32 %v6106
      %vm6114 = vmor %vm6112, %vm6113
      %v6115 = vsel %vm6114, %v6106, %v6111
      %v6116 = vrsqrt.pop %v6028
      %v6117 = vmul.f32 %v6116, %v6028
      %v6118 = vmul.f32 %v6117, %v6116
      %v6119 = vmul.f32 0.5, %v6118
      %v6120 = vsub.f32 1.5, %v6119
      %v6121 = vmul.f32 %v6116, %v6120
      %vm6122 = vweird.f32 %v6028
      %vm6123 = vweird.f32 %v6116
      %vm6124 = vmor %vm6122, %vm6123
      %v6125 = vsel %vm6124, %v6116, %v6121
      %v6126 = vrsqrt.pop %v6029
      %v6127 = vmul.f32 %v6126, %v6029
      %v6128 = vmul.f32 %v6127, %v6126
      %v6129 = vmul.f32 0.5, %v6128
      %v6130 = vsub.f32 1.5, %v6129
      %v6131 = vmul.f32 %v6126, %v6130
      %vm6132 = vweird.f32 %v6029
      %vm6133 = vweird.f32 %v6126
      %vm6134 = vmor %vm6132, %vm6133
      %v6135 = vsel %vm6134, %v6126, %v6131
      %v6136 = vrsqrt.pop %v6030
      %v6137 = vmul.f32 %v6136, %v6030
      %v6138 = vmul.f32 %v6137, %v6136
      %v6139 = vmul.f32 0.5, %v6138
      %v6140 = vsub.f32 1.5, %v6139
      %v6141 = vmul.f32 %v6136, %v6140
      %vm6142 = vweird.f32 %v6030
      %vm6143 = vweird.f32 %v6136
      %vm6144 = vmor %vm6142, %vm6143
      %v6145 = vsel %vm6144, %v6136, %v6141
      %v6146 = vrsqrt.pop %v6031
      %v6147 = vmul.f32 %v6146, %v6031
      %v6148 = vmul.f32 %v6147, %v6146
      %v6149 = vmul.f32 0.5, %v6148
      %v6150 = vsub.f32 1.5, %v6149
      %v6151 = vmul.f32 %v6146, %v6150
      %vm6152 = vweird.f32 %v6031
      %vm6153 = vweird.f32 %v6146
      %vm6154 = vmor %vm6152, %vm6153
      %v6155 = vsel %vm6154, %v6146, %v6151
      %v6156 = vrsqrt.pop %v6032
      %v6157 = vmul.f32 %v6156, %v6032
      %v6158 = vmul.f32 %v6157, %v6156
      %v6159 = vmul.f32 0.5, %v6158
      %v6160 = vsub.f32 1.5, %v6159
      %v6161 = vmul.f32 %v6156, %v6160
      %vm6162 = vweird.f32 %v6032
      %vm6163 = vweird.f32 %v6156
      %vm6164 = vmor %vm6162, %vm6163
      %v6165 = vsel %vm6164, %v6156, %v6161
      %v6166 = vrsqrt.pop %v6033
      %v6167 = vmul.f32 %v6166, %v6033
      %v6168 = vmul.f32 %v6167, %v6166
      %v6169 = vmul.f32 0.5, %v6168
      %v6170 = vsub.f32 1.5, %v6169
      %v6171 = vmul.f32 %v6166, %v6170
      %vm6172 = vweird.f32 %v6033
      %vm6173 = vweird.f32 %v6166
      %vm6174 = vmor %vm6172, %vm6173
      %v6175 = vsel %vm6174, %v6166, %v6171
      %v6176 = vrsqrt.pop %v6034
      %v6177 = vmul.f32 %v6176, %v6034
      %v6178 = vmul.f32 %v6177, %v6176
      %v6179 = vmul.f32 0.5, %v6178
      %v6180 = vsub.f32 1.5, %v6179
      %v6181 = vmul.f32 %v6176, %v6180
      %vm6182 = vweird.f32 %v6034
      %vm6183 = vweird.f32 %v6176
      %vm6184 = vmor %vm6182, %vm6183
      %v6185 = vsel %vm6184, %v6176, %v6181
      %v6186 = vrsqrt.pop %v6035
      %v6187 = vmul.f32 %v6186, %v6035
      %v6188 = vmul.f32 %v6187, %v6186
      %v6189 = vmul.f32 0.5, %v6188
      %v6190 = vsub.f32 1.5, %v6189
      %v6191 = vmul.f32 %v6186, %v6190
      %vm6192 = vweird.f32 %v6035
      %vm6193 = vweird.f32 %v6186
      %vm6194 = vmor %vm6192, %vm6193
      %v6195 = vsel %vm6194, %v6186, %v6191
      %v6196 = vmul.f32 %v5924, %v6045
      %v6197 = vmul.f32 %v5925, %v6055
      %v6198 = vmul.f32 %v5926, %v6065
      %v6199 = vmul.f32 %v5927, %v6075
      %v6200 = vmul.f32 %v5928, %v6085
      %v6201 = vmul.f32 %v5929, %v6095
      %v6202 = vmul.f32 %v5930, %v6105
      %v6203 = vmul.f32 %v5931, %v6115
      %v6204 = vmul.f32 %v5932, %v6125
      %v6205 = vmul.f32 %v5933, %v6135
      %v6206 = vmul.f32 %v5934, %v6145
      %v6207 = vmul.f32 %v5935, %v6155
      %v6208 = vmul.f32 %v5936, %v6165
      %v6209 = vmul.f32 %v5937, %v6175
      %v6210 = vmul.f32 %v5938, %v6185
      %v6211 = vmul.f32 %v5939, %v6195
      %v6212 = vperm.slane %v1678, 4
      %v6213 = vmul.f32 %v6196, %v6212
      %v6214 = vmul.f32 %v6197, %v6212
      %v6215 = vmul.f32 %v6198, %v6212
      %v6216 = vmul.f32 %v6199, %v6212
      %v6217 = vmul.f32 %v6200, %v6212
      %v6218 = vmul.f32 %v6201, %v6212
      %v6219 = vmul.f32 %v6202, %v6212
      %v6220 = vmul.f32 %v6203, %v6212
      %v6221 = vmul.f32 %v6204, %v6212
      %v6222 = vmul.f32 %v6205, %v6212
      %v6223 = vmul.f32 %v6206, %v6212
      %v6224 = vmul.f32 %v6207, %v6212
      %v6225 = vmul.f32 %v6208, %v6212
      %v6226 = vmul.f32 %v6209, %v6212
      %v6227 = vmul.f32 %v6210, %v6212
      %v6228 = vmul.f32 %v6211, %v6212
      %v6229 = vperm.slane %v1678, 5
      %v6230 = vadd.f32 %v6213, %v6229
      %v6231 = vadd.f32 %v6214, %v6229
      %v6232 = vadd.f32 %v6215, %v6229
      %v6233 = vadd.f32 %v6216, %v6229
      %v6234 = vadd.f32 %v6217, %v6229
      %v6235 = vadd.f32 %v6218, %v6229
      %v6236 = vadd.f32 %v6219, %v6229
      %v6237 = vadd.f32 %v6220, %v6229
      %v6238 = vadd.f32 %v6221, %v6229
      %v6239 = vadd.f32 %v6222, %v6229
      %v6240 = vadd.f32 %v6223, %v6229
      %v6241 = vadd.f32 %v6224, %v6229
      %v6242 = vadd.f32 %v6225, %v6229
      %v6243 = vadd.f32 %v6226, %v6229
      %v6244 = vadd.f32 %v6227, %v6229
      %v6245 = vadd.f32 %v6228, %v6229
      %6246 = vst.msk [vmem:[%s579] sm:$0xff] %vm622, %v6230
      %6247 = vst.msk [vmem:[%s579 + $0x8] sm:$0xff] %vm622, %v6231
      %6248 = vst.msk [vmem:[%s579 + $0x10] sm:$0xff] %vm622, %v6232
      %6249 = vst.msk [vmem:[%s579 + $0x18] sm:$0xff] %vm622, %v6233
      %6250 = vst.msk [vmem:[%s579 + $0x20] sm:$0xff] %vm622, %v6234
      %6251 = vst.msk [vmem:[%s579 + $0x28] sm:$0xff] %vm622, %v6235
      %6252 = vst.msk [vmem:[%s579 + $0x30] sm:$0xff] %vm622, %v6236
      %6253 = vst.msk [vmem:[%s579 + $0x38] sm:$0xff] %vm622, %v6237
      %6254 = vst.msk [vmem:[%s579 + $0x40] sm:$0xff] %vm622, %v6238
      %6255 = vst.msk [vmem:[%s579 + $0x48] sm:$0xff] %vm622, %v6239
      %6256 = vst.msk [vmem:[%s579 + $0x50] sm:$0xff] %vm622, %v6240
      %6257 = vst.msk [vmem:[%s579 + $0x58] sm:$0xff] %vm622, %v6241
      %6258 = vst.msk [vmem:[%s579 + $0x60] sm:$0xff] %vm622, %v6242
      %6259 = vst.msk [vmem:[%s579 + $0x68] sm:$0xff] %vm622, %v6243
      %6260 = vst.msk [vmem:[%s579 + $0x70] sm:$0xff] %vm622, %v6244
      %6261 = vst.msk [vmem:[%s579 + $0x78] sm:$0xff] %vm622, %v6245
      %s6262 = smul.u32 16, %s26
      %p6263 = scmp.lt.s32.totalorder %s6262, 31
      %s6264 = scalar_select %p6263, %s6262, 31
      %s6265 = smul.addr %s6264, 8
      %s6266 = scalar_lea.vmem %s15, %s6265
      // Predicated region
      $region81: #{tpu_custom_call.1} parent=79 // pred_check
        %p6267 = pneg %p384
      $region82: #{tpu_custom_call.1} parent=79 // pred_check_branch
        %6269 = sbr.rel (%p6267) target = $region84
      $region83: #{tpu_custom_call.1} parent=79 // pred_region
        %s6270 = smul.u32 16, %s26
      $region84: #{tpu_custom_call.1} parent=79 // pred_fallthru
        _
    $region80: #{tpu_custom_call.1} parent=5 // pred_fallthru
      _
    %p6271 = scmp.le.s32.totalorder 2, %s21
    // Predicated region
    $region85: #{tpu_custom_call.1} parent=5 // pred_check
      %p6272 = pneg %p6271
    $region86: #{tpu_custom_call.1} parent=5 // pred_check_branch
      %6274 = sbr.rel (%p6272) target = $region88
    $region87: #{tpu_custom_call.1} parent=5 // pred_region
      %s6275 = ssub.s32 %s21, 2
      // Predicated region
      $region89: #{tpu_custom_call.1} parent=87 // pred_check
        %p6276 = pneg %p390
      $region90: #{tpu_custom_call.1} parent=87 // pred_check_branch
        %6278 = sbr.rel (%p6276) target = $region92
      $region91: #{tpu_custom_call.1} parent=87 // pred_region
        %s6279 = smul.u32 16, %s27
        %p6280 = scmp.lt.s32.totalorder %s6279, 31
        %s6281 = scalar_select %p6280, %s6279, 31
        %s6282 = smul.addr %s6281, 8
        %s6283 = scalar_lea.vmem %s15, %s6282
      $region92: #{tpu_custom_call.1} parent=87 // pred_fallthru
        _
    $region88: #{tpu_custom_call.1} parent=5 // pred_fallthru
      _
  $region6: #{tpu_custom_call.1} parent=0 // loop_footer
    %s25 = sadd.s32 1, %s21
  $region7: #{tpu_custom_call.1} parent=0 // loop_footer_branch
    %20 = sbr.rel target = $region3
  $region8: #{tpu_custom_call.1} parent=0 // loop_exit
    _

</llo_original>
